<compile_context>
chip_gen: v6e
topology: v6e:2x2x1
jax: 0.10.0
libtpu: 0.0.40
codegen_flags: <defaults>
</compile_context>

<pallas_src>
import jax
import jax.numpy as jnp
from jax import lax
from jax.experimental import pallas as pl
from jax.experimental.pallas import tpu as pltpu


# --------------------------------- fused kernel ---------------------------------

def _image_feature_kernel(
        xp_ref, ws_ref, bs_ref,
        wd1_ref, bd1_ref, wp1_ref, bp1_ref,
        wd2_ref, bd2_ref, wp2_ref, bp2_ref,
        wd3_ref, bd3_ref, wp3_ref, bp3_ref,
        wd4_ref, bd4_ref, wp4_ref, bp4_ref,
        wf_ref, bf_ref,
        o_ref,
        pad1, pad2, pad3, pad4):
    f32 = jnp.float32
    bf16 = jnp.bfloat16
    Bt = o_ref.shape[1]

    # Zero the 1-pixel borders of the per-stage padded scratch maps.  Thin strips only,
    # redone every grid step, so correctness never depends on a program_id==0 init running
    # on every core when the "parallel" batch axis is split across TensorCores.
    for ref in (pad1, pad2, pad3, pad4):
        _, ph, pw, pc = ref.shape
        ref[:, 0:1, :, :] = jnp.zeros((Bt, 1, pw, pc), f32)
        ref[:, ph - 1:ph, :, :] = jnp.zeros((Bt, 1, pw, pc), f32)
        ref[:, :, 0:1, :] = jnp.zeros((Bt, ph, 1, pc), f32)
        ref[:, :, pw - 1:pw, :] = jnp.zeros((Bt, ph, 1, pc), f32)

    # ---- stem: Conv2d(3, 32, k=3, s=2, p=1) + folded BN + ReLU as one im2col matmul ----
    h1, w1 = pad1.shape[1] - 2, pad1.shape[2] - 2
    c_stem = ws_ref.shape[1]
    y = jnp.dot(xp_ref[...], ws_ref[...], preferred_element_type=f32)   # (Bt*h1*w1, 32)
    y = jnp.maximum(y + bs_ref[...], 0.0)
    pad1[:, 1:1 + h1, 1:1 + w1, :] = y.reshape(Bt, h1, w1, c_stem)

    # ---- depthwise 3x3 (9 VPU FMAs on scratch taps) + pointwise 1x1 (one MXU dot) ----
    def dw_pw(pad_ref, wd_ref, bd_ref, wp_ref, bp_ref):
        _, ph, pw, cin = pad_ref.shape
        h, w = ph - 2, pw - 2
        acc = None
        for dy in range(3):
            for dx in range(3):
                t = dy * 3 + dx
                term = pad_ref[:, dy:dy + h, dx:dx + w, :] * wd_ref[t:t + 1, :]
                acc = term if acc is None else acc + term
        a = jnp.maximum(acc + bd_ref[...], 0.0)                    # (Bt, h, w, cin)
        a = a.reshape(Bt * h * w, cin).astype(bf16)
        z = jnp.dot(a, wp_ref[...], preferred_element_type=f32)    # (Bt*h*w, cout)
        return jnp.maximum(z + bp_ref[...], 0.0), h, w

    # ---- 2x2/2 max pool, written straight into the next stage's padded scratch ----
    def pool_into(z, h, w, dst_ref):
        c = z.shape[-1]
        h2, w2 = h // 2, w // 2
        zz = z.reshape(Bt * h2, 2 * w, c)                          # layout-preserving
        r0 = lax.slice(zz, (0, 0, 0), (Bt * h2, w, c))
        r1 = lax.slice(zz, (0, w, 0), (Bt * h2, 2 * w, c))
        a = jnp.maximum(r0, r1)                                    # row-pair max
        for j in range(w2):                                        # column-pair maxima
            c0 = lax.slice(a, (0, 2 * j, 0), (Bt * h2, 2 * j + 1, c))
            c1 = lax.slice(a, (0, 2 * j + 1, 0), (Bt * h2, 2 * j + 2, c))
            col = jnp.maximum(c0, c1).reshape(Bt, h2, 1, c)
            dst_ref[:, 1:1 + h2, 1 + j:2 + j, :] = col

    z, h, w = dw_pw(pad1, wd1_ref, bd1_ref, wp1_ref, bp1_ref)      # 32 -> 64
    pool_into(z, h, w, pad2)
    z, h, w = dw_pw(pad2, wd2_ref, bd2_ref, wp2_ref, bp2_ref)      # 64 -> 128
    pool_into(z, h, w, pad3)
    z, h, w = dw_pw(pad3, wd3_ref, bd3_ref, wp3_ref, bp3_ref)      # 128 -> 256
    pool_into(z, h, w, pad4)
    z, h, w = dw_pw(pad4, wd4_ref, bd4_ref, wp4_ref, bp4_ref)      # 256 -> 512

    # ---- global average pool (per-image sublane reduction) + Linear(512 -> 128) ----
    nsp = h * w
    cf = z.shape[-1]
    rows = [jnp.sum(lax.slice(z, (b * nsp, 0), ((b + 1) * nsp, cf)),
                    axis=0, keepdims=True) for b in range(Bt)]
    feat = jnp.concatenate(rows, axis=0) * (1.0 / nsp)             # (Bt, 512)
    out = jnp.dot(feat.astype(bf16), wf_ref[...], preferred_element_type=f32)
    o_ref[0] = out + bf_ref[...]                                   # (Bt, 128)


# --------------------------------- wrapper (glue) ---------------------------------

def _pick_bt(batch):
    """Largest batch tile <= 8 that divides the batch and keeps >= 2 grid steps."""
    for bt in (8, 4, 2):
        if batch % bt == 0 and batch // bt >= 2:
            return bt
    return 1


@jax.jit
def image_feature_extractor(x_nchw, params):
    x = jnp.transpose(x_nchw, (0, 2, 3, 1)).astype(jnp.float32)    # NCHW -> NHWC
    B, H, W, Cin = x.shape
    assert Cin == 3 and H % 16 == 0 and W % 16 == 0
    Ho, Wo = H // 2, W // 2
    npix = Ho * Wo
    Bt = _pick_bt(B)
    G = B // Bt

    # im2col patches for the stride-2 stem: pure layout (27 values / output pixel),
    # built once by XLA in HBM so the in-kernel stem is a single MXU matmul.
    xpad = jnp.pad(x, ((0, 0), (1, 1), (1, 1), (0, 0)))
    patches = [xpad[:, dy:dy + 2 * Ho:2, dx:dx + 2 * Wo:2, :]
               for dy in range(3) for dx in range(3)]
    xp = jnp.concatenate(patches, axis=-1).reshape(B * npix, 9 * Cin)
    xp = xp.astype(jnp.bfloat16)

    # Fold conv bias + inference BatchNorm into the conv weights (scale) and a bias row.
    def fold(p):
        s = p["gamma"] * lax.rsqrt(p["var"] + 1e-5)
        return s, (p["beta"] + s * (p["b"] - p["mean"])).reshape(1, -1)

    st = params["stem"]
    s, b_stem = fold(st)
    w_stem = (st["w"] * s).reshape(9 * Cin, -1).astype(jnp.bfloat16)     # (27, 32)

    args = [xp, w_stem, b_stem]
    dw_chans = []
    for stage in params["stages"]:
        dw, pw = stage["dw"], stage["pw"]
        s, b_dw = fold(dw)
        w_dw = (dw["w"] * s).reshape(9, -1)                              # (9, C)  f32
        s, b_pw = fold(pw)
        w_pw = (pw["w"] * s).astype(jnp.bfloat16)                        # (Cin, Cout)
        args += [w_dw, b_dw, w_pw, b_pw]
        dw_chans.append(dw["w"].shape[-1])
    n_out = params["fc"]["w"].shape[1]
    args += [params["fc"]["w"].astype(jnp.bfloat16),
             params["fc"]["b"].reshape(1, -1)]

    in_specs = [pl.BlockSpec((Bt * npix, 9 * Cin), lambda g: (g, 0))]
    in_specs += [pl.BlockSpec(a.shape, lambda g: (0, 0)) for a in args[1:]]

    scratch_shapes = [
        pltpu.VMEM((Bt, Ho // (1 << k) + 2, Wo // (1 << k) + 2, dw_chans[k]), jnp.float32)
        for k in range(4)]

    out = pl.pallas_call(
        _image_feature_kernel,
        out_shape=jax.ShapeDtypeStruct((G, Bt, n_out), jnp.float32),
        grid=(G,),
        in_specs=in_specs,
        out_specs=pl.BlockSpec((1, Bt, n_out), lambda g: (g, 0, 0)),
        scratch_shapes=scratch_shapes,
        compiler_params=pltpu.CompilerParams(dimension_semantics=("parallel",)),
    )(*args)
    return out.reshape(B, n_out)[:, None, :]


# ----------------------------------- parameters -----------------------------------

def _conv_bn_params(key, wshape, cout, wscale):
    kw, kb, kg, kbe, km, kv = jax.random.split(key, 6)
    return dict(
        w=wscale * jax.random.normal(kw, wshape, jnp.float32),
        b=0.05 * jax.random.normal(kb, (cout,), jnp.float32),
        gamma=1.0 + 0.1 * jax.random.normal(kg, (cout,), jnp.float32),
        beta=0.05 * jax.random.normal(kbe, (cout,), jnp.float32),
        mean=0.1 * jax.random.normal(km, (cout,), jnp.float32),
        var=0.9 + 0.2 * jax.random.uniform(kv, (cout,), jnp.float32),
    )


def init_params(key):
    keys = jax.random.split(key, 10)
    stem = _conv_bn_params(keys[0], (3, 3, 3, 32), 32, (2.0 / 27.0) ** 0.5)   # HWIO
    stages = []
    widths = [(32, 64), (64, 128), (128, 256), (256, 512)]
    for i, (cin, cout) in enumerate(widths):
        dw = _conv_bn_params(keys[1 + 2 * i], (3, 3, cin), cin, (2.0 / 9.0) ** 0.5)
        pw = _conv_bn_params(keys[2 + 2 * i], (cin, cout), cout, (2.0 / cin) ** 0.5)
        stages.append(dict(dw=dw, pw=pw))
    kfw, kfb = jax.random.split(keys[9])
    fc = dict(w=(1.0 / 512.0) ** 0.5 * jax.random.normal(kfw, (512, 128), jnp.float32),
              b=0.05 * jax.random.normal(kfb, (128,), jnp.float32))
    return dict(stem=stem, stages=stages, fc=fc)


# ------------------------------- pure-JAX reference --------------------------------

def reference_forward(x_nchw, params, eps=1e-5):
    x = jnp.transpose(x_nchw, (0, 2, 3, 1)).astype(jnp.float32)

    def bn_relu(y, p):
        y = (y - p["mean"]) / jnp.sqrt(p["var"] + eps) * p["gamma"] + p["beta"]
        return jnp.maximum(y, 0.0)

    st = params["stem"]
    y = lax.conv_general_dilated(
        x, st["w"], (2, 2), ((1, 1), (1, 1)),
        dimension_numbers=("NHWC", "HWIO", "NHWC"),
        precision=lax.Precision.HIGHEST) + st["b"]
    x = bn_relu(y, st)

    for i, stage in enumerate(params["stages"]):
        dw, pw = stage["dw"], stage["pw"]
        C = x.shape[-1]
        y = lax.conv_general_dilated(
            x, dw["w"].reshape(3, 3, 1, C), (1, 1), ((1, 1), (1, 1)),
            dimension_numbers=("NHWC", "HWIO", "NHWC"),
            feature_group_count=C,
            precision=lax.Precision.HIGHEST) + dw["b"]
        x = bn_relu(y, dw)
        y = jnp.einsum("nhwc,cd->nhwd", x, pw["w"],
                       precision=lax.Precision.HIGHEST) + pw["b"]
        x = bn_relu(y, pw)
        if i < 3:
            x = lax.reduce_window(x, -jnp.inf, lax.max,
                                  (1, 2, 2, 1), (1, 2, 2, 1), "VALID")

    feat = jnp.mean(x, axis=(1, 2))                               # (B, 512)
    feat = jnp.dot(feat, params["fc"]["w"],
                   precision=lax.Precision.HIGHEST) + params["fc"]["b"]
    return feat[:, None, :]                                       # (B, 1, 128)


# --------------------------------------- main ---------------------------------------

if __name__ == "__main__":
    key = jax.random.PRNGKey(0)
    kx, kp = jax.random.split(key)
    params = init_params(kp)

    B, H, W = 4, 32, 32
    x = jax.random.normal(kx, (B, 3, H, W), jnp.float32)          # NCHW, like the PyTorch module

    out = jax.block_until_ready(image_feature_extractor(x, params))
    assert out.shape == (B, 1, 128), out.shape

    ref = reference_forward(x, params)
    err = float(jnp.max(jnp.abs(out - ref)))
    scale = max(1.0, float(jnp.max(jnp.abs(ref))))
    # MXU matmuls (stem / 1x1 convs / FC) use bf16 inputs with f32 accumulation per the
    # perf review, while the reference is HIGHEST-precision f32, so the tolerance is
    # widened accordingly; genuine indexing/algebra bugs appear as O(1) relative errors
    # and are still caught.
    if not err <= 3e-2 * scale:
        raise AssertionError(
            f"Pallas output mismatch vs reference: max abs err {err} (scale {scale})")
    print("KERNEL_OK")
</pallas_src>

<mosaic_0001>
module attributes {stable_mosaic.version = 11 : i64} {
  func.func @_image_feature_kernel(%arg0: i32, %arg1: memref<512x27xbf16, #tpu.memory_space<vmem>>, %arg2: memref<27x32xbf16, #tpu.memory_space<vmem>>, %arg3: memref<1x32xf32, #tpu.memory_space<vmem>>, %arg4: memref<9x32xf32, #tpu.memory_space<vmem>>, %arg5: memref<1x32xf32, #tpu.memory_space<vmem>>, %arg6: memref<32x64xbf16, #tpu.memory_space<vmem>>, %arg7: memref<1x64xf32, #tpu.memory_space<vmem>>, %arg8: memref<9x64xf32, #tpu.memory_space<vmem>>, %arg9: memref<1x64xf32, #tpu.memory_space<vmem>>, %arg10: memref<64x128xbf16, #tpu.memory_space<vmem>>, %arg11: memref<1x128xf32, #tpu.memory_space<vmem>>, %arg12: memref<9x128xf32, #tpu.memory_space<vmem>>, %arg13: memref<1x128xf32, #tpu.memory_space<vmem>>, %arg14: memref<128x256xbf16, #tpu.memory_space<vmem>>, %arg15: memref<1x256xf32, #tpu.memory_space<vmem>>, %arg16: memref<9x256xf32, #tpu.memory_space<vmem>>, %arg17: memref<1x256xf32, #tpu.memory_space<vmem>>, %arg18: memref<256x512xbf16, #tpu.memory_space<vmem>>, %arg19: memref<1x512xf32, #tpu.memory_space<vmem>>, %arg20: memref<512x128xbf16, #tpu.memory_space<vmem>>, %arg21: memref<1x128xf32, #tpu.memory_space<vmem>>, %arg22: memref<1x2x128xf32, #tpu.memory_space<vmem>>, %arg23: memref<2x18x18x32xf32, #tpu.memory_space<vmem>>, %arg24: memref<2x10x10x64xf32, #tpu.memory_space<vmem>>, %arg25: memref<2x6x6x128xf32, #tpu.memory_space<vmem>>, %arg26: memref<2x4x4x256xf32, #tpu.memory_space<vmem>>) attributes {dimension_semantics = [#tpu.dimension_semantics<parallel>], iteration_bounds = array<i64: 2>, scalar_prefetch = 0 : i64, scratch_operands = 4 : i64, tpu.core_type = #tpu.core_type<tc>, window_params = [{transform_indices = @transform_0, window_bounds = array<i64: 512, 27>}, {pipeline_mode = #tpu.pipeline_mode<synchronous>, transform_indices = @transform_1, window_bounds = array<i64: 27, 32>}, {pipeline_mode = #tpu.pipeline_mode<synchronous>, transform_indices = @transform_2, window_bounds = array<i64: 1, 32>}, {pipeline_mode = #tpu.pipeline_mode<synchronous>, transform_indices = @transform_3, window_bounds = array<i64: 9, 32>}, {pipeline_mode = #tpu.pipeline_mode<synchronous>, transform_indices = @transform_4, window_bounds = array<i64: 1, 32>}, {pipeline_mode = #tpu.pipeline_mode<synchronous>, transform_indices = @transform_5, window_bounds = array<i64: 32, 64>}, {pipeline_mode = #tpu.pipeline_mode<synchronous>, transform_indices = @transform_6, window_bounds = array<i64: 1, 64>}, {pipeline_mode = #tpu.pipeline_mode<synchronous>, transform_indices = @transform_7, window_bounds = array<i64: 9, 64>}, {pipeline_mode = #tpu.pipeline_mode<synchronous>, transform_indices = @transform_8, window_bounds = array<i64: 1, 64>}, {pipeline_mode = #tpu.pipeline_mode<synchronous>, transform_indices = @transform_9, window_bounds = array<i64: 64, 128>}, {pipeline_mode = #tpu.pipeline_mode<synchronous>, transform_indices = @transform_10, window_bounds = array<i64: 1, 128>}, {pipeline_mode = #tpu.pipeline_mode<synchronous>, transform_indices = @transform_11, window_bounds = array<i64: 9, 128>}, {pipeline_mode = #tpu.pipeline_mode<synchronous>, transform_indices = @transform_12, window_bounds = array<i64: 1, 128>}, {pipeline_mode = #tpu.pipeline_mode<synchronous>, transform_indices = @transform_13, window_bounds = array<i64: 128, 256>}, {pipeline_mode = #tpu.pipeline_mode<synchronous>, transform_indices = @transform_14, window_bounds = array<i64: 1, 256>}, {pipeline_mode = #tpu.pipeline_mode<synchronous>, transform_indices = @transform_15, window_bounds = array<i64: 9, 256>}, {pipeline_mode = #tpu.pipeline_mode<synchronous>, transform_indices = @transform_16, window_bounds = array<i64: 1, 256>}, {pipeline_mode = #tpu.pipeline_mode<synchronous>, transform_indices = @transform_17, window_bounds = array<i64: 256, 512>}, {pipeline_mode = #tpu.pipeline_mode<synchronous>, transform_indices = @transform_18, window_bounds = array<i64: 1, 512>}, {pipeline_mode = #tpu.pipeline_mode<synchronous>, transform_indices = @transform_19, window_bounds = array<i64: 512, 128>}, {pipeline_mode = #tpu.pipeline_mode<synchronous>, transform_indices = @transform_20, window_bounds = array<i64: 1, 128>}, {transform_indices = @transform_21, window_bounds = array<i64: 1, 2, 128>}]} {
    %cst = arith.constant 0.000000e+00 : f32
    %0 = vector.broadcast %cst : f32 to vector<2x1x18x32xf32>
    %c0 = arith.constant 0 : index
    %c0_0 = arith.constant 0 : index
    %c0_1 = arith.constant 0 : index
    %c0_2 = arith.constant 0 : index
    %1 = vector.load %arg23[%c0, %c0_0, %c0_1, %c0_2] : memref<2x18x18x32xf32, #tpu.memory_space<vmem>>, vector<2x1x18x32xf32>
    tpu.vector_store %arg23[%c0, %c0_0, %c0_1, %c0_2], %0 {strides = array<i32>} : memref<2x18x18x32xf32, #tpu.memory_space<vmem>>, vector<2x1x18x32xf32>,
    %cst_3 = arith.constant 0.000000e+00 : f32
    %2 = vector.broadcast %cst_3 : f32 to vector<2x1x18x32xf32>
    %c0_4 = arith.constant 0 : index
    %c17 = arith.constant 17 : index
    %c0_5 = arith.constant 0 : index
    %c0_6 = arith.constant 0 : index
    %3 = vector.load %arg23[%c0_4, %c17, %c0_5, %c0_6] : memref<2x18x18x32xf32, #tpu.memory_space<vmem>>, vector<2x1x18x32xf32>
    tpu.vector_store %arg23[%c0_4, %c17, %c0_5, %c0_6], %2 {strides = array<i32>} : memref<2x18x18x32xf32, #tpu.memory_space<vmem>>, vector<2x1x18x32xf32>,
    %cst_7 = arith.constant 0.000000e+00 : f32
    %4 = vector.broadcast %cst_7 : f32 to vector<2x18x1x32xf32>
    %c0_8 = arith.constant 0 : index
    %c0_9 = arith.constant 0 : index
    %c0_10 = arith.constant 0 : index
    %c0_11 = arith.constant 0 : index
    %5 = vector.load %arg23[%c0_8, %c0_9, %c0_10, %c0_11] : memref<2x18x18x32xf32, #tpu.memory_space<vmem>>, vector<2x18x1x32xf32>
    tpu.vector_store %arg23[%c0_8, %c0_9, %c0_10, %c0_11], %4 {strides = array<i32>} : memref<2x18x18x32xf32, #tpu.memory_space<vmem>>, vector<2x18x1x32xf32>,
    %cst_12 = arith.constant 0.000000e+00 : f32
    %6 = vector.broadcast %cst_12 : f32 to vector<2x18x1x32xf32>
    %c0_13 = arith.constant 0 : index
    %c0_14 = arith.constant 0 : index
    %c17_15 = arith.constant 17 : index
    %c0_16 = arith.constant 0 : index
    %7 = vector.load %arg23[%c0_13, %c0_14, %c17_15, %c0_16] : memref<2x18x18x32xf32, #tpu.memory_space<vmem>>, vector<2x18x1x32xf32>
    tpu.vector_store %arg23[%c0_13, %c0_14, %c17_15, %c0_16], %6 {strides = array<i32>} : memref<2x18x18x32xf32, #tpu.memory_space<vmem>>, vector<2x18x1x32xf32>,
    %cst_17 = arith.constant 0.000000e+00 : f32
    %8 = vector.broadcast %cst_17 : f32 to vector<2x1x10x64xf32>
    %c0_18 = arith.constant 0 : index
    %c0_19 = arith.constant 0 : index
    %c0_20 = arith.constant 0 : index
    %c0_21 = arith.constant 0 : index
    %9 = vector.load %arg24[%c0_18, %c0_19, %c0_20, %c0_21] : memref<2x10x10x64xf32, #tpu.memory_space<vmem>>, vector<2x1x10x64xf32>
    tpu.vector_store %arg24[%c0_18, %c0_19, %c0_20, %c0_21], %8 {strides = array<i32>} : memref<2x10x10x64xf32, #tpu.memory_space<vmem>>, vector<2x1x10x64xf32>,
    %cst_22 = arith.constant 0.000000e+00 : f32
    %10 = vector.broadcast %cst_22 : f32 to vector<2x1x10x64xf32>
    %c0_23 = arith.constant 0 : index
    %c9 = arith.constant 9 : index
    %c0_24 = arith.constant 0 : index
    %c0_25 = arith.constant 0 : index
    %11 = vector.load %arg24[%c0_23, %c9, %c0_24, %c0_25] : memref<2x10x10x64xf32, #tpu.memory_space<vmem>>, vector<2x1x10x64xf32>
    tpu.vector_store %arg24[%c0_23, %c9, %c0_24, %c0_25], %10 {strides = array<i32>} : memref<2x10x10x64xf32, #tpu.memory_space<vmem>>, vector<2x1x10x64xf32>,
    %cst_26 = arith.constant 0.000000e+00 : f32
    %12 = vector.broadcast %cst_26 : f32 to vector<2x10x1x64xf32>
    %c0_27 = arith.constant 0 : index
    %c0_28 = arith.constant 0 : index
    %c0_29 = arith.constant 0 : index
    %c0_30 = arith.constant 0 : index
    %13 = vector.load %arg24[%c0_27, %c0_28, %c0_29, %c0_30] : memref<2x10x10x64xf32, #tpu.memory_space<vmem>>, vector<2x10x1x64xf32>
    tpu.vector_store %arg24[%c0_27, %c0_28, %c0_29, %c0_30], %12 {strides = array<i32>} : memref<2x10x10x64xf32, #tpu.memory_space<vmem>>, vector<2x10x1x64xf32>,
    %cst_31 = arith.constant 0.000000e+00 : f32
    %14 = vector.broadcast %cst_31 : f32 to vector<2x10x1x64xf32>
    %c0_32 = arith.constant 0 : index
    %c0_33 = arith.constant 0 : index
    %c9_34 = arith.constant 9 : index
    %c0_35 = arith.constant 0 : index
    %15 = vector.load %arg24[%c0_32, %c0_33, %c9_34, %c0_35] : memref<2x10x10x64xf32, #tpu.memory_space<vmem>>, vector<2x10x1x64xf32>
    tpu.vector_store %arg24[%c0_32, %c0_33, %c9_34, %c0_35], %14 {strides = array<i32>} : memref<2x10x10x64xf32, #tpu.memory_space<vmem>>, vector<2x10x1x64xf32>,
    %cst_36 = arith.constant 0.000000e+00 : f32
    %16 = vector.broadcast %cst_36 : f32 to vector<2x1x6x128xf32>
    %c0_37 = arith.constant 0 : index
    %c0_38 = arith.constant 0 : index
    %c0_39 = arith.constant 0 : index
    %c0_40 = arith.constant 0 : index
    %17 = vector.load %arg25[%c0_37, %c0_38, %c0_39, %c0_40] : memref<2x6x6x128xf32, #tpu.memory_space<vmem>>, vector<2x1x6x128xf32>
    tpu.vector_store %arg25[%c0_37, %c0_38, %c0_39, %c0_40], %16 {strides = array<i32>} : memref<2x6x6x128xf32, #tpu.memory_space<vmem>>, vector<2x1x6x128xf32>,
    %cst_41 = arith.constant 0.000000e+00 : f32
    %18 = vector.broadcast %cst_41 : f32 to vector<2x1x6x128xf32>
    %c0_42 = arith.constant 0 : index
    %c5 = arith.constant 5 : index
    %c0_43 = arith.constant 0 : index
    %c0_44 = arith.constant 0 : index
    %19 = vector.load %arg25[%c0_42, %c5, %c0_43, %c0_44] : memref<2x6x6x128xf32, #tpu.memory_space<vmem>>, vector<2x1x6x128xf32>
    tpu.vector_store %arg25[%c0_42, %c5, %c0_43, %c0_44], %18 {strides = array<i32>} : memref<2x6x6x128xf32, #tpu.memory_space<vmem>>, vector<2x1x6x128xf32>,
    %cst_45 = arith.constant 0.000000e+00 : f32
    %20 = vector.broadcast %cst_45 : f32 to vector<2x6x1x128xf32>
    %c0_46 = arith.constant 0 : index
    %c0_47 = arith.constant 0 : index
    %c0_48 = arith.constant 0 : index
    %c0_49 = arith.constant 0 : index
    %21 = vector.load %arg25[%c0_46, %c0_47, %c0_48, %c0_49] : memref<2x6x6x128xf32, #tpu.memory_space<vmem>>, vector<2x6x1x128xf32>
    tpu.vector_store %arg25[%c0_46, %c0_47, %c0_48, %c0_49], %20 {strides = array<i32>} : memref<2x6x6x128xf32, #tpu.memory_space<vmem>>, vector<2x6x1x128xf32>,
    %cst_50 = arith.constant 0.000000e+00 : f32
    %22 = vector.broadcast %cst_50 : f32 to vector<2x6x1x128xf32>
    %c0_51 = arith.constant 0 : index
    %c0_52 = arith.constant 0 : index
    %c5_53 = arith.constant 5 : index
    %c0_54 = arith.constant 0 : index
    %23 = vector.load %arg25[%c0_51, %c0_52, %c5_53, %c0_54] : memref<2x6x6x128xf32, #tpu.memory_space<vmem>>, vector<2x6x1x128xf32>
    tpu.vector_store %arg25[%c0_51, %c0_52, %c5_53, %c0_54], %22 {strides = array<i32>} : memref<2x6x6x128xf32, #tpu.memory_space<vmem>>, vector<2x6x1x128xf32>,
    %cst_55 = arith.constant 0.000000e+00 : f32
    %24 = vector.broadcast %cst_55 : f32 to vector<2x1x4x256xf32>
    %c0_56 = arith.constant 0 : index
    %c0_57 = arith.constant 0 : index
    %c0_58 = arith.constant 0 : index
    %c0_59 = arith.constant 0 : index
    %25 = vector.load %arg26[%c0_56, %c0_57, %c0_58, %c0_59] : memref<2x4x4x256xf32, #tpu.memory_space<vmem>>, vector<2x1x4x256xf32>
    tpu.vector_store %arg26[%c0_56, %c0_57, %c0_58, %c0_59], %24 {strides = array<i32>} : memref<2x4x4x256xf32, #tpu.memory_space<vmem>>, vector<2x1x4x256xf32>,
    %cst_60 = arith.constant 0.000000e+00 : f32
    %26 = vector.broadcast %cst_60 : f32 to vector<2x1x4x256xf32>
    %c0_61 = arith.constant 0 : index
    %c3 = arith.constant 3 : index
    %c0_62 = arith.constant 0 : index
    %c0_63 = arith.constant 0 : index
    %27 = vector.load %arg26[%c0_61, %c3, %c0_62, %c0_63] : memref<2x4x4x256xf32, #tpu.memory_space<vmem>>, vector<2x1x4x256xf32>
    tpu.vector_store %arg26[%c0_61, %c3, %c0_62, %c0_63], %26 {strides = array<i32>} : memref<2x4x4x256xf32, #tpu.memory_space<vmem>>, vector<2x1x4x256xf32>,
    %cst_64 = arith.constant 0.000000e+00 : f32
    %28 = vector.broadcast %cst_64 : f32 to vector<2x4x1x256xf32>
    %c0_65 = arith.constant 0 : index
    %c0_66 = arith.constant 0 : index
    %c0_67 = arith.constant 0 : index
    %c0_68 = arith.constant 0 : index
    %29 = vector.load %arg26[%c0_65, %c0_66, %c0_67, %c0_68] : memref<2x4x4x256xf32, #tpu.memory_space<vmem>>, vector<2x4x1x256xf32>
    tpu.vector_store %arg26[%c0_65, %c0_66, %c0_67, %c0_68], %28 {strides = array<i32>} : memref<2x4x4x256xf32, #tpu.memory_space<vmem>>, vector<2x4x1x256xf32>,
    %cst_69 = arith.constant 0.000000e+00 : f32
    %30 = vector.broadcast %cst_69 : f32 to vector<2x4x1x256xf32>
    %c0_70 = arith.constant 0 : index
    %c0_71 = arith.constant 0 : index
    %c3_72 = arith.constant 3 : index
    %c0_73 = arith.constant 0 : index
    %31 = vector.load %arg26[%c0_70, %c0_71, %c3_72, %c0_73] : memref<2x4x4x256xf32, #tpu.memory_space<vmem>>, vector<2x4x1x256xf32>
    tpu.vector_store %arg26[%c0_70, %c0_71, %c3_72, %c0_73], %30 {strides = array<i32>} : memref<2x4x4x256xf32, #tpu.memory_space<vmem>>, vector<2x4x1x256xf32>,
    %c0_74 = arith.constant 0 : index
    %c0_75 = arith.constant 0 : index
    %32 = vector.load %arg1[%c0_74, %c0_75] : memref<512x27xbf16, #tpu.memory_space<vmem>>, vector<512x27xbf16>
    %c0_76 = arith.constant 0 : index
    %c0_77 = arith.constant 0 : index
    %33 = vector.load %arg2[%c0_76, %c0_77] : memref<27x32xbf16, #tpu.memory_space<vmem>>, vector<27x32xbf16>
    %cst_78 = arith.constant dense<0.000000e+00> : vector<512x32xf32>
    %34 = tpu.matmul %32, %33, %cst_78 {dimension_numbers = #tpu.dot_dimension_numbers<[1], [0], [0], [1], [0, 0, 1, 1], [], []>} : vector<512x27xbf16>, vector<27x32xbf16>, vector<512x32xf32> -> vector<512x32xf32>
    %c0_79 = arith.constant 0 : index
    %c0_80 = arith.constant 0 : index
    %35 = vector.load %arg3[%c0_79, %c0_80] : memref<1x32xf32, #tpu.memory_space<vmem>>, vector<1x32xf32>
    %36 = vector.broadcast %35 : vector<1x32xf32> to vector<512x32xf32>
    %37 = arith.addf %34, %36 : vector<512x32xf32>
    %cst_81 = arith.constant 0.000000e+00 : f32
    %38 = vector.broadcast %cst_81 : f32 to vector<512x32xf32>
    %39 = arith.maximumf %37, %38 : vector<512x32xf32>
    %40 = vector.shape_cast %39 : vector<512x32xf32> to vector<2x16x16x32xf32>
    %c0_82 = arith.constant 0 : index
    %c1 = arith.constant 1 : index
    %c1_83 = arith.constant 1 : index
    %c0_84 = arith.constant 0 : index
    %41 = vector.load %arg23[%c0_82, %c1, %c1_83, %c0_84] : memref<2x18x18x32xf32, #tpu.memory_space<vmem>>, vector<2x16x16x32xf32>
    tpu.vector_store %arg23[%c0_82, %c1, %c1_83, %c0_84], %40 {strides = array<i32>} : memref<2x18x18x32xf32, #tpu.memory_space<vmem>>, vector<2x16x16x32xf32>,
    %c0_85 = arith.constant 0 : index
    %c0_86 = arith.constant 0 : index
    %c0_87 = arith.constant 0 : index
    %c0_88 = arith.constant 0 : index
    %42 = vector.load %arg23[%c0_85, %c0_86, %c0_87, %c0_88] : memref<2x18x18x32xf32, #tpu.memory_space<vmem>>, vector<2x16x16x32xf32>
    %c0_89 = arith.constant 0 : index
    %c0_90 = arith.constant 0 : index
    %43 = vector.load %arg4[%c0_89, %c0_90] : memref<9x32xf32, #tpu.memory_space<vmem>>, vector<1x32xf32>
    %44 = vector.shape_cast %43 : vector<1x32xf32> to vector<1x1x1x32xf32>
    %45 = vector.broadcast %44 : vector<1x1x1x32xf32> to vector<2x16x16x32xf32>
    %46 = arith.mulf %42, %45 : vector<2x16x16x32xf32>
    %c0_91 = arith.constant 0 : index
    %c0_92 = arith.constant 0 : index
    %c1_93 = arith.constant 1 : index
    %c0_94 = arith.constant 0 : index
    %47 = vector.load %arg23[%c0_91, %c0_92, %c1_93, %c0_94] : memref<2x18x18x32xf32, #tpu.memory_space<vmem>>, vector<2x16x16x32xf32>
    %c1_95 = arith.constant 1 : index
    %c0_96 = arith.constant 0 : index
    %48 = vector.load %arg4[%c1_95, %c0_96] : memref<9x32xf32, #tpu.memory_space<vmem>>, vector<1x32xf32>
    %49 = vector.shape_cast %48 : vector<1x32xf32> to vector<1x1x1x32xf32>
    %50 = vector.broadcast %49 : vector<1x1x1x32xf32> to vector<2x16x16x32xf32>
    %51 = arith.mulf %47, %50 : vector<2x16x16x32xf32>
    %52 = arith.addf %46, %51 : vector<2x16x16x32xf32>
    %c0_97 = arith.constant 0 : index
    %c0_98 = arith.constant 0 : index
    %c2 = arith.constant 2 : index
    %c0_99 = arith.constant 0 : index
    %53 = vector.load %arg23[%c0_97, %c0_98, %c2, %c0_99] : memref<2x18x18x32xf32, #tpu.memory_space<vmem>>, vector<2x16x16x32xf32>
    %c2_100 = arith.constant 2 : index
    %c0_101 = arith.constant 0 : index
    %54 = vector.load %arg4[%c2_100, %c0_101] : memref<9x32xf32, #tpu.memory_space<vmem>>, vector<1x32xf32>
    %55 = vector.shape_cast %54 : vector<1x32xf32> to vector<1x1x1x32xf32>
    %56 = vector.broadcast %55 : vector<1x1x1x32xf32> to vector<2x16x16x32xf32>
    %57 = arith.mulf %53, %56 : vector<2x16x16x32xf32>
    %58 = arith.addf %52, %57 : vector<2x16x16x32xf32>
    %c0_102 = arith.constant 0 : index
    %c1_103 = arith.constant 1 : index
    %c0_104 = arith.constant 0 : index
    %c0_105 = arith.constant 0 : index
    %59 = vector.load %arg23[%c0_102, %c1_103, %c0_104, %c0_105] : memref<2x18x18x32xf32, #tpu.memory_space<vmem>>, vector<2x16x16x32xf32>
    %c3_106 = arith.constant 3 : index
    %c0_107 = arith.constant 0 : index
    %60 = vector.load %arg4[%c3_106, %c0_107] : memref<9x32xf32, #tpu.memory_space<vmem>>, vector<1x32xf32>
    %61 = vector.shape_cast %60 : vector<1x32xf32> to vector<1x1x1x32xf32>
    %62 = vector.broadcast %61 : vector<1x1x1x32xf32> to vector<2x16x16x32xf32>
    %63 = arith.mulf %59, %62 : vector<2x16x16x32xf32>
    %64 = arith.addf %58, %63 : vector<2x16x16x32xf32>
    %c0_108 = arith.constant 0 : index
    %c1_109 = arith.constant 1 : index
    %c1_110 = arith.constant 1 : index
    %c0_111 = arith.constant 0 : index
    %65 = vector.load %arg23[%c0_108, %c1_109, %c1_110, %c0_111] : memref<2x18x18x32xf32, #tpu.memory_space<vmem>>, vector<2x16x16x32xf32>
    %c4 = arith.constant 4 : index
    %c0_112 = arith.constant 0 : index
    %66 = vector.load %arg4[%c4, %c0_112] : memref<9x32xf32, #tpu.memory_space<vmem>>, vector<1x32xf32>
    %67 = vector.shape_cast %66 : vector<1x32xf32> to vector<1x1x1x32xf32>
    %68 = vector.broadcast %67 : vector<1x1x1x32xf32> to vector<2x16x16x32xf32>
    %69 = arith.mulf %65, %68 : vector<2x16x16x32xf32>
    %70 = arith.addf %64, %69 : vector<2x16x16x32xf32>
    %c0_113 = arith.constant 0 : index
    %c1_114 = arith.constant 1 : index
    %c2_115 = arith.constant 2 : index
    %c0_116 = arith.constant 0 : index
    %71 = vector.load %arg23[%c0_113, %c1_114, %c2_115, %c0_116] : memref<2x18x18x32xf32, #tpu.memory_space<vmem>>, vector<2x16x16x32xf32>
    %c5_117 = arith.constant 5 : index
    %c0_118 = arith.constant 0 : index
    %72 = vector.load %arg4[%c5_117, %c0_118] : memref<9x32xf32, #tpu.memory_space<vmem>>, vector<1x32xf32>
    %73 = vector.shape_cast %72 : vector<1x32xf32> to vector<1x1x1x32xf32>
    %74 = vector.broadcast %73 : vector<1x1x1x32xf32> to vector<2x16x16x32xf32>
    %75 = arith.mulf %71, %74 : vector<2x16x16x32xf32>
    %76 = arith.addf %70, %75 : vector<2x16x16x32xf32>
    %c0_119 = arith.constant 0 : index
    %c2_120 = arith.constant 2 : index
    %c0_121 = arith.constant 0 : index
    %c0_122 = arith.constant 0 : index
    %77 = vector.load %arg23[%c0_119, %c2_120, %c0_121, %c0_122] : memref<2x18x18x32xf32, #tpu.memory_space<vmem>>, vector<2x16x16x32xf32>
    %c6 = arith.constant 6 : index
    %c0_123 = arith.constant 0 : index
    %78 = vector.load %arg4[%c6, %c0_123] : memref<9x32xf32, #tpu.memory_space<vmem>>, vector<1x32xf32>
    %79 = vector.shape_cast %78 : vector<1x32xf32> to vector<1x1x1x32xf32>
    %80 = vector.broadcast %79 : vector<1x1x1x32xf32> to vector<2x16x16x32xf32>
    %81 = arith.mulf %77, %80 : vector<2x16x16x32xf32>
    %82 = arith.addf %76, %81 : vector<2x16x16x32xf32>
    %c0_124 = arith.constant 0 : index
    %c2_125 = arith.constant 2 : index
    %c1_126 = arith.constant 1 : index
    %c0_127 = arith.constant 0 : index
    %83 = vector.load %arg23[%c0_124, %c2_125, %c1_126, %c0_127] : memref<2x18x18x32xf32, #tpu.memory_space<vmem>>, vector<2x16x16x32xf32>
    %c7 = arith.constant 7 : index
    %c0_128 = arith.constant 0 : index
    %84 = vector.load %arg4[%c7, %c0_128] : memref<9x32xf32, #tpu.memory_space<vmem>>, vector<1x32xf32>
    %85 = vector.shape_cast %84 : vector<1x32xf32> to vector<1x1x1x32xf32>
    %86 = vector.broadcast %85 : vector<1x1x1x32xf32> to vector<2x16x16x32xf32>
    %87 = arith.mulf %83, %86 : vector<2x16x16x32xf32>
    %88 = arith.addf %82, %87 : vector<2x16x16x32xf32>
    %c0_129 = arith.constant 0 : index
    %c2_130 = arith.constant 2 : index
    %c2_131 = arith.constant 2 : index
    %c0_132 = arith.constant 0 : index
    %89 = vector.load %arg23[%c0_129, %c2_130, %c2_131, %c0_132] : memref<2x18x18x32xf32, #tpu.memory_space<vmem>>, vector<2x16x16x32xf32>
    %c8 = arith.constant 8 : index
    %c0_133 = arith.constant 0 : index
    %90 = vector.load %arg4[%c8, %c0_133] : memref<9x32xf32, #tpu.memory_space<vmem>>, vector<1x32xf32>
    %91 = vector.shape_cast %90 : vector<1x32xf32> to vector<1x1x1x32xf32>
    %92 = vector.broadcast %91 : vector<1x1x1x32xf32> to vector<2x16x16x32xf32>
    %93 = arith.mulf %89, %92 : vector<2x16x16x32xf32>
    %94 = arith.addf %88, %93 : vector<2x16x16x32xf32>
    %c0_134 = arith.constant 0 : index
    %c0_135 = arith.constant 0 : index
    %95 = vector.load %arg5[%c0_134, %c0_135] : memref<1x32xf32, #tpu.memory_space<vmem>>, vector<1x32xf32>
    %96 = vector.shape_cast %95 : vector<1x32xf32> to vector<1x1x1x32xf32>
    %97 = vector.broadcast %96 : vector<1x1x1x32xf32> to vector<2x16x16x32xf32>
    %98 = arith.addf %94, %97 : vector<2x16x16x32xf32>
    %cst_136 = arith.constant 0.000000e+00 : f32
    %99 = vector.broadcast %cst_136 : f32 to vector<2x16x16x32xf32>
    %100 = arith.maximumf %98, %99 : vector<2x16x16x32xf32>
    %101 = vector.shape_cast %100 : vector<2x16x16x32xf32> to vector<512x32xf32>
    %102 = arith.truncf %101 : vector<512x32xf32> to vector<512x32xbf16>
    %c0_137 = arith.constant 0 : index
    %c0_138 = arith.constant 0 : index
    %103 = vector.load %arg6[%c0_137, %c0_138] : memref<32x64xbf16, #tpu.memory_space<vmem>>, vector<32x64xbf16>
    %cst_139 = arith.constant dense<0.000000e+00> : vector<512x64xf32>
    %104 = tpu.matmul %102, %103, %cst_139 {dimension_numbers = #tpu.dot_dimension_numbers<[1], [0], [0], [1], [0, 0, 1, 1], [], []>} : vector<512x32xbf16>, vector<32x64xbf16>, vector<512x64xf32> -> vector<512x64xf32>
    %c0_140 = arith.constant 0 : index
    %c0_141 = arith.constant 0 : index
    %105 = vector.load %arg7[%c0_140, %c0_141] : memref<1x64xf32, #tpu.memory_space<vmem>>, vector<1x64xf32>
    %106 = vector.broadcast %105 : vector<1x64xf32> to vector<512x64xf32>
    %107 = arith.addf %104, %106 : vector<512x64xf32>
    %cst_142 = arith.constant 0.000000e+00 : f32
    %108 = vector.broadcast %cst_142 : f32 to vector<512x64xf32>
    %109 = arith.maximumf %107, %108 : vector<512x64xf32>
    %110 = vector.shape_cast %109 : vector<512x64xf32> to vector<16x32x64xf32>
    %111 = vector.extract_strided_slice %110 {offsets = [0, 0, 0], sizes = [16, 16, 64], strides = [1, 1, 1]} : vector<16x32x64xf32> to vector<16x16x64xf32>
    %112 = vector.extract_strided_slice %110 {offsets = [0, 16, 0], sizes = [16, 16, 64], strides = [1, 1, 1]} : vector<16x32x64xf32> to vector<16x16x64xf32>
    %113 = arith.maximumf %111, %112 : vector<16x16x64xf32>
    %114 = vector.extract_strided_slice %113 {offsets = [0, 0, 0], sizes = [16, 1, 64], strides = [1, 1, 1]} : vector<16x16x64xf32> to vector<16x1x64xf32>
    %115 = vector.extract_strided_slice %113 {offsets = [0, 1, 0], sizes = [16, 1, 64], strides = [1, 1, 1]} : vector<16x16x64xf32> to vector<16x1x64xf32>
    %116 = arith.maximumf %114, %115 : vector<16x1x64xf32>
    %117 = vector.shape_cast %116 : vector<16x1x64xf32> to vector<2x8x1x64xf32>
    %c0_143 = arith.constant 0 : index
    %c1_144 = arith.constant 1 : index
    %c1_145 = arith.constant 1 : index
    %c0_146 = arith.constant 0 : index
    %118 = vector.load %arg24[%c0_143, %c1_144, %c1_145, %c0_146] : memref<2x10x10x64xf32, #tpu.memory_space<vmem>>, vector<2x8x1x64xf32>
    tpu.vector_store %arg24[%c0_143, %c1_144, %c1_145, %c0_146], %117 {strides = array<i32>} : memref<2x10x10x64xf32, #tpu.memory_space<vmem>>, vector<2x8x1x64xf32>,
    %119 = vector.extract_strided_slice %113 {offsets = [0, 2, 0], sizes = [16, 1, 64], strides = [1, 1, 1]} : vector<16x16x64xf32> to vector<16x1x64xf32>
    %120 = vector.extract_strided_slice %113 {offsets = [0, 3, 0], sizes = [16, 1, 64], strides = [1, 1, 1]} : vector<16x16x64xf32> to vector<16x1x64xf32>
    %121 = arith.maximumf %119, %120 : vector<16x1x64xf32>
    %122 = vector.shape_cast %121 : vector<16x1x64xf32> to vector<2x8x1x64xf32>
    %c0_147 = arith.constant 0 : index
    %c1_148 = arith.constant 1 : index
    %c2_149 = arith.constant 2 : index
    %c0_150 = arith.constant 0 : index
    %123 = vector.load %arg24[%c0_147, %c1_148, %c2_149, %c0_150] : memref<2x10x10x64xf32, #tpu.memory_space<vmem>>, vector<2x8x1x64xf32>
    tpu.vector_store %arg24[%c0_147, %c1_148, %c2_149, %c0_150], %122 {strides = array<i32>} : memref<2x10x10x64xf32, #tpu.memory_space<vmem>>, vector<2x8x1x64xf32>,
    %124 = vector.extract_strided_slice %113 {offsets = [0, 4, 0], sizes = [16, 1, 64], strides = [1, 1, 1]} : vector<16x16x64xf32> to vector<16x1x64xf32>
    %125 = vector.extract_strided_slice %113 {offsets = [0, 5, 0], sizes = [16, 1, 64], strides = [1, 1, 1]} : vector<16x16x64xf32> to vector<16x1x64xf32>
    %126 = arith.maximumf %124, %125 : vector<16x1x64xf32>
    %127 = vector.shape_cast %126 : vector<16x1x64xf32> to vector<2x8x1x64xf32>
    %c0_151 = arith.constant 0 : index
    %c1_152 = arith.constant 1 : index
    %c3_153 = arith.constant 3 : index
    %c0_154 = arith.constant 0 : index
    %128 = vector.load %arg24[%c0_151, %c1_152, %c3_153, %c0_154] : memref<2x10x10x64xf32, #tpu.memory_space<vmem>>, vector<2x8x1x64xf32>
    tpu.vector_store %arg24[%c0_151, %c1_152, %c3_153, %c0_154], %127 {strides = array<i32>} : memref<2x10x10x64xf32, #tpu.memory_space<vmem>>, vector<2x8x1x64xf32>,
    %129 = vector.extract_strided_slice %113 {offsets = [0, 6, 0], sizes = [16, 1, 64], strides = [1, 1, 1]} : vector<16x16x64xf32> to vector<16x1x64xf32>
    %130 = vector.extract_strided_slice %113 {offsets = [0, 7, 0], sizes = [16, 1, 64], strides = [1, 1, 1]} : vector<16x16x64xf32> to vector<16x1x64xf32>
    %131 = arith.maximumf %129, %130 : vector<16x1x64xf32>
    %132 = vector.shape_cast %131 : vector<16x1x64xf32> to vector<2x8x1x64xf32>
    %c0_155 = arith.constant 0 : index
    %c1_156 = arith.constant 1 : index
    %c4_157 = arith.constant 4 : index
    %c0_158 = arith.constant 0 : index
    %133 = vector.load %arg24[%c0_155, %c1_156, %c4_157, %c0_158] : memref<2x10x10x64xf32, #tpu.memory_space<vmem>>, vector<2x8x1x64xf32>
    tpu.vector_store %arg24[%c0_155, %c1_156, %c4_157, %c0_158], %132 {strides = array<i32>} : memref<2x10x10x64xf32, #tpu.memory_space<vmem>>, vector<2x8x1x64xf32>,
    %134 = vector.extract_strided_slice %113 {offsets = [0, 8, 0], sizes = [16, 1, 64], strides = [1, 1, 1]} : vector<16x16x64xf32> to vector<16x1x64xf32>
    %135 = vector.extract_strided_slice %113 {offsets = [0, 9, 0], sizes = [16, 1, 64], strides = [1, 1, 1]} : vector<16x16x64xf32> to vector<16x1x64xf32>
    %136 = arith.maximumf %134, %135 : vector<16x1x64xf32>
    %137 = vector.shape_cast %136 : vector<16x1x64xf32> to vector<2x8x1x64xf32>
    %c0_159 = arith.constant 0 : index
    %c1_160 = arith.constant 1 : index
    %c5_161 = arith.constant 5 : index
    %c0_162 = arith.constant 0 : index
    %138 = vector.load %arg24[%c0_159, %c1_160, %c5_161, %c0_162] : memref<2x10x10x64xf32, #tpu.memory_space<vmem>>, vector<2x8x1x64xf32>
    tpu.vector_store %arg24[%c0_159, %c1_160, %c5_161, %c0_162], %137 {strides = array<i32>} : memref<2x10x10x64xf32, #tpu.memory_space<vmem>>, vector<2x8x1x64xf32>,
    %139 = vector.extract_strided_slice %113 {offsets = [0, 10, 0], sizes = [16, 1, 64], strides = [1, 1, 1]} : vector<16x16x64xf32> to vector<16x1x64xf32>
    %140 = vector.extract_strided_slice %113 {offsets = [0, 11, 0], sizes = [16, 1, 64], strides = [1, 1, 1]} : vector<16x16x64xf32> to vector<16x1x64xf32>
    %141 = arith.maximumf %139, %140 : vector<16x1x64xf32>
    %142 = vector.shape_cast %141 : vector<16x1x64xf32> to vector<2x8x1x64xf32>
    %c0_163 = arith.constant 0 : index
    %c1_164 = arith.constant 1 : index
    %c6_165 = arith.constant 6 : index
    %c0_166 = arith.constant 0 : index
    %143 = vector.load %arg24[%c0_163, %c1_164, %c6_165, %c0_166] : memref<2x10x10x64xf32, #tpu.memory_space<vmem>>, vector<2x8x1x64xf32>
    tpu.vector_store %arg24[%c0_163, %c1_164, %c6_165, %c0_166], %142 {strides = array<i32>} : memref<2x10x10x64xf32, #tpu.memory_space<vmem>>, vector<2x8x1x64xf32>,
    %144 = vector.extract_strided_slice %113 {offsets = [0, 12, 0], sizes = [16, 1, 64], strides = [1, 1, 1]} : vector<16x16x64xf32> to vector<16x1x64xf32>
    %145 = vector.extract_strided_slice %113 {offsets = [0, 13, 0], sizes = [16, 1, 64], strides = [1, 1, 1]} : vector<16x16x64xf32> to vector<16x1x64xf32>
    %146 = arith.maximumf %144, %145 : vector<16x1x64xf32>
    %147 = vector.shape_cast %146 : vector<16x1x64xf32> to vector<2x8x1x64xf32>
    %c0_167 = arith.constant 0 : index
    %c1_168 = arith.constant 1 : index
    %c7_169 = arith.constant 7 : index
    %c0_170 = arith.constant 0 : index
    %148 = vector.load %arg24[%c0_167, %c1_168, %c7_169, %c0_170] : memref<2x10x10x64xf32, #tpu.memory_space<vmem>>, vector<2x8x1x64xf32>
    tpu.vector_store %arg24[%c0_167, %c1_168, %c7_169, %c0_170], %147 {strides = array<i32>} : memref<2x10x10x64xf32, #tpu.memory_space<vmem>>, vector<2x8x1x64xf32>,
    %149 = vector.extract_strided_slice %113 {offsets = [0, 14, 0], sizes = [16, 1, 64], strides = [1, 1, 1]} : vector<16x16x64xf32> to vector<16x1x64xf32>
    %150 = vector.extract_strided_slice %113 {offsets = [0, 15, 0], sizes = [16, 1, 64], strides = [1, 1, 1]} : vector<16x16x64xf32> to vector<16x1x64xf32>
    %151 = arith.maximumf %149, %150 : vector<16x1x64xf32>
    %152 = vector.shape_cast %151 : vector<16x1x64xf32> to vector<2x8x1x64xf32>
    %c0_171 = arith.constant 0 : index
    %c1_172 = arith.constant 1 : index
    %c8_173 = arith.constant 8 : index
    %c0_174 = arith.constant 0 : index
    %153 = vector.load %arg24[%c0_171, %c1_172, %c8_173, %c0_174] : memref<2x10x10x64xf32, #tpu.memory_space<vmem>>, vector<2x8x1x64xf32>
    tpu.vector_store %arg24[%c0_171, %c1_172, %c8_173, %c0_174], %152 {strides = array<i32>} : memref<2x10x10x64xf32, #tpu.memory_space<vmem>>, vector<2x8x1x64xf32>,
    %c0_175 = arith.constant 0 : index
    %c0_176 = arith.constant 0 : index
    %c0_177 = arith.constant 0 : index
    %c0_178 = arith.constant 0 : index
    %154 = vector.load %arg24[%c0_175, %c0_176, %c0_177, %c0_178] : memref<2x10x10x64xf32, #tpu.memory_space<vmem>>, vector<2x8x8x64xf32>
    %c0_179 = arith.constant 0 : index
    %c0_180 = arith.constant 0 : index
    %155 = vector.load %arg8[%c0_179, %c0_180] : memref<9x64xf32, #tpu.memory_space<vmem>>, vector<1x64xf32>
    %156 = vector.shape_cast %155 : vector<1x64xf32> to vector<1x1x1x64xf32>
    %157 = vector.broadcast %156 : vector<1x1x1x64xf32> to vector<2x8x8x64xf32>
    %158 = arith.mulf %154, %157 : vector<2x8x8x64xf32>
    %c0_181 = arith.constant 0 : index
    %c0_182 = arith.constant 0 : index
    %c1_183 = arith.constant 1 : index
    %c0_184 = arith.constant 0 : index
    %159 = vector.load %arg24[%c0_181, %c0_182, %c1_183, %c0_184] : memref<2x10x10x64xf32, #tpu.memory_space<vmem>>, vector<2x8x8x64xf32>
    %c1_185 = arith.constant 1 : index
    %c0_186 = arith.constant 0 : index
    %160 = vector.load %arg8[%c1_185, %c0_186] : memref<9x64xf32, #tpu.memory_space<vmem>>, vector<1x64xf32>
    %161 = vector.shape_cast %160 : vector<1x64xf32> to vector<1x1x1x64xf32>
    %162 = vector.broadcast %161 : vector<1x1x1x64xf32> to vector<2x8x8x64xf32>
    %163 = arith.mulf %159, %162 : vector<2x8x8x64xf32>
    %164 = arith.addf %158, %163 : vector<2x8x8x64xf32>
    %c0_187 = arith.constant 0 : index
    %c0_188 = arith.constant 0 : index
    %c2_189 = arith.constant 2 : index
    %c0_190 = arith.constant 0 : index
    %165 = vector.load %arg24[%c0_187, %c0_188, %c2_189, %c0_190] : memref<2x10x10x64xf32, #tpu.memory_space<vmem>>, vector<2x8x8x64xf32>
    %c2_191 = arith.constant 2 : index
    %c0_192 = arith.constant 0 : index
    %166 = vector.load %arg8[%c2_191, %c0_192] : memref<9x64xf32, #tpu.memory_space<vmem>>, vector<1x64xf32>
    %167 = vector.shape_cast %166 : vector<1x64xf32> to vector<1x1x1x64xf32>
    %168 = vector.broadcast %167 : vector<1x1x1x64xf32> to vector<2x8x8x64xf32>
    %169 = arith.mulf %165, %168 : vector<2x8x8x64xf32>
    %170 = arith.addf %164, %169 : vector<2x8x8x64xf32>
    %c0_193 = arith.constant 0 : index
    %c1_194 = arith.constant 1 : index
    %c0_195 = arith.constant 0 : index
    %c0_196 = arith.constant 0 : index
    %171 = vector.load %arg24[%c0_193, %c1_194, %c0_195, %c0_196] : memref<2x10x10x64xf32, #tpu.memory_space<vmem>>, vector<2x8x8x64xf32>
    %c3_197 = arith.constant 3 : index
    %c0_198 = arith.constant 0 : index
    %172 = vector.load %arg8[%c3_197, %c0_198] : memref<9x64xf32, #tpu.memory_space<vmem>>, vector<1x64xf32>
    %173 = vector.shape_cast %172 : vector<1x64xf32> to vector<1x1x1x64xf32>
    %174 = vector.broadcast %173 : vector<1x1x1x64xf32> to vector<2x8x8x64xf32>
    %175 = arith.mulf %171, %174 : vector<2x8x8x64xf32>
    %176 = arith.addf %170, %175 : vector<2x8x8x64xf32>
    %c0_199 = arith.constant 0 : index
    %c1_200 = arith.constant 1 : index
    %c1_201 = arith.constant 1 : index
    %c0_202 = arith.constant 0 : index
    %177 = vector.load %arg24[%c0_199, %c1_200, %c1_201, %c0_202] : memref<2x10x10x64xf32, #tpu.memory_space<vmem>>, vector<2x8x8x64xf32>
    %c4_203 = arith.constant 4 : index
    %c0_204 = arith.constant 0 : index
    %178 = vector.load %arg8[%c4_203, %c0_204] : memref<9x64xf32, #tpu.memory_space<vmem>>, vector<1x64xf32>
    %179 = vector.shape_cast %178 : vector<1x64xf32> to vector<1x1x1x64xf32>
    %180 = vector.broadcast %179 : vector<1x1x1x64xf32> to vector<2x8x8x64xf32>
    %181 = arith.mulf %177, %180 : vector<2x8x8x64xf32>
    %182 = arith.addf %176, %181 : vector<2x8x8x64xf32>
    %c0_205 = arith.constant 0 : index
    %c1_206 = arith.constant 1 : index
    %c2_207 = arith.constant 2 : index
    %c0_208 = arith.constant 0 : index
    %183 = vector.load %arg24[%c0_205, %c1_206, %c2_207, %c0_208] : memref<2x10x10x64xf32, #tpu.memory_space<vmem>>, vector<2x8x8x64xf32>
    %c5_209 = arith.constant 5 : index
    %c0_210 = arith.constant 0 : index
    %184 = vector.load %arg8[%c5_209, %c0_210] : memref<9x64xf32, #tpu.memory_space<vmem>>, vector<1x64xf32>
    %185 = vector.shape_cast %184 : vector<1x64xf32> to vector<1x1x1x64xf32>
    %186 = vector.broadcast %185 : vector<1x1x1x64xf32> to vector<2x8x8x64xf32>
    %187 = arith.mulf %183, %186 : vector<2x8x8x64xf32>
    %188 = arith.addf %182, %187 : vector<2x8x8x64xf32>
    %c0_211 = arith.constant 0 : index
    %c2_212 = arith.constant 2 : index
    %c0_213 = arith.constant 0 : index
    %c0_214 = arith.constant 0 : index
    %189 = vector.load %arg24[%c0_211, %c2_212, %c0_213, %c0_214] : memref<2x10x10x64xf32, #tpu.memory_space<vmem>>, vector<2x8x8x64xf32>
    %c6_215 = arith.constant 6 : index
    %c0_216 = arith.constant 0 : index
    %190 = vector.load %arg8[%c6_215, %c0_216] : memref<9x64xf32, #tpu.memory_space<vmem>>, vector<1x64xf32>
    %191 = vector.shape_cast %190 : vector<1x64xf32> to vector<1x1x1x64xf32>
    %192 = vector.broadcast %191 : vector<1x1x1x64xf32> to vector<2x8x8x64xf32>
    %193 = arith.mulf %189, %192 : vector<2x8x8x64xf32>
    %194 = arith.addf %188, %193 : vector<2x8x8x64xf32>
    %c0_217 = arith.constant 0 : index
    %c2_218 = arith.constant 2 : index
    %c1_219 = arith.constant 1 : index
    %c0_220 = arith.constant 0 : index
    %195 = vector.load %arg24[%c0_217, %c2_218, %c1_219, %c0_220] : memref<2x10x10x64xf32, #tpu.memory_space<vmem>>, vector<2x8x8x64xf32>
    %c7_221 = arith.constant 7 : index
    %c0_222 = arith.constant 0 : index
    %196 = vector.load %arg8[%c7_221, %c0_222] : memref<9x64xf32, #tpu.memory_space<vmem>>, vector<1x64xf32>
    %197 = vector.shape_cast %196 : vector<1x64xf32> to vector<1x1x1x64xf32>
    %198 = vector.broadcast %197 : vector<1x1x1x64xf32> to vector<2x8x8x64xf32>
    %199 = arith.mulf %195, %198 : vector<2x8x8x64xf32>
    %200 = arith.addf %194, %199 : vector<2x8x8x64xf32>
    %c0_223 = arith.constant 0 : index
    %c2_224 = arith.constant 2 : index
    %c2_225 = arith.constant 2 : index
    %c0_226 = arith.constant 0 : index
    %201 = vector.load %arg24[%c0_223, %c2_224, %c2_225, %c0_226] : memref<2x10x10x64xf32, #tpu.memory_space<vmem>>, vector<2x8x8x64xf32>
    %c8_227 = arith.constant 8 : index
    %c0_228 = arith.constant 0 : index
    %202 = vector.load %arg8[%c8_227, %c0_228] : memref<9x64xf32, #tpu.memory_space<vmem>>, vector<1x64xf32>
    %203 = vector.shape_cast %202 : vector<1x64xf32> to vector<1x1x1x64xf32>
    %204 = vector.broadcast %203 : vector<1x1x1x64xf32> to vector<2x8x8x64xf32>
    %205 = arith.mulf %201, %204 : vector<2x8x8x64xf32>
    %206 = arith.addf %200, %205 : vector<2x8x8x64xf32>
    %c0_229 = arith.constant 0 : index
    %c0_230 = arith.constant 0 : index
    %207 = vector.load %arg9[%c0_229, %c0_230] : memref<1x64xf32, #tpu.memory_space<vmem>>, vector<1x64xf32>
    %208 = vector.shape_cast %207 : vector<1x64xf32> to vector<1x1x1x64xf32>
    %209 = vector.broadcast %208 : vector<1x1x1x64xf32> to vector<2x8x8x64xf32>
    %210 = arith.addf %206, %209 : vector<2x8x8x64xf32>
    %cst_231 = arith.constant 0.000000e+00 : f32
    %211 = vector.broadcast %cst_231 : f32 to vector<2x8x8x64xf32>
    %212 = arith.maximumf %210, %211 : vector<2x8x8x64xf32>
    %213 = vector.shape_cast %212 : vector<2x8x8x64xf32> to vector<128x64xf32>
    %214 = arith.truncf %213 : vector<128x64xf32> to vector<128x64xbf16>
    %c0_232 = arith.constant 0 : index
    %c0_233 = arith.constant 0 : index
    %215 = vector.load %arg10[%c0_232, %c0_233] : memref<64x128xbf16, #tpu.memory_space<vmem>>, vector<64x128xbf16>
    %cst_234 = arith.constant dense<0.000000e+00> : vector<128x128xf32>
    %216 = tpu.matmul %214, %215, %cst_234 {dimension_numbers = #tpu.dot_dimension_numbers<[1], [0], [0], [1], [0, 0, 1, 1], [], []>} : vector<128x64xbf16>, vector<64x128xbf16>, vector<128x128xf32> -> vector<128x128xf32>
    %c0_235 = arith.constant 0 : index
    %c0_236 = arith.constant 0 : index
    %217 = vector.load %arg11[%c0_235, %c0_236] : memref<1x128xf32, #tpu.memory_space<vmem>>, vector<1x128xf32>
    %218 = vector.broadcast %217 : vector<1x128xf32> to vector<128x128xf32>
    %219 = arith.addf %216, %218 : vector<128x128xf32>
    %cst_237 = arith.constant 0.000000e+00 : f32
    %220 = vector.broadcast %cst_237 : f32 to vector<128x128xf32>
    %221 = arith.maximumf %219, %220 : vector<128x128xf32>
    %222 = vector.shape_cast %221 : vector<128x128xf32> to vector<8x16x128xf32>
    %223 = vector.extract_strided_slice %222 {offsets = [0, 0, 0], sizes = [8, 8, 128], strides = [1, 1, 1]} : vector<8x16x128xf32> to vector<8x8x128xf32>
    %224 = vector.extract_strided_slice %222 {offsets = [0, 8, 0], sizes = [8, 8, 128], strides = [1, 1, 1]} : vector<8x16x128xf32> to vector<8x8x128xf32>
    %225 = arith.maximumf %223, %224 : vector<8x8x128xf32>
    %226 = vector.extract_strided_slice %225 {offsets = [0, 0, 0], sizes = [8, 1, 128], strides = [1, 1, 1]} : vector<8x8x128xf32> to vector<8x1x128xf32>
    %227 = vector.extract_strided_slice %225 {offsets = [0, 1, 0], sizes = [8, 1, 128], strides = [1, 1, 1]} : vector<8x8x128xf32> to vector<8x1x128xf32>
    %228 = arith.maximumf %226, %227 : vector<8x1x128xf32>
    %229 = vector.shape_cast %228 : vector<8x1x128xf32> to vector<2x4x1x128xf32>
    %c0_238 = arith.constant 0 : index
    %c1_239 = arith.constant 1 : index
    %c1_240 = arith.constant 1 : index
    %c0_241 = arith.constant 0 : index
    %230 = vector.load %arg25[%c0_238, %c1_239, %c1_240, %c0_241] : memref<2x6x6x128xf32, #tpu.memory_space<vmem>>, vector<2x4x1x128xf32>
    tpu.vector_store %arg25[%c0_238, %c1_239, %c1_240, %c0_241], %229 {strides = array<i32>} : memref<2x6x6x128xf32, #tpu.memory_space<vmem>>, vector<2x4x1x128xf32>,
    %231 = vector.extract_strided_slice %225 {offsets = [0, 2, 0], sizes = [8, 1, 128], strides = [1, 1, 1]} : vector<8x8x128xf32> to vector<8x1x128xf32>
    %232 = vector.extract_strided_slice %225 {offsets = [0, 3, 0], sizes = [8, 1, 128], strides = [1, 1, 1]} : vector<8x8x128xf32> to vector<8x1x128xf32>
    %233 = arith.maximumf %231, %232 : vector<8x1x128xf32>
    %234 = vector.shape_cast %233 : vector<8x1x128xf32> to vector<2x4x1x128xf32>
    %c0_242 = arith.constant 0 : index
    %c1_243 = arith.constant 1 : index
    %c2_244 = arith.constant 2 : index
    %c0_245 = arith.constant 0 : index
    %235 = vector.load %arg25[%c0_242, %c1_243, %c2_244, %c0_245] : memref<2x6x6x128xf32, #tpu.memory_space<vmem>>, vector<2x4x1x128xf32>
    tpu.vector_store %arg25[%c0_242, %c1_243, %c2_244, %c0_245], %234 {strides = array<i32>} : memref<2x6x6x128xf32, #tpu.memory_space<vmem>>, vector<2x4x1x128xf32>,
    %236 = vector.extract_strided_slice %225 {offsets = [0, 4, 0], sizes = [8, 1, 128], strides = [1, 1, 1]} : vector<8x8x128xf32> to vector<8x1x128xf32>
    %237 = vector.extract_strided_slice %225 {offsets = [0, 5, 0], sizes = [8, 1, 128], strides = [1, 1, 1]} : vector<8x8x128xf32> to vector<8x1x128xf32>
    %238 = arith.maximumf %236, %237 : vector<8x1x128xf32>
    %239 = vector.shape_cast %238 : vector<8x1x128xf32> to vector<2x4x1x128xf32>
    %c0_246 = arith.constant 0 : index
    %c1_247 = arith.constant 1 : index
    %c3_248 = arith.constant 3 : index
    %c0_249 = arith.constant 0 : index
    %240 = vector.load %arg25[%c0_246, %c1_247, %c3_248, %c0_249] : memref<2x6x6x128xf32, #tpu.memory_space<vmem>>, vector<2x4x1x128xf32>
    tpu.vector_store %arg25[%c0_246, %c1_247, %c3_248, %c0_249], %239 {strides = array<i32>} : memref<2x6x6x128xf32, #tpu.memory_space<vmem>>, vector<2x4x1x128xf32>,
    %241 = vector.extract_strided_slice %225 {offsets = [0, 6, 0], sizes = [8, 1, 128], strides = [1, 1, 1]} : vector<8x8x128xf32> to vector<8x1x128xf32>
    %242 = vector.extract_strided_slice %225 {offsets = [0, 7, 0], sizes = [8, 1, 128], strides = [1, 1, 1]} : vector<8x8x128xf32> to vector<8x1x128xf32>
    %243 = arith.maximumf %241, %242 : vector<8x1x128xf32>
    %244 = vector.shape_cast %243 : vector<8x1x128xf32> to vector<2x4x1x128xf32>
    %c0_250 = arith.constant 0 : index
    %c1_251 = arith.constant 1 : index
    %c4_252 = arith.constant 4 : index
    %c0_253 = arith.constant 0 : index
    %245 = vector.load %arg25[%c0_250, %c1_251, %c4_252, %c0_253] : memref<2x6x6x128xf32, #tpu.memory_space<vmem>>, vector<2x4x1x128xf32>
    tpu.vector_store %arg25[%c0_250, %c1_251, %c4_252, %c0_253], %244 {strides = array<i32>} : memref<2x6x6x128xf32, #tpu.memory_space<vmem>>, vector<2x4x1x128xf32>,
    %c0_254 = arith.constant 0 : index
    %c0_255 = arith.constant 0 : index
    %c0_256 = arith.constant 0 : index
    %c0_257 = arith.constant 0 : index
    %246 = vector.load %arg25[%c0_254, %c0_255, %c0_256, %c0_257] : memref<2x6x6x128xf32, #tpu.memory_space<vmem>>, vector<2x4x4x128xf32>
    %c0_258 = arith.constant 0 : index
    %c0_259 = arith.constant 0 : index
    %247 = vector.load %arg12[%c0_258, %c0_259] : memref<9x128xf32, #tpu.memory_space<vmem>>, vector<1x128xf32>
    %248 = vector.shape_cast %247 : vector<1x128xf32> to vector<1x1x1x128xf32>
    %249 = vector.broadcast %248 : vector<1x1x1x128xf32> to vector<2x4x4x128xf32>
    %250 = arith.mulf %246, %249 : vector<2x4x4x128xf32>
    %c0_260 = arith.constant 0 : index
    %c0_261 = arith.constant 0 : index
    %c1_262 = arith.constant 1 : index
    %c0_263 = arith.constant 0 : index
    %251 = vector.load %arg25[%c0_260, %c0_261, %c1_262, %c0_263] : memref<2x6x6x128xf32, #tpu.memory_space<vmem>>, vector<2x4x4x128xf32>
    %c1_264 = arith.constant 1 : index
    %c0_265 = arith.constant 0 : index
    %252 = vector.load %arg12[%c1_264, %c0_265] : memref<9x128xf32, #tpu.memory_space<vmem>>, vector<1x128xf32>
    %253 = vector.shape_cast %252 : vector<1x128xf32> to vector<1x1x1x128xf32>
    %254 = vector.broadcast %253 : vector<1x1x1x128xf32> to vector<2x4x4x128xf32>
    %255 = arith.mulf %251, %254 : vector<2x4x4x128xf32>
    %256 = arith.addf %250, %255 : vector<2x4x4x128xf32>
    %c0_266 = arith.constant 0 : index
    %c0_267 = arith.constant 0 : index
    %c2_268 = arith.constant 2 : index
    %c0_269 = arith.constant 0 : index
    %257 = vector.load %arg25[%c0_266, %c0_267, %c2_268, %c0_269] : memref<2x6x6x128xf32, #tpu.memory_space<vmem>>, vector<2x4x4x128xf32>
    %c2_270 = arith.constant 2 : index
    %c0_271 = arith.constant 0 : index
    %258 = vector.load %arg12[%c2_270, %c0_271] : memref<9x128xf32, #tpu.memory_space<vmem>>, vector<1x128xf32>
    %259 = vector.shape_cast %258 : vector<1x128xf32> to vector<1x1x1x128xf32>
    %260 = vector.broadcast %259 : vector<1x1x1x128xf32> to vector<2x4x4x128xf32>
    %261 = arith.mulf %257, %260 : vector<2x4x4x128xf32>
    %262 = arith.addf %256, %261 : vector<2x4x4x128xf32>
    %c0_272 = arith.constant 0 : index
    %c1_273 = arith.constant 1 : index
    %c0_274 = arith.constant 0 : index
    %c0_275 = arith.constant 0 : index
    %263 = vector.load %arg25[%c0_272, %c1_273, %c0_274, %c0_275] : memref<2x6x6x128xf32, #tpu.memory_space<vmem>>, vector<2x4x4x128xf32>
    %c3_276 = arith.constant 3 : index
    %c0_277 = arith.constant 0 : index
    %264 = vector.load %arg12[%c3_276, %c0_277] : memref<9x128xf32, #tpu.memory_space<vmem>>, vector<1x128xf32>
    %265 = vector.shape_cast %264 : vector<1x128xf32> to vector<1x1x1x128xf32>
    %266 = vector.broadcast %265 : vector<1x1x1x128xf32> to vector<2x4x4x128xf32>
    %267 = arith.mulf %263, %266 : vector<2x4x4x128xf32>
    %268 = arith.addf %262, %267 : vector<2x4x4x128xf32>
    %c0_278 = arith.constant 0 : index
    %c1_279 = arith.constant 1 : index
    %c1_280 = arith.constant 1 : index
    %c0_281 = arith.constant 0 : index
    %269 = vector.load %arg25[%c0_278, %c1_279, %c1_280, %c0_281] : memref<2x6x6x128xf32, #tpu.memory_space<vmem>>, vector<2x4x4x128xf32>
    %c4_282 = arith.constant 4 : index
    %c0_283 = arith.constant 0 : index
    %270 = vector.load %arg12[%c4_282, %c0_283] : memref<9x128xf32, #tpu.memory_space<vmem>>, vector<1x128xf32>
    %271 = vector.shape_cast %270 : vector<1x128xf32> to vector<1x1x1x128xf32>
    %272 = vector.broadcast %271 : vector<1x1x1x128xf32> to vector<2x4x4x128xf32>
    %273 = arith.mulf %269, %272 : vector<2x4x4x128xf32>
    %274 = arith.addf %268, %273 : vector<2x4x4x128xf32>
    %c0_284 = arith.constant 0 : index
    %c1_285 = arith.constant 1 : index
    %c2_286 = arith.constant 2 : index
    %c0_287 = arith.constant 0 : index
    %275 = vector.load %arg25[%c0_284, %c1_285, %c2_286, %c0_287] : memref<2x6x6x128xf32, #tpu.memory_space<vmem>>, vector<2x4x4x128xf32>
    %c5_288 = arith.constant 5 : index
    %c0_289 = arith.constant 0 : index
    %276 = vector.load %arg12[%c5_288, %c0_289] : memref<9x128xf32, #tpu.memory_space<vmem>>, vector<1x128xf32>
    %277 = vector.shape_cast %276 : vector<1x128xf32> to vector<1x1x1x128xf32>
    %278 = vector.broadcast %277 : vector<1x1x1x128xf32> to vector<2x4x4x128xf32>
    %279 = arith.mulf %275, %278 : vector<2x4x4x128xf32>
    %280 = arith.addf %274, %279 : vector<2x4x4x128xf32>
    %c0_290 = arith.constant 0 : index
    %c2_291 = arith.constant 2 : index
    %c0_292 = arith.constant 0 : index
    %c0_293 = arith.constant 0 : index
    %281 = vector.load %arg25[%c0_290, %c2_291, %c0_292, %c0_293] : memref<2x6x6x128xf32, #tpu.memory_space<vmem>>, vector<2x4x4x128xf32>
    %c6_294 = arith.constant 6 : index
    %c0_295 = arith.constant 0 : index
    %282 = vector.load %arg12[%c6_294, %c0_295] : memref<9x128xf32, #tpu.memory_space<vmem>>, vector<1x128xf32>
    %283 = vector.shape_cast %282 : vector<1x128xf32> to vector<1x1x1x128xf32>
    %284 = vector.broadcast %283 : vector<1x1x1x128xf32> to vector<2x4x4x128xf32>
    %285 = arith.mulf %281, %284 : vector<2x4x4x128xf32>
    %286 = arith.addf %280, %285 : vector<2x4x4x128xf32>
    %c0_296 = arith.constant 0 : index
    %c2_297 = arith.constant 2 : index
    %c1_298 = arith.constant 1 : index
    %c0_299 = arith.constant 0 : index
    %287 = vector.load %arg25[%c0_296, %c2_297, %c1_298, %c0_299] : memref<2x6x6x128xf32, #tpu.memory_space<vmem>>, vector<2x4x4x128xf32>
    %c7_300 = arith.constant 7 : index
    %c0_301 = arith.constant 0 : index
    %288 = vector.load %arg12[%c7_300, %c0_301] : memref<9x128xf32, #tpu.memory_space<vmem>>, vector<1x128xf32>
    %289 = vector.shape_cast %288 : vector<1x128xf32> to vector<1x1x1x128xf32>
    %290 = vector.broadcast %289 : vector<1x1x1x128xf32> to vector<2x4x4x128xf32>
    %291 = arith.mulf %287, %290 : vector<2x4x4x128xf32>
    %292 = arith.addf %286, %291 : vector<2x4x4x128xf32>
    %c0_302 = arith.constant 0 : index
    %c2_303 = arith.constant 2 : index
    %c2_304 = arith.constant 2 : index
    %c0_305 = arith.constant 0 : index
    %293 = vector.load %arg25[%c0_302, %c2_303, %c2_304, %c0_305] : memref<2x6x6x128xf32, #tpu.memory_space<vmem>>, vector<2x4x4x128xf32>
    %c8_306 = arith.constant 8 : index
    %c0_307 = arith.constant 0 : index
    %294 = vector.load %arg12[%c8_306, %c0_307] : memref<9x128xf32, #tpu.memory_space<vmem>>, vector<1x128xf32>
    %295 = vector.shape_cast %294 : vector<1x128xf32> to vector<1x1x1x128xf32>
    %296 = vector.broadcast %295 : vector<1x1x1x128xf32> to vector<2x4x4x128xf32>
    %297 = arith.mulf %293, %296 : vector<2x4x4x128xf32>
    %298 = arith.addf %292, %297 : vector<2x4x4x128xf32>
    %c0_308 = arith.constant 0 : index
    %c0_309 = arith.constant 0 : index
    %299 = vector.load %arg13[%c0_308, %c0_309] : memref<1x128xf32, #tpu.memory_space<vmem>>, vector<1x128xf32>
    %300 = vector.shape_cast %299 : vector<1x128xf32> to vector<1x1x1x128xf32>
    %301 = vector.broadcast %300 : vector<1x1x1x128xf32> to vector<2x4x4x128xf32>
    %302 = arith.addf %298, %301 : vector<2x4x4x128xf32>
    %cst_310 = arith.constant 0.000000e+00 : f32
    %303 = vector.broadcast %cst_310 : f32 to vector<2x4x4x128xf32>
    %304 = arith.maximumf %302, %303 : vector<2x4x4x128xf32>
    %305 = vector.shape_cast %304 : vector<2x4x4x128xf32> to vector<32x128xf32>
    %306 = arith.truncf %305 : vector<32x128xf32> to vector<32x128xbf16>
    %c0_311 = arith.constant 0 : index
    %c0_312 = arith.constant 0 : index
    %307 = vector.load %arg14[%c0_311, %c0_312] : memref<128x256xbf16, #tpu.memory_space<vmem>>, vector<128x256xbf16>
    %cst_313 = arith.constant dense<0.000000e+00> : vector<32x256xf32>
    %308 = tpu.matmul %306, %307, %cst_313 {dimension_numbers = #tpu.dot_dimension_numbers<[1], [0], [0], [1], [0, 0, 1, 1], [], []>} : vector<32x128xbf16>, vector<128x256xbf16>, vector<32x256xf32> -> vector<32x256xf32>
    %c0_314 = arith.constant 0 : index
    %c0_315 = arith.constant 0 : index
    %309 = vector.load %arg15[%c0_314, %c0_315] : memref<1x256xf32, #tpu.memory_space<vmem>>, vector<1x256xf32>
    %310 = vector.broadcast %309 : vector<1x256xf32> to vector<32x256xf32>
    %311 = arith.addf %308, %310 : vector<32x256xf32>
    %cst_316 = arith.constant 0.000000e+00 : f32
    %312 = vector.broadcast %cst_316 : f32 to vector<32x256xf32>
    %313 = arith.maximumf %311, %312 : vector<32x256xf32>
    %314 = vector.shape_cast %313 : vector<32x256xf32> to vector<4x8x256xf32>
    %315 = vector.extract_strided_slice %314 {offsets = [0, 0, 0], sizes = [4, 4, 256], strides = [1, 1, 1]} : vector<4x8x256xf32> to vector<4x4x256xf32>
    %316 = vector.extract_strided_slice %314 {offsets = [0, 4, 0], sizes = [4, 4, 256], strides = [1, 1, 1]} : vector<4x8x256xf32> to vector<4x4x256xf32>
    %317 = arith.maximumf %315, %316 : vector<4x4x256xf32>
    %318 = vector.extract_strided_slice %317 {offsets = [0, 0, 0], sizes = [4, 1, 256], strides = [1, 1, 1]} : vector<4x4x256xf32> to vector<4x1x256xf32>
    %319 = vector.extract_strided_slice %317 {offsets = [0, 1, 0], sizes = [4, 1, 256], strides = [1, 1, 1]} : vector<4x4x256xf32> to vector<4x1x256xf32>
    %320 = arith.maximumf %318, %319 : vector<4x1x256xf32>
    %321 = vector.shape_cast %320 : vector<4x1x256xf32> to vector<2x2x1x256xf32>
    %c0_317 = arith.constant 0 : index
    %c1_318 = arith.constant 1 : index
    %c1_319 = arith.constant 1 : index
    %c0_320 = arith.constant 0 : index
    %322 = vector.load %arg26[%c0_317, %c1_318, %c1_319, %c0_320] : memref<2x4x4x256xf32, #tpu.memory_space<vmem>>, vector<2x2x1x256xf32>
    tpu.vector_store %arg26[%c0_317, %c1_318, %c1_319, %c0_320], %321 {strides = array<i32>} : memref<2x4x4x256xf32, #tpu.memory_space<vmem>>, vector<2x2x1x256xf32>,
    %323 = vector.extract_strided_slice %317 {offsets = [0, 2, 0], sizes = [4, 1, 256], strides = [1, 1, 1]} : vector<4x4x256xf32> to vector<4x1x256xf32>
    %324 = vector.extract_strided_slice %317 {offsets = [0, 3, 0], sizes = [4, 1, 256], strides = [1, 1, 1]} : vector<4x4x256xf32> to vector<4x1x256xf32>
    %325 = arith.maximumf %323, %324 : vector<4x1x256xf32>
    %326 = vector.shape_cast %325 : vector<4x1x256xf32> to vector<2x2x1x256xf32>
    %c0_321 = arith.constant 0 : index
    %c1_322 = arith.constant 1 : index
    %c2_323 = arith.constant 2 : index
    %c0_324 = arith.constant 0 : index
    %327 = vector.load %arg26[%c0_321, %c1_322, %c2_323, %c0_324] : memref<2x4x4x256xf32, #tpu.memory_space<vmem>>, vector<2x2x1x256xf32>
    tpu.vector_store %arg26[%c0_321, %c1_322, %c2_323, %c0_324], %326 {strides = array<i32>} : memref<2x4x4x256xf32, #tpu.memory_space<vmem>>, vector<2x2x1x256xf32>,
    %c0_325 = arith.constant 0 : index
    %c0_326 = arith.constant 0 : index
    %c0_327 = arith.constant 0 : index
    %c0_328 = arith.constant 0 : index
    %328 = vector.load %arg26[%c0_325, %c0_326, %c0_327, %c0_328] : memref<2x4x4x256xf32, #tpu.memory_space<vmem>>, vector<2x2x2x256xf32>
    %c0_329 = arith.constant 0 : index
    %c0_330 = arith.constant 0 : index
    %329 = vector.load %arg16[%c0_329, %c0_330] : memref<9x256xf32, #tpu.memory_space<vmem>>, vector<1x256xf32>
    %330 = vector.shape_cast %329 : vector<1x256xf32> to vector<1x1x1x256xf32>
    %331 = vector.broadcast %330 : vector<1x1x1x256xf32> to vector<2x2x2x256xf32>
    %332 = arith.mulf %328, %331 : vector<2x2x2x256xf32>
    %c0_331 = arith.constant 0 : index
    %c0_332 = arith.constant 0 : index
    %c1_333 = arith.constant 1 : index
    %c0_334 = arith.constant 0 : index
    %333 = vector.load %arg26[%c0_331, %c0_332, %c1_333, %c0_334] : memref<2x4x4x256xf32, #tpu.memory_space<vmem>>, vector<2x2x2x256xf32>
    %c1_335 = arith.constant 1 : index
    %c0_336 = arith.constant 0 : index
    %334 = vector.load %arg16[%c1_335, %c0_336] : memref<9x256xf32, #tpu.memory_space<vmem>>, vector<1x256xf32>
    %335 = vector.shape_cast %334 : vector<1x256xf32> to vector<1x1x1x256xf32>
    %336 = vector.broadcast %335 : vector<1x1x1x256xf32> to vector<2x2x2x256xf32>
    %337 = arith.mulf %333, %336 : vector<2x2x2x256xf32>
    %338 = arith.addf %332, %337 : vector<2x2x2x256xf32>
    %c0_337 = arith.constant 0 : index
    %c0_338 = arith.constant 0 : index
    %c2_339 = arith.constant 2 : index
    %c0_340 = arith.constant 0 : index
    %339 = vector.load %arg26[%c0_337, %c0_338, %c2_339, %c0_340] : memref<2x4x4x256xf32, #tpu.memory_space<vmem>>, vector<2x2x2x256xf32>
    %c2_341 = arith.constant 2 : index
    %c0_342 = arith.constant 0 : index
    %340 = vector.load %arg16[%c2_341, %c0_342] : memref<9x256xf32, #tpu.memory_space<vmem>>, vector<1x256xf32>
    %341 = vector.shape_cast %340 : vector<1x256xf32> to vector<1x1x1x256xf32>
    %342 = vector.broadcast %341 : vector<1x1x1x256xf32> to vector<2x2x2x256xf32>
    %343 = arith.mulf %339, %342 : vector<2x2x2x256xf32>
    %344 = arith.addf %338, %343 : vector<2x2x2x256xf32>
    %c0_343 = arith.constant 0 : index
    %c1_344 = arith.constant 1 : index
    %c0_345 = arith.constant 0 : index
    %c0_346 = arith.constant 0 : index
    %345 = vector.load %arg26[%c0_343, %c1_344, %c0_345, %c0_346] : memref<2x4x4x256xf32, #tpu.memory_space<vmem>>, vector<2x2x2x256xf32>
    %c3_347 = arith.constant 3 : index
    %c0_348 = arith.constant 0 : index
    %346 = vector.load %arg16[%c3_347, %c0_348] : memref<9x256xf32, #tpu.memory_space<vmem>>, vector<1x256xf32>
    %347 = vector.shape_cast %346 : vector<1x256xf32> to vector<1x1x1x256xf32>
    %348 = vector.broadcast %347 : vector<1x1x1x256xf32> to vector<2x2x2x256xf32>
    %349 = arith.mulf %345, %348 : vector<2x2x2x256xf32>
    %350 = arith.addf %344, %349 : vector<2x2x2x256xf32>
    %c0_349 = arith.constant 0 : index
    %c1_350 = arith.constant 1 : index
    %c1_351 = arith.constant 1 : index
    %c0_352 = arith.constant 0 : index
    %351 = vector.load %arg26[%c0_349, %c1_350, %c1_351, %c0_352] : memref<2x4x4x256xf32, #tpu.memory_space<vmem>>, vector<2x2x2x256xf32>
    %c4_353 = arith.constant 4 : index
    %c0_354 = arith.constant 0 : index
    %352 = vector.load %arg16[%c4_353, %c0_354] : memref<9x256xf32, #tpu.memory_space<vmem>>, vector<1x256xf32>
    %353 = vector.shape_cast %352 : vector<1x256xf32> to vector<1x1x1x256xf32>
    %354 = vector.broadcast %353 : vector<1x1x1x256xf32> to vector<2x2x2x256xf32>
    %355 = arith.mulf %351, %354 : vector<2x2x2x256xf32>
    %356 = arith.addf %350, %355 : vector<2x2x2x256xf32>
    %c0_355 = arith.constant 0 : index
    %c1_356 = arith.constant 1 : index
    %c2_357 = arith.constant 2 : index
    %c0_358 = arith.constant 0 : index
    %357 = vector.load %arg26[%c0_355, %c1_356, %c2_357, %c0_358] : memref<2x4x4x256xf32, #tpu.memory_space<vmem>>, vector<2x2x2x256xf32>
    %c5_359 = arith.constant 5 : index
    %c0_360 = arith.constant 0 : index
    %358 = vector.load %arg16[%c5_359, %c0_360] : memref<9x256xf32, #tpu.memory_space<vmem>>, vector<1x256xf32>
    %359 = vector.shape_cast %358 : vector<1x256xf32> to vector<1x1x1x256xf32>
    %360 = vector.broadcast %359 : vector<1x1x1x256xf32> to vector<2x2x2x256xf32>
    %361 = arith.mulf %357, %360 : vector<2x2x2x256xf32>
    %362 = arith.addf %356, %361 : vector<2x2x2x256xf32>
    %c0_361 = arith.constant 0 : index
    %c2_362 = arith.constant 2 : index
    %c0_363 = arith.constant 0 : index
    %c0_364 = arith.constant 0 : index
    %363 = vector.load %arg26[%c0_361, %c2_362, %c0_363, %c0_364] : memref<2x4x4x256xf32, #tpu.memory_space<vmem>>, vector<2x2x2x256xf32>
    %c6_365 = arith.constant 6 : index
    %c0_366 = arith.constant 0 : index
    %364 = vector.load %arg16[%c6_365, %c0_366] : memref<9x256xf32, #tpu.memory_space<vmem>>, vector<1x256xf32>
    %365 = vector.shape_cast %364 : vector<1x256xf32> to vector<1x1x1x256xf32>
    %366 = vector.broadcast %365 : vector<1x1x1x256xf32> to vector<2x2x2x256xf32>
    %367 = arith.mulf %363, %366 : vector<2x2x2x256xf32>
    %368 = arith.addf %362, %367 : vector<2x2x2x256xf32>
    %c0_367 = arith.constant 0 : index
    %c2_368 = arith.constant 2 : index
    %c1_369 = arith.constant 1 : index
    %c0_370 = arith.constant 0 : index
    %369 = vector.load %arg26[%c0_367, %c2_368, %c1_369, %c0_370] : memref<2x4x4x256xf32, #tpu.memory_space<vmem>>, vector<2x2x2x256xf32>
    %c7_371 = arith.constant 7 : index
    %c0_372 = arith.constant 0 : index
    %370 = vector.load %arg16[%c7_371, %c0_372] : memref<9x256xf32, #tpu.memory_space<vmem>>, vector<1x256xf32>
    %371 = vector.shape_cast %370 : vector<1x256xf32> to vector<1x1x1x256xf32>
    %372 = vector.broadcast %371 : vector<1x1x1x256xf32> to vector<2x2x2x256xf32>
    %373 = arith.mulf %369, %372 : vector<2x2x2x256xf32>
    %374 = arith.addf %368, %373 : vector<2x2x2x256xf32>
    %c0_373 = arith.constant 0 : index
    %c2_374 = arith.constant 2 : index
    %c2_375 = arith.constant 2 : index
    %c0_376 = arith.constant 0 : index
    %375 = vector.load %arg26[%c0_373, %c2_374, %c2_375, %c0_376] : memref<2x4x4x256xf32, #tpu.memory_space<vmem>>, vector<2x2x2x256xf32>
    %c8_377 = arith.constant 8 : index
    %c0_378 = arith.constant 0 : index
    %376 = vector.load %arg16[%c8_377, %c0_378] : memref<9x256xf32, #tpu.memory_space<vmem>>, vector<1x256xf32>
    %377 = vector.shape_cast %376 : vector<1x256xf32> to vector<1x1x1x256xf32>
    %378 = vector.broadcast %377 : vector<1x1x1x256xf32> to vector<2x2x2x256xf32>
    %379 = arith.mulf %375, %378 : vector<2x2x2x256xf32>
    %380 = arith.addf %374, %379 : vector<2x2x2x256xf32>
    %c0_379 = arith.constant 0 : index
    %c0_380 = arith.constant 0 : index
    %381 = vector.load %arg17[%c0_379, %c0_380] : memref<1x256xf32, #tpu.memory_space<vmem>>, vector<1x256xf32>
    %382 = vector.shape_cast %381 : vector<1x256xf32> to vector<1x1x1x256xf32>
    %383 = vector.broadcast %382 : vector<1x1x1x256xf32> to vector<2x2x2x256xf32>
    %384 = arith.addf %380, %383 : vector<2x2x2x256xf32>
    %cst_381 = arith.constant 0.000000e+00 : f32
    %385 = vector.broadcast %cst_381 : f32 to vector<2x2x2x256xf32>
    %386 = arith.maximumf %384, %385 : vector<2x2x2x256xf32>
    %387 = vector.shape_cast %386 : vector<2x2x2x256xf32> to vector<8x256xf32>
    %388 = arith.truncf %387 : vector<8x256xf32> to vector<8x256xbf16>
    %c0_382 = arith.constant 0 : index
    %c0_383 = arith.constant 0 : index
    %389 = vector.load %arg18[%c0_382, %c0_383] : memref<256x512xbf16, #tpu.memory_space<vmem>>, vector<256x512xbf16>
    %cst_384 = arith.constant dense<0.000000e+00> : vector<8x512xf32>
    %390 = tpu.matmul %388, %389, %cst_384 {dimension_numbers = #tpu.dot_dimension_numbers<[1], [0], [0], [1], [0, 0, 1, 1], [], []>} : vector<8x256xbf16>, vector<256x512xbf16>, vector<8x512xf32> -> vector<8x512xf32>
    %c0_385 = arith.constant 0 : index
    %c0_386 = arith.constant 0 : index
    %391 = vector.load %arg19[%c0_385, %c0_386] : memref<1x512xf32, #tpu.memory_space<vmem>>, vector<1x512xf32>
    %392 = vector.broadcast %391 : vector<1x512xf32> to vector<8x512xf32>
    %393 = arith.addf %390, %392 : vector<8x512xf32>
    %cst_387 = arith.constant 0.000000e+00 : f32
    %394 = vector.broadcast %cst_387 : f32 to vector<8x512xf32>
    %395 = arith.maximumf %393, %394 : vector<8x512xf32>
    %396 = vector.extract_strided_slice %395 {offsets = [0, 0], sizes = [4, 512], strides = [1, 1]} : vector<8x512xf32> to vector<4x512xf32>
    %cst_388 = arith.constant dense<0.000000e+00> : vector<512xf32>
    %397 = vector.multi_reduction <add>, %396, %cst_388 [0] : vector<4x512xf32> to vector<512xf32>
    %398 = vector.shape_cast %397 : vector<512xf32> to vector<1x512xf32>
    %399 = vector.extract_strided_slice %395 {offsets = [4, 0], sizes = [4, 512], strides = [1, 1]} : vector<8x512xf32> to vector<4x512xf32>
    %cst_389 = arith.constant dense<0.000000e+00> : vector<512xf32>
    %400 = vector.multi_reduction <add>, %399, %cst_389 [0] : vector<4x512xf32> to vector<512xf32>
    %401 = vector.shape_cast %400 : vector<512xf32> to vector<1x512xf32>
    %402 = tpu.concatenate %398, %401 in 0 : vector<1x512xf32>, vector<1x512xf32> -> vector<2x512xf32>
    %cst_390 = arith.constant 2.500000e-01 : f32
    %403 = vector.broadcast %cst_390 : f32 to vector<2x512xf32>
    %404 = arith.mulf %402, %403 : vector<2x512xf32>
    %405 = arith.truncf %404 : vector<2x512xf32> to vector<2x512xbf16>
    %c0_391 = arith.constant 0 : index
    %c0_392 = arith.constant 0 : index
    %406 = vector.load %arg20[%c0_391, %c0_392] : memref<512x128xbf16, #tpu.memory_space<vmem>>, vector<512x128xbf16>
    %cst_393 = arith.constant dense<0.000000e+00> : vector<2x128xf32>
    %407 = tpu.matmul %405, %406, %cst_393 {dimension_numbers = #tpu.dot_dimension_numbers<[1], [0], [0], [1], [0, 0, 1, 1], [], []>} : vector<2x512xbf16>, vector<512x128xbf16>, vector<2x128xf32> -> vector<2x128xf32>
    %c0_394 = arith.constant 0 : index
    %c0_395 = arith.constant 0 : index
    %408 = vector.load %arg21[%c0_394, %c0_395] : memref<1x128xf32, #tpu.memory_space<vmem>>, vector<1x128xf32>
    %409 = vector.broadcast %408 : vector<1x128xf32> to vector<2x128xf32>
    %410 = arith.addf %407, %409 : vector<2x128xf32>
    %c0_396 = arith.constant 0 : index
    %c0_397 = arith.constant 0 : index
    %c0_398 = arith.constant 0 : index
    %411 = vector.load %arg22[%c0_396, %c0_397, %c0_398] : memref<1x2x128xf32, #tpu.memory_space<vmem>>, vector<1x2x128xf32>
    %412 = vector.shape_cast %411 : vector<1x2x128xf32> to vector<2x128xf32>
    %413 = vector.shape_cast %410 : vector<2x128xf32> to vector<1x2x128xf32>
    tpu.vector_store %arg22[%c0_396, %c0_397, %c0_398], %413 {strides = array<i32>} : memref<1x2x128xf32, #tpu.memory_space<vmem>>, vector<1x2x128xf32>,
    return
  }
  func.func @transform_0(%arg0: i32) -> (i32, i32) {
    %c0_i32 = arith.constant 0 : i32
    %c0_i32_0 = arith.constant 0 : i32
    return %arg0, %c0_i32 : i32, i32
  }
  func.func @transform_1(%arg0: i32) -> (i32, i32) {
    %c0_i32 = arith.constant 0 : i32
    %c0_i32_0 = arith.constant 0 : i32
    %c0_i32_1 = arith.constant 0 : i32
    return %c0_i32, %c0_i32_0 : i32, i32
  }
  func.func @transform_2(%arg0: i32) -> (i32, i32) {
    %c0_i32 = arith.constant 0 : i32
    %c0_i32_0 = arith.constant 0 : i32
    %c0_i32_1 = arith.constant 0 : i32
    return %c0_i32, %c0_i32_0 : i32, i32
  }
  func.func @transform_3(%arg0: i32) -> (i32, i32) {
    %c0_i32 = arith.constant 0 : i32
    %c0_i32_0 = arith.constant 0 : i32
    %c0_i32_1 = arith.constant 0 : i32
    return %c0_i32, %c0_i32_0 : i32, i32
  }
  func.func @transform_4(%arg0: i32) -> (i32, i32) {
    %c0_i32 = arith.constant 0 : i32
    %c0_i32_0 = arith.constant 0 : i32
    %c0_i32_1 = arith.constant 0 : i32
    return %c0_i32, %c0_i32_0 : i32, i32
  }
  func.func @transform_5(%arg0: i32) -> (i32, i32) {
    %c0_i32 = arith.constant 0 : i32
    %c0_i32_0 = arith.constant 0 : i32
    %c0_i32_1 = arith.constant 0 : i32
    return %c0_i32, %c0_i32_0 : i32, i32
  }
  func.func @transform_6(%arg0: i32) -> (i32, i32) {
    %c0_i32 = arith.constant 0 : i32
    %c0_i32_0 = arith.constant 0 : i32
    %c0_i32_1 = arith.constant 0 : i32
    return %c0_i32, %c0_i32_0 : i32, i32
  }
  func.func @transform_7(%arg0: i32) -> (i32, i32) {
    %c0_i32 = arith.constant 0 : i32
    %c0_i32_0 = arith.constant 0 : i32
    %c0_i32_1 = arith.constant 0 : i32
    return %c0_i32, %c0_i32_0 : i32, i32
  }
  func.func @transform_8(%arg0: i32) -> (i32, i32) {
    %c0_i32 = arith.constant 0 : i32
    %c0_i32_0 = arith.constant 0 : i32
    %c0_i32_1 = arith.constant 0 : i32
    return %c0_i32, %c0_i32_0 : i32, i32
  }
  func.func @transform_9(%arg0: i32) -> (i32, i32) {
    %c0_i32 = arith.constant 0 : i32
    %c0_i32_0 = arith.constant 0 : i32
    %c0_i32_1 = arith.constant 0 : i32
    return %c0_i32, %c0_i32_0 : i32, i32
  }
  func.func @transform_10(%arg0: i32) -> (i32, i32) {
    %c0_i32 = arith.constant 0 : i32
    %c0_i32_0 = arith.constant 0 : i32
    %c0_i32_1 = arith.constant 0 : i32
    return %c0_i32, %c0_i32_0 : i32, i32
  }
  func.func @transform_11(%arg0: i32) -> (i32, i32) {
    %c0_i32 = arith.constant 0 : i32
    %c0_i32_0 = arith.constant 0 : i32
    %c0_i32_1 = arith.constant 0 : i32
    return %c0_i32, %c0_i32_0 : i32, i32
  }
  func.func @transform_12(%arg0: i32) -> (i32, i32) {
    %c0_i32 = arith.constant 0 : i32
    %c0_i32_0 = arith.constant 0 : i32
    %c0_i32_1 = arith.constant 0 : i32
    return %c0_i32, %c0_i32_0 : i32, i32
  }
  func.func @transform_13(%arg0: i32) -> (i32, i32) {
    %c0_i32 = arith.constant 0 : i32
    %c0_i32_0 = arith.constant 0 : i32
    %c0_i32_1 = arith.constant 0 : i32
    return %c0_i32, %c0_i32_0 : i32, i32
  }
  func.func @transform_14(%arg0: i32) -> (i32, i32) {
    %c0_i32 = arith.constant 0 : i32
    %c0_i32_0 = arith.constant 0 : i32
    %c0_i32_1 = arith.constant 0 : i32
    return %c0_i32, %c0_i32_0 : i32, i32
  }
  func.func @transform_15(%arg0: i32) -> (i32, i32) {
    %c0_i32 = arith.constant 0 : i32
    %c0_i32_0 = arith.constant 0 : i32
    %c0_i32_1 = arith.constant 0 : i32
    return %c0_i32, %c0_i32_0 : i32, i32
  }
  func.func @transform_16(%arg0: i32) -> (i32, i32) {
    %c0_i32 = arith.constant 0 : i32
    %c0_i32_0 = arith.constant 0 : i32
    %c0_i32_1 = arith.constant 0 : i32
    return %c0_i32, %c0_i32_0 : i32, i32
  }
  func.func @transform_17(%arg0: i32) -> (i32, i32) {
    %c0_i32 = arith.constant 0 : i32
    %c0_i32_0 = arith.constant 0 : i32
    %c0_i32_1 = arith.constant 0 : i32
    return %c0_i32, %c0_i32_0 : i32, i32
  }
  func.func @transform_18(%arg0: i32) -> (i32, i32) {
    %c0_i32 = arith.constant 0 : i32
    %c0_i32_0 = arith.constant 0 : i32
    %c0_i32_1 = arith.constant 0 : i32
    return %c0_i32, %c0_i32_0 : i32, i32
  }
  func.func @transform_19(%arg0: i32) -> (i32, i32) {
    %c0_i32 = arith.constant 0 : i32
    %c0_i32_0 = arith.constant 0 : i32
    %c0_i32_1 = arith.constant 0 : i32
    return %c0_i32, %c0_i32_0 : i32, i32
  }
  func.func @transform_20(%arg0: i32) -> (i32, i32) {
    %c0_i32 = arith.constant 0 : i32
    %c0_i32_0 = arith.constant 0 : i32
    %c0_i32_1 = arith.constant 0 : i32
    return %c0_i32, %c0_i32_0 : i32, i32
  }
  func.func @transform_21(%arg0: i32) -> (i32, i32, i32) {
    %c0_i32 = arith.constant 0 : i32
    %c0_i32_0 = arith.constant 0 : i32
    %c0_i32_1 = arith.constant 0 : i32
    return %arg0, %c0_i32, %c0_i32_0 : i32, i32, i32
  }
}

</mosaic_0001>

<llo_original>
// kernel: image_feature_extractor.1
$region0: #{image_feature_extractor.1}
  #allocation0 [shape = 'u32[]', space=smem, size = 0x4, offset = 0x4, fixed_abs, tag = 'smem constant byte address 0x4 - core index']
  #allocation1 [shape = 'u32[144,128]{1,0:T(1,128)}', space=vmem, size = 0x12000, scoped, tag = 'internal scratch']
  #allocation2 [shape = 'f32[2,18,18,32]{3,2,1,0:T(8,128)}', space=vmem, size = 0x6c000, scoped, tag = 'scratch operand']
  #allocation3 [shape = 'f32[2,10,10,64]{3,2,1,0:T(8,128)}', space=vmem, size = 0x28000, scoped, tag = 'scratch operand']
  #allocation4 [shape = 'f32[2,6,6,128]{3,2,1,0:T(8,128)}', space=vmem, size = 0xc000, scoped, tag = 'scratch operand']
  #allocation5 [shape = 'f32[2,4,4,256]{3,2,1,0:T(4,128)}', space=vmem, size = 0x8000, scoped, tag = 'scratch operand']
  %s0 = inlined_call_operand.vmem [shape: bf16[1024,27], index: 0, kind: input, shape index: {}]
  %s1 = inlined_call_operand.vmem [shape: bf16[27,32], index: 1, kind: input, shape index: {}]
  %s2 = inlined_call_operand.vmem [shape: f32[1,32], index: 2, kind: input, shape index: {}]
  %s3 = inlined_call_operand.vmem [shape: f32[9,32], index: 3, kind: input, shape index: {}]
  %s4 = inlined_call_operand.vmem [shape: f32[1,32], index: 4, kind: input, shape index: {}]
  %s5 = inlined_call_operand.vmem [shape: bf16[32,64], index: 5, kind: input, shape index: {}]
  %s6 = inlined_call_operand.vmem [shape: f32[1,64], index: 6, kind: input, shape index: {}]
  %s7 = inlined_call_operand.vmem [shape: f32[9,64], index: 7, kind: input, shape index: {}]
  %s8 = inlined_call_operand.vmem [shape: f32[1,64], index: 8, kind: input, shape index: {}]
  %s9 = inlined_call_operand.vmem [shape: bf16[64,128], index: 9, kind: input, shape index: {}]
  %s10 = inlined_call_operand.vmem [shape: f32[1,128], index: 10, kind: input, shape index: {}]
  %s11 = inlined_call_operand.vmem [shape: f32[9,128], index: 11, kind: input, shape index: {}]
  %s12 = inlined_call_operand.vmem [shape: f32[1,128], index: 12, kind: input, shape index: {}]
  %s13 = inlined_call_operand.vmem [shape: bf16[128,256], index: 13, kind: input, shape index: {}]
  %s14 = inlined_call_operand.vmem [shape: f32[1,256], index: 14, kind: input, shape index: {}]
  %s15 = inlined_call_operand.vmem [shape: f32[9,256], index: 15, kind: input, shape index: {}]
  %s16 = inlined_call_operand.vmem [shape: f32[1,256], index: 16, kind: input, shape index: {}]
  %s17 = inlined_call_operand.vmem [shape: bf16[256,512], index: 17, kind: input, shape index: {}]
  %s18 = inlined_call_operand.vmem [shape: f32[1,512], index: 18, kind: input, shape index: {}]
  %s19 = inlined_call_operand.vmem [shape: bf16[512,128], index: 19, kind: input, shape index: {}]
  %s20 = inlined_call_operand.vmem [shape: f32[1,128], index: 20, kind: input, shape index: {}]
  %s21 = inlined_call_operand.hbm [shape: f32[2,2,128], index: 21, kind: output, shape index: {}]
  %s22 = sld [smem:[#allocation0]]
  $region117: #{image_feature_extractor.1} parent=0
    _
  %s24 = ssub.s32 1, %s22
  %s25 = scalar_select 0, %s24, %s22
  $region1: #{image_feature_extractor.1} parent=0
    #allocation6 [shape = 'u8[2048]{0}', space=vmem, size = 0x800, scoped, tag = 'output window, operand 0']
    #allocation7 [shape = 's32[2]{0}', space=sflag, size = 0x8, scoped, tag = 'scoped memory for image_feature_extractor.1']
    %26 = vsyncpa [#allocation7], 0
    %s27 = scalar_lea.sflag [#allocation7], 1
    %28 = vsyncpa %s27, 0
    loop: start=0, step=1, limit=4
    $region2: #{image_feature_extractor.1} parent=1 // loop_pre_header
      _
    $region3: #{image_feature_extractor.1} parent=1 // loop_header
      %s30 = sphi 0, %s34
      %p31 = scmp.ge.s32.totalorder %s30, 4
      %s40 = sphi 0, %s42
      %s43 = sphi 0, %s40
      %s44 = sphi 0, %s43
      %s60 = sphi 0, %s44
      %s64 = sphi 0, %s64
      %s66 = sphi 0, %s64
      %s67 = sphi 0, %s66
      %s81 = sphi 0, %s67
      %s85 = sphi 0, %s85
      %s87 = sphi 0, %s85
      %s88 = sphi 0, %s87
      %s102 = sphi 0, %s88
      %s106 = sphi 0, %s106
      %s108 = sphi 0, %s106
      %s109 = sphi 0, %s108
      %s123 = sphi 0, %s109
      %s127 = sphi 0, %s127
      %s129 = sphi 0, %s127
      %s130 = sphi 0, %s129
      %s144 = sphi 0, %s130
      %s148 = sphi 0, %s148
      %s150 = sphi 0, %s148
      %s151 = sphi 0, %s150
      %s165 = sphi 0, %s151
      %s169 = sphi 0, %s169
      %s171 = sphi 0, %s169
      %s172 = sphi 0, %s171
      %s186 = sphi 0, %s172
      %s190 = sphi 0, %s190
      %s192 = sphi 0, %s190
      %s193 = sphi 0, %s192
      %s207 = sphi 0, %s193
      %s211 = sphi 0, %s211
      %s213 = sphi 0, %s211
      %s214 = sphi 0, %s213
      %s228 = sphi 0, %s214
      %s232 = sphi 0, %s232
      %s234 = sphi 0, %s232
      %s235 = sphi 0, %s234
      %s249 = sphi 0, %s235
      %s253 = sphi 0, %s253
      %s255 = sphi 0, %s253
      %s256 = sphi 0, %s255
      %s270 = sphi 0, %s256
      %s274 = sphi 0, %s274
      %s276 = sphi 0, %s274
      %s277 = sphi 0, %s276
      %s291 = sphi 0, %s277
      %s295 = sphi 0, %s295
      %s297 = sphi 0, %s295
      %s298 = sphi 0, %s297
      %s312 = sphi 0, %s298
      %s316 = sphi 0, %s316
      %s318 = sphi 0, %s316
      %s319 = sphi 0, %s318
      %s333 = sphi 0, %s319
      %s337 = sphi 0, %s337
      %s339 = sphi 0, %s337
      %s340 = sphi 0, %s339
      %s354 = sphi 0, %s340
      %s358 = sphi 0, %s358
      %s360 = sphi 0, %s358
      %s361 = sphi 0, %s360
      %s375 = sphi 0, %s361
      %s379 = sphi 0, %s379
      %s381 = sphi 0, %s379
      %s382 = sphi 0, %s381
      %s396 = sphi 0, %s382
      %s400 = sphi 0, %s400
      %s402 = sphi 0, %s400
      %s403 = sphi 0, %s402
      %s417 = sphi 0, %s403
      %s421 = sphi 0, %s421
      %s423 = sphi 0, %s421
      %s424 = sphi 0, %s423
      %s438 = sphi 0, %s424
      %s442 = sphi 0, %s442
      %s444 = sphi 0, %s442
      %s445 = sphi 0, %s444
      %s459 = sphi 0, %s445
      %s463 = sphi 0, %s463
      %s465 = sphi 0, %s463
      %s466 = sphi 0, %s465
      %s480 = sphi 0, %s466
      %s486 = sphi 0, %s488
      %s489 = sphi 0, %s486
      %s490 = sphi 0, %s489
      %s506 = sphi 0, %s490
    $region4: #{image_feature_extractor.1} parent=1 // loop_header_branch
      %33 = sbr.rel (%p31) target = $region8
    $region5: #{image_feature_extractor.1} parent=1 // loop_body
      %s35 = ssub.s32 %s30, 1
      %s36 = ssub.s32 %s30, 2
      %s37 = sadd.s32 %s30, 1
      %s38 = ssub.s32 %s30, %s37
      %p39 = scmp.eq.s32.totalorder %s38, 0
      %s41 = sadd.s32 %s40, 1
      %s42 = scalar_select %p39, %s40, %s41
      %p45 = pneg %p39
      %p46 = scmp.eq.s32.totalorder %s30, 1
      %p47 = por %p45, %p46
      %p48 = scmp.ne.s32.totalorder %s40, %s43
      %p49 = scmp.eq.s32.totalorder %s30, 0
      %p50 = por %p48, %p49
      %p51 = scmp.ne.s32.totalorder %s40, %s43
      %p52 = scmp.eq.s32.totalorder %s35, 1
      %p53 = por %p51, %p52
      %p54 = scmp.ne.s32.totalorder %s43, %s44
      %p55 = scmp.eq.s32.totalorder %s35, 0
      %p56 = por %p54, %p55
      %p57 = scmp.ne.s32.totalorder %s43, %s44
      %p58 = scmp.eq.s32.totalorder %s36, 1
      %p59 = por %p57, %p58
      %p61 = scmp.ne.s32.totalorder %s44, %s60
      %p62 = scmp.eq.s32.totalorder %s36, 0
      %p63 = por %p61, %p62
      %s65 = sadd.s32 %s64, 1
      %p68 = scmp.eq.s32.totalorder %s30, 1
      %p69 = scmp.ne.s32.totalorder %s64, %s66
      %p70 = scmp.eq.s32.totalorder %s30, 0
      %p71 = por %p69, %p70
      %p72 = scmp.ne.s32.totalorder %s64, %s66
      %p73 = scmp.eq.s32.totalorder %s35, 1
      %p74 = por %p72, %p73
      %p75 = scmp.ne.s32.totalorder %s66, %s67
      %p76 = scmp.eq.s32.totalorder %s35, 0
      %p77 = por %p75, %p76
      %p78 = scmp.ne.s32.totalorder %s66, %s67
      %p79 = scmp.eq.s32.totalorder %s36, 1
      %p80 = por %p78, %p79
      %p82 = scmp.ne.s32.totalorder %s67, %s81
      %p83 = scmp.eq.s32.totalorder %s36, 0
      %p84 = por %p82, %p83
      %s86 = sadd.s32 %s85, 1
      %p89 = scmp.eq.s32.totalorder %s30, 1
      %p90 = scmp.ne.s32.totalorder %s85, %s87
      %p91 = scmp.eq.s32.totalorder %s30, 0
      %p92 = por %p90, %p91
      %p93 = scmp.ne.s32.totalorder %s85, %s87
      %p94 = scmp.eq.s32.totalorder %s35, 1
      %p95 = por %p93, %p94
      %p96 = scmp.ne.s32.totalorder %s87, %s88
      %p97 = scmp.eq.s32.totalorder %s35, 0
      %p98 = por %p96, %p97
      %p99 = scmp.ne.s32.totalorder %s87, %s88
      %p100 = scmp.eq.s32.totalorder %s36, 1
      %p101 = por %p99, %p100
      %p103 = scmp.ne.s32.totalorder %s88, %s102
      %p104 = scmp.eq.s32.totalorder %s36, 0
      %p105 = por %p103, %p104
      %s107 = sadd.s32 %s106, 1
      %p110 = scmp.eq.s32.totalorder %s30, 1
      %p111 = scmp.ne.s32.totalorder %s106, %s108
      %p112 = scmp.eq.s32.totalorder %s30, 0
      %p113 = por %p111, %p112
      %p114 = scmp.ne.s32.totalorder %s106, %s108
      %p115 = scmp.eq.s32.totalorder %s35, 1
      %p116 = por %p114, %p115
      %p117 = scmp.ne.s32.totalorder %s108, %s109
      %p118 = scmp.eq.s32.totalorder %s35, 0
      %p119 = por %p117, %p118
      %p120 = scmp.ne.s32.totalorder %s108, %s109
      %p121 = scmp.eq.s32.totalorder %s36, 1
      %p122 = por %p120, %p121
      %p124 = scmp.ne.s32.totalorder %s109, %s123
      %p125 = scmp.eq.s32.totalorder %s36, 0
      %p126 = por %p124, %p125
      %s128 = sadd.s32 %s127, 1
      %p131 = scmp.eq.s32.totalorder %s30, 1
      %p132 = scmp.ne.s32.totalorder %s127, %s129
      %p133 = scmp.eq.s32.totalorder %s30, 0
      %p134 = por %p132, %p133
      %p135 = scmp.ne.s32.totalorder %s127, %s129
      %p136 = scmp.eq.s32.totalorder %s35, 1
      %p137 = por %p135, %p136
      %p138 = scmp.ne.s32.totalorder %s129, %s130
      %p139 = scmp.eq.s32.totalorder %s35, 0
      %p140 = por %p138, %p139
      %p141 = scmp.ne.s32.totalorder %s129, %s130
      %p142 = scmp.eq.s32.totalorder %s36, 1
      %p143 = por %p141, %p142
      %p145 = scmp.ne.s32.totalorder %s130, %s144
      %p146 = scmp.eq.s32.totalorder %s36, 0
      %p147 = por %p145, %p146
      %s149 = sadd.s32 %s148, 1
      %p152 = scmp.eq.s32.totalorder %s30, 1
      %p153 = scmp.ne.s32.totalorder %s148, %s150
      %p154 = scmp.eq.s32.totalorder %s30, 0
      %p155 = por %p153, %p154
      %p156 = scmp.ne.s32.totalorder %s148, %s150
      %p157 = scmp.eq.s32.totalorder %s35, 1
      %p158 = por %p156, %p157
      %p159 = scmp.ne.s32.totalorder %s150, %s151
      %p160 = scmp.eq.s32.totalorder %s35, 0
      %p161 = por %p159, %p160
      %p162 = scmp.ne.s32.totalorder %s150, %s151
      %p163 = scmp.eq.s32.totalorder %s36, 1
      %p164 = por %p162, %p163
      %p166 = scmp.ne.s32.totalorder %s151, %s165
      %p167 = scmp.eq.s32.totalorder %s36, 0
      %p168 = por %p166, %p167
      %s170 = sadd.s32 %s169, 1
      %p173 = scmp.eq.s32.totalorder %s30, 1
      %p174 = scmp.ne.s32.totalorder %s169, %s171
      %p175 = scmp.eq.s32.totalorder %s30, 0
      %p176 = por %p174, %p175
      %p177 = scmp.ne.s32.totalorder %s169, %s171
      %p178 = scmp.eq.s32.totalorder %s35, 1
      %p179 = por %p177, %p178
      %p180 = scmp.ne.s32.totalorder %s171, %s172
      %p181 = scmp.eq.s32.totalorder %s35, 0
      %p182 = por %p180, %p181
      %p183 = scmp.ne.s32.totalorder %s171, %s172
      %p184 = scmp.eq.s32.totalorder %s36, 1
      %p185 = por %p183, %p184
      %p187 = scmp.ne.s32.totalorder %s172, %s186
      %p188 = scmp.eq.s32.totalorder %s36, 0
      %p189 = por %p187, %p188
      %s191 = sadd.s32 %s190, 1
      %p194 = scmp.eq.s32.totalorder %s30, 1
      %p195 = scmp.ne.s32.totalorder %s190, %s192
      %p196 = scmp.eq.s32.totalorder %s30, 0
      %p197 = por %p195, %p196
      %p198 = scmp.ne.s32.totalorder %s190, %s192
      %p199 = scmp.eq.s32.totalorder %s35, 1
      %p200 = por %p198, %p199
      %p201 = scmp.ne.s32.totalorder %s192, %s193
      %p202 = scmp.eq.s32.totalorder %s35, 0
      %p203 = por %p201, %p202
      %p204 = scmp.ne.s32.totalorder %s192, %s193
      %p205 = scmp.eq.s32.totalorder %s36, 1
      %p206 = por %p204, %p205
      %p208 = scmp.ne.s32.totalorder %s193, %s207
      %p209 = scmp.eq.s32.totalorder %s36, 0
      %p210 = por %p208, %p209
      %s212 = sadd.s32 %s211, 1
      %p215 = scmp.eq.s32.totalorder %s30, 1
      %p216 = scmp.ne.s32.totalorder %s211, %s213
      %p217 = scmp.eq.s32.totalorder %s30, 0
      %p218 = por %p216, %p217
      %p219 = scmp.ne.s32.totalorder %s211, %s213
      %p220 = scmp.eq.s32.totalorder %s35, 1
      %p221 = por %p219, %p220
      %p222 = scmp.ne.s32.totalorder %s213, %s214
      %p223 = scmp.eq.s32.totalorder %s35, 0
      %p224 = por %p222, %p223
      %p225 = scmp.ne.s32.totalorder %s213, %s214
      %p226 = scmp.eq.s32.totalorder %s36, 1
      %p227 = por %p225, %p226
      %p229 = scmp.ne.s32.totalorder %s214, %s228
      %p230 = scmp.eq.s32.totalorder %s36, 0
      %p231 = por %p229, %p230
      %s233 = sadd.s32 %s232, 1
      %p236 = scmp.eq.s32.totalorder %s30, 1
      %p237 = scmp.ne.s32.totalorder %s232, %s234
      %p238 = scmp.eq.s32.totalorder %s30, 0
      %p239 = por %p237, %p238
      %p240 = scmp.ne.s32.totalorder %s232, %s234
      %p241 = scmp.eq.s32.totalorder %s35, 1
      %p242 = por %p240, %p241
      %p243 = scmp.ne.s32.totalorder %s234, %s235
      %p244 = scmp.eq.s32.totalorder %s35, 0
      %p245 = por %p243, %p244
      %p246 = scmp.ne.s32.totalorder %s234, %s235
      %p247 = scmp.eq.s32.totalorder %s36, 1
      %p248 = por %p246, %p247
      %p250 = scmp.ne.s32.totalorder %s235, %s249
      %p251 = scmp.eq.s32.totalorder %s36, 0
      %p252 = por %p250, %p251
      %s254 = sadd.s32 %s253, 1
      %p257 = scmp.eq.s32.totalorder %s30, 1
      %p258 = scmp.ne.s32.totalorder %s253, %s255
      %p259 = scmp.eq.s32.totalorder %s30, 0
      %p260 = por %p258, %p259
      %p261 = scmp.ne.s32.totalorder %s253, %s255
      %p262 = scmp.eq.s32.totalorder %s35, 1
      %p263 = por %p261, %p262
      %p264 = scmp.ne.s32.totalorder %s255, %s256
      %p265 = scmp.eq.s32.totalorder %s35, 0
      %p266 = por %p264, %p265
      %p267 = scmp.ne.s32.totalorder %s255, %s256
      %p268 = scmp.eq.s32.totalorder %s36, 1
      %p269 = por %p267, %p268
      %p271 = scmp.ne.s32.totalorder %s256, %s270
      %p272 = scmp.eq.s32.totalorder %s36, 0
      %p273 = por %p271, %p272
      %s275 = sadd.s32 %s274, 1
      %p278 = scmp.eq.s32.totalorder %s30, 1
      %p279 = scmp.ne.s32.totalorder %s274, %s276
      %p280 = scmp.eq.s32.totalorder %s30, 0
      %p281 = por %p279, %p280
      %p282 = scmp.ne.s32.totalorder %s274, %s276
      %p283 = scmp.eq.s32.totalorder %s35, 1
      %p284 = por %p282, %p283
      %p285 = scmp.ne.s32.totalorder %s276, %s277
      %p286 = scmp.eq.s32.totalorder %s35, 0
      %p287 = por %p285, %p286
      %p288 = scmp.ne.s32.totalorder %s276, %s277
      %p289 = scmp.eq.s32.totalorder %s36, 1
      %p290 = por %p288, %p289
      %p292 = scmp.ne.s32.totalorder %s277, %s291
      %p293 = scmp.eq.s32.totalorder %s36, 0
      %p294 = por %p292, %p293
      %s296 = sadd.s32 %s295, 1
      %p299 = scmp.eq.s32.totalorder %s30, 1
      %p300 = scmp.ne.s32.totalorder %s295, %s297
      %p301 = scmp.eq.s32.totalorder %s30, 0
      %p302 = por %p300, %p301
      %p303 = scmp.ne.s32.totalorder %s295, %s297
      %p304 = scmp.eq.s32.totalorder %s35, 1
      %p305 = por %p303, %p304
      %p306 = scmp.ne.s32.totalorder %s297, %s298
      %p307 = scmp.eq.s32.totalorder %s35, 0
      %p308 = por %p306, %p307
      %p309 = scmp.ne.s32.totalorder %s297, %s298
      %p310 = scmp.eq.s32.totalorder %s36, 1
      %p311 = por %p309, %p310
      %p313 = scmp.ne.s32.totalorder %s298, %s312
      %p314 = scmp.eq.s32.totalorder %s36, 0
      %p315 = por %p313, %p314
      %s317 = sadd.s32 %s316, 1
      %p320 = scmp.eq.s32.totalorder %s30, 1
      %p321 = scmp.ne.s32.totalorder %s316, %s318
      %p322 = scmp.eq.s32.totalorder %s30, 0
      %p323 = por %p321, %p322
      %p324 = scmp.ne.s32.totalorder %s316, %s318
      %p325 = scmp.eq.s32.totalorder %s35, 1
      %p326 = por %p324, %p325
      %p327 = scmp.ne.s32.totalorder %s318, %s319
      %p328 = scmp.eq.s32.totalorder %s35, 0
      %p329 = por %p327, %p328
      %p330 = scmp.ne.s32.totalorder %s318, %s319
      %p331 = scmp.eq.s32.totalorder %s36, 1
      %p332 = por %p330, %p331
      %p334 = scmp.ne.s32.totalorder %s319, %s333
      %p335 = scmp.eq.s32.totalorder %s36, 0
      %p336 = por %p334, %p335
      %s338 = sadd.s32 %s337, 1
      %p341 = scmp.eq.s32.totalorder %s30, 1
      %p342 = scmp.ne.s32.totalorder %s337, %s339
      %p343 = scmp.eq.s32.totalorder %s30, 0
      %p344 = por %p342, %p343
      %p345 = scmp.ne.s32.totalorder %s337, %s339
      %p346 = scmp.eq.s32.totalorder %s35, 1
      %p347 = por %p345, %p346
      %p348 = scmp.ne.s32.totalorder %s339, %s340
      %p349 = scmp.eq.s32.totalorder %s35, 0
      %p350 = por %p348, %p349
      %p351 = scmp.ne.s32.totalorder %s339, %s340
      %p352 = scmp.eq.s32.totalorder %s36, 1
      %p353 = por %p351, %p352
      %p355 = scmp.ne.s32.totalorder %s340, %s354
      %p356 = scmp.eq.s32.totalorder %s36, 0
      %p357 = por %p355, %p356
      %s359 = sadd.s32 %s358, 1
      %p362 = scmp.eq.s32.totalorder %s30, 1
      %p363 = scmp.ne.s32.totalorder %s358, %s360
      %p364 = scmp.eq.s32.totalorder %s30, 0
      %p365 = por %p363, %p364
      %p366 = scmp.ne.s32.totalorder %s358, %s360
      %p367 = scmp.eq.s32.totalorder %s35, 1
      %p368 = por %p366, %p367
      %p369 = scmp.ne.s32.totalorder %s360, %s361
      %p370 = scmp.eq.s32.totalorder %s35, 0
      %p371 = por %p369, %p370
      %p372 = scmp.ne.s32.totalorder %s360, %s361
      %p373 = scmp.eq.s32.totalorder %s36, 1
      %p374 = por %p372, %p373
      %p376 = scmp.ne.s32.totalorder %s361, %s375
      %p377 = scmp.eq.s32.totalorder %s36, 0
      %p378 = por %p376, %p377
      %s380 = sadd.s32 %s379, 1
      %p383 = scmp.eq.s32.totalorder %s30, 1
      %p384 = scmp.ne.s32.totalorder %s379, %s381
      %p385 = scmp.eq.s32.totalorder %s30, 0
      %p386 = por %p384, %p385
      %p387 = scmp.ne.s32.totalorder %s379, %s381
      %p388 = scmp.eq.s32.totalorder %s35, 1
      %p389 = por %p387, %p388
      %p390 = scmp.ne.s32.totalorder %s381, %s382
      %p391 = scmp.eq.s32.totalorder %s35, 0
      %p392 = por %p390, %p391
      %p393 = scmp.ne.s32.totalorder %s381, %s382
      %p394 = scmp.eq.s32.totalorder %s36, 1
      %p395 = por %p393, %p394
      %p397 = scmp.ne.s32.totalorder %s382, %s396
      %p398 = scmp.eq.s32.totalorder %s36, 0
      %p399 = por %p397, %p398
      %s401 = sadd.s32 %s400, 1
      %p404 = scmp.eq.s32.totalorder %s30, 1
      %p405 = scmp.ne.s32.totalorder %s400, %s402
      %p406 = scmp.eq.s32.totalorder %s30, 0
      %p407 = por %p405, %p406
      %p408 = scmp.ne.s32.totalorder %s400, %s402
      %p409 = scmp.eq.s32.totalorder %s35, 1
      %p410 = por %p408, %p409
      %p411 = scmp.ne.s32.totalorder %s402, %s403
      %p412 = scmp.eq.s32.totalorder %s35, 0
      %p413 = por %p411, %p412
      %p414 = scmp.ne.s32.totalorder %s402, %s403
      %p415 = scmp.eq.s32.totalorder %s36, 1
      %p416 = por %p414, %p415
      %p418 = scmp.ne.s32.totalorder %s403, %s417
      %p419 = scmp.eq.s32.totalorder %s36, 0
      %p420 = por %p418, %p419
      %s422 = sadd.s32 %s421, 1
      %p425 = scmp.eq.s32.totalorder %s30, 1
      %p426 = scmp.ne.s32.totalorder %s421, %s423
      %p427 = scmp.eq.s32.totalorder %s30, 0
      %p428 = por %p426, %p427
      %p429 = scmp.ne.s32.totalorder %s421, %s423
      %p430 = scmp.eq.s32.totalorder %s35, 1
      %p431 = por %p429, %p430
      %p432 = scmp.ne.s32.totalorder %s423, %s424
      %p433 = scmp.eq.s32.totalorder %s35, 0
      %p434 = por %p432, %p433
      %p435 = scmp.ne.s32.totalorder %s423, %s424
      %p436 = scmp.eq.s32.totalorder %s36, 1
      %p437 = por %p435, %p436
      %p439 = scmp.ne.s32.totalorder %s424, %s438
      %p440 = scmp.eq.s32.totalorder %s36, 0
      %p441 = por %p439, %p440
      %s443 = sadd.s32 %s442, 1
      %p446 = scmp.eq.s32.totalorder %s30, 1
      %p447 = scmp.ne.s32.totalorder %s442, %s444
      %p448 = scmp.eq.s32.totalorder %s30, 0
      %p449 = por %p447, %p448
      %p450 = scmp.ne.s32.totalorder %s442, %s444
      %p451 = scmp.eq.s32.totalorder %s35, 1
      %p452 = por %p450, %p451
      %p453 = scmp.ne.s32.totalorder %s444, %s445
      %p454 = scmp.eq.s32.totalorder %s35, 0
      %p455 = por %p453, %p454
      %p456 = scmp.ne.s32.totalorder %s444, %s445
      %p457 = scmp.eq.s32.totalorder %s36, 1
      %p458 = por %p456, %p457
      %p460 = scmp.ne.s32.totalorder %s445, %s459
      %p461 = scmp.eq.s32.totalorder %s36, 0
      %p462 = por %p460, %p461
      %s464 = sadd.s32 %s463, 1
      %p467 = scmp.eq.s32.totalorder %s30, 1
      %p468 = scmp.ne.s32.totalorder %s463, %s465
      %p469 = scmp.eq.s32.totalorder %s30, 0
      %p470 = por %p468, %p469
      %p471 = scmp.ne.s32.totalorder %s463, %s465
      %p472 = scmp.eq.s32.totalorder %s35, 1
      %p473 = por %p471, %p472
      %p474 = scmp.ne.s32.totalorder %s465, %s466
      %p475 = scmp.eq.s32.totalorder %s35, 0
      %p476 = por %p474, %p475
      %p477 = scmp.ne.s32.totalorder %s465, %s466
      %p478 = scmp.eq.s32.totalorder %s36, 1
      %p479 = por %p477, %p478
      %p481 = scmp.ne.s32.totalorder %s466, %s480
      %p482 = scmp.eq.s32.totalorder %s36, 0
      %p483 = por %p481, %p482
      %s484 = ssub.s32 %s30, %s37
      %p485 = scmp.eq.s32.totalorder %s484, 0
      %s487 = sadd.s32 %s486, 1
      %s488 = scalar_select %p485, %s486, %s487
      %p491 = pneg %p485
      %p492 = scmp.eq.s32.totalorder %s30, 1
      %p493 = por %p491, %p492
      %p494 = scmp.ne.s32.totalorder %s486, %s489
      %p495 = scmp.eq.s32.totalorder %s30, 0
      %p496 = por %p494, %p495
      %p497 = scmp.ne.s32.totalorder %s486, %s489
      %p498 = scmp.eq.s32.totalorder %s35, 1
      %p499 = por %p497, %p498
      %p500 = scmp.ne.s32.totalorder %s489, %s490
      %p501 = scmp.eq.s32.totalorder %s35, 0
      %p502 = por %p500, %p501
      %p503 = scmp.ne.s32.totalorder %s489, %s490
      %p504 = scmp.eq.s32.totalorder %s36, 1
      %p505 = por %p503, %p504
      %p507 = scmp.ne.s32.totalorder %s490, %s506
      %p508 = scmp.eq.s32.totalorder %s36, 0
      %p509 = por %p507, %p508
      %p510 = scmp.le.s32.totalorder 1, %s30
      %p511 = scmp.lt.s32.totalorder %s30, 3
      %p512 = pnand %p510, %p511
      %p513 = pneg %p512
      // Predicated region
      $region9: #{image_feature_extractor.1} parent=5 // pred_check
        _
      $region10: #{image_feature_extractor.1} parent=5 // pred_check_branch
        %515 = sbr.rel (%p512) target = $region12
      $region11: #{image_feature_extractor.1} parent=5 // pred_region
        %s516 = ssub.s32 %s30, 1
        // Predicated region
        $region13: #{image_feature_extractor.1} parent=11 // pred_check
          %p517 = pneg %p77
        $region14: #{image_feature_extractor.1} parent=11 // pred_check_branch
          %519 = sbr.rel (%p517) target = $region16
        $region15: #{image_feature_extractor.1} parent=11 // pred_region
          _
        $region16: #{image_feature_extractor.1} parent=11 // pred_fallthru
          _
        // Predicated region
        $region17: #{image_feature_extractor.1} parent=11 // pred_check
          %p520 = pneg %p98
        $region18: #{image_feature_extractor.1} parent=11 // pred_check_branch
          %522 = sbr.rel (%p520) target = $region20
        $region19: #{image_feature_extractor.1} parent=11 // pred_region
          _
        $region20: #{image_feature_extractor.1} parent=11 // pred_fallthru
          _
        // Predicated region
        $region21: #{image_feature_extractor.1} parent=11 // pred_check
          %p523 = pneg %p119
        $region22: #{image_feature_extractor.1} parent=11 // pred_check_branch
          %525 = sbr.rel (%p523) target = $region24
        $region23: #{image_feature_extractor.1} parent=11 // pred_region
          _
        $region24: #{image_feature_extractor.1} parent=11 // pred_fallthru
          _
        // Predicated region
        $region25: #{image_feature_extractor.1} parent=11 // pred_check
          %p526 = pneg %p140
        $region26: #{image_feature_extractor.1} parent=11 // pred_check_branch
          %528 = sbr.rel (%p526) target = $region28
        $region27: #{image_feature_extractor.1} parent=11 // pred_region
          _
        $region28: #{image_feature_extractor.1} parent=11 // pred_fallthru
          _
        // Predicated region
        $region29: #{image_feature_extractor.1} parent=11 // pred_check
          %p529 = pneg %p161
        $region30: #{image_feature_extractor.1} parent=11 // pred_check_branch
          %531 = sbr.rel (%p529) target = $region32
        $region31: #{image_feature_extractor.1} parent=11 // pred_region
          _
        $region32: #{image_feature_extractor.1} parent=11 // pred_fallthru
          _
        // Predicated region
        $region33: #{image_feature_extractor.1} parent=11 // pred_check
          %p532 = pneg %p182
        $region34: #{image_feature_extractor.1} parent=11 // pred_check_branch
          %534 = sbr.rel (%p532) target = $region36
        $region35: #{image_feature_extractor.1} parent=11 // pred_region
          _
        $region36: #{image_feature_extractor.1} parent=11 // pred_fallthru
          _
        // Predicated region
        $region37: #{image_feature_extractor.1} parent=11 // pred_check
          %p535 = pneg %p203
        $region38: #{image_feature_extractor.1} parent=11 // pred_check_branch
          %537 = sbr.rel (%p535) target = $region40
        $region39: #{image_feature_extractor.1} parent=11 // pred_region
          _
        $region40: #{image_feature_extractor.1} parent=11 // pred_fallthru
          _
        // Predicated region
        $region41: #{image_feature_extractor.1} parent=11 // pred_check
          %p538 = pneg %p224
        $region42: #{image_feature_extractor.1} parent=11 // pred_check_branch
          %540 = sbr.rel (%p538) target = $region44
        $region43: #{image_feature_extractor.1} parent=11 // pred_region
          _
        $region44: #{image_feature_extractor.1} parent=11 // pred_fallthru
          _
        // Predicated region
        $region45: #{image_feature_extractor.1} parent=11 // pred_check
          %p541 = pneg %p245
        $region46: #{image_feature_extractor.1} parent=11 // pred_check_branch
          %543 = sbr.rel (%p541) target = $region48
        $region47: #{image_feature_extractor.1} parent=11 // pred_region
          _
        $region48: #{image_feature_extractor.1} parent=11 // pred_fallthru
          _
        // Predicated region
        $region49: #{image_feature_extractor.1} parent=11 // pred_check
          %p544 = pneg %p266
        $region50: #{image_feature_extractor.1} parent=11 // pred_check_branch
          %546 = sbr.rel (%p544) target = $region52
        $region51: #{image_feature_extractor.1} parent=11 // pred_region
          _
        $region52: #{image_feature_extractor.1} parent=11 // pred_fallthru
          _
        // Predicated region
        $region53: #{image_feature_extractor.1} parent=11 // pred_check
          %p547 = pneg %p287
        $region54: #{image_feature_extractor.1} parent=11 // pred_check_branch
          %549 = sbr.rel (%p547) target = $region56
        $region55: #{image_feature_extractor.1} parent=11 // pred_region
          _
        $region56: #{image_feature_extractor.1} parent=11 // pred_fallthru
          _
        // Predicated region
        $region57: #{image_feature_extractor.1} parent=11 // pred_check
          %p550 = pneg %p308
        $region58: #{image_feature_extractor.1} parent=11 // pred_check_branch
          %552 = sbr.rel (%p550) target = $region60
        $region59: #{image_feature_extractor.1} parent=11 // pred_region
          _
        $region60: #{image_feature_extractor.1} parent=11 // pred_fallthru
          _
        // Predicated region
        $region61: #{image_feature_extractor.1} parent=11 // pred_check
          %p553 = pneg %p329
        $region62: #{image_feature_extractor.1} parent=11 // pred_check_branch
          %555 = sbr.rel (%p553) target = $region64
        $region63: #{image_feature_extractor.1} parent=11 // pred_region
          _
        $region64: #{image_feature_extractor.1} parent=11 // pred_fallthru
          _
        // Predicated region
        $region65: #{image_feature_extractor.1} parent=11 // pred_check
          %p556 = pneg %p350
        $region66: #{image_feature_extractor.1} parent=11 // pred_check_branch
          %558 = sbr.rel (%p556) target = $region68
        $region67: #{image_feature_extractor.1} parent=11 // pred_region
          _
        $region68: #{image_feature_extractor.1} parent=11 // pred_fallthru
          _
        // Predicated region
        $region69: #{image_feature_extractor.1} parent=11 // pred_check
          %p559 = pneg %p371
        $region70: #{image_feature_extractor.1} parent=11 // pred_check_branch
          %561 = sbr.rel (%p559) target = $region72
        $region71: #{image_feature_extractor.1} parent=11 // pred_region
          _
        $region72: #{image_feature_extractor.1} parent=11 // pred_fallthru
          _
        // Predicated region
        $region73: #{image_feature_extractor.1} parent=11 // pred_check
          %p562 = pneg %p392
        $region74: #{image_feature_extractor.1} parent=11 // pred_check_branch
          %564 = sbr.rel (%p562) target = $region76
        $region75: #{image_feature_extractor.1} parent=11 // pred_region
          _
        $region76: #{image_feature_extractor.1} parent=11 // pred_fallthru
          _
        // Predicated region
        $region77: #{image_feature_extractor.1} parent=11 // pred_check
          %p565 = pneg %p413
        $region78: #{image_feature_extractor.1} parent=11 // pred_check_branch
          %567 = sbr.rel (%p565) target = $region80
        $region79: #{image_feature_extractor.1} parent=11 // pred_region
          _
        $region80: #{image_feature_extractor.1} parent=11 // pred_fallthru
          _
        // Predicated region
        $region81: #{image_feature_extractor.1} parent=11 // pred_check
          %p568 = pneg %p434
        $region82: #{image_feature_extractor.1} parent=11 // pred_check_branch
          %570 = sbr.rel (%p568) target = $region84
        $region83: #{image_feature_extractor.1} parent=11 // pred_region
          _
        $region84: #{image_feature_extractor.1} parent=11 // pred_fallthru
          _
        // Predicated region
        $region85: #{image_feature_extractor.1} parent=11 // pred_check
          %p571 = pneg %p455
        $region86: #{image_feature_extractor.1} parent=11 // pred_check_branch
          %573 = sbr.rel (%p571) target = $region88
        $region87: #{image_feature_extractor.1} parent=11 // pred_region
          _
        $region88: #{image_feature_extractor.1} parent=11 // pred_fallthru
          _
        // Predicated region
        $region89: #{image_feature_extractor.1} parent=11 // pred_check
          %p574 = pneg %p476
        $region90: #{image_feature_extractor.1} parent=11 // pred_check_branch
          %576 = sbr.rel (%p574) target = $region92
        $region91: #{image_feature_extractor.1} parent=11 // pred_region
          _
        $region92: #{image_feature_extractor.1} parent=11 // pred_fallthru
          _
      $region12: #{image_feature_extractor.1} parent=5 // pred_fallthru
        _
      %p577 = scmp.lt.s32.totalorder %s30, 2
      // Predicated region
      $region93: #{image_feature_extractor.1} parent=5 // pred_check
        %p578 = pneg %p577
      $region94: #{image_feature_extractor.1} parent=5 // pred_check_branch
        %580 = sbr.rel (%p578) target = $region96
      $region95: #{image_feature_extractor.1} parent=5 // pred_region
        // Predicated region
        $region97: #{image_feature_extractor.1} parent=95 // pred_check
          %p581 = pneg %p50
        $region98: #{image_feature_extractor.1} parent=95 // pred_check_branch
          %583 = sbr.rel (%p581) target = $region100
        $region99: #{image_feature_extractor.1} parent=95 // pred_region
          %s584 = smul.u32 64, %s30
          %p585 = scmp.lt.s32.totalorder %s584, 127
          %s586 = scalar_select %p585, %s584, 127
          %s587 = smul.addr %s586, 4
          %s588 = scalar_lea.vmem %s0, %s587
          %s589 = smul.u32 64, %s30
        $region100: #{image_feature_extractor.1} parent=95 // pred_fallthru
          _
      $region96: #{image_feature_extractor.1} parent=5 // pred_fallthru
        _
      %p590 = scmp.le.s32.totalorder 1, %s30
      %p591 = scmp.lt.s32.totalorder %s30, 3
      %p592 = pnand %p590, %p591
      %p593 = pneg %p592
      // Predicated region
      $region101: #{image_feature_extractor.1} parent=5 // pred_check
        _
      $region102: #{image_feature_extractor.1} parent=5 // pred_check_branch
        %595 = sbr.rel (%p592) target = $region104
      $region103: #{image_feature_extractor.1} parent=5 // pred_region
        %s596 = ssub.s32 %s30, 1
        %s597 = smul.u32 64, %s35
        %p598 = scmp.lt.s32.totalorder %s597, 127
        %s599 = scalar_select %p598, %s597, 127
        %s600 = smul.addr %s599, 4
        %s601 = scalar_lea.vmem %s0, %s600
        %p602 = pneg %p56
        %p603 = pneg %p53
        %p604 = pneg %p77
        %p605 = pneg %p74
        %p606 = pneg %p98
        %p607 = pneg %p95
        %p608 = pneg %p119
        %p609 = pneg %p116
        %p610 = pneg %p140
        %p611 = pneg %p137
        %p612 = pneg %p161
        %p613 = pneg %p158
        %p614 = pneg %p182
        %p615 = pneg %p179
        %p616 = pneg %p203
        %p617 = pneg %p200
        %p618 = pneg %p224
        %p619 = pneg %p221
        %p620 = pneg %p245
        %p621 = pneg %p242
        %p622 = pneg %p266
        %p623 = pneg %p263
        %p624 = pneg %p287
        %p625 = pneg %p284
        %p626 = pneg %p308
        %p627 = pneg %p305
        %p628 = pneg %p329
        %p629 = pneg %p326
        %p630 = pneg %p350
        %p631 = pneg %p347
        %p632 = pneg %p371
        %p633 = pneg %p368
        %p634 = pneg %p392
        %p635 = pneg %p389
        %p636 = pneg %p413
        %p637 = pneg %p410
        %p638 = pneg %p434
        %p639 = pneg %p431
        %p640 = pneg %p455
        %p641 = pneg %p452
        %p642 = pneg %p476
        %p643 = pneg %p473
        %p644 = pneg %p502
        %p645 = pneg %p499
        %s646 = sand.u32 %s489, 1
        %s647 = scalar_lea.sflag [#allocation7], %s646
        %s648 = sand.u32 %s489, 1
        %s649 = smul.addr %s648, 2
        %s650 = scalar_lea.vmem [#allocation6], %s649
        %s651 = smul.u32 64, %s35
        %p652 = scmp.lt.s32.totalorder %s651, 127
        %s653 = scalar_select %p652, %s651, 127
        %s654 = smul.addr %s653, 4
        %s655 = scalar_lea.vmem %s0, %s654
        %s656 = smul.u32 64, %s35
        %vm658 = vcmask 261120
        %659 = vst.msk [vmem:[#allocation2] sm:$0xff] %vm658, 0.0
        %660 = vst.msk [vmem:[#allocation2 + $0x8] sm:$0xff] %vm658, 0.0
        %vm661 = vcmask 254976
        %662 = vst.msk [vmem:[#allocation2 + $0x10] sm:$0x3] %vm661, 0.0
        %663 = vst.msk [vmem:[#allocation2 + $0x1b0] sm:$0xff] %vm658, 0.0
        %664 = vst.msk [vmem:[#allocation2 + $0x1b8] sm:$0xff] %vm658, 0.0
        %665 = vst.msk [vmem:[#allocation2 + $0x1c0] sm:$0x3] %vm661, 0.0
        %s666 = scalar_lea.vmem [#allocation2], 408
        %667 = vst.msk [vmem:[%s666] sm:$0xff] %vm658, 0.0
        %668 = vst.msk [vmem:[%s666 + $0x8] sm:$0xff] %vm658, 0.0
        %669 = vst.msk [vmem:[%s666 + $0x10] sm:$0x3] %vm661, 0.0
        %670 = vst.msk [vmem:[%s666 + $0x1b0] sm:$0xff] %vm658, 0.0
        %671 = vst.msk [vmem:[%s666 + $0x1b8] sm:$0xff] %vm658, 0.0
        %672 = vst.msk [vmem:[%s666 + $0x1c0] sm:$0x3] %vm661, 0.0
        %vm673 = vcmask 253952
        %674 = vst.msk [vmem:[#allocation2] sm:$0x1] %vm673, 0.0
        %675 = vst.msk [vmem:[#allocation2 + $0x18] sm:$0x1] %vm673, 0.0
        %676 = vst.msk [vmem:[#allocation2 + $0x30] sm:$0x1] %vm673, 0.0
        %677 = vst.msk [vmem:[#allocation2 + $0x48] sm:$0x1] %vm673, 0.0
        %678 = vst.msk [vmem:[#allocation2 + $0x60] sm:$0x1] %vm673, 0.0
        %679 = vst.msk [vmem:[#allocation2 + $0x78] sm:$0x1] %vm673, 0.0
        %680 = vst.msk [vmem:[#allocation2 + $0x90] sm:$0x1] %vm673, 0.0
        %681 = vst.msk [vmem:[#allocation2 + $0xa8] sm:$0x1] %vm673, 0.0
        %682 = vst.msk [vmem:[#allocation2 + $0xc0] sm:$0x1] %vm673, 0.0
        %683 = vst.msk [vmem:[#allocation2 + $0xd8] sm:$0x1] %vm673, 0.0
        %684 = vst.msk [vmem:[#allocation2 + $0xf0] sm:$0x1] %vm673, 0.0
        %685 = vst.msk [vmem:[#allocation2 + $0x108] sm:$0x1] %vm673, 0.0
        %686 = vst.msk [vmem:[#allocation2 + $0x120] sm:$0x1] %vm673, 0.0
        %687 = vst.msk [vmem:[#allocation2 + $0x138] sm:$0x1] %vm673, 0.0
        %688 = vst.msk [vmem:[#allocation2 + $0x150] sm:$0x1] %vm673, 0.0
        %689 = vst.msk [vmem:[#allocation2 + $0x168] sm:$0x1] %vm673, 0.0
        %690 = vst.msk [vmem:[#allocation2 + $0x180] sm:$0x1] %vm673, 0.0
        %691 = vst.msk [vmem:[#allocation2 + $0x198] sm:$0x1] %vm673, 0.0
        %692 = vst.msk [vmem:[#allocation2 + $0x1b0] sm:$0x1] %vm673, 0.0
        %693 = vst.msk [vmem:[#allocation2 + $0x1c8] sm:$0x1] %vm673, 0.0
        %694 = vst.msk [vmem:[#allocation2 + $0x1e0] sm:$0x1] %vm673, 0.0
        %695 = vst.msk [vmem:[#allocation2 + $0x1f8] sm:$0x1] %vm673, 0.0
        %696 = vst.msk [vmem:[#allocation2 + $0x210] sm:$0x1] %vm673, 0.0
        %697 = vst.msk [vmem:[#allocation2 + $0x228] sm:$0x1] %vm673, 0.0
        %698 = vst.msk [vmem:[#allocation2 + $0x240] sm:$0x1] %vm673, 0.0
        %699 = vst.msk [vmem:[#allocation2 + $0x258] sm:$0x1] %vm673, 0.0
        %700 = vst.msk [vmem:[#allocation2 + $0x270] sm:$0x1] %vm673, 0.0
        %701 = vst.msk [vmem:[#allocation2 + $0x288] sm:$0x1] %vm673, 0.0
        %702 = vst.msk [vmem:[#allocation2 + $0x2a0] sm:$0x1] %vm673, 0.0
        %703 = vst.msk [vmem:[#allocation2 + $0x2b8] sm:$0x1] %vm673, 0.0
        %704 = vst.msk [vmem:[#allocation2 + $0x2d0] sm:$0x1] %vm673, 0.0
        %705 = vst.msk [vmem:[#allocation2 + $0x2e8] sm:$0x1] %vm673, 0.0
        %706 = vst.msk [vmem:[#allocation2 + $0x300] sm:$0x1] %vm673, 0.0
        %707 = vst.msk [vmem:[#allocation2 + $0x318] sm:$0x1] %vm673, 0.0
        %708 = vst.msk [vmem:[#allocation2 + $0x330] sm:$0x1] %vm673, 0.0
        %709 = vst.msk [vmem:[#allocation2 + $0x348] sm:$0x1] %vm673, 0.0
        %710 = vst.msk [vmem:[#allocation2 + $0x11] sm:$0x1] %vm673, 0.0
        %711 = vst.msk [vmem:[#allocation2 + $0x29] sm:$0x1] %vm673, 0.0
        %712 = vst.msk [vmem:[#allocation2 + $0x41] sm:$0x1] %vm673, 0.0
        %713 = vst.msk [vmem:[#allocation2 + $0x59] sm:$0x1] %vm673, 0.0
        %714 = vst.msk [vmem:[#allocation2 + $0x71] sm:$0x1] %vm673, 0.0
        %715 = vst.msk [vmem:[#allocation2 + $0x89] sm:$0x1] %vm673, 0.0
        %716 = vst.msk [vmem:[#allocation2 + $0xa1] sm:$0x1] %vm673, 0.0
        %717 = vst.msk [vmem:[#allocation2 + $0xb9] sm:$0x1] %vm673, 0.0
        %718 = vst.msk [vmem:[#allocation2 + $0xd1] sm:$0x1] %vm673, 0.0
        %719 = vst.msk [vmem:[#allocation2 + $0xe9] sm:$0x1] %vm673, 0.0
        %720 = vst.msk [vmem:[#allocation2 + $0x101] sm:$0x1] %vm673, 0.0
        %721 = vst.msk [vmem:[#allocation2 + $0x119] sm:$0x1] %vm673, 0.0
        %722 = vst.msk [vmem:[#allocation2 + $0x131] sm:$0x1] %vm673, 0.0
        %723 = vst.msk [vmem:[#allocation2 + $0x149] sm:$0x1] %vm673, 0.0
        %724 = vst.msk [vmem:[#allocation2 + $0x161] sm:$0x1] %vm673, 0.0
        %725 = vst.msk [vmem:[#allocation2 + $0x179] sm:$0x1] %vm673, 0.0
        %726 = vst.msk [vmem:[#allocation2 + $0x191] sm:$0x1] %vm673, 0.0
        %727 = vst.msk [vmem:[#allocation2 + $0x1a9] sm:$0x1] %vm673, 0.0
        %728 = vst.msk [vmem:[#allocation2 + $0x1c1] sm:$0x1] %vm673, 0.0
        %729 = vst.msk [vmem:[#allocation2 + $0x1d9] sm:$0x1] %vm673, 0.0
        %730 = vst.msk [vmem:[#allocation2 + $0x1f1] sm:$0x1] %vm673, 0.0
        %731 = vst.msk [vmem:[#allocation2 + $0x209] sm:$0x1] %vm673, 0.0
        %732 = vst.msk [vmem:[#allocation2 + $0x221] sm:$0x1] %vm673, 0.0
        %733 = vst.msk [vmem:[#allocation2 + $0x239] sm:$0x1] %vm673, 0.0
        %734 = vst.msk [vmem:[#allocation2 + $0x251] sm:$0x1] %vm673, 0.0
        %735 = vst.msk [vmem:[#allocation2 + $0x269] sm:$0x1] %vm673, 0.0
        %736 = vst.msk [vmem:[#allocation2 + $0x281] sm:$0x1] %vm673, 0.0
        %737 = vst.msk [vmem:[#allocation2 + $0x299] sm:$0x1] %vm673, 0.0
        %738 = vst.msk [vmem:[#allocation2 + $0x2b1] sm:$0x1] %vm673, 0.0
        %739 = vst.msk [vmem:[#allocation2 + $0x2c9] sm:$0x1] %vm673, 0.0
        %740 = vst.msk [vmem:[#allocation2 + $0x2e1] sm:$0x1] %vm673, 0.0
        %741 = vst.msk [vmem:[#allocation2 + $0x2f9] sm:$0x1] %vm673, 0.0
        %742 = vst.msk [vmem:[#allocation2 + $0x311] sm:$0x1] %vm673, 0.0
        %743 = vst.msk [vmem:[#allocation2 + $0x329] sm:$0x1] %vm673, 0.0
        %744 = vst.msk [vmem:[#allocation2 + $0x341] sm:$0x1] %vm673, 0.0
        %745 = vst.msk [vmem:[#allocation2 + $0x359] sm:$0x1] %vm673, 0.0
        %vm746 = vcmask 523264
        %747 = vst.msk [vmem:[#allocation3] sm:$0xff] %vm746, 0.0
        %vm748 = vcmask 517120
        %749 = vst.msk [vmem:[#allocation3 + $0x8] sm:$0x3] %vm748, 0.0
        %750 = vst.msk [vmem:[#allocation3 + $0xa0] sm:$0xff] %vm746, 0.0
        %751 = vst.msk [vmem:[#allocation3 + $0xa8] sm:$0x3] %vm748, 0.0
        %s752 = scalar_lea.vmem [#allocation3], 144
        %753 = vst.msk [vmem:[%s752] sm:$0xff] %vm746, 0.0
        %754 = vst.msk [vmem:[%s752 + $0x8] sm:$0x3] %vm748, 0.0
        %755 = vst.msk [vmem:[%s752 + $0xa0] sm:$0xff] %vm746, 0.0
        %756 = vst.msk [vmem:[%s752 + $0xa8] sm:$0x3] %vm748, 0.0
        %vm757 = vcmask 516096
        %758 = vst.msk [vmem:[#allocation3] sm:$0x1] %vm757, 0.0
        %759 = vst.msk [vmem:[#allocation3 + $0x10] sm:$0x1] %vm757, 0.0
        %760 = vst.msk [vmem:[#allocation3 + $0x20] sm:$0x1] %vm757, 0.0
        %761 = vst.msk [vmem:[#allocation3 + $0x30] sm:$0x1] %vm757, 0.0
        %762 = vst.msk [vmem:[#allocation3 + $0x40] sm:$0x1] %vm757, 0.0
        %763 = vst.msk [vmem:[#allocation3 + $0x50] sm:$0x1] %vm757, 0.0
        %764 = vst.msk [vmem:[#allocation3 + $0x60] sm:$0x1] %vm757, 0.0
        %765 = vst.msk [vmem:[#allocation3 + $0x70] sm:$0x1] %vm757, 0.0
        %766 = vst.msk [vmem:[#allocation3 + $0x80] sm:$0x1] %vm757, 0.0
        %767 = vst.msk [vmem:[#allocation3 + $0x90] sm:$0x1] %vm757, 0.0
        %768 = vst.msk [vmem:[#allocation3 + $0xa0] sm:$0x1] %vm757, 0.0
        %769 = vst.msk [vmem:[#allocation3 + $0xb0] sm:$0x1] %vm757, 0.0
        %770 = vst.msk [vmem:[#allocation3 + $0xc0] sm:$0x1] %vm757, 0.0
        %771 = vst.msk [vmem:[#allocation3 + $0xd0] sm:$0x1] %vm757, 0.0
        %772 = vst.msk [vmem:[#allocation3 + $0xe0] sm:$0x1] %vm757, 0.0
        %773 = vst.msk [vmem:[#allocation3 + $0xf0] sm:$0x1] %vm757, 0.0
        %774 = vst.msk [vmem:[#allocation3 + $0x100] sm:$0x1] %vm757, 0.0
        %775 = vst.msk [vmem:[#allocation3 + $0x110] sm:$0x1] %vm757, 0.0
        %776 = vst.msk [vmem:[#allocation3 + $0x120] sm:$0x1] %vm757, 0.0
        %777 = vst.msk [vmem:[#allocation3 + $0x130] sm:$0x1] %vm757, 0.0
        %778 = vst.msk [vmem:[#allocation3 + $0x9] sm:$0x1] %vm757, 0.0
        %779 = vst.msk [vmem:[#allocation3 + $0x19] sm:$0x1] %vm757, 0.0
        %780 = vst.msk [vmem:[#allocation3 + $0x29] sm:$0x1] %vm757, 0.0
        %781 = vst.msk [vmem:[#allocation3 + $0x39] sm:$0x1] %vm757, 0.0
        %782 = vst.msk [vmem:[#allocation3 + $0x49] sm:$0x1] %vm757, 0.0
        %783 = vst.msk [vmem:[#allocation3 + $0x59] sm:$0x1] %vm757, 0.0
        %784 = vst.msk [vmem:[#allocation3 + $0x69] sm:$0x1] %vm757, 0.0
        %785 = vst.msk [vmem:[#allocation3 + $0x79] sm:$0x1] %vm757, 0.0
        %786 = vst.msk [vmem:[#allocation3 + $0x89] sm:$0x1] %vm757, 0.0
        %787 = vst.msk [vmem:[#allocation3 + $0x99] sm:$0x1] %vm757, 0.0
        %788 = vst.msk [vmem:[#allocation3 + $0xa9] sm:$0x1] %vm757, 0.0
        %789 = vst.msk [vmem:[#allocation3 + $0xb9] sm:$0x1] %vm757, 0.0
        %790 = vst.msk [vmem:[#allocation3 + $0xc9] sm:$0x1] %vm757, 0.0
        %791 = vst.msk [vmem:[#allocation3 + $0xd9] sm:$0x1] %vm757, 0.0
        %792 = vst.msk [vmem:[#allocation3 + $0xe9] sm:$0x1] %vm757, 0.0
        %793 = vst.msk [vmem:[#allocation3 + $0xf9] sm:$0x1] %vm757, 0.0
        %794 = vst.msk [vmem:[#allocation3 + $0x109] sm:$0x1] %vm757, 0.0
        %795 = vst.msk [vmem:[#allocation3 + $0x119] sm:$0x1] %vm757, 0.0
        %796 = vst.msk [vmem:[#allocation3 + $0x129] sm:$0x1] %vm757, 0.0
        %797 = vst.msk [vmem:[#allocation3 + $0x139] sm:$0x1] %vm757, 0.0
        %798 = vst [vmem:[#allocation4] sm:$0x3f] 0.0
        %799 = vst [vmem:[#allocation4 + $0x30] sm:$0x3f] 0.0
        %s800 = scalar_lea.vmem [#allocation4], 40
        %801 = vst [vmem:[%s800] sm:$0x3f] 0.0
        %802 = vst [vmem:[%s800 + $0x30] sm:$0x3f] 0.0
        %803 = vst [vmem:[#allocation4] sm:$0x1] 0.0
        %804 = vst [vmem:[#allocation4 + $0x8] sm:$0x1] 0.0
        %805 = vst [vmem:[#allocation4 + $0x10] sm:$0x1] 0.0
        %806 = vst [vmem:[#allocation4 + $0x18] sm:$0x1] 0.0
        %807 = vst [vmem:[#allocation4 + $0x20] sm:$0x1] 0.0
        %808 = vst [vmem:[#allocation4 + $0x28] sm:$0x1] 0.0
        %809 = vst [vmem:[#allocation4 + $0x30] sm:$0x1] 0.0
        %810 = vst [vmem:[#allocation4 + $0x38] sm:$0x1] 0.0
        %811 = vst [vmem:[#allocation4 + $0x40] sm:$0x1] 0.0
        %812 = vst [vmem:[#allocation4 + $0x48] sm:$0x1] 0.0
        %813 = vst [vmem:[#allocation4 + $0x50] sm:$0x1] 0.0
        %814 = vst [vmem:[#allocation4 + $0x58] sm:$0x1] 0.0
        %815 = vst [vmem:[#allocation4 + $0x5] sm:$0x1] 0.0
        %816 = vst [vmem:[#allocation4 + $0xd] sm:$0x1] 0.0
        %817 = vst [vmem:[#allocation4 + $0x15] sm:$0x1] 0.0
        %818 = vst [vmem:[#allocation4 + $0x1d] sm:$0x1] 0.0
        %819 = vst [vmem:[#allocation4 + $0x25] sm:$0x1] 0.0
        %820 = vst [vmem:[#allocation4 + $0x2d] sm:$0x1] 0.0
        %821 = vst [vmem:[#allocation4 + $0x35] sm:$0x1] 0.0
        %822 = vst [vmem:[#allocation4 + $0x3d] sm:$0x1] 0.0
        %823 = vst [vmem:[#allocation4 + $0x45] sm:$0x1] 0.0
        %824 = vst [vmem:[#allocation4 + $0x4d] sm:$0x1] 0.0
        %825 = vst [vmem:[#allocation4 + $0x55] sm:$0x1] 0.0
        %826 = vst [vmem:[#allocation4 + $0x5d] sm:$0x1] 0.0
        %827 = vst [vmem:[#allocation5] sm:$0xff] 0.0
        %828 = vst [vmem:[#allocation5 + $0x20] sm:$0xff] 0.0
        %s829 = scalar_lea.vmem [#allocation5], 24
        %830 = vst [vmem:[%s829] sm:$0xff] 0.0
        %831 = vst [vmem:[%s829 + $0x20] sm:$0xff] 0.0
        %v832 = vlaneseq
        %vm833 = vcmp.ge.s32.totalorder %v832, 0
        %vm834 = vcmp.lt.s32.totalorder %v832, 256
        %vm835 = vmand %vm833, %vm834
        %836 = vst.msk [vmem:[#allocation5] ss:$4 sm:$0x3] %vm835, 0.0
        %s837 = scalar_lea.vmem [#allocation5], 8
        %838 = vst.msk [vmem:[%s837] ss:$4 sm:$0x3] %vm835, 0.0
        %s839 = scalar_lea.vmem [#allocation5], 16
        %840 = vst.msk [vmem:[%s839] ss:$4 sm:$0x3] %vm835, 0.0
        %s841 = scalar_lea.vmem [#allocation5], 24
        %842 = vst.msk [vmem:[%s841] ss:$4 sm:$0x3] %vm835, 0.0
        %s843 = scalar_lea.vmem [#allocation5], 32
        %844 = vst.msk [vmem:[%s843] ss:$4 sm:$0x3] %vm835, 0.0
        %s845 = scalar_lea.vmem [#allocation5], 40
        %846 = vst.msk [vmem:[%s845] ss:$4 sm:$0x3] %vm835, 0.0
        %s847 = scalar_lea.vmem [#allocation5], 48
        %848 = vst.msk [vmem:[%s847] ss:$4 sm:$0x3] %vm835, 0.0
        %s849 = scalar_lea.vmem [#allocation5], 56
        %850 = vst.msk [vmem:[%s849] ss:$4 sm:$0x3] %vm835, 0.0
        %s851 = scalar_lea.vmem [#allocation5], 3
        %852 = vst.msk [vmem:[%s851] ss:$4 sm:$0x3] %vm835, 0.0
        %s853 = scalar_lea.vmem [#allocation5], 11
        %854 = vst.msk [vmem:[%s853] ss:$4 sm:$0x3] %vm835, 0.0
        %s855 = scalar_lea.vmem [#allocation5], 19
        %856 = vst.msk [vmem:[%s855] ss:$4 sm:$0x3] %vm835, 0.0
        %s857 = scalar_lea.vmem [#allocation5], 27
        %858 = vst.msk [vmem:[%s857] ss:$4 sm:$0x3] %vm835, 0.0
        %s859 = scalar_lea.vmem [#allocation5], 35
        %860 = vst.msk [vmem:[%s859] ss:$4 sm:$0x3] %vm835, 0.0
        %s861 = scalar_lea.vmem [#allocation5], 43
        %862 = vst.msk [vmem:[%s861] ss:$4 sm:$0x3] %vm835, 0.0
        %s863 = scalar_lea.vmem [#allocation5], 51
        %864 = vst.msk [vmem:[%s863] ss:$4 sm:$0x3] %vm835, 0.0
        %s865 = scalar_lea.vmem [#allocation5], 59
        %866 = vst.msk [vmem:[%s865] ss:$4 sm:$0x3] %vm835, 0.0
        %v867 = vld [vmem:[%s655] sm:$0xf]
        %v868 = vld [vmem:[%s655 + $0x4] sm:$0xf]
        %v869 = vld [vmem:[%s655 + $0x8] sm:$0xf]
        %v870 = vld [vmem:[%s655 + $0xc] sm:$0xf]
        %v871 = vld [vmem:[%s655 + $0x10] sm:$0xf]
        %v872 = vld [vmem:[%s655 + $0x14] sm:$0xf]
        %v873 = vld [vmem:[%s655 + $0x18] sm:$0xf]
        %v874 = vld [vmem:[%s655 + $0x1c] sm:$0xf]
        %v875 = vld [vmem:[%s655 + $0x20] sm:$0xf]
        %v876 = vld [vmem:[%s655 + $0x24] sm:$0xf]
        %v877 = vld [vmem:[%s655 + $0x28] sm:$0xf]
        %v878 = vld [vmem:[%s655 + $0x2c] sm:$0xf]
        %v879 = vld [vmem:[%s655 + $0x30] sm:$0xf]
        %v880 = vld [vmem:[%s655 + $0x34] sm:$0xf]
        %v881 = vld [vmem:[%s655 + $0x38] sm:$0xf]
        %v882 = vld [vmem:[%s655 + $0x3c] sm:$0xf]
        %v883 = vld [vmem:[%s655 + $0x40] sm:$0xf]
        %v884 = vld [vmem:[%s655 + $0x44] sm:$0xf]
        %v885 = vld [vmem:[%s655 + $0x48] sm:$0xf]
        %v886 = vld [vmem:[%s655 + $0x4c] sm:$0xf]
        %v887 = vld [vmem:[%s655 + $0x50] sm:$0xf]
        %v888 = vld [vmem:[%s655 + $0x54] sm:$0xf]
        %v889 = vld [vmem:[%s655 + $0x58] sm:$0xf]
        %v890 = vld [vmem:[%s655 + $0x5c] sm:$0xf]
        %v891 = vld [vmem:[%s655 + $0x60] sm:$0xf]
        %v892 = vld [vmem:[%s655 + $0x64] sm:$0xf]
        %v893 = vld [vmem:[%s655 + $0x68] sm:$0xf]
        %v894 = vld [vmem:[%s655 + $0x6c] sm:$0xf]
        %v895 = vld [vmem:[%s655 + $0x70] sm:$0xf]
        %v896 = vld [vmem:[%s655 + $0x74] sm:$0xf]
        %v897 = vld [vmem:[%s655 + $0x78] sm:$0xf]
        %v898 = vld [vmem:[%s655 + $0x7c] sm:$0xf]
        %v899 = vld [vmem:[%s655 + $0x80] sm:$0xf]
        %v900 = vld [vmem:[%s655 + $0x84] sm:$0xf]
        %v901 = vld [vmem:[%s655 + $0x88] sm:$0xf]
        %v902 = vld [vmem:[%s655 + $0x8c] sm:$0xf]
        %v903 = vld [vmem:[%s655 + $0x90] sm:$0xf]
        %v904 = vld [vmem:[%s655 + $0x94] sm:$0xf]
        %v905 = vld [vmem:[%s655 + $0x98] sm:$0xf]
        %v906 = vld [vmem:[%s655 + $0x9c] sm:$0xf]
        %v907 = vld [vmem:[%s655 + $0xa0] sm:$0xf]
        %v908 = vld [vmem:[%s655 + $0xa4] sm:$0xf]
        %v909 = vld [vmem:[%s655 + $0xa8] sm:$0xf]
        %v910 = vld [vmem:[%s655 + $0xac] sm:$0xf]
        %v911 = vld [vmem:[%s655 + $0xb0] sm:$0xf]
        %v912 = vld [vmem:[%s655 + $0xb4] sm:$0xf]
        %v913 = vld [vmem:[%s655 + $0xb8] sm:$0xf]
        %v914 = vld [vmem:[%s655 + $0xbc] sm:$0xf]
        %v915 = vld [vmem:[%s655 + $0xc0] sm:$0xf]
        %v916 = vld [vmem:[%s655 + $0xc4] sm:$0xf]
        %v917 = vld [vmem:[%s655 + $0xc8] sm:$0xf]
        %v918 = vld [vmem:[%s655 + $0xcc] sm:$0xf]
        %v919 = vld [vmem:[%s655 + $0xd0] sm:$0xf]
        %v920 = vld [vmem:[%s655 + $0xd4] sm:$0xf]
        %v921 = vld [vmem:[%s655 + $0xd8] sm:$0xf]
        %v922 = vld [vmem:[%s655 + $0xdc] sm:$0xf]
        %v923 = vld [vmem:[%s655 + $0xe0] sm:$0xf]
        %v924 = vld [vmem:[%s655 + $0xe4] sm:$0xf]
        %v925 = vld [vmem:[%s655 + $0xe8] sm:$0xf]
        %v926 = vld [vmem:[%s655 + $0xec] sm:$0xf]
        %v927 = vld [vmem:[%s655 + $0xf0] sm:$0xf]
        %v928 = vld [vmem:[%s655 + $0xf4] sm:$0xf]
        %v929 = vld [vmem:[%s655 + $0xf8] sm:$0xf]
        %v930 = vld [vmem:[%s655 + $0xfc] sm:$0xf]
        %v931 = vld [vmem:[%s1] sm:$0xf]
        %v932 = vld [vmem:[%s1 + $0x4] sm:$0xf]
        %v933 = vld [vmem:[%s1 + $0x8] sm:$0xf]
        %v934 = vld [vmem:[%s1 + $0xc] sm:$0x3]
        %v935 = vld [vmem:[%s2] sm:$0x1]
        %v937 = vlaneseq
        %v938 = vshrl.u32 %v937, 7
        %v939 = vsub.s32 0, %v938
        %v940 = vrot.slane %v935, %v939
        %v1006 = vunpack.c.l.b16 %v867
        %v1007 = vunpack.c.l.b16 %v868
        %v1008 = vunpack.c.l.b16 %v869
        %v1009 = vunpack.c.l.b16 %v870
        %v1010 = vunpack.c.l.b16 %v871
        %v1011 = vunpack.c.l.b16 %v872
        %v1012 = vunpack.c.l.b16 %v873
        %v1013 = vunpack.c.l.b16 %v874
        %v1014 = vunpack.c.l.b16 %v875
        %v1015 = vunpack.c.l.b16 %v876
        %v1016 = vunpack.c.l.b16 %v877
        %v1017 = vunpack.c.l.b16 %v878
        %v1018 = vunpack.c.l.b16 %v879
        %v1019 = vunpack.c.l.b16 %v880
        %v1020 = vunpack.c.l.b16 %v881
        %v1021 = vunpack.c.l.b16 %v882
        %v1022 = vunpack.c.l.b16 %v883
        %v1023 = vunpack.c.l.b16 %v884
        %v1024 = vunpack.c.l.b16 %v885
        %v1025 = vunpack.c.l.b16 %v886
        %v1026 = vunpack.c.l.b16 %v887
        %v1027 = vunpack.c.l.b16 %v888
        %v1028 = vunpack.c.l.b16 %v889
        %v1029 = vunpack.c.l.b16 %v890
        %v1030 = vunpack.c.l.b16 %v891
        %v1031 = vunpack.c.l.b16 %v892
        %v1032 = vunpack.c.l.b16 %v893
        %v1033 = vunpack.c.l.b16 %v894
        %v1034 = vunpack.c.l.b16 %v895
        %v1035 = vunpack.c.l.b16 %v896
        %v1036 = vunpack.c.l.b16 %v897
        %v1037 = vunpack.c.l.b16 %v898
        %v1038 = vunpack.c.l.b16 %v899
        %v1039 = vunpack.c.l.b16 %v900
        %v1040 = vunpack.c.l.b16 %v901
        %v1041 = vunpack.c.l.b16 %v902
        %v1042 = vunpack.c.l.b16 %v903
        %v1043 = vunpack.c.l.b16 %v904
        %v1044 = vunpack.c.l.b16 %v905
        %v1045 = vunpack.c.l.b16 %v906
        %v1046 = vunpack.c.l.b16 %v907
        %v1047 = vunpack.c.l.b16 %v908
        %v1048 = vunpack.c.l.b16 %v909
        %v1049 = vunpack.c.l.b16 %v910
        %v1050 = vunpack.c.l.b16 %v911
        %v1051 = vunpack.c.l.b16 %v912
        %v1052 = vunpack.c.l.b16 %v913
        %v1053 = vunpack.c.l.b16 %v914
        %v1054 = vunpack.c.l.b16 %v915
        %v1055 = vunpack.c.l.b16 %v916
        %v1056 = vunpack.c.l.b16 %v917
        %v1057 = vunpack.c.l.b16 %v918
        %v1058 = vunpack.c.l.b16 %v919
        %v1059 = vunpack.c.l.b16 %v920
        %v1060 = vunpack.c.l.b16 %v921
        %v1061 = vunpack.c.l.b16 %v922
        %v1062 = vunpack.c.l.b16 %v923
        %v1063 = vunpack.c.l.b16 %v924
        %v1064 = vunpack.c.l.b16 %v925
        %v1065 = vunpack.c.l.b16 %v926
        %v1066 = vunpack.c.l.b16 %v927
        %v1067 = vunpack.c.l.b16 %v928
        %v1068 = vunpack.c.l.b16 %v929
        %v1069 = vunpack.c.l.b16 %v930
        %v1070 = vpack.c.b16 %v1007, %v1006
        %v1071 = vpack.c.b16 %v1009, %v1008
        %v1072 = vpack.c.b16 %v1011, %v1010
        %v1073 = vpack.c.b16 %v1013, %v1012
        %v1074 = vpack.c.b16 %v1015, %v1014
        %v1075 = vpack.c.b16 %v1017, %v1016
        %v1076 = vpack.c.b16 %v1019, %v1018
        %v1077 = vpack.c.b16 %v1021, %v1020
        %v1078 = vpack.c.b16 %v1023, %v1022
        %v1079 = vpack.c.b16 %v1025, %v1024
        %v1080 = vpack.c.b16 %v1027, %v1026
        %v1081 = vpack.c.b16 %v1029, %v1028
        %v1082 = vpack.c.b16 %v1031, %v1030
        %v1083 = vpack.c.b16 %v1033, %v1032
        %v1084 = vpack.c.b16 %v1035, %v1034
        %v1085 = vpack.c.b16 %v1037, %v1036
        %v1086 = vpack.c.b16 %v1039, %v1038
        %v1087 = vpack.c.b16 %v1041, %v1040
        %v1088 = vpack.c.b16 %v1043, %v1042
        %v1089 = vpack.c.b16 %v1045, %v1044
        %v1090 = vpack.c.b16 %v1047, %v1046
        %v1091 = vpack.c.b16 %v1049, %v1048
        %v1092 = vpack.c.b16 %v1051, %v1050
        %v1093 = vpack.c.b16 %v1053, %v1052
        %v1094 = vpack.c.b16 %v1055, %v1054
        %v1095 = vpack.c.b16 %v1057, %v1056
        %v1096 = vpack.c.b16 %v1059, %v1058
        %v1097 = vpack.c.b16 %v1061, %v1060
        %v1098 = vpack.c.b16 %v1063, %v1062
        %v1099 = vpack.c.b16 %v1065, %v1064
        %v1100 = vpack.c.b16 %v1067, %v1066
        %v1101 = vpack.c.b16 %v1069, %v1068
        %v1106 = vunpack.c.l.b16 %v931
        %v1107 = vunpack.c.l.b16 %v932
        %v1108 = vunpack.c.l.b16 %v933
        %v1109 = vunpack.c.l.b16 %v934
        %v1110 = vpack.c.b16 %v1107, %v1106
        %v1111 = vpack.c.b16 %v1109, %v1108
        %vm1113 = vcmask 220160
        %v1115 = vsel %vm1113, %v1070, 0
        %v1118 = vsel %vm1113, %v1071, 0
        %v1121 = vsel %vm1113, %v1072, 0
        %v1124 = vsel %vm1113, %v1073, 0
        %v1127 = vsel %vm1113, %v1074, 0
        %v1130 = vsel %vm1113, %v1075, 0
        %v1133 = vsel %vm1113, %v1076, 0
        %v1136 = vsel %vm1113, %v1077, 0
        %v1139 = vsel %vm1113, %v1078, 0
        %v1142 = vsel %vm1113, %v1079, 0
        %v1145 = vsel %vm1113, %v1080, 0
        %v1148 = vsel %vm1113, %v1081, 0
        %v1151 = vsel %vm1113, %v1082, 0
        %v1154 = vsel %vm1113, %v1083, 0
        %v1157 = vsel %vm1113, %v1084, 0
        %v1160 = vsel %vm1113, %v1085, 0
        %v1163 = vsel %vm1113, %v1086, 0
        %v1166 = vsel %vm1113, %v1087, 0
        %v1169 = vsel %vm1113, %v1088, 0
        %v1172 = vsel %vm1113, %v1089, 0
        %v1175 = vsel %vm1113, %v1090, 0
        %v1178 = vsel %vm1113, %v1091, 0
        %v1181 = vsel %vm1113, %v1092, 0
        %v1184 = vsel %vm1113, %v1093, 0
        %v1187 = vsel %vm1113, %v1094, 0
        %v1190 = vsel %vm1113, %v1095, 0
        %v1193 = vsel %vm1113, %v1096, 0
        %v1196 = vsel %vm1113, %v1097, 0
        %v1199 = vsel %vm1113, %v1098, 0
        %v1202 = vsel %vm1113, %v1099, 0
        %v1205 = vsel %vm1113, %v1100, 0
        %v1208 = vsel %vm1113, %v1101, 0
        %vm1210 = vcmask 1044480
        %vm1211 = vcmask 1045504
        %v1212 = vsel %vm1210, 4294967295, 65535
        %v1213 = vsel %vm1211, %v1212, 0
        %v1215 = vand.u32 %v1111, %v1213
        %1217 = vmatprep.subr.bf16.mxu0 0
        %1218 = vmatpush1.bf16.msra.mxu0 0
        %1219 = vmatprep.subr.bf16.mxu0 0
        %1220 = vmatpush1.bf16.msra.mxu0 0
        %1221 = vmatprep.subr.bf16.mxu0 0
        %1222 = vmatpush1.bf16.msra.mxu0 0
        %1223 = vmatprep.subr.bf16.mxu0 0
        %1224 = vmatpush1.bf16.msra.mxu0 0
        %1225 = vmatprep.subr.bf16.mxu0 0
        %1226 = vmatpush1.bf16.msra.mxu0 0
        %1227 = vmatprep.subr.bf16.mxu0 0
        %1228 = vmatpush1.bf16.msra.mxu0 0
        %1229 = vmatprep.subr.bf16.mxu0 0
        %1230 = vmatpush1.bf16.msra.mxu0 %v1215
        %1231 = vmatprep.subr.bf16.mxu0 0
        %1232 = vmatpush1.bf16.msra.mxu0 %v1110
        %1233 = vmatprep.subr.bf16.mxu0 0
        %1234 = vmatpush2.bf16.msra.mxu0 0
        %1235 = vmatprep.subr.bf16.mxu0 0
        %1236 = vmatpush2.bf16.msra.mxu0 0
        %1237 = vmatprep.subr.bf16.mxu0 0
        %1238 = vmatpush2.bf16.msra.mxu0 0
        %1239 = vmatprep.subr.bf16.mxu0 0
        %1240 = vmatpush2.bf16.msra.mxu0 0
        %1241 = vmatprep.subr.bf16.mxu0 0
        %1242 = vmatpush2.bf16.msra.mxu0 0
        %1243 = vmatprep.subr.bf16.mxu0 0
        %1244 = vmatpush2.bf16.msra.mxu0 0
        %1245 = vmatprep.subr.bf16.mxu0 0
        %1246 = vmatpush2.bf16.msra.mxu0 0
        %1247 = vmatprep.subr.bf16.mxu0 0
        %1248 = vmatpush2.bf16.msra.mxu0 0
        %1249 = vmatprep.mubr.bf16.mxu0 0
        %1250 = vmatmul.mubr.bf16.gmra.mxu0 %v1115
        %v1251 = vpop.f32.mrf.mxu0
        %v1252 = vadd.f32 %v940, %v1251
        %v1253 = vpop.f32.mrf.mxu0
        %v1254 = vpop.f32.mrf.mxu0
        %v1255 = vadd.f32 %v940, %v1254
        %v1256 = vpop.f32.mrf.mxu0
        %1257 = vmatprep.mubr.bf16.mxu0 0
        %1258 = vmatmul.mubr.bf16.gmra.mxu0 %v1118
        %v1259 = vpop.f32.mrf.mxu0
        %v1260 = vadd.f32 %v940, %v1259
        %v1261 = vpop.f32.mrf.mxu0
        %v1262 = vpop.f32.mrf.mxu0
        %v1263 = vadd.f32 %v940, %v1262
        %v1264 = vpop.f32.mrf.mxu0
        %1265 = vmatprep.mubr.bf16.mxu0 0
        %1266 = vmatmul.mubr.bf16.gmra.mxu0 %v1121
        %v1267 = vpop.f32.mrf.mxu0
        %v1268 = vadd.f32 %v940, %v1267
        %v1269 = vpop.f32.mrf.mxu0
        %v1270 = vpop.f32.mrf.mxu0
        %v1271 = vadd.f32 %v940, %v1270
        %v1272 = vpop.f32.mrf.mxu0
        %1273 = vmatprep.mubr.bf16.mxu0 0
        %1274 = vmatmul.mubr.bf16.gmra.mxu0 %v1124
        %v1275 = vpop.f32.mrf.mxu0
        %v1276 = vadd.f32 %v940, %v1275
        %v1277 = vpop.f32.mrf.mxu0
        %v1278 = vpop.f32.mrf.mxu0
        %v1279 = vadd.f32 %v940, %v1278
        %v1280 = vpop.f32.mrf.mxu0
        %1281 = vmatprep.mubr.bf16.mxu0 0
        %1282 = vmatmul.mubr.bf16.gmra.mxu0 %v1127
        %v1283 = vpop.f32.mrf.mxu0
        %v1284 = vadd.f32 %v940, %v1283
        %v1285 = vpop.f32.mrf.mxu0
        %v1286 = vpop.f32.mrf.mxu0
        %v1287 = vadd.f32 %v940, %v1286
        %v1288 = vpop.f32.mrf.mxu0
        %1289 = vmatprep.mubr.bf16.mxu0 0
        %1290 = vmatmul.mubr.bf16.gmra.mxu0 %v1130
        %v1291 = vpop.f32.mrf.mxu0
        %v1292 = vadd.f32 %v940, %v1291
        %v1293 = vpop.f32.mrf.mxu0
        %v1294 = vpop.f32.mrf.mxu0
        %v1295 = vadd.f32 %v940, %v1294
        %v1296 = vpop.f32.mrf.mxu0
        %1297 = vmatprep.mubr.bf16.mxu0 0
        %1298 = vmatmul.mubr.bf16.gmra.mxu0 %v1133
        %v1299 = vpop.f32.mrf.mxu0
        %v1300 = vadd.f32 %v940, %v1299
        %v1301 = vpop.f32.mrf.mxu0
        %v1302 = vpop.f32.mrf.mxu0
        %v1303 = vadd.f32 %v940, %v1302
        %v1304 = vpop.f32.mrf.mxu0
        %1305 = vmatprep.mubr.bf16.mxu0 0
        %1306 = vmatmul.mubr.bf16.gmra.mxu0 %v1136
        %v1307 = vpop.f32.mrf.mxu0
        %v1308 = vadd.f32 %v940, %v1307
        %v1309 = vpop.f32.mrf.mxu0
        %v1310 = vpop.f32.mrf.mxu0
        %v1311 = vadd.f32 %v940, %v1310
        %v1312 = vpop.f32.mrf.mxu0
        %1313 = vmatprep.mubr.bf16.mxu0 0
        %1314 = vmatmul.mubr.bf16.gmra.mxu0 %v1139
        %v1315 = vpop.f32.mrf.mxu0
        %v1316 = vadd.f32 %v940, %v1315
        %v1317 = vpop.f32.mrf.mxu0
        %v1318 = vpop.f32.mrf.mxu0
        %v1319 = vadd.f32 %v940, %v1318
        %v1320 = vpop.f32.mrf.mxu0
        %1321 = vmatprep.mubr.bf16.mxu0 0
        %1322 = vmatmul.mubr.bf16.gmra.mxu0 %v1142
        %v1323 = vpop.f32.mrf.mxu0
        %v1324 = vadd.f32 %v940, %v1323
        %v1325 = vpop.f32.mrf.mxu0
        %v1326 = vpop.f32.mrf.mxu0
        %v1327 = vadd.f32 %v940, %v1326
        %v1328 = vpop.f32.mrf.mxu0
        %1329 = vmatprep.mubr.bf16.mxu0 0
        %1330 = vmatmul.mubr.bf16.gmra.mxu0 %v1145
        %v1331 = vpop.f32.mrf.mxu0
        %v1332 = vadd.f32 %v940, %v1331
        %v1333 = vpop.f32.mrf.mxu0
        %v1334 = vpop.f32.mrf.mxu0
        %v1335 = vadd.f32 %v940, %v1334
        %v1336 = vpop.f32.mrf.mxu0
        %1337 = vmatprep.mubr.bf16.mxu0 0
        %1338 = vmatmul.mubr.bf16.gmra.mxu0 %v1148
        %v1339 = vpop.f32.mrf.mxu0
        %v1340 = vadd.f32 %v940, %v1339
        %v1341 = vpop.f32.mrf.mxu0
        %v1342 = vpop.f32.mrf.mxu0
        %v1343 = vadd.f32 %v940, %v1342
        %v1344 = vpop.f32.mrf.mxu0
        %1345 = vmatprep.mubr.bf16.mxu0 0
        %1346 = vmatmul.mubr.bf16.gmra.mxu0 %v1151
        %v1347 = vpop.f32.mrf.mxu0
        %v1348 = vadd.f32 %v940, %v1347
        %v1349 = vpop.f32.mrf.mxu0
        %v1350 = vpop.f32.mrf.mxu0
        %v1351 = vadd.f32 %v940, %v1350
        %v1352 = vpop.f32.mrf.mxu0
        %1353 = vmatprep.mubr.bf16.mxu0 0
        %1354 = vmatmul.mubr.bf16.gmra.mxu0 %v1154
        %v1355 = vpop.f32.mrf.mxu0
        %v1356 = vadd.f32 %v940, %v1355
        %v1357 = vpop.f32.mrf.mxu0
        %v1358 = vpop.f32.mrf.mxu0
        %v1359 = vadd.f32 %v940, %v1358
        %v1360 = vpop.f32.mrf.mxu0
        %1361 = vmatprep.mubr.bf16.mxu0 0
        %1362 = vmatmul.mubr.bf16.gmra.mxu0 %v1157
        %v1363 = vpop.f32.mrf.mxu0
        %v1364 = vadd.f32 %v940, %v1363
        %v1365 = vpop.f32.mrf.mxu0
        %v1366 = vpop.f32.mrf.mxu0
        %v1367 = vadd.f32 %v940, %v1366
        %v1368 = vpop.f32.mrf.mxu0
        %1369 = vmatprep.mubr.bf16.mxu0 0
        %1370 = vmatmul.mubr.bf16.gmra.mxu0 %v1160
        %v1371 = vpop.f32.mrf.mxu0
        %v1372 = vadd.f32 %v940, %v1371
        %v1373 = vpop.f32.mrf.mxu0
        %v1374 = vpop.f32.mrf.mxu0
        %v1375 = vadd.f32 %v940, %v1374
        %v1376 = vpop.f32.mrf.mxu0
        %1377 = vmatprep.mubr.bf16.mxu0 0
        %1378 = vmatmul.mubr.bf16.gmra.mxu0 %v1163
        %v1379 = vpop.f32.mrf.mxu0
        %v1380 = vadd.f32 %v940, %v1379
        %v1381 = vpop.f32.mrf.mxu0
        %v1382 = vpop.f32.mrf.mxu0
        %v1383 = vadd.f32 %v940, %v1382
        %v1384 = vpop.f32.mrf.mxu0
        %1385 = vmatprep.mubr.bf16.mxu0 0
        %1386 = vmatmul.mubr.bf16.gmra.mxu0 %v1166
        %v1387 = vpop.f32.mrf.mxu0
        %v1388 = vadd.f32 %v940, %v1387
        %v1389 = vpop.f32.mrf.mxu0
        %v1390 = vpop.f32.mrf.mxu0
        %v1391 = vadd.f32 %v940, %v1390
        %v1392 = vpop.f32.mrf.mxu0
        %1393 = vmatprep.mubr.bf16.mxu0 0
        %1394 = vmatmul.mubr.bf16.gmra.mxu0 %v1169
        %v1395 = vpop.f32.mrf.mxu0
        %v1396 = vadd.f32 %v940, %v1395
        %v1397 = vpop.f32.mrf.mxu0
        %v1398 = vpop.f32.mrf.mxu0
        %v1399 = vadd.f32 %v940, %v1398
        %v1400 = vpop.f32.mrf.mxu0
        %1401 = vmatprep.mubr.bf16.mxu0 0
        %1402 = vmatmul.mubr.bf16.gmra.mxu0 %v1172
        %v1403 = vpop.f32.mrf.mxu0
        %v1404 = vadd.f32 %v940, %v1403
        %v1405 = vpop.f32.mrf.mxu0
        %v1406 = vpop.f32.mrf.mxu0
        %v1407 = vadd.f32 %v940, %v1406
        %v1408 = vpop.f32.mrf.mxu0
        %1409 = vmatprep.mubr.bf16.mxu0 0
        %1410 = vmatmul.mubr.bf16.gmra.mxu0 %v1175
        %v1411 = vpop.f32.mrf.mxu0
        %v1412 = vadd.f32 %v940, %v1411
        %v1413 = vpop.f32.mrf.mxu0
        %v1414 = vpop.f32.mrf.mxu0
        %v1415 = vadd.f32 %v940, %v1414
        %v1416 = vpop.f32.mrf.mxu0
        %1417 = vmatprep.mubr.bf16.mxu0 0
        %1418 = vmatmul.mubr.bf16.gmra.mxu0 %v1178
        %v1419 = vpop.f32.mrf.mxu0
        %v1420 = vadd.f32 %v940, %v1419
        %v1421 = vpop.f32.mrf.mxu0
        %v1422 = vpop.f32.mrf.mxu0
        %v1423 = vadd.f32 %v940, %v1422
        %v1424 = vpop.f32.mrf.mxu0
        %1425 = vmatprep.mubr.bf16.mxu0 0
        %1426 = vmatmul.mubr.bf16.gmra.mxu0 %v1181
        %v1427 = vpop.f32.mrf.mxu0
        %v1428 = vadd.f32 %v940, %v1427
        %v1429 = vpop.f32.mrf.mxu0
        %v1430 = vpop.f32.mrf.mxu0
        %v1431 = vadd.f32 %v940, %v1430
        %v1432 = vpop.f32.mrf.mxu0
        %1433 = vmatprep.mubr.bf16.mxu0 0
        %1434 = vmatmul.mubr.bf16.gmra.mxu0 %v1184
        %v1435 = vpop.f32.mrf.mxu0
        %v1436 = vadd.f32 %v940, %v1435
        %v1437 = vpop.f32.mrf.mxu0
        %v1438 = vpop.f32.mrf.mxu0
        %v1439 = vadd.f32 %v940, %v1438
        %v1440 = vpop.f32.mrf.mxu0
        %1441 = vmatprep.mubr.bf16.mxu0 0
        %1442 = vmatmul.mubr.bf16.gmra.mxu0 %v1187
        %v1443 = vpop.f32.mrf.mxu0
        %v1444 = vadd.f32 %v940, %v1443
        %v1445 = vpop.f32.mrf.mxu0
        %v1446 = vpop.f32.mrf.mxu0
        %v1447 = vadd.f32 %v940, %v1446
        %v1448 = vpop.f32.mrf.mxu0
        %1449 = vmatprep.mubr.bf16.mxu0 0
        %1450 = vmatmul.mubr.bf16.gmra.mxu0 %v1190
        %v1451 = vpop.f32.mrf.mxu0
        %v1452 = vadd.f32 %v940, %v1451
        %v1453 = vpop.f32.mrf.mxu0
        %v1454 = vpop.f32.mrf.mxu0
        %v1455 = vadd.f32 %v940, %v1454
        %v1456 = vpop.f32.mrf.mxu0
        %1457 = vmatprep.mubr.bf16.mxu0 0
        %1458 = vmatmul.mubr.bf16.gmra.mxu0 %v1193
        %v1459 = vpop.f32.mrf.mxu0
        %v1460 = vadd.f32 %v940, %v1459
        %v1461 = vpop.f32.mrf.mxu0
        %v1462 = vpop.f32.mrf.mxu0
        %v1463 = vadd.f32 %v940, %v1462
        %v1464 = vpop.f32.mrf.mxu0
        %1465 = vmatprep.mubr.bf16.mxu0 0
        %1466 = vmatmul.mubr.bf16.gmra.mxu0 %v1196
        %v1467 = vpop.f32.mrf.mxu0
        %v1468 = vadd.f32 %v940, %v1467
        %v1469 = vpop.f32.mrf.mxu0
        %v1470 = vpop.f32.mrf.mxu0
        %v1471 = vadd.f32 %v940, %v1470
        %v1472 = vpop.f32.mrf.mxu0
        %1473 = vmatprep.mubr.bf16.mxu0 0
        %1474 = vmatmul.mubr.bf16.gmra.mxu0 %v1199
        %v1475 = vpop.f32.mrf.mxu0
        %v1476 = vadd.f32 %v940, %v1475
        %v1477 = vpop.f32.mrf.mxu0
        %v1478 = vpop.f32.mrf.mxu0
        %v1479 = vadd.f32 %v940, %v1478
        %v1480 = vpop.f32.mrf.mxu0
        %1481 = vmatprep.mubr.bf16.mxu0 0
        %1482 = vmatmul.mubr.bf16.gmra.mxu0 %v1202
        %v1483 = vpop.f32.mrf.mxu0
        %v1484 = vadd.f32 %v940, %v1483
        %v1485 = vpop.f32.mrf.mxu0
        %v1486 = vpop.f32.mrf.mxu0
        %v1487 = vadd.f32 %v940, %v1486
        %v1488 = vpop.f32.mrf.mxu0
        %1489 = vmatprep.mubr.bf16.mxu0 0
        %1490 = vmatmul.mubr.bf16.gmra.mxu0 %v1205
        %v1491 = vpop.f32.mrf.mxu0
        %v1492 = vadd.f32 %v940, %v1491
        %v1493 = vpop.f32.mrf.mxu0
        %v1494 = vpop.f32.mrf.mxu0
        %v1495 = vadd.f32 %v940, %v1494
        %v1496 = vpop.f32.mrf.mxu0
        %1497 = vmatprep.mubr.bf16.mxu0 0
        %1498 = vmatmul.mubr.bf16.gmra.mxu0 %v1208
        %v1499 = vpop.f32.mrf.mxu0
        %v1500 = vadd.f32 %v940, %v1499
        %v1501 = vpop.f32.mrf.mxu0
        %v1502 = vpop.f32.mrf.mxu0
        %v1503 = vadd.f32 %v940, %v1502
        %v1504 = vpop.f32.mrf.mxu0
        %1505 = vdwg.mxu0
        %v1506 = vmax.f32 %v1252, 0.0
        %v1507 = vmax.f32 %v1255, 0.0
        %v1508 = vmax.f32 %v1260, 0.0
        %v1509 = vmax.f32 %v1263, 0.0
        %v1510 = vmax.f32 %v1268, 0.0
        %v1511 = vmax.f32 %v1271, 0.0
        %v1512 = vmax.f32 %v1276, 0.0
        %v1513 = vmax.f32 %v1279, 0.0
        %v1514 = vmax.f32 %v1284, 0.0
        %v1515 = vmax.f32 %v1287, 0.0
        %v1516 = vmax.f32 %v1292, 0.0
        %v1517 = vmax.f32 %v1295, 0.0
        %v1518 = vmax.f32 %v1300, 0.0
        %v1519 = vmax.f32 %v1303, 0.0
        %v1520 = vmax.f32 %v1308, 0.0
        %v1521 = vmax.f32 %v1311, 0.0
        %v1522 = vmax.f32 %v1316, 0.0
        %v1523 = vmax.f32 %v1319, 0.0
        %v1524 = vmax.f32 %v1324, 0.0
        %v1525 = vmax.f32 %v1327, 0.0
        %v1526 = vmax.f32 %v1332, 0.0
        %v1527 = vmax.f32 %v1335, 0.0
        %v1528 = vmax.f32 %v1340, 0.0
        %v1529 = vmax.f32 %v1343, 0.0
        %v1530 = vmax.f32 %v1348, 0.0
        %v1531 = vmax.f32 %v1351, 0.0
        %v1532 = vmax.f32 %v1356, 0.0
        %v1533 = vmax.f32 %v1359, 0.0
        %v1534 = vmax.f32 %v1364, 0.0
        %v1535 = vmax.f32 %v1367, 0.0
        %v1536 = vmax.f32 %v1372, 0.0
        %v1537 = vmax.f32 %v1375, 0.0
        %v1538 = vmax.f32 %v1380, 0.0
        %v1539 = vmax.f32 %v1383, 0.0
        %v1540 = vmax.f32 %v1388, 0.0
        %v1541 = vmax.f32 %v1391, 0.0
        %v1542 = vmax.f32 %v1396, 0.0
        %v1543 = vmax.f32 %v1399, 0.0
        %v1544 = vmax.f32 %v1404, 0.0
        %v1545 = vmax.f32 %v1407, 0.0
        %v1546 = vmax.f32 %v1412, 0.0
        %v1547 = vmax.f32 %v1415, 0.0
        %v1548 = vmax.f32 %v1420, 0.0
        %v1549 = vmax.f32 %v1423, 0.0
        %v1550 = vmax.f32 %v1428, 0.0
        %v1551 = vmax.f32 %v1431, 0.0
        %v1552 = vmax.f32 %v1436, 0.0
        %v1553 = vmax.f32 %v1439, 0.0
        %v1554 = vmax.f32 %v1444, 0.0
        %v1555 = vmax.f32 %v1447, 0.0
        %v1556 = vmax.f32 %v1452, 0.0
        %v1557 = vmax.f32 %v1455, 0.0
        %v1558 = vmax.f32 %v1460, 0.0
        %v1559 = vmax.f32 %v1463, 0.0
        %v1560 = vmax.f32 %v1468, 0.0
        %v1561 = vmax.f32 %v1471, 0.0
        %v1562 = vmax.f32 %v1476, 0.0
        %v1563 = vmax.f32 %v1479, 0.0
        %v1564 = vmax.f32 %v1484, 0.0
        %v1565 = vmax.f32 %v1487, 0.0
        %v1566 = vmax.f32 %v1492, 0.0
        %v1567 = vmax.f32 %v1495, 0.0
        %v1568 = vmax.f32 %v1500, 0.0
        %v1569 = vmax.f32 %v1503, 0.0
        %s1570 = scalar_lea.vmem [#allocation2], 24
        %1571 = vst.msk [vmem:[%s1570 + $0x1] sm:$0xff] %vm658, %v1506
        %1572 = vst.msk [vmem:[%s1570 + $0x9] sm:$0xff] %vm658, %v1507
        %1573 = vst.msk [vmem:[%s1570 + $0x19] sm:$0xff] %vm658, %v1508
        %1574 = vst.msk [vmem:[%s1570 + $0x21] sm:$0xff] %vm658, %v1509
        %1575 = vst.msk [vmem:[%s1570 + $0x31] sm:$0xff] %vm658, %v1510
        %1576 = vst.msk [vmem:[%s1570 + $0x39] sm:$0xff] %vm658, %v1511
        %1577 = vst.msk [vmem:[%s1570 + $0x49] sm:$0xff] %vm658, %v1512
        %1578 = vst.msk [vmem:[%s1570 + $0x51] sm:$0xff] %vm658, %v1513
        %1579 = vst.msk [vmem:[%s1570 + $0x61] sm:$0xff] %vm658, %v1514
        %1580 = vst.msk [vmem:[%s1570 + $0x69] sm:$0xff] %vm658, %v1515
        %1581 = vst.msk [vmem:[%s1570 + $0x79] sm:$0xff] %vm658, %v1516
        %1582 = vst.msk [vmem:[%s1570 + $0x81] sm:$0xff] %vm658, %v1517
        %1583 = vst.msk [vmem:[%s1570 + $0x91] sm:$0xff] %vm658, %v1518
        %1584 = vst.msk [vmem:[%s1570 + $0x99] sm:$0xff] %vm658, %v1519
        %1585 = vst.msk [vmem:[%s1570 + $0xa9] sm:$0xff] %vm658, %v1520
        %1586 = vst.msk [vmem:[%s1570 + $0xb1] sm:$0xff] %vm658, %v1521
        %1587 = vst.msk [vmem:[%s1570 + $0xc1] sm:$0xff] %vm658, %v1522
        %1588 = vst.msk [vmem:[%s1570 + $0xc9] sm:$0xff] %vm658, %v1523
        %1589 = vst.msk [vmem:[%s1570 + $0xd9] sm:$0xff] %vm658, %v1524
        %1590 = vst.msk [vmem:[%s1570 + $0xe1] sm:$0xff] %vm658, %v1525
        %1591 = vst.msk [vmem:[%s1570 + $0xf1] sm:$0xff] %vm658, %v1526
        %1592 = vst.msk [vmem:[%s1570 + $0xf9] sm:$0xff] %vm658, %v1527
        %1593 = vst.msk [vmem:[%s1570 + $0x109] sm:$0xff] %vm658, %v1528
        %1594 = vst.msk [vmem:[%s1570 + $0x111] sm:$0xff] %vm658, %v1529
        %1595 = vst.msk [vmem:[%s1570 + $0x121] sm:$0xff] %vm658, %v1530
        %1596 = vst.msk [vmem:[%s1570 + $0x129] sm:$0xff] %vm658, %v1531
        %1597 = vst.msk [vmem:[%s1570 + $0x139] sm:$0xff] %vm658, %v1532
        %1598 = vst.msk [vmem:[%s1570 + $0x141] sm:$0xff] %vm658, %v1533
        %1599 = vst.msk [vmem:[%s1570 + $0x151] sm:$0xff] %vm658, %v1534
        %1600 = vst.msk [vmem:[%s1570 + $0x159] sm:$0xff] %vm658, %v1535
        %1601 = vst.msk [vmem:[%s1570 + $0x169] sm:$0xff] %vm658, %v1536
        %1602 = vst.msk [vmem:[%s1570 + $0x171] sm:$0xff] %vm658, %v1537
        %1603 = vst.msk [vmem:[%s1570 + $0x1b1] sm:$0xff] %vm658, %v1538
        %1604 = vst.msk [vmem:[%s1570 + $0x1b9] sm:$0xff] %vm658, %v1539
        %1605 = vst.msk [vmem:[%s1570 + $0x1c9] sm:$0xff] %vm658, %v1540
        %1606 = vst.msk [vmem:[%s1570 + $0x1d1] sm:$0xff] %vm658, %v1541
        %1607 = vst.msk [vmem:[%s1570 + $0x1e1] sm:$0xff] %vm658, %v1542
        %1608 = vst.msk [vmem:[%s1570 + $0x1e9] sm:$0xff] %vm658, %v1543
        %1609 = vst.msk [vmem:[%s1570 + $0x1f9] sm:$0xff] %vm658, %v1544
        %1610 = vst.msk [vmem:[%s1570 + $0x201] sm:$0xff] %vm658, %v1545
        %1611 = vst.msk [vmem:[%s1570 + $0x211] sm:$0xff] %vm658, %v1546
        %1612 = vst.msk [vmem:[%s1570 + $0x219] sm:$0xff] %vm658, %v1547
        %1613 = vst.msk [vmem:[%s1570 + $0x229] sm:$0xff] %vm658, %v1548
        %1614 = vst.msk [vmem:[%s1570 + $0x231] sm:$0xff] %vm658, %v1549
        %1615 = vst.msk [vmem:[%s1570 + $0x241] sm:$0xff] %vm658, %v1550
        %1616 = vst.msk [vmem:[%s1570 + $0x249] sm:$0xff] %vm658, %v1551
        %1617 = vst.msk [vmem:[%s1570 + $0x259] sm:$0xff] %vm658, %v1552
        %1618 = vst.msk [vmem:[%s1570 + $0x261] sm:$0xff] %vm658, %v1553
        %1619 = vst.msk [vmem:[%s1570 + $0x271] sm:$0xff] %vm658, %v1554
        %1620 = vst.msk [vmem:[%s1570 + $0x279] sm:$0xff] %vm658, %v1555
        %1621 = vst.msk [vmem:[%s1570 + $0x289] sm:$0xff] %vm658, %v1556
        %1622 = vst.msk [vmem:[%s1570 + $0x291] sm:$0xff] %vm658, %v1557
        %1623 = vst.msk [vmem:[%s1570 + $0x2a1] sm:$0xff] %vm658, %v1558
        %1624 = vst.msk [vmem:[%s1570 + $0x2a9] sm:$0xff] %vm658, %v1559
        %1625 = vst.msk [vmem:[%s1570 + $0x2b9] sm:$0xff] %vm658, %v1560
        %1626 = vst.msk [vmem:[%s1570 + $0x2c1] sm:$0xff] %vm658, %v1561
        %1627 = vst.msk [vmem:[%s1570 + $0x2d1] sm:$0xff] %vm658, %v1562
        %1628 = vst.msk [vmem:[%s1570 + $0x2d9] sm:$0xff] %vm658, %v1563
        %1629 = vst.msk [vmem:[%s1570 + $0x2e9] sm:$0xff] %vm658, %v1564
        %1630 = vst.msk [vmem:[%s1570 + $0x2f1] sm:$0xff] %vm658, %v1565
        %1631 = vst.msk [vmem:[%s1570 + $0x301] sm:$0xff] %vm658, %v1566
        %1632 = vst.msk [vmem:[%s1570 + $0x309] sm:$0xff] %vm658, %v1567
        %1633 = vst.msk [vmem:[%s1570 + $0x319] sm:$0xff] %vm658, %v1568
        %1634 = vst.msk [vmem:[%s1570 + $0x321] sm:$0xff] %vm658, %v1569
        %v1635 = vld [vmem:[#allocation2] sm:$0xff]
        %v1636 = vld [vmem:[#allocation2 + $0x8] sm:$0xff]
        %v1637 = vld [vmem:[#allocation2 + $0x18] sm:$0xff]
        %v1638 = vld [vmem:[#allocation2 + $0x20] sm:$0xff]
        %v1639 = vld [vmem:[#allocation2 + $0x30] sm:$0xff]
        %v1640 = vld [vmem:[#allocation2 + $0x38] sm:$0xff]
        %v1641 = vld [vmem:[#allocation2 + $0x48] sm:$0xff]
        %v1642 = vld [vmem:[#allocation2 + $0x50] sm:$0xff]
        %v1643 = vld [vmem:[#allocation2 + $0x60] sm:$0xff]
        %v1644 = vld [vmem:[#allocation2 + $0x68] sm:$0xff]
        %v1645 = vld [vmem:[#allocation2 + $0x78] sm:$0xff]
        %v1646 = vld [vmem:[#allocation2 + $0x80] sm:$0xff]
        %v1647 = vld [vmem:[#allocation2 + $0x90] sm:$0xff]
        %v1648 = vld [vmem:[#allocation2 + $0x98] sm:$0xff]
        %v1649 = vld [vmem:[#allocation2 + $0xa8] sm:$0xff]
        %v1650 = vld [vmem:[#allocation2 + $0xb0] sm:$0xff]
        %v1651 = vld [vmem:[#allocation2 + $0xc0] sm:$0xff]
        %v1652 = vld [vmem:[#allocation2 + $0xc8] sm:$0xff]
        %v1653 = vld [vmem:[#allocation2 + $0xd8] sm:$0xff]
        %v1654 = vld [vmem:[#allocation2 + $0xe0] sm:$0xff]
        %v1655 = vld [vmem:[#allocation2 + $0xf0] sm:$0xff]
        %v1656 = vld [vmem:[#allocation2 + $0xf8] sm:$0xff]
        %v1657 = vld [vmem:[#allocation2 + $0x108] sm:$0xff]
        %v1658 = vld [vmem:[#allocation2 + $0x110] sm:$0xff]
        %v1659 = vld [vmem:[#allocation2 + $0x120] sm:$0xff]
        %v1660 = vld [vmem:[#allocation2 + $0x128] sm:$0xff]
        %v1661 = vld [vmem:[#allocation2 + $0x138] sm:$0xff]
        %v1662 = vld [vmem:[#allocation2 + $0x140] sm:$0xff]
        %v1663 = vld [vmem:[#allocation2 + $0x150] sm:$0xff]
        %v1664 = vld [vmem:[#allocation2 + $0x158] sm:$0xff]
        %v1665 = vld [vmem:[#allocation2 + $0x168] sm:$0xff]
        %v1666 = vld [vmem:[#allocation2 + $0x170] sm:$0xff]
        %v1667 = vld [vmem:[#allocation2 + $0x1b0] sm:$0xff]
        %v1668 = vld [vmem:[#allocation2 + $0x1b8] sm:$0xff]
        %v1669 = vld [vmem:[#allocation2 + $0x1c8] sm:$0xff]
        %v1670 = vld [vmem:[#allocation2 + $0x1d0] sm:$0xff]
        %v1671 = vld [vmem:[#allocation2 + $0x1e0] sm:$0xff]
        %v1672 = vld [vmem:[#allocation2 + $0x1e8] sm:$0xff]
        %v1673 = vld [vmem:[#allocation2 + $0x1f8] sm:$0xff]
        %v1674 = vld [vmem:[#allocation2 + $0x200] sm:$0xff]
        %v1675 = vld [vmem:[#allocation2 + $0x210] sm:$0xff]
        %v1676 = vld [vmem:[#allocation2 + $0x218] sm:$0xff]
        %v1677 = vld [vmem:[#allocation2 + $0x228] sm:$0xff]
        %v1678 = vld [vmem:[#allocation2 + $0x230] sm:$0xff]
        %v1679 = vld [vmem:[#allocation2 + $0x240] sm:$0xff]
        %v1680 = vld [vmem:[#allocation2 + $0x248] sm:$0xff]
        %v1681 = vld [vmem:[#allocation2 + $0x258] sm:$0xff]
        %v1682 = vld [vmem:[#allocation2 + $0x260] sm:$0xff]
        %v1683 = vld [vmem:[#allocation2 + $0x270] sm:$0xff]
        %v1684 = vld [vmem:[#allocation2 + $0x278] sm:$0xff]
        %v1685 = vld [vmem:[#allocation2 + $0x288] sm:$0xff]
        %v1686 = vld [vmem:[#allocation2 + $0x290] sm:$0xff]
        %v1687 = vld [vmem:[#allocation2 + $0x2a0] sm:$0xff]
        %v1688 = vld [vmem:[#allocation2 + $0x2a8] sm:$0xff]
        %v1689 = vld [vmem:[#allocation2 + $0x2b8] sm:$0xff]
        %v1690 = vld [vmem:[#allocation2 + $0x2c0] sm:$0xff]
        %v1691 = vld [vmem:[#allocation2 + $0x2d0] sm:$0xff]
        %v1692 = vld [vmem:[#allocation2 + $0x2d8] sm:$0xff]
        %v1693 = vld [vmem:[#allocation2 + $0x2e8] sm:$0xff]
        %v1694 = vld [vmem:[#allocation2 + $0x2f0] sm:$0xff]
        %v1695 = vld [vmem:[#allocation2 + $0x300] sm:$0xff]
        %v1696 = vld [vmem:[#allocation2 + $0x308] sm:$0xff]
        %v1697 = vld [vmem:[#allocation2 + $0x318] sm:$0xff]
        %v1698 = vld [vmem:[#allocation2 + $0x320] sm:$0xff]
        %v1699 = vld [vmem:[%s3] sm:$0x1]
        %v1700 = vlaneseq
        %v1701 = vshrl.u32 %v1700, 7
        %v1702 = vsub.s32 0, %v1701
        %v1703 = vrot.slane %v1699, %v1702
        %v1704 = vmul.f32 %v1635, %v1703
        %v1705 = vmul.f32 %v1636, %v1703
        %v1706 = vmul.f32 %v1637, %v1703
        %v1707 = vmul.f32 %v1638, %v1703
        %v1708 = vmul.f32 %v1639, %v1703
        %v1709 = vmul.f32 %v1640, %v1703
        %v1710 = vmul.f32 %v1641, %v1703
        %v1711 = vmul.f32 %v1642, %v1703
        %v1712 = vmul.f32 %v1643, %v1703
        %v1713 = vmul.f32 %v1644, %v1703
        %v1714 = vmul.f32 %v1645, %v1703
        %v1715 = vmul.f32 %v1646, %v1703
        %v1716 = vmul.f32 %v1647, %v1703
        %v1717 = vmul.f32 %v1648, %v1703
        %v1718 = vmul.f32 %v1649, %v1703
        %v1719 = vmul.f32 %v1650, %v1703
        %v1720 = vmul.f32 %v1651, %v1703
        %v1721 = vmul.f32 %v1652, %v1703
        %v1722 = vmul.f32 %v1653, %v1703
        %v1723 = vmul.f32 %v1654, %v1703
        %v1724 = vmul.f32 %v1655, %v1703
        %v1725 = vmul.f32 %v1656, %v1703
        %v1726 = vmul.f32 %v1657, %v1703
        %v1727 = vmul.f32 %v1658, %v1703
        %v1728 = vmul.f32 %v1659, %v1703
        %v1729 = vmul.f32 %v1660, %v1703
        %v1730 = vmul.f32 %v1661, %v1703
        %v1731 = vmul.f32 %v1662, %v1703
        %v1732 = vmul.f32 %v1663, %v1703
        %v1733 = vmul.f32 %v1664, %v1703
        %v1734 = vmul.f32 %v1665, %v1703
        %v1735 = vmul.f32 %v1666, %v1703
        %v1736 = vmul.f32 %v1667, %v1703
        %v1737 = vmul.f32 %v1668, %v1703
        %v1738 = vmul.f32 %v1669, %v1703
        %v1739 = vmul.f32 %v1670, %v1703
        %v1740 = vmul.f32 %v1671, %v1703
        %v1741 = vmul.f32 %v1672, %v1703
        %v1742 = vmul.f32 %v1673, %v1703
        %v1743 = vmul.f32 %v1674, %v1703
        %v1744 = vmul.f32 %v1675, %v1703
        %v1745 = vmul.f32 %v1676, %v1703
        %v1746 = vmul.f32 %v1677, %v1703
        %v1747 = vmul.f32 %v1678, %v1703
        %v1748 = vmul.f32 %v1679, %v1703
        %v1749 = vmul.f32 %v1680, %v1703
        %v1750 = vmul.f32 %v1681, %v1703
        %v1751 = vmul.f32 %v1682, %v1703
        %v1752 = vmul.f32 %v1683, %v1703
        %v1753 = vmul.f32 %v1684, %v1703
        %v1754 = vmul.f32 %v1685, %v1703
        %v1755 = vmul.f32 %v1686, %v1703
        %v1756 = vmul.f32 %v1687, %v1703
        %v1757 = vmul.f32 %v1688, %v1703
        %v1758 = vmul.f32 %v1689, %v1703
        %v1759 = vmul.f32 %v1690, %v1703
        %v1760 = vmul.f32 %v1691, %v1703
        %v1761 = vmul.f32 %v1692, %v1703
        %v1762 = vmul.f32 %v1693, %v1703
        %v1763 = vmul.f32 %v1694, %v1703
        %v1764 = vmul.f32 %v1695, %v1703
        %v1765 = vmul.f32 %v1696, %v1703
        %v1766 = vmul.f32 %v1697, %v1703
        %v1767 = vmul.f32 %v1698, %v1703
        %v1768 = vld [vmem:[#allocation2 + $0x1] sm:$0xff]
        %v1769 = vld [vmem:[#allocation2 + $0x9] sm:$0xff]
        %v1770 = vld [vmem:[#allocation2 + $0x19] sm:$0xff]
        %v1771 = vld [vmem:[#allocation2 + $0x21] sm:$0xff]
        %v1772 = vld [vmem:[#allocation2 + $0x31] sm:$0xff]
        %v1773 = vld [vmem:[#allocation2 + $0x39] sm:$0xff]
        %v1774 = vld [vmem:[#allocation2 + $0x49] sm:$0xff]
        %v1775 = vld [vmem:[#allocation2 + $0x51] sm:$0xff]
        %v1776 = vld [vmem:[#allocation2 + $0x61] sm:$0xff]
        %v1777 = vld [vmem:[#allocation2 + $0x69] sm:$0xff]
        %v1778 = vld [vmem:[#allocation2 + $0x79] sm:$0xff]
        %v1779 = vld [vmem:[#allocation2 + $0x81] sm:$0xff]
        %v1780 = vld [vmem:[#allocation2 + $0x91] sm:$0xff]
        %v1781 = vld [vmem:[#allocation2 + $0x99] sm:$0xff]
        %v1782 = vld [vmem:[#allocation2 + $0xa9] sm:$0xff]
        %v1783 = vld [vmem:[#allocation2 + $0xb1] sm:$0xff]
        %v1784 = vld [vmem:[#allocation2 + $0xc1] sm:$0xff]
        %v1785 = vld [vmem:[#allocation2 + $0xc9] sm:$0xff]
        %v1786 = vld [vmem:[#allocation2 + $0xd9] sm:$0xff]
        %v1787 = vld [vmem:[#allocation2 + $0xe1] sm:$0xff]
        %v1788 = vld [vmem:[#allocation2 + $0xf1] sm:$0xff]
        %v1789 = vld [vmem:[#allocation2 + $0xf9] sm:$0xff]
        %v1790 = vld [vmem:[#allocation2 + $0x109] sm:$0xff]
        %v1791 = vld [vmem:[#allocation2 + $0x111] sm:$0xff]
        %v1792 = vld [vmem:[#allocation2 + $0x121] sm:$0xff]
        %v1793 = vld [vmem:[#allocation2 + $0x129] sm:$0xff]
        %v1794 = vld [vmem:[#allocation2 + $0x139] sm:$0xff]
        %v1795 = vld [vmem:[#allocation2 + $0x141] sm:$0xff]
        %v1796 = vld [vmem:[#allocation2 + $0x151] sm:$0xff]
        %v1797 = vld [vmem:[#allocation2 + $0x159] sm:$0xff]
        %v1798 = vld [vmem:[#allocation2 + $0x169] sm:$0xff]
        %v1799 = vld [vmem:[#allocation2 + $0x171] sm:$0xff]
        %v1800 = vld [vmem:[#allocation2 + $0x1b1] sm:$0xff]
        %v1801 = vld [vmem:[#allocation2 + $0x1b9] sm:$0xff]
        %v1802 = vld [vmem:[#allocation2 + $0x1c9] sm:$0xff]
        %v1803 = vld [vmem:[#allocation2 + $0x1d1] sm:$0xff]
        %v1804 = vld [vmem:[#allocation2 + $0x1e1] sm:$0xff]
        %v1805 = vld [vmem:[#allocation2 + $0x1e9] sm:$0xff]
        %v1806 = vld [vmem:[#allocation2 + $0x1f9] sm:$0xff]
        %v1807 = vld [vmem:[#allocation2 + $0x201] sm:$0xff]
        %v1808 = vld [vmem:[#allocation2 + $0x211] sm:$0xff]
        %v1809 = vld [vmem:[#allocation2 + $0x219] sm:$0xff]
        %v1810 = vld [vmem:[#allocation2 + $0x229] sm:$0xff]
        %v1811 = vld [vmem:[#allocation2 + $0x231] sm:$0xff]
        %v1812 = vld [vmem:[#allocation2 + $0x241] sm:$0xff]
        %v1813 = vld [vmem:[#allocation2 + $0x249] sm:$0xff]
        %v1814 = vld [vmem:[#allocation2 + $0x259] sm:$0xff]
        %v1815 = vld [vmem:[#allocation2 + $0x261] sm:$0xff]
        %v1816 = vld [vmem:[#allocation2 + $0x271] sm:$0xff]
        %v1817 = vld [vmem:[#allocation2 + $0x279] sm:$0xff]
        %v1818 = vld [vmem:[#allocation2 + $0x289] sm:$0xff]
        %v1819 = vld [vmem:[#allocation2 + $0x291] sm:$0xff]
        %v1820 = vld [vmem:[#allocation2 + $0x2a1] sm:$0xff]
        %v1821 = vld [vmem:[#allocation2 + $0x2a9] sm:$0xff]
        %v1822 = vld [vmem:[#allocation2 + $0x2b9] sm:$0xff]
        %v1823 = vld [vmem:[#allocation2 + $0x2c1] sm:$0xff]
        %v1824 = vld [vmem:[#allocation2 + $0x2d1] sm:$0xff]
        %v1825 = vld [vmem:[#allocation2 + $0x2d9] sm:$0xff]
        %v1826 = vld [vmem:[#allocation2 + $0x2e9] sm:$0xff]
        %v1827 = vld [vmem:[#allocation2 + $0x2f1] sm:$0xff]
        %v1828 = vld [vmem:[#allocation2 + $0x301] sm:$0xff]
        %v1829 = vld [vmem:[#allocation2 + $0x309] sm:$0xff]
        %v1830 = vld [vmem:[#allocation2 + $0x319] sm:$0xff]
        %v1831 = vld [vmem:[#allocation2 + $0x321] sm:$0xff]
        %v1832 = vld [vmem:[%s3 + $0x1] sm:$0x1]
        %v1833 = vlaneseq
        %v1834 = vshrl.u32 %v1833, 7
        %v1835 = vsub.s32 0, %v1834
        %v1836 = vrot.slane %v1832, %v1835
        %v1837 = vmul.f32 %v1768, %v1836
        %v1838 = vmul.f32 %v1769, %v1836
        %v1839 = vmul.f32 %v1770, %v1836
        %v1840 = vmul.f32 %v1771, %v1836
        %v1841 = vmul.f32 %v1772, %v1836
        %v1842 = vmul.f32 %v1773, %v1836
        %v1843 = vmul.f32 %v1774, %v1836
        %v1844 = vmul.f32 %v1775, %v1836
        %v1845 = vmul.f32 %v1776, %v1836
        %v1846 = vmul.f32 %v1777, %v1836
        %v1847 = vmul.f32 %v1778, %v1836
        %v1848 = vmul.f32 %v1779, %v1836
        %v1849 = vmul.f32 %v1780, %v1836
        %v1850 = vmul.f32 %v1781, %v1836
        %v1851 = vmul.f32 %v1782, %v1836
        %v1852 = vmul.f32 %v1783, %v1836
        %v1853 = vmul.f32 %v1784, %v1836
        %v1854 = vmul.f32 %v1785, %v1836
        %v1855 = vmul.f32 %v1786, %v1836
        %v1856 = vmul.f32 %v1787, %v1836
        %v1857 = vmul.f32 %v1788, %v1836
        %v1858 = vmul.f32 %v1789, %v1836
        %v1859 = vmul.f32 %v1790, %v1836
        %v1860 = vmul.f32 %v1791, %v1836
        %v1861 = vmul.f32 %v1792, %v1836
        %v1862 = vmul.f32 %v1793, %v1836
        %v1863 = vmul.f32 %v1794, %v1836
        %v1864 = vmul.f32 %v1795, %v1836
        %v1865 = vmul.f32 %v1796, %v1836
        %v1866 = vmul.f32 %v1797, %v1836
        %v1867 = vmul.f32 %v1798, %v1836
        %v1868 = vmul.f32 %v1799, %v1836
        %v1869 = vmul.f32 %v1800, %v1836
        %v1870 = vmul.f32 %v1801, %v1836
        %v1871 = vmul.f32 %v1802, %v1836
        %v1872 = vmul.f32 %v1803, %v1836
        %v1873 = vmul.f32 %v1804, %v1836
        %v1874 = vmul.f32 %v1805, %v1836
        %v1875 = vmul.f32 %v1806, %v1836
        %v1876 = vmul.f32 %v1807, %v1836
        %v1877 = vmul.f32 %v1808, %v1836
        %v1878 = vmul.f32 %v1809, %v1836
        %v1879 = vmul.f32 %v1810, %v1836
        %v1880 = vmul.f32 %v1811, %v1836
        %v1881 = vmul.f32 %v1812, %v1836
        %v1882 = vmul.f32 %v1813, %v1836
        %v1883 = vmul.f32 %v1814, %v1836
        %v1884 = vmul.f32 %v1815, %v1836
        %v1885 = vmul.f32 %v1816, %v1836
        %v1886 = vmul.f32 %v1817, %v1836
        %v1887 = vmul.f32 %v1818, %v1836
        %v1888 = vmul.f32 %v1819, %v1836
        %v1889 = vmul.f32 %v1820, %v1836
        %v1890 = vmul.f32 %v1821, %v1836
        %v1891 = vmul.f32 %v1822, %v1836
        %v1892 = vmul.f32 %v1823, %v1836
        %v1893 = vmul.f32 %v1824, %v1836
        %v1894 = vmul.f32 %v1825, %v1836
        %v1895 = vmul.f32 %v1826, %v1836
        %v1896 = vmul.f32 %v1827, %v1836
        %v1897 = vmul.f32 %v1828, %v1836
        %v1898 = vmul.f32 %v1829, %v1836
        %v1899 = vmul.f32 %v1830, %v1836
        %v1900 = vmul.f32 %v1831, %v1836
        %v1901 = vadd.f32 %v1704, %v1837
        %v1902 = vadd.f32 %v1705, %v1838
        %v1903 = vadd.f32 %v1706, %v1839
        %v1904 = vadd.f32 %v1707, %v1840
        %v1905 = vadd.f32 %v1708, %v1841
        %v1906 = vadd.f32 %v1709, %v1842
        %v1907 = vadd.f32 %v1710, %v1843
        %v1908 = vadd.f32 %v1711, %v1844
        %v1909 = vadd.f32 %v1712, %v1845
        %v1910 = vadd.f32 %v1713, %v1846
        %v1911 = vadd.f32 %v1714, %v1847
        %v1912 = vadd.f32 %v1715, %v1848
        %v1913 = vadd.f32 %v1716, %v1849
        %v1914 = vadd.f32 %v1717, %v1850
        %v1915 = vadd.f32 %v1718, %v1851
        %v1916 = vadd.f32 %v1719, %v1852
        %v1917 = vadd.f32 %v1720, %v1853
        %v1918 = vadd.f32 %v1721, %v1854
        %v1919 = vadd.f32 %v1722, %v1855
        %v1920 = vadd.f32 %v1723, %v1856
        %v1921 = vadd.f32 %v1724, %v1857
        %v1922 = vadd.f32 %v1725, %v1858
        %v1923 = vadd.f32 %v1726, %v1859
        %v1924 = vadd.f32 %v1727, %v1860
        %v1925 = vadd.f32 %v1728, %v1861
        %v1926 = vadd.f32 %v1729, %v1862
        %v1927 = vadd.f32 %v1730, %v1863
        %v1928 = vadd.f32 %v1731, %v1864
        %v1929 = vadd.f32 %v1732, %v1865
        %v1930 = vadd.f32 %v1733, %v1866
        %v1931 = vadd.f32 %v1734, %v1867
        %v1932 = vadd.f32 %v1735, %v1868
        %v1933 = vadd.f32 %v1736, %v1869
        %v1934 = vadd.f32 %v1737, %v1870
        %v1935 = vadd.f32 %v1738, %v1871
        %v1936 = vadd.f32 %v1739, %v1872
        %v1937 = vadd.f32 %v1740, %v1873
        %v1938 = vadd.f32 %v1741, %v1874
        %v1939 = vadd.f32 %v1742, %v1875
        %v1940 = vadd.f32 %v1743, %v1876
        %v1941 = vadd.f32 %v1744, %v1877
        %v1942 = vadd.f32 %v1745, %v1878
        %v1943 = vadd.f32 %v1746, %v1879
        %v1944 = vadd.f32 %v1747, %v1880
        %v1945 = vadd.f32 %v1748, %v1881
        %v1946 = vadd.f32 %v1749, %v1882
        %v1947 = vadd.f32 %v1750, %v1883
        %v1948 = vadd.f32 %v1751, %v1884
        %v1949 = vadd.f32 %v1752, %v1885
        %v1950 = vadd.f32 %v1753, %v1886
        %v1951 = vadd.f32 %v1754, %v1887
        %v1952 = vadd.f32 %v1755, %v1888
        %v1953 = vadd.f32 %v1756, %v1889
        %v1954 = vadd.f32 %v1757, %v1890
        %v1955 = vadd.f32 %v1758, %v1891
        %v1956 = vadd.f32 %v1759, %v1892
        %v1957 = vadd.f32 %v1760, %v1893
        %v1958 = vadd.f32 %v1761, %v1894
        %v1959 = vadd.f32 %v1762, %v1895
        %v1960 = vadd.f32 %v1763, %v1896
        %v1961 = vadd.f32 %v1764, %v1897
        %v1962 = vadd.f32 %v1765, %v1898
        %v1963 = vadd.f32 %v1766, %v1899
        %v1964 = vadd.f32 %v1767, %v1900
        %v1965 = vld [vmem:[#allocation2 + $0x2] sm:$0xff]
        %v1966 = vld [vmem:[#allocation2 + $0xa] sm:$0xff]
        %v1967 = vld [vmem:[#allocation2 + $0x1a] sm:$0xff]
        %v1968 = vld [vmem:[#allocation2 + $0x22] sm:$0xff]
        %v1969 = vld [vmem:[#allocation2 + $0x32] sm:$0xff]
        %v1970 = vld [vmem:[#allocation2 + $0x3a] sm:$0xff]
        %v1971 = vld [vmem:[#allocation2 + $0x4a] sm:$0xff]
        %v1972 = vld [vmem:[#allocation2 + $0x52] sm:$0xff]
        %v1973 = vld [vmem:[#allocation2 + $0x62] sm:$0xff]
        %v1974 = vld [vmem:[#allocation2 + $0x6a] sm:$0xff]
        %v1975 = vld [vmem:[#allocation2 + $0x7a] sm:$0xff]
        %v1976 = vld [vmem:[#allocation2 + $0x82] sm:$0xff]
        %v1977 = vld [vmem:[#allocation2 + $0x92] sm:$0xff]
        %v1978 = vld [vmem:[#allocation2 + $0x9a] sm:$0xff]
        %v1979 = vld [vmem:[#allocation2 + $0xaa] sm:$0xff]
        %v1980 = vld [vmem:[#allocation2 + $0xb2] sm:$0xff]
        %v1981 = vld [vmem:[#allocation2 + $0xc2] sm:$0xff]
        %v1982 = vld [vmem:[#allocation2 + $0xca] sm:$0xff]
        %v1983 = vld [vmem:[#allocation2 + $0xda] sm:$0xff]
        %v1984 = vld [vmem:[#allocation2 + $0xe2] sm:$0xff]
        %v1985 = vld [vmem:[#allocation2 + $0xf2] sm:$0xff]
        %v1986 = vld [vmem:[#allocation2 + $0xfa] sm:$0xff]
        %v1987 = vld [vmem:[#allocation2 + $0x10a] sm:$0xff]
        %v1988 = vld [vmem:[#allocation2 + $0x112] sm:$0xff]
        %v1989 = vld [vmem:[#allocation2 + $0x122] sm:$0xff]
        %v1990 = vld [vmem:[#allocation2 + $0x12a] sm:$0xff]
        %v1991 = vld [vmem:[#allocation2 + $0x13a] sm:$0xff]
        %v1992 = vld [vmem:[#allocation2 + $0x142] sm:$0xff]
        %v1993 = vld [vmem:[#allocation2 + $0x152] sm:$0xff]
        %v1994 = vld [vmem:[#allocation2 + $0x15a] sm:$0xff]
        %v1995 = vld [vmem:[#allocation2 + $0x16a] sm:$0xff]
        %v1996 = vld [vmem:[#allocation2 + $0x172] sm:$0xff]
        %v1997 = vld [vmem:[#allocation2 + $0x1b2] sm:$0xff]
        %v1998 = vld [vmem:[#allocation2 + $0x1ba] sm:$0xff]
        %v1999 = vld [vmem:[#allocation2 + $0x1ca] sm:$0xff]
        %v2000 = vld [vmem:[#allocation2 + $0x1d2] sm:$0xff]
        %v2001 = vld [vmem:[#allocation2 + $0x1e2] sm:$0xff]
        %v2002 = vld [vmem:[#allocation2 + $0x1ea] sm:$0xff]
        %v2003 = vld [vmem:[#allocation2 + $0x1fa] sm:$0xff]
        %v2004 = vld [vmem:[#allocation2 + $0x202] sm:$0xff]
        %v2005 = vld [vmem:[#allocation2 + $0x212] sm:$0xff]
        %v2006 = vld [vmem:[#allocation2 + $0x21a] sm:$0xff]
        %v2007 = vld [vmem:[#allocation2 + $0x22a] sm:$0xff]
        %v2008 = vld [vmem:[#allocation2 + $0x232] sm:$0xff]
        %v2009 = vld [vmem:[#allocation2 + $0x242] sm:$0xff]
        %v2010 = vld [vmem:[#allocation2 + $0x24a] sm:$0xff]
        %v2011 = vld [vmem:[#allocation2 + $0x25a] sm:$0xff]
        %v2012 = vld [vmem:[#allocation2 + $0x262] sm:$0xff]
        %v2013 = vld [vmem:[#allocation2 + $0x272] sm:$0xff]
        %v2014 = vld [vmem:[#allocation2 + $0x27a] sm:$0xff]
        %v2015 = vld [vmem:[#allocation2 + $0x28a] sm:$0xff]
        %v2016 = vld [vmem:[#allocation2 + $0x292] sm:$0xff]
        %v2017 = vld [vmem:[#allocation2 + $0x2a2] sm:$0xff]
        %v2018 = vld [vmem:[#allocation2 + $0x2aa] sm:$0xff]
        %v2019 = vld [vmem:[#allocation2 + $0x2ba] sm:$0xff]
        %v2020 = vld [vmem:[#allocation2 + $0x2c2] sm:$0xff]
        %v2021 = vld [vmem:[#allocation2 + $0x2d2] sm:$0xff]
        %v2022 = vld [vmem:[#allocation2 + $0x2da] sm:$0xff]
        %v2023 = vld [vmem:[#allocation2 + $0x2ea] sm:$0xff]
        %v2024 = vld [vmem:[#allocation2 + $0x2f2] sm:$0xff]
        %v2025 = vld [vmem:[#allocation2 + $0x302] sm:$0xff]
        %v2026 = vld [vmem:[#allocation2 + $0x30a] sm:$0xff]
        %v2027 = vld [vmem:[#allocation2 + $0x31a] sm:$0xff]
        %v2028 = vld [vmem:[#allocation2 + $0x322] sm:$0xff]
        %v2029 = vld [vmem:[%s3 + $0x2] sm:$0x1]
        %v2030 = vlaneseq
        %v2031 = vshrl.u32 %v2030, 7
        %v2032 = vsub.s32 0, %v2031
        %v2033 = vrot.slane %v2029, %v2032
        %v2034 = vmul.f32 %v1965, %v2033
        %v2035 = vmul.f32 %v1966, %v2033
        %v2036 = vmul.f32 %v1967, %v2033
        %v2037 = vmul.f32 %v1968, %v2033
        %v2038 = vmul.f32 %v1969, %v2033
        %v2039 = vmul.f32 %v1970, %v2033
        %v2040 = vmul.f32 %v1971, %v2033
        %v2041 = vmul.f32 %v1972, %v2033
        %v2042 = vmul.f32 %v1973, %v2033
        %v2043 = vmul.f32 %v1974, %v2033
        %v2044 = vmul.f32 %v1975, %v2033
        %v2045 = vmul.f32 %v1976, %v2033
        %v2046 = vmul.f32 %v1977, %v2033
        %v2047 = vmul.f32 %v1978, %v2033
        %v2048 = vmul.f32 %v1979, %v2033
        %v2049 = vmul.f32 %v1980, %v2033
        %v2050 = vmul.f32 %v1981, %v2033
        %v2051 = vmul.f32 %v1982, %v2033
        %v2052 = vmul.f32 %v1983, %v2033
        %v2053 = vmul.f32 %v1984, %v2033
        %v2054 = vmul.f32 %v1985, %v2033
        %v2055 = vmul.f32 %v1986, %v2033
        %v2056 = vmul.f32 %v1987, %v2033
        %v2057 = vmul.f32 %v1988, %v2033
        %v2058 = vmul.f32 %v1989, %v2033
        %v2059 = vmul.f32 %v1990, %v2033
        %v2060 = vmul.f32 %v1991, %v2033
        %v2061 = vmul.f32 %v1992, %v2033
        %v2062 = vmul.f32 %v1993, %v2033
        %v2063 = vmul.f32 %v1994, %v2033
        %v2064 = vmul.f32 %v1995, %v2033
        %v2065 = vmul.f32 %v1996, %v2033
        %v2066 = vmul.f32 %v1997, %v2033
        %v2067 = vmul.f32 %v1998, %v2033
        %v2068 = vmul.f32 %v1999, %v2033
        %v2069 = vmul.f32 %v2000, %v2033
        %v2070 = vmul.f32 %v2001, %v2033
        %v2071 = vmul.f32 %v2002, %v2033
        %v2072 = vmul.f32 %v2003, %v2033
        %v2073 = vmul.f32 %v2004, %v2033
        %v2074 = vmul.f32 %v2005, %v2033
        %v2075 = vmul.f32 %v2006, %v2033
        %v2076 = vmul.f32 %v2007, %v2033
        %v2077 = vmul.f32 %v2008, %v2033
        %v2078 = vmul.f32 %v2009, %v2033
        %v2079 = vmul.f32 %v2010, %v2033
        %v2080 = vmul.f32 %v2011, %v2033
        %v2081 = vmul.f32 %v2012, %v2033
        %v2082 = vmul.f32 %v2013, %v2033
        %v2083 = vmul.f32 %v2014, %v2033
        %v2084 = vmul.f32 %v2015, %v2033
        %v2085 = vmul.f32 %v2016, %v2033
        %v2086 = vmul.f32 %v2017, %v2033
        %v2087 = vmul.f32 %v2018, %v2033
        %v2088 = vmul.f32 %v2019, %v2033
        %v2089 = vmul.f32 %v2020, %v2033
        %v2090 = vmul.f32 %v2021, %v2033
        %v2091 = vmul.f32 %v2022, %v2033
        %v2092 = vmul.f32 %v2023, %v2033
        %v2093 = vmul.f32 %v2024, %v2033
        %v2094 = vmul.f32 %v2025, %v2033
        %v2095 = vmul.f32 %v2026, %v2033
        %v2096 = vmul.f32 %v2027, %v2033
        %v2097 = vmul.f32 %v2028, %v2033
        %v2098 = vadd.f32 %v1901, %v2034
        %v2099 = vadd.f32 %v1902, %v2035
        %v2100 = vadd.f32 %v1903, %v2036
        %v2101 = vadd.f32 %v1904, %v2037
        %v2102 = vadd.f32 %v1905, %v2038
        %v2103 = vadd.f32 %v1906, %v2039
        %v2104 = vadd.f32 %v1907, %v2040
        %v2105 = vadd.f32 %v1908, %v2041
        %v2106 = vadd.f32 %v1909, %v2042
        %v2107 = vadd.f32 %v1910, %v2043
        %v2108 = vadd.f32 %v1911, %v2044
        %v2109 = vadd.f32 %v1912, %v2045
        %v2110 = vadd.f32 %v1913, %v2046
        %v2111 = vadd.f32 %v1914, %v2047
        %v2112 = vadd.f32 %v1915, %v2048
        %v2113 = vadd.f32 %v1916, %v2049
        %v2114 = vadd.f32 %v1917, %v2050
        %v2115 = vadd.f32 %v1918, %v2051
        %v2116 = vadd.f32 %v1919, %v2052
        %v2117 = vadd.f32 %v1920, %v2053
        %v2118 = vadd.f32 %v1921, %v2054
        %v2119 = vadd.f32 %v1922, %v2055
        %v2120 = vadd.f32 %v1923, %v2056
        %v2121 = vadd.f32 %v1924, %v2057
        %v2122 = vadd.f32 %v1925, %v2058
        %v2123 = vadd.f32 %v1926, %v2059
        %v2124 = vadd.f32 %v1927, %v2060
        %v2125 = vadd.f32 %v1928, %v2061
        %v2126 = vadd.f32 %v1929, %v2062
        %v2127 = vadd.f32 %v1930, %v2063
        %v2128 = vadd.f32 %v1931, %v2064
        %v2129 = vadd.f32 %v1932, %v2065
        %v2130 = vadd.f32 %v1933, %v2066
        %v2131 = vadd.f32 %v1934, %v2067
        %v2132 = vadd.f32 %v1935, %v2068
        %v2133 = vadd.f32 %v1936, %v2069
        %v2134 = vadd.f32 %v1937, %v2070
        %v2135 = vadd.f32 %v1938, %v2071
        %v2136 = vadd.f32 %v1939, %v2072
        %v2137 = vadd.f32 %v1940, %v2073
        %v2138 = vadd.f32 %v1941, %v2074
        %v2139 = vadd.f32 %v1942, %v2075
        %v2140 = vadd.f32 %v1943, %v2076
        %v2141 = vadd.f32 %v1944, %v2077
        %v2142 = vadd.f32 %v1945, %v2078
        %v2143 = vadd.f32 %v1946, %v2079
        %v2144 = vadd.f32 %v1947, %v2080
        %v2145 = vadd.f32 %v1948, %v2081
        %v2146 = vadd.f32 %v1949, %v2082
        %v2147 = vadd.f32 %v1950, %v2083
        %v2148 = vadd.f32 %v1951, %v2084
        %v2149 = vadd.f32 %v1952, %v2085
        %v2150 = vadd.f32 %v1953, %v2086
        %v2151 = vadd.f32 %v1954, %v2087
        %v2152 = vadd.f32 %v1955, %v2088
        %v2153 = vadd.f32 %v1956, %v2089
        %v2154 = vadd.f32 %v1957, %v2090
        %v2155 = vadd.f32 %v1958, %v2091
        %v2156 = vadd.f32 %v1959, %v2092
        %v2157 = vadd.f32 %v1960, %v2093
        %v2158 = vadd.f32 %v1961, %v2094
        %v2159 = vadd.f32 %v1962, %v2095
        %v2160 = vadd.f32 %v1963, %v2096
        %v2161 = vadd.f32 %v1964, %v2097
        %v2162 = vld [vmem:[%s1570] sm:$0xff]
        %v2163 = vld [vmem:[%s1570 + $0x8] sm:$0xff]
        %v2164 = vld [vmem:[%s1570 + $0x18] sm:$0xff]
        %v2165 = vld [vmem:[%s1570 + $0x20] sm:$0xff]
        %v2166 = vld [vmem:[%s1570 + $0x30] sm:$0xff]
        %v2167 = vld [vmem:[%s1570 + $0x38] sm:$0xff]
        %v2168 = vld [vmem:[%s1570 + $0x48] sm:$0xff]
        %v2169 = vld [vmem:[%s1570 + $0x50] sm:$0xff]
        %v2170 = vld [vmem:[%s1570 + $0x60] sm:$0xff]
        %v2171 = vld [vmem:[%s1570 + $0x68] sm:$0xff]
        %v2172 = vld [vmem:[%s1570 + $0x78] sm:$0xff]
        %v2173 = vld [vmem:[%s1570 + $0x80] sm:$0xff]
        %v2174 = vld [vmem:[%s1570 + $0x90] sm:$0xff]
        %v2175 = vld [vmem:[%s1570 + $0x98] sm:$0xff]
        %v2176 = vld [vmem:[%s1570 + $0xa8] sm:$0xff]
        %v2177 = vld [vmem:[%s1570 + $0xb0] sm:$0xff]
        %v2178 = vld [vmem:[%s1570 + $0xc0] sm:$0xff]
        %v2179 = vld [vmem:[%s1570 + $0xc8] sm:$0xff]
        %v2180 = vld [vmem:[%s1570 + $0xd8] sm:$0xff]
        %v2181 = vld [vmem:[%s1570 + $0xe0] sm:$0xff]
        %v2182 = vld [vmem:[%s1570 + $0xf0] sm:$0xff]
        %v2183 = vld [vmem:[%s1570 + $0xf8] sm:$0xff]
        %v2184 = vld [vmem:[%s1570 + $0x108] sm:$0xff]
        %v2185 = vld [vmem:[%s1570 + $0x110] sm:$0xff]
        %v2186 = vld [vmem:[%s1570 + $0x120] sm:$0xff]
        %v2187 = vld [vmem:[%s1570 + $0x128] sm:$0xff]
        %v2188 = vld [vmem:[%s1570 + $0x138] sm:$0xff]
        %v2189 = vld [vmem:[%s1570 + $0x140] sm:$0xff]
        %v2190 = vld [vmem:[%s1570 + $0x150] sm:$0xff]
        %v2191 = vld [vmem:[%s1570 + $0x158] sm:$0xff]
        %v2192 = vld [vmem:[%s1570 + $0x168] sm:$0xff]
        %v2193 = vld [vmem:[%s1570 + $0x170] sm:$0xff]
        %v2194 = vld [vmem:[%s1570 + $0x1b0] sm:$0xff]
        %v2195 = vld [vmem:[%s1570 + $0x1b8] sm:$0xff]
        %v2196 = vld [vmem:[%s1570 + $0x1c8] sm:$0xff]
        %v2197 = vld [vmem:[%s1570 + $0x1d0] sm:$0xff]
        %v2198 = vld [vmem:[%s1570 + $0x1e0] sm:$0xff]
        %v2199 = vld [vmem:[%s1570 + $0x1e8] sm:$0xff]
        %v2200 = vld [vmem:[%s1570 + $0x1f8] sm:$0xff]
        %v2201 = vld [vmem:[%s1570 + $0x200] sm:$0xff]
        %v2202 = vld [vmem:[%s1570 + $0x210] sm:$0xff]
        %v2203 = vld [vmem:[%s1570 + $0x218] sm:$0xff]
        %v2204 = vld [vmem:[%s1570 + $0x228] sm:$0xff]
        %v2205 = vld [vmem:[%s1570 + $0x230] sm:$0xff]
        %v2206 = vld [vmem:[%s1570 + $0x240] sm:$0xff]
        %v2207 = vld [vmem:[%s1570 + $0x248] sm:$0xff]
        %v2208 = vld [vmem:[%s1570 + $0x258] sm:$0xff]
        %v2209 = vld [vmem:[%s1570 + $0x260] sm:$0xff]
        %v2210 = vld [vmem:[%s1570 + $0x270] sm:$0xff]
        %v2211 = vld [vmem:[%s1570 + $0x278] sm:$0xff]
        %v2212 = vld [vmem:[%s1570 + $0x288] sm:$0xff]
        %v2213 = vld [vmem:[%s1570 + $0x290] sm:$0xff]
        %v2214 = vld [vmem:[%s1570 + $0x2a0] sm:$0xff]
        %v2215 = vld [vmem:[%s1570 + $0x2a8] sm:$0xff]
        %v2216 = vld [vmem:[%s1570 + $0x2b8] sm:$0xff]
        %v2217 = vld [vmem:[%s1570 + $0x2c0] sm:$0xff]
        %v2218 = vld [vmem:[%s1570 + $0x2d0] sm:$0xff]
        %v2219 = vld [vmem:[%s1570 + $0x2d8] sm:$0xff]
        %v2220 = vld [vmem:[%s1570 + $0x2e8] sm:$0xff]
        %v2221 = vld [vmem:[%s1570 + $0x2f0] sm:$0xff]
        %v2222 = vld [vmem:[%s1570 + $0x300] sm:$0xff]
        %v2223 = vld [vmem:[%s1570 + $0x308] sm:$0xff]
        %v2224 = vld [vmem:[%s1570 + $0x318] sm:$0xff]
        %v2225 = vld [vmem:[%s1570 + $0x320] sm:$0xff]
        %v2226 = vld [vmem:[%s3 + $0x3] sm:$0x1]
        %v2227 = vlaneseq
        %v2228 = vshrl.u32 %v2227, 7
        %v2229 = vsub.s32 0, %v2228
        %v2230 = vrot.slane %v2226, %v2229
        %v2231 = vmul.f32 %v2162, %v2230
        %v2232 = vmul.f32 %v2163, %v2230
        %v2233 = vmul.f32 %v2164, %v2230
        %v2234 = vmul.f32 %v2165, %v2230
        %v2235 = vmul.f32 %v2166, %v2230
        %v2236 = vmul.f32 %v2167, %v2230
        %v2237 = vmul.f32 %v2168, %v2230
        %v2238 = vmul.f32 %v2169, %v2230
        %v2239 = vmul.f32 %v2170, %v2230
        %v2240 = vmul.f32 %v2171, %v2230
        %v2241 = vmul.f32 %v2172, %v2230
        %v2242 = vmul.f32 %v2173, %v2230
        %v2243 = vmul.f32 %v2174, %v2230
        %v2244 = vmul.f32 %v2175, %v2230
        %v2245 = vmul.f32 %v2176, %v2230
        %v2246 = vmul.f32 %v2177, %v2230
        %v2247 = vmul.f32 %v2178, %v2230
        %v2248 = vmul.f32 %v2179, %v2230
        %v2249 = vmul.f32 %v2180, %v2230
        %v2250 = vmul.f32 %v2181, %v2230
        %v2251 = vmul.f32 %v2182, %v2230
        %v2252 = vmul.f32 %v2183, %v2230
        %v2253 = vmul.f32 %v2184, %v2230
        %v2254 = vmul.f32 %v2185, %v2230
        %v2255 = vmul.f32 %v2186, %v2230
        %v2256 = vmul.f32 %v2187, %v2230
        %v2257 = vmul.f32 %v2188, %v2230
        %v2258 = vmul.f32 %v2189, %v2230
        %v2259 = vmul.f32 %v2190, %v2230
        %v2260 = vmul.f32 %v2191, %v2230
        %v2261 = vmul.f32 %v2192, %v2230
        %v2262 = vmul.f32 %v2193, %v2230
        %v2263 = vmul.f32 %v2194, %v2230
        %v2264 = vmul.f32 %v2195, %v2230
        %v2265 = vmul.f32 %v2196, %v2230
        %v2266 = vmul.f32 %v2197, %v2230
        %v2267 = vmul.f32 %v2198, %v2230
        %v2268 = vmul.f32 %v2199, %v2230
        %v2269 = vmul.f32 %v2200, %v2230
        %v2270 = vmul.f32 %v2201, %v2230
        %v2271 = vmul.f32 %v2202, %v2230
        %v2272 = vmul.f32 %v2203, %v2230
        %v2273 = vmul.f32 %v2204, %v2230
        %v2274 = vmul.f32 %v2205, %v2230
        %v2275 = vmul.f32 %v2206, %v2230
        %v2276 = vmul.f32 %v2207, %v2230
        %v2277 = vmul.f32 %v2208, %v2230
        %v2278 = vmul.f32 %v2209, %v2230
        %v2279 = vmul.f32 %v2210, %v2230
        %v2280 = vmul.f32 %v2211, %v2230
        %v2281 = vmul.f32 %v2212, %v2230
        %v2282 = vmul.f32 %v2213, %v2230
        %v2283 = vmul.f32 %v2214, %v2230
        %v2284 = vmul.f32 %v2215, %v2230
        %v2285 = vmul.f32 %v2216, %v2230
        %v2286 = vmul.f32 %v2217, %v2230
        %v2287 = vmul.f32 %v2218, %v2230
        %v2288 = vmul.f32 %v2219, %v2230
        %v2289 = vmul.f32 %v2220, %v2230
        %v2290 = vmul.f32 %v2221, %v2230
        %v2291 = vmul.f32 %v2222, %v2230
        %v2292 = vmul.f32 %v2223, %v2230
        %v2293 = vmul.f32 %v2224, %v2230
        %v2294 = vmul.f32 %v2225, %v2230
        %v2295 = vadd.f32 %v2098, %v2231
        %v2296 = vadd.f32 %v2099, %v2232
        %v2297 = vadd.f32 %v2100, %v2233
        %v2298 = vadd.f32 %v2101, %v2234
        %v2299 = vadd.f32 %v2102, %v2235
        %v2300 = vadd.f32 %v2103, %v2236
        %v2301 = vadd.f32 %v2104, %v2237
        %v2302 = vadd.f32 %v2105, %v2238
        %v2303 = vadd.f32 %v2106, %v2239
        %v2304 = vadd.f32 %v2107, %v2240
        %v2305 = vadd.f32 %v2108, %v2241
        %v2306 = vadd.f32 %v2109, %v2242
        %v2307 = vadd.f32 %v2110, %v2243
        %v2308 = vadd.f32 %v2111, %v2244
        %v2309 = vadd.f32 %v2112, %v2245
        %v2310 = vadd.f32 %v2113, %v2246
        %v2311 = vadd.f32 %v2114, %v2247
        %v2312 = vadd.f32 %v2115, %v2248
        %v2313 = vadd.f32 %v2116, %v2249
        %v2314 = vadd.f32 %v2117, %v2250
        %v2315 = vadd.f32 %v2118, %v2251
        %v2316 = vadd.f32 %v2119, %v2252
        %v2317 = vadd.f32 %v2120, %v2253
        %v2318 = vadd.f32 %v2121, %v2254
        %v2319 = vadd.f32 %v2122, %v2255
        %v2320 = vadd.f32 %v2123, %v2256
        %v2321 = vadd.f32 %v2124, %v2257
        %v2322 = vadd.f32 %v2125, %v2258
        %v2323 = vadd.f32 %v2126, %v2259
        %v2324 = vadd.f32 %v2127, %v2260
        %v2325 = vadd.f32 %v2128, %v2261
        %v2326 = vadd.f32 %v2129, %v2262
        %v2327 = vadd.f32 %v2130, %v2263
        %v2328 = vadd.f32 %v2131, %v2264
        %v2329 = vadd.f32 %v2132, %v2265
        %v2330 = vadd.f32 %v2133, %v2266
        %v2331 = vadd.f32 %v2134, %v2267
        %v2332 = vadd.f32 %v2135, %v2268
        %v2333 = vadd.f32 %v2136, %v2269
        %v2334 = vadd.f32 %v2137, %v2270
        %v2335 = vadd.f32 %v2138, %v2271
        %v2336 = vadd.f32 %v2139, %v2272
        %v2337 = vadd.f32 %v2140, %v2273
        %v2338 = vadd.f32 %v2141, %v2274
        %v2339 = vadd.f32 %v2142, %v2275
        %v2340 = vadd.f32 %v2143, %v2276
        %v2341 = vadd.f32 %v2144, %v2277
        %v2342 = vadd.f32 %v2145, %v2278
        %v2343 = vadd.f32 %v2146, %v2279
        %v2344 = vadd.f32 %v2147, %v2280
        %v2345 = vadd.f32 %v2148, %v2281
        %v2346 = vadd.f32 %v2149, %v2282
        %v2347 = vadd.f32 %v2150, %v2283
        %v2348 = vadd.f32 %v2151, %v2284
        %v2349 = vadd.f32 %v2152, %v2285
        %v2350 = vadd.f32 %v2153, %v2286
        %v2351 = vadd.f32 %v2154, %v2287
        %v2352 = vadd.f32 %v2155, %v2288
        %v2353 = vadd.f32 %v2156, %v2289
        %v2354 = vadd.f32 %v2157, %v2290
        %v2355 = vadd.f32 %v2158, %v2291
        %v2356 = vadd.f32 %v2159, %v2292
        %v2357 = vadd.f32 %v2160, %v2293
        %v2358 = vadd.f32 %v2161, %v2294
        %v2359 = vld [vmem:[%s1570 + $0x1] sm:$0xff]
        %v2360 = vld [vmem:[%s1570 + $0x9] sm:$0xff]
        %v2361 = vld [vmem:[%s1570 + $0x19] sm:$0xff]
        %v2362 = vld [vmem:[%s1570 + $0x21] sm:$0xff]
        %v2363 = vld [vmem:[%s1570 + $0x31] sm:$0xff]
        %v2364 = vld [vmem:[%s1570 + $0x39] sm:$0xff]
        %v2365 = vld [vmem:[%s1570 + $0x49] sm:$0xff]
        %v2366 = vld [vmem:[%s1570 + $0x51] sm:$0xff]
        %v2367 = vld [vmem:[%s1570 + $0x61] sm:$0xff]
        %v2368 = vld [vmem:[%s1570 + $0x69] sm:$0xff]
        %v2369 = vld [vmem:[%s1570 + $0x79] sm:$0xff]
        %v2370 = vld [vmem:[%s1570 + $0x81] sm:$0xff]
        %v2371 = vld [vmem:[%s1570 + $0x91] sm:$0xff]
        %v2372 = vld [vmem:[%s1570 + $0x99] sm:$0xff]
        %v2373 = vld [vmem:[%s1570 + $0xa9] sm:$0xff]
        %v2374 = vld [vmem:[%s1570 + $0xb1] sm:$0xff]
        %v2375 = vld [vmem:[%s1570 + $0xc1] sm:$0xff]
        %v2376 = vld [vmem:[%s1570 + $0xc9] sm:$0xff]
        %v2377 = vld [vmem:[%s1570 + $0xd9] sm:$0xff]
        %v2378 = vld [vmem:[%s1570 + $0xe1] sm:$0xff]
        %v2379 = vld [vmem:[%s1570 + $0xf1] sm:$0xff]
        %v2380 = vld [vmem:[%s1570 + $0xf9] sm:$0xff]
        %v2381 = vld [vmem:[%s1570 + $0x109] sm:$0xff]
        %v2382 = vld [vmem:[%s1570 + $0x111] sm:$0xff]
        %v2383 = vld [vmem:[%s1570 + $0x121] sm:$0xff]
        %v2384 = vld [vmem:[%s1570 + $0x129] sm:$0xff]
        %v2385 = vld [vmem:[%s1570 + $0x139] sm:$0xff]
        %v2386 = vld [vmem:[%s1570 + $0x141] sm:$0xff]
        %v2387 = vld [vmem:[%s1570 + $0x151] sm:$0xff]
        %v2388 = vld [vmem:[%s1570 + $0x159] sm:$0xff]
        %v2389 = vld [vmem:[%s1570 + $0x169] sm:$0xff]
        %v2390 = vld [vmem:[%s1570 + $0x171] sm:$0xff]
        %v2391 = vld [vmem:[%s1570 + $0x1b1] sm:$0xff]
        %v2392 = vld [vmem:[%s1570 + $0x1b9] sm:$0xff]
        %v2393 = vld [vmem:[%s1570 + $0x1c9] sm:$0xff]
        %v2394 = vld [vmem:[%s1570 + $0x1d1] sm:$0xff]
        %v2395 = vld [vmem:[%s1570 + $0x1e1] sm:$0xff]
        %v2396 = vld [vmem:[%s1570 + $0x1e9] sm:$0xff]
        %v2397 = vld [vmem:[%s1570 + $0x1f9] sm:$0xff]
        %v2398 = vld [vmem:[%s1570 + $0x201] sm:$0xff]
        %v2399 = vld [vmem:[%s1570 + $0x211] sm:$0xff]
        %v2400 = vld [vmem:[%s1570 + $0x219] sm:$0xff]
        %v2401 = vld [vmem:[%s1570 + $0x229] sm:$0xff]
        %v2402 = vld [vmem:[%s1570 + $0x231] sm:$0xff]
        %v2403 = vld [vmem:[%s1570 + $0x241] sm:$0xff]
        %v2404 = vld [vmem:[%s1570 + $0x249] sm:$0xff]
        %v2405 = vld [vmem:[%s1570 + $0x259] sm:$0xff]
        %v2406 = vld [vmem:[%s1570 + $0x261] sm:$0xff]
        %v2407 = vld [vmem:[%s1570 + $0x271] sm:$0xff]
        %v2408 = vld [vmem:[%s1570 + $0x279] sm:$0xff]
        %v2409 = vld [vmem:[%s1570 + $0x289] sm:$0xff]
        %v2410 = vld [vmem:[%s1570 + $0x291] sm:$0xff]
        %v2411 = vld [vmem:[%s1570 + $0x2a1] sm:$0xff]
        %v2412 = vld [vmem:[%s1570 + $0x2a9] sm:$0xff]
        %v2413 = vld [vmem:[%s1570 + $0x2b9] sm:$0xff]
        %v2414 = vld [vmem:[%s1570 + $0x2c1] sm:$0xff]
        %v2415 = vld [vmem:[%s1570 + $0x2d1] sm:$0xff]
        %v2416 = vld [vmem:[%s1570 + $0x2d9] sm:$0xff]
        %v2417 = vld [vmem:[%s1570 + $0x2e9] sm:$0xff]
        %v2418 = vld [vmem:[%s1570 + $0x2f1] sm:$0xff]
        %v2419 = vld [vmem:[%s1570 + $0x301] sm:$0xff]
        %v2420 = vld [vmem:[%s1570 + $0x309] sm:$0xff]
        %v2421 = vld [vmem:[%s1570 + $0x319] sm:$0xff]
        %v2422 = vld [vmem:[%s1570 + $0x321] sm:$0xff]
        %v2423 = vld [vmem:[%s3 + $0x4] sm:$0x1]
        %v2424 = vlaneseq
        %v2425 = vshrl.u32 %v2424, 7
        %v2426 = vsub.s32 0, %v2425
        %v2427 = vrot.slane %v2423, %v2426
        %v2428 = vmul.f32 %v2359, %v2427
        %v2429 = vmul.f32 %v2360, %v2427
        %v2430 = vmul.f32 %v2361, %v2427
        %v2431 = vmul.f32 %v2362, %v2427
        %v2432 = vmul.f32 %v2363, %v2427
        %v2433 = vmul.f32 %v2364, %v2427
        %v2434 = vmul.f32 %v2365, %v2427
        %v2435 = vmul.f32 %v2366, %v2427
        %v2436 = vmul.f32 %v2367, %v2427
        %v2437 = vmul.f32 %v2368, %v2427
        %v2438 = vmul.f32 %v2369, %v2427
        %v2439 = vmul.f32 %v2370, %v2427
        %v2440 = vmul.f32 %v2371, %v2427
        %v2441 = vmul.f32 %v2372, %v2427
        %v2442 = vmul.f32 %v2373, %v2427
        %v2443 = vmul.f32 %v2374, %v2427
        %v2444 = vmul.f32 %v2375, %v2427
        %v2445 = vmul.f32 %v2376, %v2427
        %v2446 = vmul.f32 %v2377, %v2427
        %v2447 = vmul.f32 %v2378, %v2427
        %v2448 = vmul.f32 %v2379, %v2427
        %v2449 = vmul.f32 %v2380, %v2427
        %v2450 = vmul.f32 %v2381, %v2427
        %v2451 = vmul.f32 %v2382, %v2427
        %v2452 = vmul.f32 %v2383, %v2427
        %v2453 = vmul.f32 %v2384, %v2427
        %v2454 = vmul.f32 %v2385, %v2427
        %v2455 = vmul.f32 %v2386, %v2427
        %v2456 = vmul.f32 %v2387, %v2427
        %v2457 = vmul.f32 %v2388, %v2427
        %v2458 = vmul.f32 %v2389, %v2427
        %v2459 = vmul.f32 %v2390, %v2427
        %v2460 = vmul.f32 %v2391, %v2427
        %v2461 = vmul.f32 %v2392, %v2427
        %v2462 = vmul.f32 %v2393, %v2427
        %v2463 = vmul.f32 %v2394, %v2427
        %v2464 = vmul.f32 %v2395, %v2427
        %v2465 = vmul.f32 %v2396, %v2427
        %v2466 = vmul.f32 %v2397, %v2427
        %v2467 = vmul.f32 %v2398, %v2427
        %v2468 = vmul.f32 %v2399, %v2427
        %v2469 = vmul.f32 %v2400, %v2427
        %v2470 = vmul.f32 %v2401, %v2427
        %v2471 = vmul.f32 %v2402, %v2427
        %v2472 = vmul.f32 %v2403, %v2427
        %v2473 = vmul.f32 %v2404, %v2427
        %v2474 = vmul.f32 %v2405, %v2427
        %v2475 = vmul.f32 %v2406, %v2427
        %v2476 = vmul.f32 %v2407, %v2427
        %v2477 = vmul.f32 %v2408, %v2427
        %v2478 = vmul.f32 %v2409, %v2427
        %v2479 = vmul.f32 %v2410, %v2427
        %v2480 = vmul.f32 %v2411, %v2427
        %v2481 = vmul.f32 %v2412, %v2427
        %v2482 = vmul.f32 %v2413, %v2427
        %v2483 = vmul.f32 %v2414, %v2427
        %v2484 = vmul.f32 %v2415, %v2427
        %v2485 = vmul.f32 %v2416, %v2427
        %v2486 = vmul.f32 %v2417, %v2427
        %v2487 = vmul.f32 %v2418, %v2427
        %v2488 = vmul.f32 %v2419, %v2427
        %v2489 = vmul.f32 %v2420, %v2427
        %v2490 = vmul.f32 %v2421, %v2427
        %v2491 = vmul.f32 %v2422, %v2427
        %v2492 = vadd.f32 %v2295, %v2428
        %v2493 = vadd.f32 %v2296, %v2429
        %v2494 = vadd.f32 %v2297, %v2430
        %v2495 = vadd.f32 %v2298, %v2431
        %v2496 = vadd.f32 %v2299, %v2432
        %v2497 = vadd.f32 %v2300, %v2433
        %v2498 = vadd.f32 %v2301, %v2434
        %v2499 = vadd.f32 %v2302, %v2435
        %v2500 = vadd.f32 %v2303, %v2436
        %v2501 = vadd.f32 %v2304, %v2437
        %v2502 = vadd.f32 %v2305, %v2438
        %v2503 = vadd.f32 %v2306, %v2439
        %v2504 = vadd.f32 %v2307, %v2440
        %v2505 = vadd.f32 %v2308, %v2441
        %v2506 = vadd.f32 %v2309, %v2442
        %v2507 = vadd.f32 %v2310, %v2443
        %v2508 = vadd.f32 %v2311, %v2444
        %v2509 = vadd.f32 %v2312, %v2445
        %v2510 = vadd.f32 %v2313, %v2446
        %v2511 = vadd.f32 %v2314, %v2447
        %v2512 = vadd.f32 %v2315, %v2448
        %v2513 = vadd.f32 %v2316, %v2449
        %v2514 = vadd.f32 %v2317, %v2450
        %v2515 = vadd.f32 %v2318, %v2451
        %v2516 = vadd.f32 %v2319, %v2452
        %v2517 = vadd.f32 %v2320, %v2453
        %v2518 = vadd.f32 %v2321, %v2454
        %v2519 = vadd.f32 %v2322, %v2455
        %v2520 = vadd.f32 %v2323, %v2456
        %v2521 = vadd.f32 %v2324, %v2457
        %v2522 = vadd.f32 %v2325, %v2458
        %v2523 = vadd.f32 %v2326, %v2459
        %v2524 = vadd.f32 %v2327, %v2460
        %v2525 = vadd.f32 %v2328, %v2461
        %v2526 = vadd.f32 %v2329, %v2462
        %v2527 = vadd.f32 %v2330, %v2463
        %v2528 = vadd.f32 %v2331, %v2464
        %v2529 = vadd.f32 %v2332, %v2465
        %v2530 = vadd.f32 %v2333, %v2466
        %v2531 = vadd.f32 %v2334, %v2467
        %v2532 = vadd.f32 %v2335, %v2468
        %v2533 = vadd.f32 %v2336, %v2469
        %v2534 = vadd.f32 %v2337, %v2470
        %v2535 = vadd.f32 %v2338, %v2471
        %v2536 = vadd.f32 %v2339, %v2472
        %v2537 = vadd.f32 %v2340, %v2473
        %v2538 = vadd.f32 %v2341, %v2474
        %v2539 = vadd.f32 %v2342, %v2475
        %v2540 = vadd.f32 %v2343, %v2476
        %v2541 = vadd.f32 %v2344, %v2477
        %v2542 = vadd.f32 %v2345, %v2478
        %v2543 = vadd.f32 %v2346, %v2479
        %v2544 = vadd.f32 %v2347, %v2480
        %v2545 = vadd.f32 %v2348, %v2481
        %v2546 = vadd.f32 %v2349, %v2482
        %v2547 = vadd.f32 %v2350, %v2483
        %v2548 = vadd.f32 %v2351, %v2484
        %v2549 = vadd.f32 %v2352, %v2485
        %v2550 = vadd.f32 %v2353, %v2486
        %v2551 = vadd.f32 %v2354, %v2487
        %v2552 = vadd.f32 %v2355, %v2488
        %v2553 = vadd.f32 %v2356, %v2489
        %v2554 = vadd.f32 %v2357, %v2490
        %v2555 = vadd.f32 %v2358, %v2491
        %v2556 = vld [vmem:[%s1570 + $0x2] sm:$0xff]
        %v2557 = vld [vmem:[%s1570 + $0xa] sm:$0xff]
        %v2558 = vld [vmem:[%s1570 + $0x1a] sm:$0xff]
        %v2559 = vld [vmem:[%s1570 + $0x22] sm:$0xff]
        %v2560 = vld [vmem:[%s1570 + $0x32] sm:$0xff]
        %v2561 = vld [vmem:[%s1570 + $0x3a] sm:$0xff]
        %v2562 = vld [vmem:[%s1570 + $0x4a] sm:$0xff]
        %v2563 = vld [vmem:[%s1570 + $0x52] sm:$0xff]
        %v2564 = vld [vmem:[%s1570 + $0x62] sm:$0xff]
        %v2565 = vld [vmem:[%s1570 + $0x6a] sm:$0xff]
        %v2566 = vld [vmem:[%s1570 + $0x7a] sm:$0xff]
        %v2567 = vld [vmem:[%s1570 + $0x82] sm:$0xff]
        %v2568 = vld [vmem:[%s1570 + $0x92] sm:$0xff]
        %v2569 = vld [vmem:[%s1570 + $0x9a] sm:$0xff]
        %v2570 = vld [vmem:[%s1570 + $0xaa] sm:$0xff]
        %v2571 = vld [vmem:[%s1570 + $0xb2] sm:$0xff]
        %v2572 = vld [vmem:[%s1570 + $0xc2] sm:$0xff]
        %v2573 = vld [vmem:[%s1570 + $0xca] sm:$0xff]
        %v2574 = vld [vmem:[%s1570 + $0xda] sm:$0xff]
        %v2575 = vld [vmem:[%s1570 + $0xe2] sm:$0xff]
        %v2576 = vld [vmem:[%s1570 + $0xf2] sm:$0xff]
        %v2577 = vld [vmem:[%s1570 + $0xfa] sm:$0xff]
        %v2578 = vld [vmem:[%s1570 + $0x10a] sm:$0xff]
        %v2579 = vld [vmem:[%s1570 + $0x112] sm:$0xff]
        %v2580 = vld [vmem:[%s1570 + $0x122] sm:$0xff]
        %v2581 = vld [vmem:[%s1570 + $0x12a] sm:$0xff]
        %v2582 = vld [vmem:[%s1570 + $0x13a] sm:$0xff]
        %v2583 = vld [vmem:[%s1570 + $0x142] sm:$0xff]
        %v2584 = vld [vmem:[%s1570 + $0x152] sm:$0xff]
        %v2585 = vld [vmem:[%s1570 + $0x15a] sm:$0xff]
        %v2586 = vld [vmem:[%s1570 + $0x16a] sm:$0xff]
        %v2587 = vld [vmem:[%s1570 + $0x172] sm:$0xff]
        %v2588 = vld [vmem:[%s1570 + $0x1b2] sm:$0xff]
        %v2589 = vld [vmem:[%s1570 + $0x1ba] sm:$0xff]
        %v2590 = vld [vmem:[%s1570 + $0x1ca] sm:$0xff]
        %v2591 = vld [vmem:[%s1570 + $0x1d2] sm:$0xff]
        %v2592 = vld [vmem:[%s1570 + $0x1e2] sm:$0xff]
        %v2593 = vld [vmem:[%s1570 + $0x1ea] sm:$0xff]
        %v2594 = vld [vmem:[%s1570 + $0x1fa] sm:$0xff]
        %v2595 = vld [vmem:[%s1570 + $0x202] sm:$0xff]
        %v2596 = vld [vmem:[%s1570 + $0x212] sm:$0xff]
        %v2597 = vld [vmem:[%s1570 + $0x21a] sm:$0xff]
        %v2598 = vld [vmem:[%s1570 + $0x22a] sm:$0xff]
        %v2599 = vld [vmem:[%s1570 + $0x232] sm:$0xff]
        %v2600 = vld [vmem:[%s1570 + $0x242] sm:$0xff]
        %v2601 = vld [vmem:[%s1570 + $0x24a] sm:$0xff]
        %v2602 = vld [vmem:[%s1570 + $0x25a] sm:$0xff]
        %v2603 = vld [vmem:[%s1570 + $0x262] sm:$0xff]
        %v2604 = vld [vmem:[%s1570 + $0x272] sm:$0xff]
        %v2605 = vld [vmem:[%s1570 + $0x27a] sm:$0xff]
        %v2606 = vld [vmem:[%s1570 + $0x28a] sm:$0xff]
        %v2607 = vld [vmem:[%s1570 + $0x292] sm:$0xff]
        %v2608 = vld [vmem:[%s1570 + $0x2a2] sm:$0xff]
        %v2609 = vld [vmem:[%s1570 + $0x2aa] sm:$0xff]
        %v2610 = vld [vmem:[%s1570 + $0x2ba] sm:$0xff]
        %v2611 = vld [vmem:[%s1570 + $0x2c2] sm:$0xff]
        %v2612 = vld [vmem:[%s1570 + $0x2d2] sm:$0xff]
        %v2613 = vld [vmem:[%s1570 + $0x2da] sm:$0xff]
        %v2614 = vld [vmem:[%s1570 + $0x2ea] sm:$0xff]
        %v2615 = vld [vmem:[%s1570 + $0x2f2] sm:$0xff]
        %v2616 = vld [vmem:[%s1570 + $0x302] sm:$0xff]
        %v2617 = vld [vmem:[%s1570 + $0x30a] sm:$0xff]
        %v2618 = vld [vmem:[%s1570 + $0x31a] sm:$0xff]
        %v2619 = vld [vmem:[%s1570 + $0x322] sm:$0xff]
        %v2620 = vld [vmem:[%s3 + $0x5] sm:$0x1]
        %v2621 = vlaneseq
        %v2622 = vshrl.u32 %v2621, 7
        %v2623 = vsub.s32 0, %v2622
        %v2624 = vrot.slane %v2620, %v2623
        %v2625 = vmul.f32 %v2556, %v2624
        %v2626 = vmul.f32 %v2557, %v2624
        %v2627 = vmul.f32 %v2558, %v2624
        %v2628 = vmul.f32 %v2559, %v2624
        %v2629 = vmul.f32 %v2560, %v2624
        %v2630 = vmul.f32 %v2561, %v2624
        %v2631 = vmul.f32 %v2562, %v2624
        %v2632 = vmul.f32 %v2563, %v2624
        %v2633 = vmul.f32 %v2564, %v2624
        %v2634 = vmul.f32 %v2565, %v2624
        %v2635 = vmul.f32 %v2566, %v2624
        %v2636 = vmul.f32 %v2567, %v2624
        %v2637 = vmul.f32 %v2568, %v2624
        %v2638 = vmul.f32 %v2569, %v2624
        %v2639 = vmul.f32 %v2570, %v2624
        %v2640 = vmul.f32 %v2571, %v2624
        %v2641 = vmul.f32 %v2572, %v2624
        %v2642 = vmul.f32 %v2573, %v2624
        %v2643 = vmul.f32 %v2574, %v2624
        %v2644 = vmul.f32 %v2575, %v2624
        %v2645 = vmul.f32 %v2576, %v2624
        %v2646 = vmul.f32 %v2577, %v2624
        %v2647 = vmul.f32 %v2578, %v2624
        %v2648 = vmul.f32 %v2579, %v2624
        %v2649 = vmul.f32 %v2580, %v2624
        %v2650 = vmul.f32 %v2581, %v2624
        %v2651 = vmul.f32 %v2582, %v2624
        %v2652 = vmul.f32 %v2583, %v2624
        %v2653 = vmul.f32 %v2584, %v2624
        %v2654 = vmul.f32 %v2585, %v2624
        %v2655 = vmul.f32 %v2586, %v2624
        %v2656 = vmul.f32 %v2587, %v2624
        %v2657 = vmul.f32 %v2588, %v2624
        %v2658 = vmul.f32 %v2589, %v2624
        %v2659 = vmul.f32 %v2590, %v2624
        %v2660 = vmul.f32 %v2591, %v2624
        %v2661 = vmul.f32 %v2592, %v2624
        %v2662 = vmul.f32 %v2593, %v2624
        %v2663 = vmul.f32 %v2594, %v2624
        %v2664 = vmul.f32 %v2595, %v2624
        %v2665 = vmul.f32 %v2596, %v2624
        %v2666 = vmul.f32 %v2597, %v2624
        %v2667 = vmul.f32 %v2598, %v2624
        %v2668 = vmul.f32 %v2599, %v2624
        %v2669 = vmul.f32 %v2600, %v2624
        %v2670 = vmul.f32 %v2601, %v2624
        %v2671 = vmul.f32 %v2602, %v2624
        %v2672 = vmul.f32 %v2603, %v2624
        %v2673 = vmul.f32 %v2604, %v2624
        %v2674 = vmul.f32 %v2605, %v2624
        %v2675 = vmul.f32 %v2606, %v2624
        %v2676 = vmul.f32 %v2607, %v2624
        %v2677 = vmul.f32 %v2608, %v2624
        %v2678 = vmul.f32 %v2609, %v2624
        %v2679 = vmul.f32 %v2610, %v2624
        %v2680 = vmul.f32 %v2611, %v2624
        %v2681 = vmul.f32 %v2612, %v2624
        %v2682 = vmul.f32 %v2613, %v2624
        %v2683 = vmul.f32 %v2614, %v2624
        %v2684 = vmul.f32 %v2615, %v2624
        %v2685 = vmul.f32 %v2616, %v2624
        %v2686 = vmul.f32 %v2617, %v2624
        %v2687 = vmul.f32 %v2618, %v2624
        %v2688 = vmul.f32 %v2619, %v2624
        %v2689 = vadd.f32 %v2492, %v2625
        %v2690 = vadd.f32 %v2493, %v2626
        %v2691 = vadd.f32 %v2494, %v2627
        %v2692 = vadd.f32 %v2495, %v2628
        %v2693 = vadd.f32 %v2496, %v2629
        %v2694 = vadd.f32 %v2497, %v2630
        %v2695 = vadd.f32 %v2498, %v2631
        %v2696 = vadd.f32 %v2499, %v2632
        %v2697 = vadd.f32 %v2500, %v2633
        %v2698 = vadd.f32 %v2501, %v2634
        %v2699 = vadd.f32 %v2502, %v2635
        %v2700 = vadd.f32 %v2503, %v2636
        %v2701 = vadd.f32 %v2504, %v2637
        %v2702 = vadd.f32 %v2505, %v2638
        %v2703 = vadd.f32 %v2506, %v2639
        %v2704 = vadd.f32 %v2507, %v2640
        %v2705 = vadd.f32 %v2508, %v2641
        %v2706 = vadd.f32 %v2509, %v2642
        %v2707 = vadd.f32 %v2510, %v2643
        %v2708 = vadd.f32 %v2511, %v2644
        %v2709 = vadd.f32 %v2512, %v2645
        %v2710 = vadd.f32 %v2513, %v2646
        %v2711 = vadd.f32 %v2514, %v2647
        %v2712 = vadd.f32 %v2515, %v2648
        %v2713 = vadd.f32 %v2516, %v2649
        %v2714 = vadd.f32 %v2517, %v2650
        %v2715 = vadd.f32 %v2518, %v2651
        %v2716 = vadd.f32 %v2519, %v2652
        %v2717 = vadd.f32 %v2520, %v2653
        %v2718 = vadd.f32 %v2521, %v2654
        %v2719 = vadd.f32 %v2522, %v2655
        %v2720 = vadd.f32 %v2523, %v2656
        %v2721 = vadd.f32 %v2524, %v2657
        %v2722 = vadd.f32 %v2525, %v2658
        %v2723 = vadd.f32 %v2526, %v2659
        %v2724 = vadd.f32 %v2527, %v2660
        %v2725 = vadd.f32 %v2528, %v2661
        %v2726 = vadd.f32 %v2529, %v2662
        %v2727 = vadd.f32 %v2530, %v2663
        %v2728 = vadd.f32 %v2531, %v2664
        %v2729 = vadd.f32 %v2532, %v2665
        %v2730 = vadd.f32 %v2533, %v2666
        %v2731 = vadd.f32 %v2534, %v2667
        %v2732 = vadd.f32 %v2535, %v2668
        %v2733 = vadd.f32 %v2536, %v2669
        %v2734 = vadd.f32 %v2537, %v2670
        %v2735 = vadd.f32 %v2538, %v2671
        %v2736 = vadd.f32 %v2539, %v2672
        %v2737 = vadd.f32 %v2540, %v2673
        %v2738 = vadd.f32 %v2541, %v2674
        %v2739 = vadd.f32 %v2542, %v2675
        %v2740 = vadd.f32 %v2543, %v2676
        %v2741 = vadd.f32 %v2544, %v2677
        %v2742 = vadd.f32 %v2545, %v2678
        %v2743 = vadd.f32 %v2546, %v2679
        %v2744 = vadd.f32 %v2547, %v2680
        %v2745 = vadd.f32 %v2548, %v2681
        %v2746 = vadd.f32 %v2549, %v2682
        %v2747 = vadd.f32 %v2550, %v2683
        %v2748 = vadd.f32 %v2551, %v2684
        %v2749 = vadd.f32 %v2552, %v2685
        %v2750 = vadd.f32 %v2553, %v2686
        %v2751 = vadd.f32 %v2554, %v2687
        %v2752 = vadd.f32 %v2555, %v2688
        %s2753 = scalar_lea.vmem [#allocation2], 48
        %v2754 = vld [vmem:[%s2753] sm:$0xff]
        %v2755 = vld [vmem:[%s2753 + $0x8] sm:$0xff]
        %v2756 = vld [vmem:[%s2753 + $0x18] sm:$0xff]
        %v2757 = vld [vmem:[%s2753 + $0x20] sm:$0xff]
        %v2758 = vld [vmem:[%s2753 + $0x30] sm:$0xff]
        %v2759 = vld [vmem:[%s2753 + $0x38] sm:$0xff]
        %v2760 = vld [vmem:[%s2753 + $0x48] sm:$0xff]
        %v2761 = vld [vmem:[%s2753 + $0x50] sm:$0xff]
        %v2762 = vld [vmem:[%s2753 + $0x60] sm:$0xff]
        %v2763 = vld [vmem:[%s2753 + $0x68] sm:$0xff]
        %v2764 = vld [vmem:[%s2753 + $0x78] sm:$0xff]
        %v2765 = vld [vmem:[%s2753 + $0x80] sm:$0xff]
        %v2766 = vld [vmem:[%s2753 + $0x90] sm:$0xff]
        %v2767 = vld [vmem:[%s2753 + $0x98] sm:$0xff]
        %v2768 = vld [vmem:[%s2753 + $0xa8] sm:$0xff]
        %v2769 = vld [vmem:[%s2753 + $0xb0] sm:$0xff]
        %v2770 = vld [vmem:[%s2753 + $0xc0] sm:$0xff]
        %v2771 = vld [vmem:[%s2753 + $0xc8] sm:$0xff]
        %v2772 = vld [vmem:[%s2753 + $0xd8] sm:$0xff]
        %v2773 = vld [vmem:[%s2753 + $0xe0] sm:$0xff]
        %v2774 = vld [vmem:[%s2753 + $0xf0] sm:$0xff]
        %v2775 = vld [vmem:[%s2753 + $0xf8] sm:$0xff]
        %v2776 = vld [vmem:[%s2753 + $0x108] sm:$0xff]
        %v2777 = vld [vmem:[%s2753 + $0x110] sm:$0xff]
        %v2778 = vld [vmem:[%s2753 + $0x120] sm:$0xff]
        %v2779 = vld [vmem:[%s2753 + $0x128] sm:$0xff]
        %v2780 = vld [vmem:[%s2753 + $0x138] sm:$0xff]
        %v2781 = vld [vmem:[%s2753 + $0x140] sm:$0xff]
        %v2782 = vld [vmem:[%s2753 + $0x150] sm:$0xff]
        %v2783 = vld [vmem:[%s2753 + $0x158] sm:$0xff]
        %v2784 = vld [vmem:[%s2753 + $0x168] sm:$0xff]
        %v2785 = vld [vmem:[%s2753 + $0x170] sm:$0xff]
        %v2786 = vld [vmem:[%s2753 + $0x1b0] sm:$0xff]
        %v2787 = vld [vmem:[%s2753 + $0x1b8] sm:$0xff]
        %v2788 = vld [vmem:[%s2753 + $0x1c8] sm:$0xff]
        %v2789 = vld [vmem:[%s2753 + $0x1d0] sm:$0xff]
        %v2790 = vld [vmem:[%s2753 + $0x1e0] sm:$0xff]
        %v2791 = vld [vmem:[%s2753 + $0x1e8] sm:$0xff]
        %v2792 = vld [vmem:[%s2753 + $0x1f8] sm:$0xff]
        %v2793 = vld [vmem:[%s2753 + $0x200] sm:$0xff]
        %v2794 = vld [vmem:[%s2753 + $0x210] sm:$0xff]
        %v2795 = vld [vmem:[%s2753 + $0x218] sm:$0xff]
        %v2796 = vld [vmem:[%s2753 + $0x228] sm:$0xff]
        %v2797 = vld [vmem:[%s2753 + $0x230] sm:$0xff]
        %v2798 = vld [vmem:[%s2753 + $0x240] sm:$0xff]
        %v2799 = vld [vmem:[%s2753 + $0x248] sm:$0xff]
        %v2800 = vld [vmem:[%s2753 + $0x258] sm:$0xff]
        %v2801 = vld [vmem:[%s2753 + $0x260] sm:$0xff]
        %v2802 = vld [vmem:[%s2753 + $0x270] sm:$0xff]
        %v2803 = vld [vmem:[%s2753 + $0x278] sm:$0xff]
        %v2804 = vld [vmem:[%s2753 + $0x288] sm:$0xff]
        %v2805 = vld [vmem:[%s2753 + $0x290] sm:$0xff]
        %v2806 = vld [vmem:[%s2753 + $0x2a0] sm:$0xff]
        %v2807 = vld [vmem:[%s2753 + $0x2a8] sm:$0xff]
        %v2808 = vld [vmem:[%s2753 + $0x2b8] sm:$0xff]
        %v2809 = vld [vmem:[%s2753 + $0x2c0] sm:$0xff]
        %v2810 = vld [vmem:[%s2753 + $0x2d0] sm:$0xff]
        %v2811 = vld [vmem:[%s2753 + $0x2d8] sm:$0xff]
        %v2812 = vld [vmem:[%s2753 + $0x2e8] sm:$0xff]
        %v2813 = vld [vmem:[%s2753 + $0x2f0] sm:$0xff]
        %v2814 = vld [vmem:[%s2753 + $0x300] sm:$0xff]
        %v2815 = vld [vmem:[%s2753 + $0x308] sm:$0xff]
        %v2816 = vld [vmem:[%s2753 + $0x318] sm:$0xff]
        %v2817 = vld [vmem:[%s2753 + $0x320] sm:$0xff]
        %v2818 = vld [vmem:[%s3 + $0x6] sm:$0x1]
        %v2819 = vlaneseq
        %v2820 = vshrl.u32 %v2819, 7
        %v2821 = vsub.s32 0, %v2820
        %v2822 = vrot.slane %v2818, %v2821
        %v2823 = vmul.f32 %v2754, %v2822
        %v2824 = vmul.f32 %v2755, %v2822
        %v2825 = vmul.f32 %v2756, %v2822
        %v2826 = vmul.f32 %v2757, %v2822
        %v2827 = vmul.f32 %v2758, %v2822
        %v2828 = vmul.f32 %v2759, %v2822
        %v2829 = vmul.f32 %v2760, %v2822
        %v2830 = vmul.f32 %v2761, %v2822
        %v2831 = vmul.f32 %v2762, %v2822
        %v2832 = vmul.f32 %v2763, %v2822
        %v2833 = vmul.f32 %v2764, %v2822
        %v2834 = vmul.f32 %v2765, %v2822
        %v2835 = vmul.f32 %v2766, %v2822
        %v2836 = vmul.f32 %v2767, %v2822
        %v2837 = vmul.f32 %v2768, %v2822
        %v2838 = vmul.f32 %v2769, %v2822
        %v2839 = vmul.f32 %v2770, %v2822
        %v2840 = vmul.f32 %v2771, %v2822
        %v2841 = vmul.f32 %v2772, %v2822
        %v2842 = vmul.f32 %v2773, %v2822
        %v2843 = vmul.f32 %v2774, %v2822
        %v2844 = vmul.f32 %v2775, %v2822
        %v2845 = vmul.f32 %v2776, %v2822
        %v2846 = vmul.f32 %v2777, %v2822
        %v2847 = vmul.f32 %v2778, %v2822
        %v2848 = vmul.f32 %v2779, %v2822
        %v2849 = vmul.f32 %v2780, %v2822
        %v2850 = vmul.f32 %v2781, %v2822
        %v2851 = vmul.f32 %v2782, %v2822
        %v2852 = vmul.f32 %v2783, %v2822
        %v2853 = vmul.f32 %v2784, %v2822
        %v2854 = vmul.f32 %v2785, %v2822
        %v2855 = vmul.f32 %v2786, %v2822
        %v2856 = vmul.f32 %v2787, %v2822
        %v2857 = vmul.f32 %v2788, %v2822
        %v2858 = vmul.f32 %v2789, %v2822
        %v2859 = vmul.f32 %v2790, %v2822
        %v2860 = vmul.f32 %v2791, %v2822
        %v2861 = vmul.f32 %v2792, %v2822
        %v2862 = vmul.f32 %v2793, %v2822
        %v2863 = vmul.f32 %v2794, %v2822
        %v2864 = vmul.f32 %v2795, %v2822
        %v2865 = vmul.f32 %v2796, %v2822
        %v2866 = vmul.f32 %v2797, %v2822
        %v2867 = vmul.f32 %v2798, %v2822
        %v2868 = vmul.f32 %v2799, %v2822
        %v2869 = vmul.f32 %v2800, %v2822
        %v2870 = vmul.f32 %v2801, %v2822
        %v2871 = vmul.f32 %v2802, %v2822
        %v2872 = vmul.f32 %v2803, %v2822
        %v2873 = vmul.f32 %v2804, %v2822
        %v2874 = vmul.f32 %v2805, %v2822
        %v2875 = vmul.f32 %v2806, %v2822
        %v2876 = vmul.f32 %v2807, %v2822
        %v2877 = vmul.f32 %v2808, %v2822
        %v2878 = vmul.f32 %v2809, %v2822
        %v2879 = vmul.f32 %v2810, %v2822
        %v2880 = vmul.f32 %v2811, %v2822
        %v2881 = vmul.f32 %v2812, %v2822
        %v2882 = vmul.f32 %v2813, %v2822
        %v2883 = vmul.f32 %v2814, %v2822
        %v2884 = vmul.f32 %v2815, %v2822
        %v2885 = vmul.f32 %v2816, %v2822
        %v2886 = vmul.f32 %v2817, %v2822
        %v2887 = vadd.f32 %v2689, %v2823
        %v2888 = vadd.f32 %v2690, %v2824
        %v2889 = vadd.f32 %v2691, %v2825
        %v2890 = vadd.f32 %v2692, %v2826
        %v2891 = vadd.f32 %v2693, %v2827
        %v2892 = vadd.f32 %v2694, %v2828
        %v2893 = vadd.f32 %v2695, %v2829
        %v2894 = vadd.f32 %v2696, %v2830
        %v2895 = vadd.f32 %v2697, %v2831
        %v2896 = vadd.f32 %v2698, %v2832
        %v2897 = vadd.f32 %v2699, %v2833
        %v2898 = vadd.f32 %v2700, %v2834
        %v2899 = vadd.f32 %v2701, %v2835
        %v2900 = vadd.f32 %v2702, %v2836
        %v2901 = vadd.f32 %v2703, %v2837
        %v2902 = vadd.f32 %v2704, %v2838
        %v2903 = vadd.f32 %v2705, %v2839
        %v2904 = vadd.f32 %v2706, %v2840
        %v2905 = vadd.f32 %v2707, %v2841
        %v2906 = vadd.f32 %v2708, %v2842
        %v2907 = vadd.f32 %v2709, %v2843
        %v2908 = vadd.f32 %v2710, %v2844
        %v2909 = vadd.f32 %v2711, %v2845
        %v2910 = vadd.f32 %v2712, %v2846
        %v2911 = vadd.f32 %v2713, %v2847
        %v2912 = vadd.f32 %v2714, %v2848
        %v2913 = vadd.f32 %v2715, %v2849
        %v2914 = vadd.f32 %v2716, %v2850
        %v2915 = vadd.f32 %v2717, %v2851
        %v2916 = vadd.f32 %v2718, %v2852
        %v2917 = vadd.f32 %v2719, %v2853
        %v2918 = vadd.f32 %v2720, %v2854
        %v2919 = vadd.f32 %v2721, %v2855
        %v2920 = vadd.f32 %v2722, %v2856
        %v2921 = vadd.f32 %v2723, %v2857
        %v2922 = vadd.f32 %v2724, %v2858
        %v2923 = vadd.f32 %v2725, %v2859
        %v2924 = vadd.f32 %v2726, %v2860
        %v2925 = vadd.f32 %v2727, %v2861
        %v2926 = vadd.f32 %v2728, %v2862
        %v2927 = vadd.f32 %v2729, %v2863
        %v2928 = vadd.f32 %v2730, %v2864
        %v2929 = vadd.f32 %v2731, %v2865
        %v2930 = vadd.f32 %v2732, %v2866
        %v2931 = vadd.f32 %v2733, %v2867
        %v2932 = vadd.f32 %v2734, %v2868
        %v2933 = vadd.f32 %v2735, %v2869
        %v2934 = vadd.f32 %v2736, %v2870
        %v2935 = vadd.f32 %v2737, %v2871
        %v2936 = vadd.f32 %v2738, %v2872
        %v2937 = vadd.f32 %v2739, %v2873
        %v2938 = vadd.f32 %v2740, %v2874
        %v2939 = vadd.f32 %v2741, %v2875
        %v2940 = vadd.f32 %v2742, %v2876
        %v2941 = vadd.f32 %v2743, %v2877
        %v2942 = vadd.f32 %v2744, %v2878
        %v2943 = vadd.f32 %v2745, %v2879
        %v2944 = vadd.f32 %v2746, %v2880
        %v2945 = vadd.f32 %v2747, %v2881
        %v2946 = vadd.f32 %v2748, %v2882
        %v2947 = vadd.f32 %v2749, %v2883
        %v2948 = vadd.f32 %v2750, %v2884
        %v2949 = vadd.f32 %v2751, %v2885
        %v2950 = vadd.f32 %v2752, %v2886
        %v2951 = vld [vmem:[%s2753 + $0x1] sm:$0xff]
        %v2952 = vld [vmem:[%s2753 + $0x9] sm:$0xff]
        %v2953 = vld [vmem:[%s2753 + $0x19] sm:$0xff]
        %v2954 = vld [vmem:[%s2753 + $0x21] sm:$0xff]
        %v2955 = vld [vmem:[%s2753 + $0x31] sm:$0xff]
        %v2956 = vld [vmem:[%s2753 + $0x39] sm:$0xff]
        %v2957 = vld [vmem:[%s2753 + $0x49] sm:$0xff]
        %v2958 = vld [vmem:[%s2753 + $0x51] sm:$0xff]
        %v2959 = vld [vmem:[%s2753 + $0x61] sm:$0xff]
        %v2960 = vld [vmem:[%s2753 + $0x69] sm:$0xff]
        %v2961 = vld [vmem:[%s2753 + $0x79] sm:$0xff]
        %v2962 = vld [vmem:[%s2753 + $0x81] sm:$0xff]
        %v2963 = vld [vmem:[%s2753 + $0x91] sm:$0xff]
        %v2964 = vld [vmem:[%s2753 + $0x99] sm:$0xff]
        %v2965 = vld [vmem:[%s2753 + $0xa9] sm:$0xff]
        %v2966 = vld [vmem:[%s2753 + $0xb1] sm:$0xff]
        %v2967 = vld [vmem:[%s2753 + $0xc1] sm:$0xff]
        %v2968 = vld [vmem:[%s2753 + $0xc9] sm:$0xff]
        %v2969 = vld [vmem:[%s2753 + $0xd9] sm:$0xff]
        %v2970 = vld [vmem:[%s2753 + $0xe1] sm:$0xff]
        %v2971 = vld [vmem:[%s2753 + $0xf1] sm:$0xff]
        %v2972 = vld [vmem:[%s2753 + $0xf9] sm:$0xff]
        %v2973 = vld [vmem:[%s2753 + $0x109] sm:$0xff]
        %v2974 = vld [vmem:[%s2753 + $0x111] sm:$0xff]
        %v2975 = vld [vmem:[%s2753 + $0x121] sm:$0xff]
        %v2976 = vld [vmem:[%s2753 + $0x129] sm:$0xff]
        %v2977 = vld [vmem:[%s2753 + $0x139] sm:$0xff]
        %v2978 = vld [vmem:[%s2753 + $0x141] sm:$0xff]
        %v2979 = vld [vmem:[%s2753 + $0x151] sm:$0xff]
        %v2980 = vld [vmem:[%s2753 + $0x159] sm:$0xff]
        %v2981 = vld [vmem:[%s2753 + $0x169] sm:$0xff]
        %v2982 = vld [vmem:[%s2753 + $0x171] sm:$0xff]
        %v2983 = vld [vmem:[%s2753 + $0x1b1] sm:$0xff]
        %v2984 = vld [vmem:[%s2753 + $0x1b9] sm:$0xff]
        %v2985 = vld [vmem:[%s2753 + $0x1c9] sm:$0xff]
        %v2986 = vld [vmem:[%s2753 + $0x1d1] sm:$0xff]
        %v2987 = vld [vmem:[%s2753 + $0x1e1] sm:$0xff]
        %v2988 = vld [vmem:[%s2753 + $0x1e9] sm:$0xff]
        %v2989 = vld [vmem:[%s2753 + $0x1f9] sm:$0xff]
        %v2990 = vld [vmem:[%s2753 + $0x201] sm:$0xff]
        %v2991 = vld [vmem:[%s2753 + $0x211] sm:$0xff]
        %v2992 = vld [vmem:[%s2753 + $0x219] sm:$0xff]
        %v2993 = vld [vmem:[%s2753 + $0x229] sm:$0xff]
        %v2994 = vld [vmem:[%s2753 + $0x231] sm:$0xff]
        %v2995 = vld [vmem:[%s2753 + $0x241] sm:$0xff]
        %v2996 = vld [vmem:[%s2753 + $0x249] sm:$0xff]
        %v2997 = vld [vmem:[%s2753 + $0x259] sm:$0xff]
        %v2998 = vld [vmem:[%s2753 + $0x261] sm:$0xff]
        %v2999 = vld [vmem:[%s2753 + $0x271] sm:$0xff]
        %v3000 = vld [vmem:[%s2753 + $0x279] sm:$0xff]
        %v3001 = vld [vmem:[%s2753 + $0x289] sm:$0xff]
        %v3002 = vld [vmem:[%s2753 + $0x291] sm:$0xff]
        %v3003 = vld [vmem:[%s2753 + $0x2a1] sm:$0xff]
        %v3004 = vld [vmem:[%s2753 + $0x2a9] sm:$0xff]
        %v3005 = vld [vmem:[%s2753 + $0x2b9] sm:$0xff]
        %v3006 = vld [vmem:[%s2753 + $0x2c1] sm:$0xff]
        %v3007 = vld [vmem:[%s2753 + $0x2d1] sm:$0xff]
        %v3008 = vld [vmem:[%s2753 + $0x2d9] sm:$0xff]
        %v3009 = vld [vmem:[%s2753 + $0x2e9] sm:$0xff]
        %v3010 = vld [vmem:[%s2753 + $0x2f1] sm:$0xff]
        %v3011 = vld [vmem:[%s2753 + $0x301] sm:$0xff]
        %v3012 = vld [vmem:[%s2753 + $0x309] sm:$0xff]
        %v3013 = vld [vmem:[%s2753 + $0x319] sm:$0xff]
        %v3014 = vld [vmem:[%s2753 + $0x321] sm:$0xff]
        %v3015 = vld [vmem:[%s3 + $0x7] sm:$0x1]
        %v3016 = vlaneseq
        %v3017 = vshrl.u32 %v3016, 7
        %v3018 = vsub.s32 0, %v3017
        %v3019 = vrot.slane %v3015, %v3018
        %v3020 = vmul.f32 %v2951, %v3019
        %v3021 = vmul.f32 %v2952, %v3019
        %v3022 = vmul.f32 %v2953, %v3019
        %v3023 = vmul.f32 %v2954, %v3019
        %v3024 = vmul.f32 %v2955, %v3019
        %v3025 = vmul.f32 %v2956, %v3019
        %v3026 = vmul.f32 %v2957, %v3019
        %v3027 = vmul.f32 %v2958, %v3019
        %v3028 = vmul.f32 %v2959, %v3019
        %v3029 = vmul.f32 %v2960, %v3019
        %v3030 = vmul.f32 %v2961, %v3019
        %v3031 = vmul.f32 %v2962, %v3019
        %v3032 = vmul.f32 %v2963, %v3019
        %v3033 = vmul.f32 %v2964, %v3019
        %v3034 = vmul.f32 %v2965, %v3019
        %v3035 = vmul.f32 %v2966, %v3019
        %v3036 = vmul.f32 %v2967, %v3019
        %v3037 = vmul.f32 %v2968, %v3019
        %v3038 = vmul.f32 %v2969, %v3019
        %v3039 = vmul.f32 %v2970, %v3019
        %v3040 = vmul.f32 %v2971, %v3019
        %v3041 = vmul.f32 %v2972, %v3019
        %v3042 = vmul.f32 %v2973, %v3019
        %v3043 = vmul.f32 %v2974, %v3019
        %v3044 = vmul.f32 %v2975, %v3019
        %v3045 = vmul.f32 %v2976, %v3019
        %v3046 = vmul.f32 %v2977, %v3019
        %v3047 = vmul.f32 %v2978, %v3019
        %v3048 = vmul.f32 %v2979, %v3019
        %v3049 = vmul.f32 %v2980, %v3019
        %v3050 = vmul.f32 %v2981, %v3019
        %v3051 = vmul.f32 %v2982, %v3019
        %v3052 = vmul.f32 %v2983, %v3019
        %v3053 = vmul.f32 %v2984, %v3019
        %v3054 = vmul.f32 %v2985, %v3019
        %v3055 = vmul.f32 %v2986, %v3019
        %v3056 = vmul.f32 %v2987, %v3019
        %v3057 = vmul.f32 %v2988, %v3019
        %v3058 = vmul.f32 %v2989, %v3019
        %v3059 = vmul.f32 %v2990, %v3019
        %v3060 = vmul.f32 %v2991, %v3019
        %v3061 = vmul.f32 %v2992, %v3019
        %v3062 = vmul.f32 %v2993, %v3019
        %v3063 = vmul.f32 %v2994, %v3019
        %v3064 = vmul.f32 %v2995, %v3019
        %v3065 = vmul.f32 %v2996, %v3019
        %v3066 = vmul.f32 %v2997, %v3019
        %v3067 = vmul.f32 %v2998, %v3019
        %v3068 = vmul.f32 %v2999, %v3019
        %v3069 = vmul.f32 %v3000, %v3019
        %v3070 = vmul.f32 %v3001, %v3019
        %v3071 = vmul.f32 %v3002, %v3019
        %v3072 = vmul.f32 %v3003, %v3019
        %v3073 = vmul.f32 %v3004, %v3019
        %v3074 = vmul.f32 %v3005, %v3019
        %v3075 = vmul.f32 %v3006, %v3019
        %v3076 = vmul.f32 %v3007, %v3019
        %v3077 = vmul.f32 %v3008, %v3019
        %v3078 = vmul.f32 %v3009, %v3019
        %v3079 = vmul.f32 %v3010, %v3019
        %v3080 = vmul.f32 %v3011, %v3019
        %v3081 = vmul.f32 %v3012, %v3019
        %v3082 = vmul.f32 %v3013, %v3019
        %v3083 = vmul.f32 %v3014, %v3019
        %v3084 = vadd.f32 %v2887, %v3020
        %v3085 = vadd.f32 %v2888, %v3021
        %v3086 = vadd.f32 %v2889, %v3022
        %v3087 = vadd.f32 %v2890, %v3023
        %v3088 = vadd.f32 %v2891, %v3024
        %v3089 = vadd.f32 %v2892, %v3025
        %v3090 = vadd.f32 %v2893, %v3026
        %v3091 = vadd.f32 %v2894, %v3027
        %v3092 = vadd.f32 %v2895, %v3028
        %v3093 = vadd.f32 %v2896, %v3029
        %v3094 = vadd.f32 %v2897, %v3030
        %v3095 = vadd.f32 %v2898, %v3031
        %v3096 = vadd.f32 %v2899, %v3032
        %v3097 = vadd.f32 %v2900, %v3033
        %v3098 = vadd.f32 %v2901, %v3034
        %v3099 = vadd.f32 %v2902, %v3035
        %v3100 = vadd.f32 %v2903, %v3036
        %v3101 = vadd.f32 %v2904, %v3037
        %v3102 = vadd.f32 %v2905, %v3038
        %v3103 = vadd.f32 %v2906, %v3039
        %v3104 = vadd.f32 %v2907, %v3040
        %v3105 = vadd.f32 %v2908, %v3041
        %v3106 = vadd.f32 %v2909, %v3042
        %v3107 = vadd.f32 %v2910, %v3043
        %v3108 = vadd.f32 %v2911, %v3044
        %v3109 = vadd.f32 %v2912, %v3045
        %v3110 = vadd.f32 %v2913, %v3046
        %v3111 = vadd.f32 %v2914, %v3047
        %v3112 = vadd.f32 %v2915, %v3048
        %v3113 = vadd.f32 %v2916, %v3049
        %v3114 = vadd.f32 %v2917, %v3050
        %v3115 = vadd.f32 %v2918, %v3051
        %v3116 = vadd.f32 %v2919, %v3052
        %v3117 = vadd.f32 %v2920, %v3053
        %v3118 = vadd.f32 %v2921, %v3054
        %v3119 = vadd.f32 %v2922, %v3055
        %v3120 = vadd.f32 %v2923, %v3056
        %v3121 = vadd.f32 %v2924, %v3057
        %v3122 = vadd.f32 %v2925, %v3058
        %v3123 = vadd.f32 %v2926, %v3059
        %v3124 = vadd.f32 %v2927, %v3060
        %v3125 = vadd.f32 %v2928, %v3061
        %v3126 = vadd.f32 %v2929, %v3062
        %v3127 = vadd.f32 %v2930, %v3063
        %v3128 = vadd.f32 %v2931, %v3064
        %v3129 = vadd.f32 %v2932, %v3065
        %v3130 = vadd.f32 %v2933, %v3066
        %v3131 = vadd.f32 %v2934, %v3067
        %v3132 = vadd.f32 %v2935, %v3068
        %v3133 = vadd.f32 %v2936, %v3069
        %v3134 = vadd.f32 %v2937, %v3070
        %v3135 = vadd.f32 %v2938, %v3071
        %v3136 = vadd.f32 %v2939, %v3072
        %v3137 = vadd.f32 %v2940, %v3073
        %v3138 = vadd.f32 %v2941, %v3074
        %v3139 = vadd.f32 %v2942, %v3075
        %v3140 = vadd.f32 %v2943, %v3076
        %v3141 = vadd.f32 %v2944, %v3077
        %v3142 = vadd.f32 %v2945, %v3078
        %v3143 = vadd.f32 %v2946, %v3079
        %v3144 = vadd.f32 %v2947, %v3080
        %v3145 = vadd.f32 %v2948, %v3081
        %v3146 = vadd.f32 %v2949, %v3082
        %v3147 = vadd.f32 %v2950, %v3083
        %v3148 = vld [vmem:[%s2753 + $0x2] sm:$0xff]
        %v3149 = vld [vmem:[%s2753 + $0xa] sm:$0xff]
        %v3150 = vld [vmem:[%s2753 + $0x1a] sm:$0xff]
        %v3151 = vld [vmem:[%s2753 + $0x22] sm:$0xff]
        %v3152 = vld [vmem:[%s2753 + $0x32] sm:$0xff]
        %v3153 = vld [vmem:[%s2753 + $0x3a] sm:$0xff]
        %v3154 = vld [vmem:[%s2753 + $0x4a] sm:$0xff]
        %v3155 = vld [vmem:[%s2753 + $0x52] sm:$0xff]
        %v3156 = vld [vmem:[%s2753 + $0x62] sm:$0xff]
        %v3157 = vld [vmem:[%s2753 + $0x6a] sm:$0xff]
        %v3158 = vld [vmem:[%s2753 + $0x7a] sm:$0xff]
        %v3159 = vld [vmem:[%s2753 + $0x82] sm:$0xff]
        %v3160 = vld [vmem:[%s2753 + $0x92] sm:$0xff]
        %v3161 = vld [vmem:[%s2753 + $0x9a] sm:$0xff]
        %v3162 = vld [vmem:[%s2753 + $0xaa] sm:$0xff]
        %v3163 = vld [vmem:[%s2753 + $0xb2] sm:$0xff]
        %v3164 = vld [vmem:[%s2753 + $0xc2] sm:$0xff]
        %v3165 = vld [vmem:[%s2753 + $0xca] sm:$0xff]
        %v3166 = vld [vmem:[%s2753 + $0xda] sm:$0xff]
        %v3167 = vld [vmem:[%s2753 + $0xe2] sm:$0xff]
        %v3168 = vld [vmem:[%s2753 + $0xf2] sm:$0xff]
        %v3169 = vld [vmem:[%s2753 + $0xfa] sm:$0xff]
        %v3170 = vld [vmem:[%s2753 + $0x10a] sm:$0xff]
        %v3171 = vld [vmem:[%s2753 + $0x112] sm:$0xff]
        %v3172 = vld [vmem:[%s2753 + $0x122] sm:$0xff]
        %v3173 = vld [vmem:[%s2753 + $0x12a] sm:$0xff]
        %v3174 = vld [vmem:[%s2753 + $0x13a] sm:$0xff]
        %v3175 = vld [vmem:[%s2753 + $0x142] sm:$0xff]
        %v3176 = vld [vmem:[%s2753 + $0x152] sm:$0xff]
        %v3177 = vld [vmem:[%s2753 + $0x15a] sm:$0xff]
        %v3178 = vld [vmem:[%s2753 + $0x16a] sm:$0xff]
        %v3179 = vld [vmem:[%s2753 + $0x172] sm:$0xff]
        %v3180 = vld [vmem:[%s2753 + $0x1b2] sm:$0xff]
        %v3181 = vld [vmem:[%s2753 + $0x1ba] sm:$0xff]
        %v3182 = vld [vmem:[%s2753 + $0x1ca] sm:$0xff]
        %v3183 = vld [vmem:[%s2753 + $0x1d2] sm:$0xff]
        %v3184 = vld [vmem:[%s2753 + $0x1e2] sm:$0xff]
        %v3185 = vld [vmem:[%s2753 + $0x1ea] sm:$0xff]
        %v3186 = vld [vmem:[%s2753 + $0x1fa] sm:$0xff]
        %v3187 = vld [vmem:[%s2753 + $0x202] sm:$0xff]
        %v3188 = vld [vmem:[%s2753 + $0x212] sm:$0xff]
        %v3189 = vld [vmem:[%s2753 + $0x21a] sm:$0xff]
        %v3190 = vld [vmem:[%s2753 + $0x22a] sm:$0xff]
        %v3191 = vld [vmem:[%s2753 + $0x232] sm:$0xff]
        %v3192 = vld [vmem:[%s2753 + $0x242] sm:$0xff]
        %v3193 = vld [vmem:[%s2753 + $0x24a] sm:$0xff]
        %v3194 = vld [vmem:[%s2753 + $0x25a] sm:$0xff]
        %v3195 = vld [vmem:[%s2753 + $0x262] sm:$0xff]
        %v3196 = vld [vmem:[%s2753 + $0x272] sm:$0xff]
        %v3197 = vld [vmem:[%s2753 + $0x27a] sm:$0xff]
        %v3198 = vld [vmem:[%s2753 + $0x28a] sm:$0xff]
        %v3199 = vld [vmem:[%s2753 + $0x292] sm:$0xff]
        %v3200 = vld [vmem:[%s2753 + $0x2a2] sm:$0xff]
        %v3201 = vld [vmem:[%s2753 + $0x2aa] sm:$0xff]
        %v3202 = vld [vmem:[%s2753 + $0x2ba] sm:$0xff]
        %v3203 = vld [vmem:[%s2753 + $0x2c2] sm:$0xff]
        %v3204 = vld [vmem:[%s2753 + $0x2d2] sm:$0xff]
        %v3205 = vld [vmem:[%s2753 + $0x2da] sm:$0xff]
        %v3206 = vld [vmem:[%s2753 + $0x2ea] sm:$0xff]
        %v3207 = vld [vmem:[%s2753 + $0x2f2] sm:$0xff]
        %v3208 = vld [vmem:[%s2753 + $0x302] sm:$0xff]
        %v3209 = vld [vmem:[%s2753 + $0x30a] sm:$0xff]
        %v3210 = vld [vmem:[%s2753 + $0x31a] sm:$0xff]
        %v3211 = vld [vmem:[%s2753 + $0x322] sm:$0xff]
        %v3212 = vld [vmem:[%s3 + $0x8] sm:$0x1]
        %v3213 = vlaneseq
        %v3214 = vshrl.u32 %v3213, 7
        %v3215 = vsub.s32 0, %v3214
        %v3216 = vrot.slane %v3212, %v3215
        %v3217 = vmul.f32 %v3148, %v3216
        %v3218 = vmul.f32 %v3149, %v3216
        %v3219 = vmul.f32 %v3150, %v3216
        %v3220 = vmul.f32 %v3151, %v3216
        %v3221 = vmul.f32 %v3152, %v3216
        %v3222 = vmul.f32 %v3153, %v3216
        %v3223 = vmul.f32 %v3154, %v3216
        %v3224 = vmul.f32 %v3155, %v3216
        %v3225 = vmul.f32 %v3156, %v3216
        %v3226 = vmul.f32 %v3157, %v3216
        %v3227 = vmul.f32 %v3158, %v3216
        %v3228 = vmul.f32 %v3159, %v3216
        %v3229 = vmul.f32 %v3160, %v3216
        %v3230 = vmul.f32 %v3161, %v3216
        %v3231 = vmul.f32 %v3162, %v3216
        %v3232 = vmul.f32 %v3163, %v3216
        %v3233 = vmul.f32 %v3164, %v3216
        %v3234 = vmul.f32 %v3165, %v3216
        %v3235 = vmul.f32 %v3166, %v3216
        %v3236 = vmul.f32 %v3167, %v3216
        %v3237 = vmul.f32 %v3168, %v3216
        %v3238 = vmul.f32 %v3169, %v3216
        %v3239 = vmul.f32 %v3170, %v3216
        %v3240 = vmul.f32 %v3171, %v3216
        %v3241 = vmul.f32 %v3172, %v3216
        %v3242 = vmul.f32 %v3173, %v3216
        %v3243 = vmul.f32 %v3174, %v3216
        %v3244 = vmul.f32 %v3175, %v3216
        %v3245 = vmul.f32 %v3176, %v3216
        %v3246 = vmul.f32 %v3177, %v3216
        %v3247 = vmul.f32 %v3178, %v3216
        %v3248 = vmul.f32 %v3179, %v3216
        %v3249 = vmul.f32 %v3180, %v3216
        %v3250 = vmul.f32 %v3181, %v3216
        %v3251 = vmul.f32 %v3182, %v3216
        %v3252 = vmul.f32 %v3183, %v3216
        %v3253 = vmul.f32 %v3184, %v3216
        %v3254 = vmul.f32 %v3185, %v3216
        %v3255 = vmul.f32 %v3186, %v3216
        %v3256 = vmul.f32 %v3187, %v3216
        %v3257 = vmul.f32 %v3188, %v3216
        %v3258 = vmul.f32 %v3189, %v3216
        %v3259 = vmul.f32 %v3190, %v3216
        %v3260 = vmul.f32 %v3191, %v3216
        %v3261 = vmul.f32 %v3192, %v3216
        %v3262 = vmul.f32 %v3193, %v3216
        %v3263 = vmul.f32 %v3194, %v3216
        %v3264 = vmul.f32 %v3195, %v3216
        %v3265 = vmul.f32 %v3196, %v3216
        %v3266 = vmul.f32 %v3197, %v3216
        %v3267 = vmul.f32 %v3198, %v3216
        %v3268 = vmul.f32 %v3199, %v3216
        %v3269 = vmul.f32 %v3200, %v3216
        %v3270 = vmul.f32 %v3201, %v3216
        %v3271 = vmul.f32 %v3202, %v3216
        %v3272 = vmul.f32 %v3203, %v3216
        %v3273 = vmul.f32 %v3204, %v3216
        %v3274 = vmul.f32 %v3205, %v3216
        %v3275 = vmul.f32 %v3206, %v3216
        %v3276 = vmul.f32 %v3207, %v3216
        %v3277 = vmul.f32 %v3208, %v3216
        %v3278 = vmul.f32 %v3209, %v3216
        %v3279 = vmul.f32 %v3210, %v3216
        %v3280 = vmul.f32 %v3211, %v3216
        %v3281 = vadd.f32 %v3084, %v3217
        %v3282 = vadd.f32 %v3085, %v3218
        %v3283 = vadd.f32 %v3086, %v3219
        %v3284 = vadd.f32 %v3087, %v3220
        %v3285 = vadd.f32 %v3088, %v3221
        %v3286 = vadd.f32 %v3089, %v3222
        %v3287 = vadd.f32 %v3090, %v3223
        %v3288 = vadd.f32 %v3091, %v3224
        %v3289 = vadd.f32 %v3092, %v3225
        %v3290 = vadd.f32 %v3093, %v3226
        %v3291 = vadd.f32 %v3094, %v3227
        %v3292 = vadd.f32 %v3095, %v3228
        %v3293 = vadd.f32 %v3096, %v3229
        %v3294 = vadd.f32 %v3097, %v3230
        %v3295 = vadd.f32 %v3098, %v3231
        %v3296 = vadd.f32 %v3099, %v3232
        %v3297 = vadd.f32 %v3100, %v3233
        %v3298 = vadd.f32 %v3101, %v3234
        %v3299 = vadd.f32 %v3102, %v3235
        %v3300 = vadd.f32 %v3103, %v3236
        %v3301 = vadd.f32 %v3104, %v3237
        %v3302 = vadd.f32 %v3105, %v3238
        %v3303 = vadd.f32 %v3106, %v3239
        %v3304 = vadd.f32 %v3107, %v3240
        %v3305 = vadd.f32 %v3108, %v3241
        %v3306 = vadd.f32 %v3109, %v3242
        %v3307 = vadd.f32 %v3110, %v3243
        %v3308 = vadd.f32 %v3111, %v3244
        %v3309 = vadd.f32 %v3112, %v3245
        %v3310 = vadd.f32 %v3113, %v3246
        %v3311 = vadd.f32 %v3114, %v3247
        %v3312 = vadd.f32 %v3115, %v3248
        %v3313 = vadd.f32 %v3116, %v3249
        %v3314 = vadd.f32 %v3117, %v3250
        %v3315 = vadd.f32 %v3118, %v3251
        %v3316 = vadd.f32 %v3119, %v3252
        %v3317 = vadd.f32 %v3120, %v3253
        %v3318 = vadd.f32 %v3121, %v3254
        %v3319 = vadd.f32 %v3122, %v3255
        %v3320 = vadd.f32 %v3123, %v3256
        %v3321 = vadd.f32 %v3124, %v3257
        %v3322 = vadd.f32 %v3125, %v3258
        %v3323 = vadd.f32 %v3126, %v3259
        %v3324 = vadd.f32 %v3127, %v3260
        %v3325 = vadd.f32 %v3128, %v3261
        %v3326 = vadd.f32 %v3129, %v3262
        %v3327 = vadd.f32 %v3130, %v3263
        %v3328 = vadd.f32 %v3131, %v3264
        %v3329 = vadd.f32 %v3132, %v3265
        %v3330 = vadd.f32 %v3133, %v3266
        %v3331 = vadd.f32 %v3134, %v3267
        %v3332 = vadd.f32 %v3135, %v3268
        %v3333 = vadd.f32 %v3136, %v3269
        %v3334 = vadd.f32 %v3137, %v3270
        %v3335 = vadd.f32 %v3138, %v3271
        %v3336 = vadd.f32 %v3139, %v3272
        %v3337 = vadd.f32 %v3140, %v3273
        %v3338 = vadd.f32 %v3141, %v3274
        %v3339 = vadd.f32 %v3142, %v3275
        %v3340 = vadd.f32 %v3143, %v3276
        %v3341 = vadd.f32 %v3144, %v3277
        %v3342 = vadd.f32 %v3145, %v3278
        %v3343 = vadd.f32 %v3146, %v3279
        %v3344 = vadd.f32 %v3147, %v3280
        %v3345 = vld [vmem:[%s4] sm:$0x1]
        %v3347 = vlaneseq
        %v3348 = vshrl.u32 %v3347, 7
        %v3349 = vsub.s32 0, %v3348
        %v3350 = vrot.slane %v3345, %v3349
        %v3352 = vadd.f32 %v3281, %v3350
        %v3353 = vadd.f32 %v3282, %v3350
        %v3354 = vadd.f32 %v3283, %v3350
        %v3355 = vadd.f32 %v3284, %v3350
        %v3356 = vadd.f32 %v3285, %v3350
        %v3357 = vadd.f32 %v3286, %v3350
        %v3358 = vadd.f32 %v3287, %v3350
        %v3359 = vadd.f32 %v3288, %v3350
        %v3360 = vadd.f32 %v3289, %v3350
        %v3361 = vadd.f32 %v3290, %v3350
        %v3362 = vadd.f32 %v3291, %v3350
        %v3363 = vadd.f32 %v3292, %v3350
        %v3364 = vadd.f32 %v3293, %v3350
        %v3365 = vadd.f32 %v3294, %v3350
        %v3366 = vadd.f32 %v3295, %v3350
        %v3367 = vadd.f32 %v3296, %v3350
        %v3368 = vadd.f32 %v3297, %v3350
        %v3369 = vadd.f32 %v3298, %v3350
        %v3370 = vadd.f32 %v3299, %v3350
        %v3371 = vadd.f32 %v3300, %v3350
        %v3372 = vadd.f32 %v3301, %v3350
        %v3373 = vadd.f32 %v3302, %v3350
        %v3374 = vadd.f32 %v3303, %v3350
        %v3375 = vadd.f32 %v3304, %v3350
        %v3376 = vadd.f32 %v3305, %v3350
        %v3377 = vadd.f32 %v3306, %v3350
        %v3378 = vadd.f32 %v3307, %v3350
        %v3379 = vadd.f32 %v3308, %v3350
        %v3380 = vadd.f32 %v3309, %v3350
        %v3381 = vadd.f32 %v3310, %v3350
        %v3382 = vadd.f32 %v3311, %v3350
        %v3383 = vadd.f32 %v3312, %v3350
        %v3384 = vadd.f32 %v3313, %v3350
        %v3385 = vadd.f32 %v3314, %v3350
        %v3386 = vadd.f32 %v3315, %v3350
        %v3387 = vadd.f32 %v3316, %v3350
        %v3388 = vadd.f32 %v3317, %v3350
        %v3389 = vadd.f32 %v3318, %v3350
        %v3390 = vadd.f32 %v3319, %v3350
        %v3391 = vadd.f32 %v3320, %v3350
        %v3392 = vadd.f32 %v3321, %v3350
        %v3393 = vadd.f32 %v3322, %v3350
        %v3394 = vadd.f32 %v3323, %v3350
        %v3395 = vadd.f32 %v3324, %v3350
        %v3396 = vadd.f32 %v3325, %v3350
        %v3397 = vadd.f32 %v3326, %v3350
        %v3398 = vadd.f32 %v3327, %v3350
        %v3399 = vadd.f32 %v3328, %v3350
        %v3400 = vadd.f32 %v3329, %v3350
        %v3401 = vadd.f32 %v3330, %v3350
        %v3402 = vadd.f32 %v3331, %v3350
        %v3403 = vadd.f32 %v3332, %v3350
        %v3404 = vadd.f32 %v3333, %v3350
        %v3405 = vadd.f32 %v3334, %v3350
        %v3406 = vadd.f32 %v3335, %v3350
        %v3407 = vadd.f32 %v3336, %v3350
        %v3408 = vadd.f32 %v3337, %v3350
        %v3409 = vadd.f32 %v3338, %v3350
        %v3410 = vadd.f32 %v3339, %v3350
        %v3411 = vadd.f32 %v3340, %v3350
        %v3412 = vadd.f32 %v3341, %v3350
        %v3413 = vadd.f32 %v3342, %v3350
        %v3414 = vadd.f32 %v3343, %v3350
        %v3415 = vadd.f32 %v3344, %v3350
        %v3416 = vmax.f32 %v3352, 0.0
        %v3417 = vmax.f32 %v3353, 0.0
        %v3418 = vmax.f32 %v3354, 0.0
        %v3419 = vmax.f32 %v3355, 0.0
        %v3420 = vmax.f32 %v3356, 0.0
        %v3421 = vmax.f32 %v3357, 0.0
        %v3422 = vmax.f32 %v3358, 0.0
        %v3423 = vmax.f32 %v3359, 0.0
        %v3424 = vmax.f32 %v3360, 0.0
        %v3425 = vmax.f32 %v3361, 0.0
        %v3426 = vmax.f32 %v3362, 0.0
        %v3427 = vmax.f32 %v3363, 0.0
        %v3428 = vmax.f32 %v3364, 0.0
        %v3429 = vmax.f32 %v3365, 0.0
        %v3430 = vmax.f32 %v3366, 0.0
        %v3431 = vmax.f32 %v3367, 0.0
        %v3432 = vmax.f32 %v3368, 0.0
        %v3433 = vmax.f32 %v3369, 0.0
        %v3434 = vmax.f32 %v3370, 0.0
        %v3435 = vmax.f32 %v3371, 0.0
        %v3436 = vmax.f32 %v3372, 0.0
        %v3437 = vmax.f32 %v3373, 0.0
        %v3438 = vmax.f32 %v3374, 0.0
        %v3439 = vmax.f32 %v3375, 0.0
        %v3440 = vmax.f32 %v3376, 0.0
        %v3441 = vmax.f32 %v3377, 0.0
        %v3442 = vmax.f32 %v3378, 0.0
        %v3443 = vmax.f32 %v3379, 0.0
        %v3444 = vmax.f32 %v3380, 0.0
        %v3445 = vmax.f32 %v3381, 0.0
        %v3446 = vmax.f32 %v3382, 0.0
        %v3447 = vmax.f32 %v3383, 0.0
        %v3448 = vmax.f32 %v3384, 0.0
        %v3449 = vmax.f32 %v3385, 0.0
        %v3450 = vmax.f32 %v3386, 0.0
        %v3451 = vmax.f32 %v3387, 0.0
        %v3452 = vmax.f32 %v3388, 0.0
        %v3453 = vmax.f32 %v3389, 0.0
        %v3454 = vmax.f32 %v3390, 0.0
        %v3455 = vmax.f32 %v3391, 0.0
        %v3456 = vmax.f32 %v3392, 0.0
        %v3457 = vmax.f32 %v3393, 0.0
        %v3458 = vmax.f32 %v3394, 0.0
        %v3459 = vmax.f32 %v3395, 0.0
        %v3460 = vmax.f32 %v3396, 0.0
        %v3461 = vmax.f32 %v3397, 0.0
        %v3462 = vmax.f32 %v3398, 0.0
        %v3463 = vmax.f32 %v3399, 0.0
        %v3464 = vmax.f32 %v3400, 0.0
        %v3465 = vmax.f32 %v3401, 0.0
        %v3466 = vmax.f32 %v3402, 0.0
        %v3467 = vmax.f32 %v3403, 0.0
        %v3468 = vmax.f32 %v3404, 0.0
        %v3469 = vmax.f32 %v3405, 0.0
        %v3470 = vmax.f32 %v3406, 0.0
        %v3471 = vmax.f32 %v3407, 0.0
        %v3472 = vmax.f32 %v3408, 0.0
        %v3473 = vmax.f32 %v3409, 0.0
        %v3474 = vmax.f32 %v3410, 0.0
        %v3475 = vmax.f32 %v3411, 0.0
        %v3476 = vmax.f32 %v3412, 0.0
        %v3477 = vmax.f32 %v3413, 0.0
        %v3478 = vmax.f32 %v3414, 0.0
        %v3479 = vmax.f32 %v3415, 0.0
        %v3480 = vpack.c.bf16 %v3417, %v3416
        %v3481 = vpack.c.bf16 %v3419, %v3418
        %v3482 = vpack.c.bf16 %v3421, %v3420
        %v3483 = vpack.c.bf16 %v3423, %v3422
        %v3484 = vpack.c.bf16 %v3425, %v3424
        %v3485 = vpack.c.bf16 %v3427, %v3426
        %v3486 = vpack.c.bf16 %v3429, %v3428
        %v3487 = vpack.c.bf16 %v3431, %v3430
        %v3488 = vpack.c.bf16 %v3433, %v3432
        %v3489 = vpack.c.bf16 %v3435, %v3434
        %v3490 = vpack.c.bf16 %v3437, %v3436
        %v3491 = vpack.c.bf16 %v3439, %v3438
        %v3492 = vpack.c.bf16 %v3441, %v3440
        %v3493 = vpack.c.bf16 %v3443, %v3442
        %v3494 = vpack.c.bf16 %v3445, %v3444
        %v3495 = vpack.c.bf16 %v3447, %v3446
        %v3496 = vpack.c.bf16 %v3449, %v3448
        %v3497 = vpack.c.bf16 %v3451, %v3450
        %v3498 = vpack.c.bf16 %v3453, %v3452
        %v3499 = vpack.c.bf16 %v3455, %v3454
        %v3500 = vpack.c.bf16 %v3457, %v3456
        %v3501 = vpack.c.bf16 %v3459, %v3458
        %v3502 = vpack.c.bf16 %v3461, %v3460
        %v3503 = vpack.c.bf16 %v3463, %v3462
        %v3504 = vpack.c.bf16 %v3465, %v3464
        %v3505 = vpack.c.bf16 %v3467, %v3466
        %v3506 = vpack.c.bf16 %v3469, %v3468
        %v3507 = vpack.c.bf16 %v3471, %v3470
        %v3508 = vpack.c.bf16 %v3473, %v3472
        %v3509 = vpack.c.bf16 %v3475, %v3474
        %v3510 = vpack.c.bf16 %v3477, %v3476
        %v3511 = vpack.c.bf16 %v3479, %v3478
        %v3512 = vld [vmem:[%s5] sm:$0xf]
        %v3513 = vld [vmem:[%s5 + $0x4] sm:$0xf]
        %v3514 = vld [vmem:[%s5 + $0x8] sm:$0xf]
        %v3515 = vld [vmem:[%s5 + $0xc] sm:$0xf]
        %v3516 = vld [vmem:[%s6] sm:$0x1]
        %v3518 = vlaneseq
        %v3519 = vshrl.u32 %v3518, 7
        %v3520 = vsub.s32 0, %v3519
        %v3521 = vrot.slane %v3516, %v3520
        %v3527 = vunpack.c.l.b16 %v3512
        %v3528 = vunpack.c.l.b16 %v3513
        %v3529 = vunpack.c.l.b16 %v3514
        %v3530 = vunpack.c.l.b16 %v3515
        %v3531 = vpack.c.b16 %v3528, %v3527
        %v3532 = vpack.c.b16 %v3530, %v3529
        %v3536 = vsel %vm658, %v3480, 0
        %v3539 = vsel %vm658, %v3481, 0
        %v3542 = vsel %vm658, %v3482, 0
        %v3545 = vsel %vm658, %v3483, 0
        %v3548 = vsel %vm658, %v3484, 0
        %v3551 = vsel %vm658, %v3485, 0
        %v3554 = vsel %vm658, %v3486, 0
        %v3557 = vsel %vm658, %v3487, 0
        %v3560 = vsel %vm658, %v3488, 0
        %v3563 = vsel %vm658, %v3489, 0
        %v3566 = vsel %vm658, %v3490, 0
        %v3569 = vsel %vm658, %v3491, 0
        %v3572 = vsel %vm658, %v3492, 0
        %v3575 = vsel %vm658, %v3493, 0
        %v3578 = vsel %vm658, %v3494, 0
        %v3581 = vsel %vm658, %v3495, 0
        %v3584 = vsel %vm658, %v3496, 0
        %v3587 = vsel %vm658, %v3497, 0
        %v3590 = vsel %vm658, %v3498, 0
        %v3593 = vsel %vm658, %v3499, 0
        %v3596 = vsel %vm658, %v3500, 0
        %v3599 = vsel %vm658, %v3501, 0
        %v3602 = vsel %vm658, %v3502, 0
        %v3605 = vsel %vm658, %v3503, 0
        %v3608 = vsel %vm658, %v3504, 0
        %v3611 = vsel %vm658, %v3505, 0
        %v3614 = vsel %vm658, %v3506, 0
        %v3617 = vsel %vm658, %v3507, 0
        %v3620 = vsel %vm658, %v3508, 0
        %v3623 = vsel %vm658, %v3509, 0
        %v3626 = vsel %vm658, %v3510, 0
        %v3629 = vsel %vm658, %v3511, 0
        %3631 = vmatprep.subr.bf16.mxu0 0
        %3632 = vmatpush1.bf16.msra.mxu0 0
        %3633 = vmatprep.subr.bf16.mxu0 0
        %3634 = vmatpush1.bf16.msra.mxu0 0
        %3635 = vmatprep.subr.bf16.mxu0 0
        %3636 = vmatpush1.bf16.msra.mxu0 0
        %3637 = vmatprep.subr.bf16.mxu0 0
        %3638 = vmatpush1.bf16.msra.mxu0 0
        %3639 = vmatprep.subr.bf16.mxu0 0
        %3640 = vmatpush1.bf16.msra.mxu0 0
        %3641 = vmatprep.subr.bf16.mxu0 0
        %3642 = vmatpush1.bf16.msra.mxu0 0
        %3643 = vmatprep.subr.bf16.mxu0 0
        %3644 = vmatpush1.bf16.msra.mxu0 %v3532
        %3645 = vmatprep.subr.bf16.mxu0 0
        %3646 = vmatpush1.bf16.msra.mxu0 %v3531
        %3647 = vmatprep.subr.bf16.mxu0 0
        %3648 = vmatpush2.bf16.msra.mxu0 0
        %3649 = vmatprep.subr.bf16.mxu0 0
        %3650 = vmatpush2.bf16.msra.mxu0 0
        %3651 = vmatprep.subr.bf16.mxu0 0
        %3652 = vmatpush2.bf16.msra.mxu0 0
        %3653 = vmatprep.subr.bf16.mxu0 0
        %3654 = vmatpush2.bf16.msra.mxu0 0
        %3655 = vmatprep.subr.bf16.mxu0 0
        %3656 = vmatpush2.bf16.msra.mxu0 0
        %3657 = vmatprep.subr.bf16.mxu0 0
        %3658 = vmatpush2.bf16.msra.mxu0 0
        %3659 = vmatprep.subr.bf16.mxu0 0
        %3660 = vmatpush2.bf16.msra.mxu0 0
        %3661 = vmatprep.subr.bf16.mxu0 0
        %3662 = vmatpush2.bf16.msra.mxu0 0
        %3663 = vmatprep.mubr.bf16.mxu0 0
        %3664 = vmatmul.mubr.bf16.gmra.mxu0 %v3536
        %v3665 = vpop.f32.mrf.mxu0
        %v3666 = vadd.f32 %v3521, %v3665
        %v3667 = vpop.f32.mrf.mxu0
        %v3668 = vpop.f32.mrf.mxu0
        %v3669 = vadd.f32 %v3521, %v3668
        %v3670 = vpop.f32.mrf.mxu0
        %3671 = vmatprep.mubr.bf16.mxu0 0
        %3672 = vmatmul.mubr.bf16.gmra.mxu0 %v3539
        %v3673 = vpop.f32.mrf.mxu0
        %v3674 = vadd.f32 %v3521, %v3673
        %v3675 = vpop.f32.mrf.mxu0
        %v3676 = vpop.f32.mrf.mxu0
        %v3677 = vadd.f32 %v3521, %v3676
        %v3678 = vpop.f32.mrf.mxu0
        %3679 = vmatprep.mubr.bf16.mxu0 0
        %3680 = vmatmul.mubr.bf16.gmra.mxu0 %v3542
        %v3681 = vpop.f32.mrf.mxu0
        %v3682 = vadd.f32 %v3521, %v3681
        %v3683 = vpop.f32.mrf.mxu0
        %v3684 = vpop.f32.mrf.mxu0
        %v3685 = vadd.f32 %v3521, %v3684
        %v3686 = vpop.f32.mrf.mxu0
        %3687 = vmatprep.mubr.bf16.mxu0 0
        %3688 = vmatmul.mubr.bf16.gmra.mxu0 %v3545
        %v3689 = vpop.f32.mrf.mxu0
        %v3690 = vadd.f32 %v3521, %v3689
        %v3691 = vpop.f32.mrf.mxu0
        %v3692 = vpop.f32.mrf.mxu0
        %v3693 = vadd.f32 %v3521, %v3692
        %v3694 = vpop.f32.mrf.mxu0
        %3695 = vmatprep.mubr.bf16.mxu0 0
        %3696 = vmatmul.mubr.bf16.gmra.mxu0 %v3548
        %v3697 = vpop.f32.mrf.mxu0
        %v3698 = vadd.f32 %v3521, %v3697
        %v3699 = vpop.f32.mrf.mxu0
        %v3700 = vpop.f32.mrf.mxu0
        %v3701 = vadd.f32 %v3521, %v3700
        %v3702 = vpop.f32.mrf.mxu0
        %3703 = vmatprep.mubr.bf16.mxu0 0
        %3704 = vmatmul.mubr.bf16.gmra.mxu0 %v3551
        %v3705 = vpop.f32.mrf.mxu0
        %v3706 = vadd.f32 %v3521, %v3705
        %v3707 = vpop.f32.mrf.mxu0
        %v3708 = vpop.f32.mrf.mxu0
        %v3709 = vadd.f32 %v3521, %v3708
        %v3710 = vpop.f32.mrf.mxu0
        %3711 = vmatprep.mubr.bf16.mxu0 0
        %3712 = vmatmul.mubr.bf16.gmra.mxu0 %v3554
        %v3713 = vpop.f32.mrf.mxu0
        %v3714 = vadd.f32 %v3521, %v3713
        %v3715 = vpop.f32.mrf.mxu0
        %v3716 = vpop.f32.mrf.mxu0
        %v3717 = vadd.f32 %v3521, %v3716
        %v3718 = vpop.f32.mrf.mxu0
        %3719 = vmatprep.mubr.bf16.mxu0 0
        %3720 = vmatmul.mubr.bf16.gmra.mxu0 %v3557
        %v3721 = vpop.f32.mrf.mxu0
        %v3722 = vadd.f32 %v3521, %v3721
        %v3723 = vpop.f32.mrf.mxu0
        %v3724 = vpop.f32.mrf.mxu0
        %v3725 = vadd.f32 %v3521, %v3724
        %v3726 = vpop.f32.mrf.mxu0
        %3727 = vmatprep.mubr.bf16.mxu0 0
        %3728 = vmatmul.mubr.bf16.gmra.mxu0 %v3560
        %v3729 = vpop.f32.mrf.mxu0
        %v3730 = vadd.f32 %v3521, %v3729
        %v3731 = vpop.f32.mrf.mxu0
        %v3732 = vpop.f32.mrf.mxu0
        %v3733 = vadd.f32 %v3521, %v3732
        %v3734 = vpop.f32.mrf.mxu0
        %3735 = vmatprep.mubr.bf16.mxu0 0
        %3736 = vmatmul.mubr.bf16.gmra.mxu0 %v3563
        %v3737 = vpop.f32.mrf.mxu0
        %v3738 = vadd.f32 %v3521, %v3737
        %v3739 = vpop.f32.mrf.mxu0
        %v3740 = vpop.f32.mrf.mxu0
        %v3741 = vadd.f32 %v3521, %v3740
        %v3742 = vpop.f32.mrf.mxu0
        %3743 = vmatprep.mubr.bf16.mxu0 0
        %3744 = vmatmul.mubr.bf16.gmra.mxu0 %v3566
        %v3745 = vpop.f32.mrf.mxu0
        %v3746 = vadd.f32 %v3521, %v3745
        %v3747 = vpop.f32.mrf.mxu0
        %v3748 = vpop.f32.mrf.mxu0
        %v3749 = vadd.f32 %v3521, %v3748
        %v3750 = vpop.f32.mrf.mxu0
        %3751 = vmatprep.mubr.bf16.mxu0 0
        %3752 = vmatmul.mubr.bf16.gmra.mxu0 %v3569
        %v3753 = vpop.f32.mrf.mxu0
        %v3754 = vadd.f32 %v3521, %v3753
        %v3755 = vpop.f32.mrf.mxu0
        %v3756 = vpop.f32.mrf.mxu0
        %v3757 = vadd.f32 %v3521, %v3756
        %v3758 = vpop.f32.mrf.mxu0
        %3759 = vmatprep.mubr.bf16.mxu0 0
        %3760 = vmatmul.mubr.bf16.gmra.mxu0 %v3572
        %v3761 = vpop.f32.mrf.mxu0
        %v3762 = vadd.f32 %v3521, %v3761
        %v3763 = vpop.f32.mrf.mxu0
        %v3764 = vpop.f32.mrf.mxu0
        %v3765 = vadd.f32 %v3521, %v3764
        %v3766 = vpop.f32.mrf.mxu0
        %3767 = vmatprep.mubr.bf16.mxu0 0
        %3768 = vmatmul.mubr.bf16.gmra.mxu0 %v3575
        %v3769 = vpop.f32.mrf.mxu0
        %v3770 = vadd.f32 %v3521, %v3769
        %v3771 = vpop.f32.mrf.mxu0
        %v3772 = vpop.f32.mrf.mxu0
        %v3773 = vadd.f32 %v3521, %v3772
        %v3774 = vpop.f32.mrf.mxu0
        %3775 = vmatprep.mubr.bf16.mxu0 0
        %3776 = vmatmul.mubr.bf16.gmra.mxu0 %v3578
        %v3777 = vpop.f32.mrf.mxu0
        %v3778 = vadd.f32 %v3521, %v3777
        %v3779 = vpop.f32.mrf.mxu0
        %v3780 = vpop.f32.mrf.mxu0
        %v3781 = vadd.f32 %v3521, %v3780
        %v3782 = vpop.f32.mrf.mxu0
        %3783 = vmatprep.mubr.bf16.mxu0 0
        %3784 = vmatmul.mubr.bf16.gmra.mxu0 %v3581
        %v3785 = vpop.f32.mrf.mxu0
        %v3786 = vadd.f32 %v3521, %v3785
        %v3787 = vpop.f32.mrf.mxu0
        %v3788 = vpop.f32.mrf.mxu0
        %v3789 = vadd.f32 %v3521, %v3788
        %v3790 = vpop.f32.mrf.mxu0
        %3791 = vmatprep.mubr.bf16.mxu0 0
        %3792 = vmatmul.mubr.bf16.gmra.mxu0 %v3584
        %v3793 = vpop.f32.mrf.mxu0
        %v3794 = vadd.f32 %v3521, %v3793
        %v3795 = vpop.f32.mrf.mxu0
        %v3796 = vpop.f32.mrf.mxu0
        %v3797 = vadd.f32 %v3521, %v3796
        %v3798 = vpop.f32.mrf.mxu0
        %3799 = vmatprep.mubr.bf16.mxu0 0
        %3800 = vmatmul.mubr.bf16.gmra.mxu0 %v3587
        %v3801 = vpop.f32.mrf.mxu0
        %v3802 = vadd.f32 %v3521, %v3801
        %v3803 = vpop.f32.mrf.mxu0
        %v3804 = vpop.f32.mrf.mxu0
        %v3805 = vadd.f32 %v3521, %v3804
        %v3806 = vpop.f32.mrf.mxu0
        %3807 = vmatprep.mubr.bf16.mxu0 0
        %3808 = vmatmul.mubr.bf16.gmra.mxu0 %v3590
        %v3809 = vpop.f32.mrf.mxu0
        %v3810 = vadd.f32 %v3521, %v3809
        %v3811 = vpop.f32.mrf.mxu0
        %v3812 = vpop.f32.mrf.mxu0
        %v3813 = vadd.f32 %v3521, %v3812
        %v3814 = vpop.f32.mrf.mxu0
        %3815 = vmatprep.mubr.bf16.mxu0 0
        %3816 = vmatmul.mubr.bf16.gmra.mxu0 %v3593
        %v3817 = vpop.f32.mrf.mxu0
        %v3818 = vadd.f32 %v3521, %v3817
        %v3819 = vpop.f32.mrf.mxu0
        %v3820 = vpop.f32.mrf.mxu0
        %v3821 = vadd.f32 %v3521, %v3820
        %v3822 = vpop.f32.mrf.mxu0
        %3823 = vmatprep.mubr.bf16.mxu0 0
        %3824 = vmatmul.mubr.bf16.gmra.mxu0 %v3596
        %v3825 = vpop.f32.mrf.mxu0
        %v3826 = vadd.f32 %v3521, %v3825
        %v3827 = vpop.f32.mrf.mxu0
        %v3828 = vpop.f32.mrf.mxu0
        %v3829 = vadd.f32 %v3521, %v3828
        %v3830 = vpop.f32.mrf.mxu0
        %3831 = vmatprep.mubr.bf16.mxu0 0
        %3832 = vmatmul.mubr.bf16.gmra.mxu0 %v3599
        %v3833 = vpop.f32.mrf.mxu0
        %v3834 = vadd.f32 %v3521, %v3833
        %v3835 = vpop.f32.mrf.mxu0
        %v3836 = vpop.f32.mrf.mxu0
        %v3837 = vadd.f32 %v3521, %v3836
        %v3838 = vpop.f32.mrf.mxu0
        %3839 = vmatprep.mubr.bf16.mxu0 0
        %3840 = vmatmul.mubr.bf16.gmra.mxu0 %v3602
        %v3841 = vpop.f32.mrf.mxu0
        %v3842 = vadd.f32 %v3521, %v3841
        %v3843 = vpop.f32.mrf.mxu0
        %v3844 = vpop.f32.mrf.mxu0
        %v3845 = vadd.f32 %v3521, %v3844
        %v3846 = vpop.f32.mrf.mxu0
        %3847 = vmatprep.mubr.bf16.mxu0 0
        %3848 = vmatmul.mubr.bf16.gmra.mxu0 %v3605
        %v3849 = vpop.f32.mrf.mxu0
        %v3850 = vadd.f32 %v3521, %v3849
        %v3851 = vpop.f32.mrf.mxu0
        %v3852 = vpop.f32.mrf.mxu0
        %v3853 = vadd.f32 %v3521, %v3852
        %v3854 = vpop.f32.mrf.mxu0
        %3855 = vmatprep.mubr.bf16.mxu0 0
        %3856 = vmatmul.mubr.bf16.gmra.mxu0 %v3608
        %v3857 = vpop.f32.mrf.mxu0
        %v3858 = vadd.f32 %v3521, %v3857
        %v3859 = vpop.f32.mrf.mxu0
        %v3860 = vpop.f32.mrf.mxu0
        %v3861 = vadd.f32 %v3521, %v3860
        %v3862 = vpop.f32.mrf.mxu0
        %3863 = vmatprep.mubr.bf16.mxu0 0
        %3864 = vmatmul.mubr.bf16.gmra.mxu0 %v3611
        %v3865 = vpop.f32.mrf.mxu0
        %v3866 = vadd.f32 %v3521, %v3865
        %v3867 = vpop.f32.mrf.mxu0
        %v3868 = vpop.f32.mrf.mxu0
        %v3869 = vadd.f32 %v3521, %v3868
        %v3870 = vpop.f32.mrf.mxu0
        %3871 = vmatprep.mubr.bf16.mxu0 0
        %3872 = vmatmul.mubr.bf16.gmra.mxu0 %v3614
        %v3873 = vpop.f32.mrf.mxu0
        %v3874 = vadd.f32 %v3521, %v3873
        %v3875 = vpop.f32.mrf.mxu0
        %v3876 = vpop.f32.mrf.mxu0
        %v3877 = vadd.f32 %v3521, %v3876
        %v3878 = vpop.f32.mrf.mxu0
        %3879 = vmatprep.mubr.bf16.mxu0 0
        %3880 = vmatmul.mubr.bf16.gmra.mxu0 %v3617
        %v3881 = vpop.f32.mrf.mxu0
        %v3882 = vadd.f32 %v3521, %v3881
        %v3883 = vpop.f32.mrf.mxu0
        %v3884 = vpop.f32.mrf.mxu0
        %v3885 = vadd.f32 %v3521, %v3884
        %v3886 = vpop.f32.mrf.mxu0
        %3887 = vmatprep.mubr.bf16.mxu0 0
        %3888 = vmatmul.mubr.bf16.gmra.mxu0 %v3620
        %v3889 = vpop.f32.mrf.mxu0
        %v3890 = vadd.f32 %v3521, %v3889
        %v3891 = vpop.f32.mrf.mxu0
        %v3892 = vpop.f32.mrf.mxu0
        %v3893 = vadd.f32 %v3521, %v3892
        %v3894 = vpop.f32.mrf.mxu0
        %3895 = vmatprep.mubr.bf16.mxu0 0
        %3896 = vmatmul.mubr.bf16.gmra.mxu0 %v3623
        %v3897 = vpop.f32.mrf.mxu0
        %v3898 = vadd.f32 %v3521, %v3897
        %v3899 = vpop.f32.mrf.mxu0
        %v3900 = vpop.f32.mrf.mxu0
        %v3901 = vadd.f32 %v3521, %v3900
        %v3902 = vpop.f32.mrf.mxu0
        %3903 = vmatprep.mubr.bf16.mxu0 0
        %3904 = vmatmul.mubr.bf16.gmra.mxu0 %v3626
        %v3905 = vpop.f32.mrf.mxu0
        %v3906 = vadd.f32 %v3521, %v3905
        %v3907 = vpop.f32.mrf.mxu0
        %v3908 = vpop.f32.mrf.mxu0
        %v3909 = vadd.f32 %v3521, %v3908
        %v3910 = vpop.f32.mrf.mxu0
        %3911 = vmatprep.mubr.bf16.mxu0 0
        %3912 = vmatmul.mubr.bf16.gmra.mxu0 %v3629
        %v3913 = vpop.f32.mrf.mxu0
        %v3914 = vadd.f32 %v3521, %v3913
        %v3915 = vpop.f32.mrf.mxu0
        %v3916 = vpop.f32.mrf.mxu0
        %v3917 = vadd.f32 %v3521, %v3916
        %v3918 = vpop.f32.mrf.mxu0
        %3919 = vdwg.mxu0
        %v3920 = vmax.f32 %v3666, 0.0
        %v3921 = vmax.f32 %v3669, 0.0
        %v3922 = vmax.f32 %v3674, 0.0
        %v3923 = vmax.f32 %v3677, 0.0
        %v3924 = vmax.f32 %v3682, 0.0
        %v3925 = vmax.f32 %v3685, 0.0
        %v3926 = vmax.f32 %v3690, 0.0
        %v3927 = vmax.f32 %v3693, 0.0
        %v3928 = vmax.f32 %v3698, 0.0
        %v3929 = vmax.f32 %v3701, 0.0
        %v3930 = vmax.f32 %v3706, 0.0
        %v3931 = vmax.f32 %v3709, 0.0
        %v3932 = vmax.f32 %v3714, 0.0
        %v3933 = vmax.f32 %v3717, 0.0
        %v3934 = vmax.f32 %v3722, 0.0
        %v3935 = vmax.f32 %v3725, 0.0
        %v3936 = vmax.f32 %v3730, 0.0
        %v3937 = vmax.f32 %v3733, 0.0
        %v3938 = vmax.f32 %v3738, 0.0
        %v3939 = vmax.f32 %v3741, 0.0
        %v3940 = vmax.f32 %v3746, 0.0
        %v3941 = vmax.f32 %v3749, 0.0
        %v3942 = vmax.f32 %v3754, 0.0
        %v3943 = vmax.f32 %v3757, 0.0
        %v3944 = vmax.f32 %v3762, 0.0
        %v3945 = vmax.f32 %v3765, 0.0
        %v3946 = vmax.f32 %v3770, 0.0
        %v3947 = vmax.f32 %v3773, 0.0
        %v3948 = vmax.f32 %v3778, 0.0
        %v3949 = vmax.f32 %v3781, 0.0
        %v3950 = vmax.f32 %v3786, 0.0
        %v3951 = vmax.f32 %v3789, 0.0
        %v3952 = vmax.f32 %v3794, 0.0
        %v3953 = vmax.f32 %v3797, 0.0
        %v3954 = vmax.f32 %v3802, 0.0
        %v3955 = vmax.f32 %v3805, 0.0
        %v3956 = vmax.f32 %v3810, 0.0
        %v3957 = vmax.f32 %v3813, 0.0
        %v3958 = vmax.f32 %v3818, 0.0
        %v3959 = vmax.f32 %v3821, 0.0
        %v3960 = vmax.f32 %v3826, 0.0
        %v3961 = vmax.f32 %v3829, 0.0
        %v3962 = vmax.f32 %v3834, 0.0
        %v3963 = vmax.f32 %v3837, 0.0
        %v3964 = vmax.f32 %v3842, 0.0
        %v3965 = vmax.f32 %v3845, 0.0
        %v3966 = vmax.f32 %v3850, 0.0
        %v3967 = vmax.f32 %v3853, 0.0
        %v3968 = vmax.f32 %v3858, 0.0
        %v3969 = vmax.f32 %v3861, 0.0
        %v3970 = vmax.f32 %v3866, 0.0
        %v3971 = vmax.f32 %v3869, 0.0
        %v3972 = vmax.f32 %v3874, 0.0
        %v3973 = vmax.f32 %v3877, 0.0
        %v3974 = vmax.f32 %v3882, 0.0
        %v3975 = vmax.f32 %v3885, 0.0
        %v3976 = vmax.f32 %v3890, 0.0
        %v3977 = vmax.f32 %v3893, 0.0
        %v3978 = vmax.f32 %v3898, 0.0
        %v3979 = vmax.f32 %v3901, 0.0
        %v3980 = vmax.f32 %v3906, 0.0
        %v3981 = vmax.f32 %v3909, 0.0
        %v3982 = vmax.f32 %v3914, 0.0
        %v3983 = vmax.f32 %v3917, 0.0
        %v3984 = vmax.f32 %v3920, %v3922
        %v3985 = vmax.f32 %v3921, %v3923
        %v3986 = vmax.f32 %v3924, %v3926
        %v3987 = vmax.f32 %v3925, %v3927
        %v3988 = vmax.f32 %v3928, %v3930
        %v3989 = vmax.f32 %v3929, %v3931
        %v3990 = vmax.f32 %v3932, %v3934
        %v3991 = vmax.f32 %v3933, %v3935
        %v3992 = vmax.f32 %v3936, %v3938
        %v3993 = vmax.f32 %v3937, %v3939
        %v3994 = vmax.f32 %v3940, %v3942
        %v3995 = vmax.f32 %v3941, %v3943
        %v3996 = vmax.f32 %v3944, %v3946
        %v3997 = vmax.f32 %v3945, %v3947
        %v3998 = vmax.f32 %v3948, %v3950
        %v3999 = vmax.f32 %v3949, %v3951
        %v4000 = vmax.f32 %v3952, %v3954
        %v4001 = vmax.f32 %v3953, %v3955
        %v4002 = vmax.f32 %v3956, %v3958
        %v4003 = vmax.f32 %v3957, %v3959
        %v4004 = vmax.f32 %v3960, %v3962
        %v4005 = vmax.f32 %v3961, %v3963
        %v4006 = vmax.f32 %v3964, %v3966
        %v4007 = vmax.f32 %v3965, %v3967
        %v4008 = vmax.f32 %v3968, %v3970
        %v4009 = vmax.f32 %v3969, %v3971
        %v4010 = vmax.f32 %v3972, %v3974
        %v4011 = vmax.f32 %v3973, %v3975
        %v4012 = vmax.f32 %v3976, %v3978
        %v4013 = vmax.f32 %v3977, %v3979
        %v4014 = vmax.f32 %v3980, %v3982
        %v4015 = vmax.f32 %v3981, %v3983
        %v4032 = vrot.slane %v3984, 1
        %v4033 = vrot.slane %v3986, 1
        %v4034 = vrot.slane %v3988, 1
        %v4035 = vrot.slane %v3990, 1
        %v4036 = vrot.slane %v3992, 1
        %v4037 = vrot.slane %v3994, 1
        %v4038 = vrot.slane %v3996, 1
        %v4039 = vrot.slane %v3998, 1
        %v4040 = vrot.slane %v4000, 1
        %v4041 = vrot.slane %v4002, 1
        %v4042 = vrot.slane %v4004, 1
        %v4043 = vrot.slane %v4006, 1
        %v4044 = vrot.slane %v4008, 1
        %v4045 = vrot.slane %v4010, 1
        %v4046 = vrot.slane %v4012, 1
        %v4047 = vrot.slane %v4014, 1
        %v4064 = vmax.f32 %v3984, %v4032
        %v4065 = vmax.f32 %v3986, %v4033
        %v4066 = vmax.f32 %v3988, %v4034
        %v4067 = vmax.f32 %v3990, %v4035
        %v4068 = vmax.f32 %v3992, %v4036
        %v4069 = vmax.f32 %v3994, %v4037
        %v4070 = vmax.f32 %v3996, %v4038
        %v4071 = vmax.f32 %v3998, %v4039
        %v4072 = vmax.f32 %v4000, %v4040
        %v4073 = vmax.f32 %v4002, %v4041
        %v4074 = vmax.f32 %v4004, %v4042
        %v4075 = vmax.f32 %v4006, %v4043
        %v4076 = vmax.f32 %v4008, %v4044
        %v4077 = vmax.f32 %v4010, %v4045
        %v4078 = vmax.f32 %v4012, %v4046
        %v4079 = vmax.f32 %v4014, %v4047
        %s4080 = scalar_lea.vmem [#allocation3], 16
        %4081 = vst.msk [vmem:[%s4080 + $0x1] sm:$0x1] %vm757, %v4064
        %4082 = vst.msk [vmem:[%s4080 + $0x11] sm:$0x1] %vm757, %v4065
        %4083 = vst.msk [vmem:[%s4080 + $0x21] sm:$0x1] %vm757, %v4066
        %4084 = vst.msk [vmem:[%s4080 + $0x31] sm:$0x1] %vm757, %v4067
        %4085 = vst.msk [vmem:[%s4080 + $0x41] sm:$0x1] %vm757, %v4068
        %4086 = vst.msk [vmem:[%s4080 + $0x51] sm:$0x1] %vm757, %v4069
        %4087 = vst.msk [vmem:[%s4080 + $0x61] sm:$0x1] %vm757, %v4070
        %4088 = vst.msk [vmem:[%s4080 + $0x71] sm:$0x1] %vm757, %v4071
        %4089 = vst.msk [vmem:[%s4080 + $0xa1] sm:$0x1] %vm757, %v4072
        %4090 = vst.msk [vmem:[%s4080 + $0xb1] sm:$0x1] %vm757, %v4073
        %4091 = vst.msk [vmem:[%s4080 + $0xc1] sm:$0x1] %vm757, %v4074
        %4092 = vst.msk [vmem:[%s4080 + $0xd1] sm:$0x1] %vm757, %v4075
        %4093 = vst.msk [vmem:[%s4080 + $0xe1] sm:$0x1] %vm757, %v4076
        %4094 = vst.msk [vmem:[%s4080 + $0xf1] sm:$0x1] %vm757, %v4077
        %4095 = vst.msk [vmem:[%s4080 + $0x101] sm:$0x1] %vm757, %v4078
        %4096 = vst.msk [vmem:[%s4080 + $0x111] sm:$0x1] %vm757, %v4079
        %vm4097 = vcmask 518146
        %4098 = vst.msk [vmem:[%s4080] sm:$0x4] %vm4097, %v4064
        %4099 = vst.msk [vmem:[%s4080 + $0x10] sm:$0x4] %vm4097, %v4065
        %4100 = vst.msk [vmem:[%s4080 + $0x20] sm:$0x4] %vm4097, %v4066
        %4101 = vst.msk [vmem:[%s4080 + $0x30] sm:$0x4] %vm4097, %v4067
        %4102 = vst.msk [vmem:[%s4080 + $0x40] sm:$0x4] %vm4097, %v4068
        %4103 = vst.msk [vmem:[%s4080 + $0x50] sm:$0x4] %vm4097, %v4069
        %4104 = vst.msk [vmem:[%s4080 + $0x60] sm:$0x4] %vm4097, %v4070
        %4105 = vst.msk [vmem:[%s4080 + $0x70] sm:$0x4] %vm4097, %v4071
        %4106 = vst.msk [vmem:[%s4080 + $0xa0] sm:$0x4] %vm4097, %v4072
        %4107 = vst.msk [vmem:[%s4080 + $0xb0] sm:$0x4] %vm4097, %v4073
        %4108 = vst.msk [vmem:[%s4080 + $0xc0] sm:$0x4] %vm4097, %v4074
        %4109 = vst.msk [vmem:[%s4080 + $0xd0] sm:$0x4] %vm4097, %v4075
        %4110 = vst.msk [vmem:[%s4080 + $0xe0] sm:$0x4] %vm4097, %v4076
        %4111 = vst.msk [vmem:[%s4080 + $0xf0] sm:$0x4] %vm4097, %v4077
        %4112 = vst.msk [vmem:[%s4080 + $0x100] sm:$0x4] %vm4097, %v4078
        %4113 = vst.msk [vmem:[%s4080 + $0x110] sm:$0x4] %vm4097, %v4079
        %vm4114 = vcmask 520196
        %4115 = vst.msk [vmem:[%s4080 - $0x1] sm:$0x10] %vm4114, %v4064
        %4116 = vst.msk [vmem:[%s4080 + $0xf] sm:$0x10] %vm4114, %v4065
        %4117 = vst.msk [vmem:[%s4080 + $0x1f] sm:$0x10] %vm4114, %v4066
        %4118 = vst.msk [vmem:[%s4080 + $0x2f] sm:$0x10] %vm4114, %v4067
        %4119 = vst.msk [vmem:[%s4080 + $0x3f] sm:$0x10] %vm4114, %v4068
        %4120 = vst.msk [vmem:[%s4080 + $0x4f] sm:$0x10] %vm4114, %v4069
        %4121 = vst.msk [vmem:[%s4080 + $0x5f] sm:$0x10] %vm4114, %v4070
        %4122 = vst.msk [vmem:[%s4080 + $0x6f] sm:$0x10] %vm4114, %v4071
        %4123 = vst.msk [vmem:[%s4080 + $0x9f] sm:$0x10] %vm4114, %v4072
        %4124 = vst.msk [vmem:[%s4080 + $0xaf] sm:$0x10] %vm4114, %v4073
        %4125 = vst.msk [vmem:[%s4080 + $0xbf] sm:$0x10] %vm4114, %v4074
        %4126 = vst.msk [vmem:[%s4080 + $0xcf] sm:$0x10] %vm4114, %v4075
        %4127 = vst.msk [vmem:[%s4080 + $0xdf] sm:$0x10] %vm4114, %v4076
        %4128 = vst.msk [vmem:[%s4080 + $0xef] sm:$0x10] %vm4114, %v4077
        %4129 = vst.msk [vmem:[%s4080 + $0xff] sm:$0x10] %vm4114, %v4078
        %4130 = vst.msk [vmem:[%s4080 + $0x10f] sm:$0x10] %vm4114, %v4079
        %vm4131 = vcmask 522246
        %4132 = vst.msk [vmem:[%s4080 - $0x2] sm:$0x40] %vm4131, %v4064
        %4133 = vst.msk [vmem:[%s4080 + $0xe] sm:$0x40] %vm4131, %v4065
        %4134 = vst.msk [vmem:[%s4080 + $0x1e] sm:$0x40] %vm4131, %v4066
        %4135 = vst.msk [vmem:[%s4080 + $0x2e] sm:$0x40] %vm4131, %v4067
        %4136 = vst.msk [vmem:[%s4080 + $0x3e] sm:$0x40] %vm4131, %v4068
        %4137 = vst.msk [vmem:[%s4080 + $0x4e] sm:$0x40] %vm4131, %v4069
        %4138 = vst.msk [vmem:[%s4080 + $0x5e] sm:$0x40] %vm4131, %v4070
        %4139 = vst.msk [vmem:[%s4080 + $0x6e] sm:$0x40] %vm4131, %v4071
        %4140 = vst.msk [vmem:[%s4080 + $0x9e] sm:$0x40] %vm4131, %v4072
        %4141 = vst.msk [vmem:[%s4080 + $0xae] sm:$0x40] %vm4131, %v4073
        %4142 = vst.msk [vmem:[%s4080 + $0xbe] sm:$0x40] %vm4131, %v4074
        %4143 = vst.msk [vmem:[%s4080 + $0xce] sm:$0x40] %vm4131, %v4075
        %4144 = vst.msk [vmem:[%s4080 + $0xde] sm:$0x40] %vm4131, %v4076
        %4145 = vst.msk [vmem:[%s4080 + $0xee] sm:$0x40] %vm4131, %v4077
        %4146 = vst.msk [vmem:[%s4080 + $0xfe] sm:$0x40] %vm4131, %v4078
        %4147 = vst.msk [vmem:[%s4080 + $0x10e] sm:$0x40] %vm4131, %v4079
        %v4164 = vrot.slane %v3985, 1
        %v4165 = vrot.slane %v3987, 1
        %v4166 = vrot.slane %v3989, 1
        %v4167 = vrot.slane %v3991, 1
        %v4168 = vrot.slane %v3993, 1
        %v4169 = vrot.slane %v3995, 1
        %v4170 = vrot.slane %v3997, 1
        %v4171 = vrot.slane %v3999, 1
        %v4172 = vrot.slane %v4001, 1
        %v4173 = vrot.slane %v4003, 1
        %v4174 = vrot.slane %v4005, 1
        %v4175 = vrot.slane %v4007, 1
        %v4176 = vrot.slane %v4009, 1
        %v4177 = vrot.slane %v4011, 1
        %v4178 = vrot.slane %v4013, 1
        %v4179 = vrot.slane %v4015, 1
        %v4196 = vmax.f32 %v3985, %v4164
        %v4197 = vmax.f32 %v3987, %v4165
        %v4198 = vmax.f32 %v3989, %v4166
        %v4199 = vmax.f32 %v3991, %v4167
        %v4200 = vmax.f32 %v3993, %v4168
        %v4201 = vmax.f32 %v3995, %v4169
        %v4202 = vmax.f32 %v3997, %v4170
        %v4203 = vmax.f32 %v3999, %v4171
        %v4204 = vmax.f32 %v4001, %v4172
        %v4205 = vmax.f32 %v4003, %v4173
        %v4206 = vmax.f32 %v4005, %v4174
        %v4207 = vmax.f32 %v4007, %v4175
        %v4208 = vmax.f32 %v4009, %v4176
        %v4209 = vmax.f32 %v4011, %v4177
        %v4210 = vmax.f32 %v4013, %v4178
        %v4211 = vmax.f32 %v4015, %v4179
        %4212 = vst.msk [vmem:[%s4080 + $0x5] sm:$0x1] %vm757, %v4196
        %4213 = vst.msk [vmem:[%s4080 + $0x15] sm:$0x1] %vm757, %v4197
        %4214 = vst.msk [vmem:[%s4080 + $0x25] sm:$0x1] %vm757, %v4198
        %4215 = vst.msk [vmem:[%s4080 + $0x35] sm:$0x1] %vm757, %v4199
        %4216 = vst.msk [vmem:[%s4080 + $0x45] sm:$0x1] %vm757, %v4200
        %4217 = vst.msk [vmem:[%s4080 + $0x55] sm:$0x1] %vm757, %v4201
        %4218 = vst.msk [vmem:[%s4080 + $0x65] sm:$0x1] %vm757, %v4202
        %4219 = vst.msk [vmem:[%s4080 + $0x75] sm:$0x1] %vm757, %v4203
        %4220 = vst.msk [vmem:[%s4080 + $0xa5] sm:$0x1] %vm757, %v4204
        %4221 = vst.msk [vmem:[%s4080 + $0xb5] sm:$0x1] %vm757, %v4205
        %4222 = vst.msk [vmem:[%s4080 + $0xc5] sm:$0x1] %vm757, %v4206
        %4223 = vst.msk [vmem:[%s4080 + $0xd5] sm:$0x1] %vm757, %v4207
        %4224 = vst.msk [vmem:[%s4080 + $0xe5] sm:$0x1] %vm757, %v4208
        %4225 = vst.msk [vmem:[%s4080 + $0xf5] sm:$0x1] %vm757, %v4209
        %4226 = vst.msk [vmem:[%s4080 + $0x105] sm:$0x1] %vm757, %v4210
        %4227 = vst.msk [vmem:[%s4080 + $0x115] sm:$0x1] %vm757, %v4211
        %4228 = vst.msk [vmem:[%s4080 + $0x4] sm:$0x4] %vm4097, %v4196
        %4229 = vst.msk [vmem:[%s4080 + $0x14] sm:$0x4] %vm4097, %v4197
        %4230 = vst.msk [vmem:[%s4080 + $0x24] sm:$0x4] %vm4097, %v4198
        %4231 = vst.msk [vmem:[%s4080 + $0x34] sm:$0x4] %vm4097, %v4199
        %4232 = vst.msk [vmem:[%s4080 + $0x44] sm:$0x4] %vm4097, %v4200
        %4233 = vst.msk [vmem:[%s4080 + $0x54] sm:$0x4] %vm4097, %v4201
        %4234 = vst.msk [vmem:[%s4080 + $0x64] sm:$0x4] %vm4097, %v4202
        %4235 = vst.msk [vmem:[%s4080 + $0x74] sm:$0x4] %vm4097, %v4203
        %4236 = vst.msk [vmem:[%s4080 + $0xa4] sm:$0x4] %vm4097, %v4204
        %4237 = vst.msk [vmem:[%s4080 + $0xb4] sm:$0x4] %vm4097, %v4205
        %4238 = vst.msk [vmem:[%s4080 + $0xc4] sm:$0x4] %vm4097, %v4206
        %4239 = vst.msk [vmem:[%s4080 + $0xd4] sm:$0x4] %vm4097, %v4207
        %4240 = vst.msk [vmem:[%s4080 + $0xe4] sm:$0x4] %vm4097, %v4208
        %4241 = vst.msk [vmem:[%s4080 + $0xf4] sm:$0x4] %vm4097, %v4209
        %4242 = vst.msk [vmem:[%s4080 + $0x104] sm:$0x4] %vm4097, %v4210
        %4243 = vst.msk [vmem:[%s4080 + $0x114] sm:$0x4] %vm4097, %v4211
        %4244 = vst.msk [vmem:[%s4080 + $0x3] sm:$0x10] %vm4114, %v4196
        %4245 = vst.msk [vmem:[%s4080 + $0x13] sm:$0x10] %vm4114, %v4197
        %4246 = vst.msk [vmem:[%s4080 + $0x23] sm:$0x10] %vm4114, %v4198
        %4247 = vst.msk [vmem:[%s4080 + $0x33] sm:$0x10] %vm4114, %v4199
        %4248 = vst.msk [vmem:[%s4080 + $0x43] sm:$0x10] %vm4114, %v4200
        %4249 = vst.msk [vmem:[%s4080 + $0x53] sm:$0x10] %vm4114, %v4201
        %4250 = vst.msk [vmem:[%s4080 + $0x63] sm:$0x10] %vm4114, %v4202
        %4251 = vst.msk [vmem:[%s4080 + $0x73] sm:$0x10] %vm4114, %v4203
        %4252 = vst.msk [vmem:[%s4080 + $0xa3] sm:$0x10] %vm4114, %v4204
        %4253 = vst.msk [vmem:[%s4080 + $0xb3] sm:$0x10] %vm4114, %v4205
        %4254 = vst.msk [vmem:[%s4080 + $0xc3] sm:$0x10] %vm4114, %v4206
        %4255 = vst.msk [vmem:[%s4080 + $0xd3] sm:$0x10] %vm4114, %v4207
        %4256 = vst.msk [vmem:[%s4080 + $0xe3] sm:$0x10] %vm4114, %v4208
        %4257 = vst.msk [vmem:[%s4080 + $0xf3] sm:$0x10] %vm4114, %v4209
        %4258 = vst.msk [vmem:[%s4080 + $0x103] sm:$0x10] %vm4114, %v4210
        %4259 = vst.msk [vmem:[%s4080 + $0x113] sm:$0x10] %vm4114, %v4211
        %4260 = vst.msk [vmem:[%s4080 + $0x2] sm:$0x40] %vm4131, %v4196
        %4261 = vst.msk [vmem:[%s4080 + $0x12] sm:$0x40] %vm4131, %v4197
        %4262 = vst.msk [vmem:[%s4080 + $0x22] sm:$0x40] %vm4131, %v4198
        %4263 = vst.msk [vmem:[%s4080 + $0x32] sm:$0x40] %vm4131, %v4199
        %4264 = vst.msk [vmem:[%s4080 + $0x42] sm:$0x40] %vm4131, %v4200
        %4265 = vst.msk [vmem:[%s4080 + $0x52] sm:$0x40] %vm4131, %v4201
        %4266 = vst.msk [vmem:[%s4080 + $0x62] sm:$0x40] %vm4131, %v4202
        %4267 = vst.msk [vmem:[%s4080 + $0x72] sm:$0x40] %vm4131, %v4203
        %4268 = vst.msk [vmem:[%s4080 + $0xa2] sm:$0x40] %vm4131, %v4204
        %4269 = vst.msk [vmem:[%s4080 + $0xb2] sm:$0x40] %vm4131, %v4205
        %4270 = vst.msk [vmem:[%s4080 + $0xc2] sm:$0x40] %vm4131, %v4206
        %4271 = vst.msk [vmem:[%s4080 + $0xd2] sm:$0x40] %vm4131, %v4207
        %4272 = vst.msk [vmem:[%s4080 + $0xe2] sm:$0x40] %vm4131, %v4208
        %4273 = vst.msk [vmem:[%s4080 + $0xf2] sm:$0x40] %vm4131, %v4209
        %4274 = vst.msk [vmem:[%s4080 + $0x102] sm:$0x40] %vm4131, %v4210
        %4275 = vst.msk [vmem:[%s4080 + $0x112] sm:$0x40] %vm4131, %v4211
        %v4276 = vld [vmem:[#allocation3] sm:$0xff]
        %v4277 = vld [vmem:[#allocation3 + $0x10] sm:$0xff]
        %v4278 = vld [vmem:[#allocation3 + $0x20] sm:$0xff]
        %v4279 = vld [vmem:[#allocation3 + $0x30] sm:$0xff]
        %v4280 = vld [vmem:[#allocation3 + $0x40] sm:$0xff]
        %v4281 = vld [vmem:[#allocation3 + $0x50] sm:$0xff]
        %v4282 = vld [vmem:[#allocation3 + $0x60] sm:$0xff]
        %v4283 = vld [vmem:[#allocation3 + $0x70] sm:$0xff]
        %v4284 = vld [vmem:[#allocation3 + $0xa0] sm:$0xff]
        %v4285 = vld [vmem:[#allocation3 + $0xb0] sm:$0xff]
        %v4286 = vld [vmem:[#allocation3 + $0xc0] sm:$0xff]
        %v4287 = vld [vmem:[#allocation3 + $0xd0] sm:$0xff]
        %v4288 = vld [vmem:[#allocation3 + $0xe0] sm:$0xff]
        %v4289 = vld [vmem:[#allocation3 + $0xf0] sm:$0xff]
        %v4290 = vld [vmem:[#allocation3 + $0x100] sm:$0xff]
        %v4291 = vld [vmem:[#allocation3 + $0x110] sm:$0xff]
        %v4292 = vld [vmem:[%s7] sm:$0x1]
        %v4293 = vlaneseq
        %v4294 = vshrl.u32 %v4293, 7
        %v4295 = vsub.s32 0, %v4294
        %v4296 = vrot.slane %v4292, %v4295
        %v4297 = vmul.f32 %v4276, %v4296
        %v4298 = vmul.f32 %v4277, %v4296
        %v4299 = vmul.f32 %v4278, %v4296
        %v4300 = vmul.f32 %v4279, %v4296
        %v4301 = vmul.f32 %v4280, %v4296
        %v4302 = vmul.f32 %v4281, %v4296
        %v4303 = vmul.f32 %v4282, %v4296
        %v4304 = vmul.f32 %v4283, %v4296
        %v4305 = vmul.f32 %v4284, %v4296
        %v4306 = vmul.f32 %v4285, %v4296
        %v4307 = vmul.f32 %v4286, %v4296
        %v4308 = vmul.f32 %v4287, %v4296
        %v4309 = vmul.f32 %v4288, %v4296
        %v4310 = vmul.f32 %v4289, %v4296
        %v4311 = vmul.f32 %v4290, %v4296
        %v4312 = vmul.f32 %v4291, %v4296
        %v4313 = vld [vmem:[#allocation3 + $0x1] sm:$0xff]
        %v4314 = vld [vmem:[#allocation3 + $0x11] sm:$0xff]
        %v4315 = vld [vmem:[#allocation3 + $0x21] sm:$0xff]
        %v4316 = vld [vmem:[#allocation3 + $0x31] sm:$0xff]
        %v4317 = vld [vmem:[#allocation3 + $0x41] sm:$0xff]
        %v4318 = vld [vmem:[#allocation3 + $0x51] sm:$0xff]
        %v4319 = vld [vmem:[#allocation3 + $0x61] sm:$0xff]
        %v4320 = vld [vmem:[#allocation3 + $0x71] sm:$0xff]
        %v4321 = vld [vmem:[#allocation3 + $0xa1] sm:$0xff]
        %v4322 = vld [vmem:[#allocation3 + $0xb1] sm:$0xff]
        %v4323 = vld [vmem:[#allocation3 + $0xc1] sm:$0xff]
        %v4324 = vld [vmem:[#allocation3 + $0xd1] sm:$0xff]
        %v4325 = vld [vmem:[#allocation3 + $0xe1] sm:$0xff]
        %v4326 = vld [vmem:[#allocation3 + $0xf1] sm:$0xff]
        %v4327 = vld [vmem:[#allocation3 + $0x101] sm:$0xff]
        %v4328 = vld [vmem:[#allocation3 + $0x111] sm:$0xff]
        %v4329 = vld [vmem:[%s7 + $0x1] sm:$0x1]
        %v4330 = vlaneseq
        %v4331 = vshrl.u32 %v4330, 7
        %v4332 = vsub.s32 0, %v4331
        %v4333 = vrot.slane %v4329, %v4332
        %v4334 = vmul.f32 %v4313, %v4333
        %v4335 = vmul.f32 %v4314, %v4333
        %v4336 = vmul.f32 %v4315, %v4333
        %v4337 = vmul.f32 %v4316, %v4333
        %v4338 = vmul.f32 %v4317, %v4333
        %v4339 = vmul.f32 %v4318, %v4333
        %v4340 = vmul.f32 %v4319, %v4333
        %v4341 = vmul.f32 %v4320, %v4333
        %v4342 = vmul.f32 %v4321, %v4333
        %v4343 = vmul.f32 %v4322, %v4333
        %v4344 = vmul.f32 %v4323, %v4333
        %v4345 = vmul.f32 %v4324, %v4333
        %v4346 = vmul.f32 %v4325, %v4333
        %v4347 = vmul.f32 %v4326, %v4333
        %v4348 = vmul.f32 %v4327, %v4333
        %v4349 = vmul.f32 %v4328, %v4333
        %v4350 = vadd.f32 %v4297, %v4334
        %v4351 = vadd.f32 %v4298, %v4335
        %v4352 = vadd.f32 %v4299, %v4336
        %v4353 = vadd.f32 %v4300, %v4337
        %v4354 = vadd.f32 %v4301, %v4338
        %v4355 = vadd.f32 %v4302, %v4339
        %v4356 = vadd.f32 %v4303, %v4340
        %v4357 = vadd.f32 %v4304, %v4341
        %v4358 = vadd.f32 %v4305, %v4342
        %v4359 = vadd.f32 %v4306, %v4343
        %v4360 = vadd.f32 %v4307, %v4344
        %v4361 = vadd.f32 %v4308, %v4345
        %v4362 = vadd.f32 %v4309, %v4346
        %v4363 = vadd.f32 %v4310, %v4347
        %v4364 = vadd.f32 %v4311, %v4348
        %v4365 = vadd.f32 %v4312, %v4349
        %v4366 = vld [vmem:[#allocation3 + $0x2] sm:$0xff]
        %v4367 = vld [vmem:[#allocation3 + $0x12] sm:$0xff]
        %v4368 = vld [vmem:[#allocation3 + $0x22] sm:$0xff]
        %v4369 = vld [vmem:[#allocation3 + $0x32] sm:$0xff]
        %v4370 = vld [vmem:[#allocation3 + $0x42] sm:$0xff]
        %v4371 = vld [vmem:[#allocation3 + $0x52] sm:$0xff]
        %v4372 = vld [vmem:[#allocation3 + $0x62] sm:$0xff]
        %v4373 = vld [vmem:[#allocation3 + $0x72] sm:$0xff]
        %v4374 = vld [vmem:[#allocation3 + $0xa2] sm:$0xff]
        %v4375 = vld [vmem:[#allocation3 + $0xb2] sm:$0xff]
        %v4376 = vld [vmem:[#allocation3 + $0xc2] sm:$0xff]
        %v4377 = vld [vmem:[#allocation3 + $0xd2] sm:$0xff]
        %v4378 = vld [vmem:[#allocation3 + $0xe2] sm:$0xff]
        %v4379 = vld [vmem:[#allocation3 + $0xf2] sm:$0xff]
        %v4380 = vld [vmem:[#allocation3 + $0x102] sm:$0xff]
        %v4381 = vld [vmem:[#allocation3 + $0x112] sm:$0xff]
        %v4382 = vld [vmem:[%s7 + $0x2] sm:$0x1]
        %v4383 = vlaneseq
        %v4384 = vshrl.u32 %v4383, 7
        %v4385 = vsub.s32 0, %v4384
        %v4386 = vrot.slane %v4382, %v4385
        %v4387 = vmul.f32 %v4366, %v4386
        %v4388 = vmul.f32 %v4367, %v4386
        %v4389 = vmul.f32 %v4368, %v4386
        %v4390 = vmul.f32 %v4369, %v4386
        %v4391 = vmul.f32 %v4370, %v4386
        %v4392 = vmul.f32 %v4371, %v4386
        %v4393 = vmul.f32 %v4372, %v4386
        %v4394 = vmul.f32 %v4373, %v4386
        %v4395 = vmul.f32 %v4374, %v4386
        %v4396 = vmul.f32 %v4375, %v4386
        %v4397 = vmul.f32 %v4376, %v4386
        %v4398 = vmul.f32 %v4377, %v4386
        %v4399 = vmul.f32 %v4378, %v4386
        %v4400 = vmul.f32 %v4379, %v4386
        %v4401 = vmul.f32 %v4380, %v4386
        %v4402 = vmul.f32 %v4381, %v4386
        %v4403 = vadd.f32 %v4350, %v4387
        %v4404 = vadd.f32 %v4351, %v4388
        %v4405 = vadd.f32 %v4352, %v4389
        %v4406 = vadd.f32 %v4353, %v4390
        %v4407 = vadd.f32 %v4354, %v4391
        %v4408 = vadd.f32 %v4355, %v4392
        %v4409 = vadd.f32 %v4356, %v4393
        %v4410 = vadd.f32 %v4357, %v4394
        %v4411 = vadd.f32 %v4358, %v4395
        %v4412 = vadd.f32 %v4359, %v4396
        %v4413 = vadd.f32 %v4360, %v4397
        %v4414 = vadd.f32 %v4361, %v4398
        %v4415 = vadd.f32 %v4362, %v4399
        %v4416 = vadd.f32 %v4363, %v4400
        %v4417 = vadd.f32 %v4364, %v4401
        %v4418 = vadd.f32 %v4365, %v4402
        %v4419 = vld [vmem:[%s4080] sm:$0xff]
        %v4420 = vld [vmem:[%s4080 + $0x10] sm:$0xff]
        %v4421 = vld [vmem:[%s4080 + $0x20] sm:$0xff]
        %v4422 = vld [vmem:[%s4080 + $0x30] sm:$0xff]
        %v4423 = vld [vmem:[%s4080 + $0x40] sm:$0xff]
        %v4424 = vld [vmem:[%s4080 + $0x50] sm:$0xff]
        %v4425 = vld [vmem:[%s4080 + $0x60] sm:$0xff]
        %v4426 = vld [vmem:[%s4080 + $0x70] sm:$0xff]
        %v4427 = vld [vmem:[%s4080 + $0xa0] sm:$0xff]
        %v4428 = vld [vmem:[%s4080 + $0xb0] sm:$0xff]
        %v4429 = vld [vmem:[%s4080 + $0xc0] sm:$0xff]
        %v4430 = vld [vmem:[%s4080 + $0xd0] sm:$0xff]
        %v4431 = vld [vmem:[%s4080 + $0xe0] sm:$0xff]
        %v4432 = vld [vmem:[%s4080 + $0xf0] sm:$0xff]
        %v4433 = vld [vmem:[%s4080 + $0x100] sm:$0xff]
        %v4434 = vld [vmem:[%s4080 + $0x110] sm:$0xff]
        %v4435 = vld [vmem:[%s7 + $0x3] sm:$0x1]
        %v4436 = vlaneseq
        %v4437 = vshrl.u32 %v4436, 7
        %v4438 = vsub.s32 0, %v4437
        %v4439 = vrot.slane %v4435, %v4438
        %v4440 = vmul.f32 %v4419, %v4439
        %v4441 = vmul.f32 %v4420, %v4439
        %v4442 = vmul.f32 %v4421, %v4439
        %v4443 = vmul.f32 %v4422, %v4439
        %v4444 = vmul.f32 %v4423, %v4439
        %v4445 = vmul.f32 %v4424, %v4439
        %v4446 = vmul.f32 %v4425, %v4439
        %v4447 = vmul.f32 %v4426, %v4439
        %v4448 = vmul.f32 %v4427, %v4439
        %v4449 = vmul.f32 %v4428, %v4439
        %v4450 = vmul.f32 %v4429, %v4439
        %v4451 = vmul.f32 %v4430, %v4439
        %v4452 = vmul.f32 %v4431, %v4439
        %v4453 = vmul.f32 %v4432, %v4439
        %v4454 = vmul.f32 %v4433, %v4439
        %v4455 = vmul.f32 %v4434, %v4439
        %v4456 = vadd.f32 %v4403, %v4440
        %v4457 = vadd.f32 %v4404, %v4441
        %v4458 = vadd.f32 %v4405, %v4442
        %v4459 = vadd.f32 %v4406, %v4443
        %v4460 = vadd.f32 %v4407, %v4444
        %v4461 = vadd.f32 %v4408, %v4445
        %v4462 = vadd.f32 %v4409, %v4446
        %v4463 = vadd.f32 %v4410, %v4447
        %v4464 = vadd.f32 %v4411, %v4448
        %v4465 = vadd.f32 %v4412, %v4449
        %v4466 = vadd.f32 %v4413, %v4450
        %v4467 = vadd.f32 %v4414, %v4451
        %v4468 = vadd.f32 %v4415, %v4452
        %v4469 = vadd.f32 %v4416, %v4453
        %v4470 = vadd.f32 %v4417, %v4454
        %v4471 = vadd.f32 %v4418, %v4455
        %v4472 = vld [vmem:[%s4080 + $0x1] sm:$0xff]
        %v4473 = vld [vmem:[%s4080 + $0x11] sm:$0xff]
        %v4474 = vld [vmem:[%s4080 + $0x21] sm:$0xff]
        %v4475 = vld [vmem:[%s4080 + $0x31] sm:$0xff]
        %v4476 = vld [vmem:[%s4080 + $0x41] sm:$0xff]
        %v4477 = vld [vmem:[%s4080 + $0x51] sm:$0xff]
        %v4478 = vld [vmem:[%s4080 + $0x61] sm:$0xff]
        %v4479 = vld [vmem:[%s4080 + $0x71] sm:$0xff]
        %v4480 = vld [vmem:[%s4080 + $0xa1] sm:$0xff]
        %v4481 = vld [vmem:[%s4080 + $0xb1] sm:$0xff]
        %v4482 = vld [vmem:[%s4080 + $0xc1] sm:$0xff]
        %v4483 = vld [vmem:[%s4080 + $0xd1] sm:$0xff]
        %v4484 = vld [vmem:[%s4080 + $0xe1] sm:$0xff]
        %v4485 = vld [vmem:[%s4080 + $0xf1] sm:$0xff]
        %v4486 = vld [vmem:[%s4080 + $0x101] sm:$0xff]
        %v4487 = vld [vmem:[%s4080 + $0x111] sm:$0xff]
        %v4488 = vld [vmem:[%s7 + $0x4] sm:$0x1]
        %v4489 = vlaneseq
        %v4490 = vshrl.u32 %v4489, 7
        %v4491 = vsub.s32 0, %v4490
        %v4492 = vrot.slane %v4488, %v4491
        %v4493 = vmul.f32 %v4472, %v4492
        %v4494 = vmul.f32 %v4473, %v4492
        %v4495 = vmul.f32 %v4474, %v4492
        %v4496 = vmul.f32 %v4475, %v4492
        %v4497 = vmul.f32 %v4476, %v4492
        %v4498 = vmul.f32 %v4477, %v4492
        %v4499 = vmul.f32 %v4478, %v4492
        %v4500 = vmul.f32 %v4479, %v4492
        %v4501 = vmul.f32 %v4480, %v4492
        %v4502 = vmul.f32 %v4481, %v4492
        %v4503 = vmul.f32 %v4482, %v4492
        %v4504 = vmul.f32 %v4483, %v4492
        %v4505 = vmul.f32 %v4484, %v4492
        %v4506 = vmul.f32 %v4485, %v4492
        %v4507 = vmul.f32 %v4486, %v4492
        %v4508 = vmul.f32 %v4487, %v4492
        %v4509 = vadd.f32 %v4456, %v4493
        %v4510 = vadd.f32 %v4457, %v4494
        %v4511 = vadd.f32 %v4458, %v4495
        %v4512 = vadd.f32 %v4459, %v4496
        %v4513 = vadd.f32 %v4460, %v4497
        %v4514 = vadd.f32 %v4461, %v4498
        %v4515 = vadd.f32 %v4462, %v4499
        %v4516 = vadd.f32 %v4463, %v4500
        %v4517 = vadd.f32 %v4464, %v4501
        %v4518 = vadd.f32 %v4465, %v4502
        %v4519 = vadd.f32 %v4466, %v4503
        %v4520 = vadd.f32 %v4467, %v4504
        %v4521 = vadd.f32 %v4468, %v4505
        %v4522 = vadd.f32 %v4469, %v4506
        %v4523 = vadd.f32 %v4470, %v4507
        %v4524 = vadd.f32 %v4471, %v4508
        %v4525 = vld [vmem:[%s4080 + $0x2] sm:$0xff]
        %v4526 = vld [vmem:[%s4080 + $0x12] sm:$0xff]
        %v4527 = vld [vmem:[%s4080 + $0x22] sm:$0xff]
        %v4528 = vld [vmem:[%s4080 + $0x32] sm:$0xff]
        %v4529 = vld [vmem:[%s4080 + $0x42] sm:$0xff]
        %v4530 = vld [vmem:[%s4080 + $0x52] sm:$0xff]
        %v4531 = vld [vmem:[%s4080 + $0x62] sm:$0xff]
        %v4532 = vld [vmem:[%s4080 + $0x72] sm:$0xff]
        %v4533 = vld [vmem:[%s4080 + $0xa2] sm:$0xff]
        %v4534 = vld [vmem:[%s4080 + $0xb2] sm:$0xff]
        %v4535 = vld [vmem:[%s4080 + $0xc2] sm:$0xff]
        %v4536 = vld [vmem:[%s4080 + $0xd2] sm:$0xff]
        %v4537 = vld [vmem:[%s4080 + $0xe2] sm:$0xff]
        %v4538 = vld [vmem:[%s4080 + $0xf2] sm:$0xff]
        %v4539 = vld [vmem:[%s4080 + $0x102] sm:$0xff]
        %v4540 = vld [vmem:[%s4080 + $0x112] sm:$0xff]
        %v4541 = vld [vmem:[%s7 + $0x5] sm:$0x1]
        %v4542 = vlaneseq
        %v4543 = vshrl.u32 %v4542, 7
        %v4544 = vsub.s32 0, %v4543
        %v4545 = vrot.slane %v4541, %v4544
        %v4546 = vmul.f32 %v4525, %v4545
        %v4547 = vmul.f32 %v4526, %v4545
        %v4548 = vmul.f32 %v4527, %v4545
        %v4549 = vmul.f32 %v4528, %v4545
        %v4550 = vmul.f32 %v4529, %v4545
        %v4551 = vmul.f32 %v4530, %v4545
        %v4552 = vmul.f32 %v4531, %v4545
        %v4553 = vmul.f32 %v4532, %v4545
        %v4554 = vmul.f32 %v4533, %v4545
        %v4555 = vmul.f32 %v4534, %v4545
        %v4556 = vmul.f32 %v4535, %v4545
        %v4557 = vmul.f32 %v4536, %v4545
        %v4558 = vmul.f32 %v4537, %v4545
        %v4559 = vmul.f32 %v4538, %v4545
        %v4560 = vmul.f32 %v4539, %v4545
        %v4561 = vmul.f32 %v4540, %v4545
        %v4562 = vadd.f32 %v4509, %v4546
        %v4563 = vadd.f32 %v4510, %v4547
        %v4564 = vadd.f32 %v4511, %v4548
        %v4565 = vadd.f32 %v4512, %v4549
        %v4566 = vadd.f32 %v4513, %v4550
        %v4567 = vadd.f32 %v4514, %v4551
        %v4568 = vadd.f32 %v4515, %v4552
        %v4569 = vadd.f32 %v4516, %v4553
        %v4570 = vadd.f32 %v4517, %v4554
        %v4571 = vadd.f32 %v4518, %v4555
        %v4572 = vadd.f32 %v4519, %v4556
        %v4573 = vadd.f32 %v4520, %v4557
        %v4574 = vadd.f32 %v4521, %v4558
        %v4575 = vadd.f32 %v4522, %v4559
        %v4576 = vadd.f32 %v4523, %v4560
        %v4577 = vadd.f32 %v4524, %v4561
        %s4578 = scalar_lea.vmem [#allocation3], 32
        %v4579 = vld [vmem:[%s4578] sm:$0xff]
        %v4580 = vld [vmem:[%s4578 + $0x10] sm:$0xff]
        %v4581 = vld [vmem:[%s4578 + $0x20] sm:$0xff]
        %v4582 = vld [vmem:[%s4578 + $0x30] sm:$0xff]
        %v4583 = vld [vmem:[%s4578 + $0x40] sm:$0xff]
        %v4584 = vld [vmem:[%s4578 + $0x50] sm:$0xff]
        %v4585 = vld [vmem:[%s4578 + $0x60] sm:$0xff]
        %v4586 = vld [vmem:[%s4578 + $0x70] sm:$0xff]
        %v4587 = vld [vmem:[%s4578 + $0xa0] sm:$0xff]
        %v4588 = vld [vmem:[%s4578 + $0xb0] sm:$0xff]
        %v4589 = vld [vmem:[%s4578 + $0xc0] sm:$0xff]
        %v4590 = vld [vmem:[%s4578 + $0xd0] sm:$0xff]
        %v4591 = vld [vmem:[%s4578 + $0xe0] sm:$0xff]
        %v4592 = vld [vmem:[%s4578 + $0xf0] sm:$0xff]
        %v4593 = vld [vmem:[%s4578 + $0x100] sm:$0xff]
        %v4594 = vld [vmem:[%s4578 + $0x110] sm:$0xff]
        %v4595 = vld [vmem:[%s7 + $0x6] sm:$0x1]
        %v4596 = vlaneseq
        %v4597 = vshrl.u32 %v4596, 7
        %v4598 = vsub.s32 0, %v4597
        %v4599 = vrot.slane %v4595, %v4598
        %v4600 = vmul.f32 %v4579, %v4599
        %v4601 = vmul.f32 %v4580, %v4599
        %v4602 = vmul.f32 %v4581, %v4599
        %v4603 = vmul.f32 %v4582, %v4599
        %v4604 = vmul.f32 %v4583, %v4599
        %v4605 = vmul.f32 %v4584, %v4599
        %v4606 = vmul.f32 %v4585, %v4599
        %v4607 = vmul.f32 %v4586, %v4599
        %v4608 = vmul.f32 %v4587, %v4599
        %v4609 = vmul.f32 %v4588, %v4599
        %v4610 = vmul.f32 %v4589, %v4599
        %v4611 = vmul.f32 %v4590, %v4599
        %v4612 = vmul.f32 %v4591, %v4599
        %v4613 = vmul.f32 %v4592, %v4599
        %v4614 = vmul.f32 %v4593, %v4599
        %v4615 = vmul.f32 %v4594, %v4599
        %v4616 = vadd.f32 %v4562, %v4600
        %v4617 = vadd.f32 %v4563, %v4601
        %v4618 = vadd.f32 %v4564, %v4602
        %v4619 = vadd.f32 %v4565, %v4603
        %v4620 = vadd.f32 %v4566, %v4604
        %v4621 = vadd.f32 %v4567, %v4605
        %v4622 = vadd.f32 %v4568, %v4606
        %v4623 = vadd.f32 %v4569, %v4607
        %v4624 = vadd.f32 %v4570, %v4608
        %v4625 = vadd.f32 %v4571, %v4609
        %v4626 = vadd.f32 %v4572, %v4610
        %v4627 = vadd.f32 %v4573, %v4611
        %v4628 = vadd.f32 %v4574, %v4612
        %v4629 = vadd.f32 %v4575, %v4613
        %v4630 = vadd.f32 %v4576, %v4614
        %v4631 = vadd.f32 %v4577, %v4615
        %v4632 = vld [vmem:[%s4578 + $0x1] sm:$0xff]
        %v4633 = vld [vmem:[%s4578 + $0x11] sm:$0xff]
        %v4634 = vld [vmem:[%s4578 + $0x21] sm:$0xff]
        %v4635 = vld [vmem:[%s4578 + $0x31] sm:$0xff]
        %v4636 = vld [vmem:[%s4578 + $0x41] sm:$0xff]
        %v4637 = vld [vmem:[%s4578 + $0x51] sm:$0xff]
        %v4638 = vld [vmem:[%s4578 + $0x61] sm:$0xff]
        %v4639 = vld [vmem:[%s4578 + $0x71] sm:$0xff]
        %v4640 = vld [vmem:[%s4578 + $0xa1] sm:$0xff]
        %v4641 = vld [vmem:[%s4578 + $0xb1] sm:$0xff]
        %v4642 = vld [vmem:[%s4578 + $0xc1] sm:$0xff]
        %v4643 = vld [vmem:[%s4578 + $0xd1] sm:$0xff]
        %v4644 = vld [vmem:[%s4578 + $0xe1] sm:$0xff]
        %v4645 = vld [vmem:[%s4578 + $0xf1] sm:$0xff]
        %v4646 = vld [vmem:[%s4578 + $0x101] sm:$0xff]
        %v4647 = vld [vmem:[%s4578 + $0x111] sm:$0xff]
        %v4648 = vld [vmem:[%s7 + $0x7] sm:$0x1]
        %v4649 = vlaneseq
        %v4650 = vshrl.u32 %v4649, 7
        %v4651 = vsub.s32 0, %v4650
        %v4652 = vrot.slane %v4648, %v4651
        %v4653 = vmul.f32 %v4632, %v4652
        %v4654 = vmul.f32 %v4633, %v4652
        %v4655 = vmul.f32 %v4634, %v4652
        %v4656 = vmul.f32 %v4635, %v4652
        %v4657 = vmul.f32 %v4636, %v4652
        %v4658 = vmul.f32 %v4637, %v4652
        %v4659 = vmul.f32 %v4638, %v4652
        %v4660 = vmul.f32 %v4639, %v4652
        %v4661 = vmul.f32 %v4640, %v4652
        %v4662 = vmul.f32 %v4641, %v4652
        %v4663 = vmul.f32 %v4642, %v4652
        %v4664 = vmul.f32 %v4643, %v4652
        %v4665 = vmul.f32 %v4644, %v4652
        %v4666 = vmul.f32 %v4645, %v4652
        %v4667 = vmul.f32 %v4646, %v4652
        %v4668 = vmul.f32 %v4647, %v4652
        %v4669 = vadd.f32 %v4616, %v4653
        %v4670 = vadd.f32 %v4617, %v4654
        %v4671 = vadd.f32 %v4618, %v4655
        %v4672 = vadd.f32 %v4619, %v4656
        %v4673 = vadd.f32 %v4620, %v4657
        %v4674 = vadd.f32 %v4621, %v4658
        %v4675 = vadd.f32 %v4622, %v4659
        %v4676 = vadd.f32 %v4623, %v4660
        %v4677 = vadd.f32 %v4624, %v4661
        %v4678 = vadd.f32 %v4625, %v4662
        %v4679 = vadd.f32 %v4626, %v4663
        %v4680 = vadd.f32 %v4627, %v4664
        %v4681 = vadd.f32 %v4628, %v4665
        %v4682 = vadd.f32 %v4629, %v4666
        %v4683 = vadd.f32 %v4630, %v4667
        %v4684 = vadd.f32 %v4631, %v4668
        %v4685 = vld [vmem:[%s4578 + $0x2] sm:$0xff]
        %v4686 = vld [vmem:[%s4578 + $0x12] sm:$0xff]
        %v4687 = vld [vmem:[%s4578 + $0x22] sm:$0xff]
        %v4688 = vld [vmem:[%s4578 + $0x32] sm:$0xff]
        %v4689 = vld [vmem:[%s4578 + $0x42] sm:$0xff]
        %v4690 = vld [vmem:[%s4578 + $0x52] sm:$0xff]
        %v4691 = vld [vmem:[%s4578 + $0x62] sm:$0xff]
        %v4692 = vld [vmem:[%s4578 + $0x72] sm:$0xff]
        %v4693 = vld [vmem:[%s4578 + $0xa2] sm:$0xff]
        %v4694 = vld [vmem:[%s4578 + $0xb2] sm:$0xff]
        %v4695 = vld [vmem:[%s4578 + $0xc2] sm:$0xff]
        %v4696 = vld [vmem:[%s4578 + $0xd2] sm:$0xff]
        %v4697 = vld [vmem:[%s4578 + $0xe2] sm:$0xff]
        %v4698 = vld [vmem:[%s4578 + $0xf2] sm:$0xff]
        %v4699 = vld [vmem:[%s4578 + $0x102] sm:$0xff]
        %v4700 = vld [vmem:[%s4578 + $0x112] sm:$0xff]
        %v4701 = vld [vmem:[%s7 + $0x8] sm:$0x1]
        %v4702 = vlaneseq
        %v4703 = vshrl.u32 %v4702, 7
        %v4704 = vsub.s32 0, %v4703
        %v4705 = vrot.slane %v4701, %v4704
        %v4706 = vmul.f32 %v4685, %v4705
        %v4707 = vmul.f32 %v4686, %v4705
        %v4708 = vmul.f32 %v4687, %v4705
        %v4709 = vmul.f32 %v4688, %v4705
        %v4710 = vmul.f32 %v4689, %v4705
        %v4711 = vmul.f32 %v4690, %v4705
        %v4712 = vmul.f32 %v4691, %v4705
        %v4713 = vmul.f32 %v4692, %v4705
        %v4714 = vmul.f32 %v4693, %v4705
        %v4715 = vmul.f32 %v4694, %v4705
        %v4716 = vmul.f32 %v4695, %v4705
        %v4717 = vmul.f32 %v4696, %v4705
        %v4718 = vmul.f32 %v4697, %v4705
        %v4719 = vmul.f32 %v4698, %v4705
        %v4720 = vmul.f32 %v4699, %v4705
        %v4721 = vmul.f32 %v4700, %v4705
        %v4722 = vadd.f32 %v4669, %v4706
        %v4723 = vadd.f32 %v4670, %v4707
        %v4724 = vadd.f32 %v4671, %v4708
        %v4725 = vadd.f32 %v4672, %v4709
        %v4726 = vadd.f32 %v4673, %v4710
        %v4727 = vadd.f32 %v4674, %v4711
        %v4728 = vadd.f32 %v4675, %v4712
        %v4729 = vadd.f32 %v4676, %v4713
        %v4730 = vadd.f32 %v4677, %v4714
        %v4731 = vadd.f32 %v4678, %v4715
        %v4732 = vadd.f32 %v4679, %v4716
        %v4733 = vadd.f32 %v4680, %v4717
        %v4734 = vadd.f32 %v4681, %v4718
        %v4735 = vadd.f32 %v4682, %v4719
        %v4736 = vadd.f32 %v4683, %v4720
        %v4737 = vadd.f32 %v4684, %v4721
        %v4738 = vld [vmem:[%s8] sm:$0x1]
        %v4740 = vlaneseq
        %v4741 = vshrl.u32 %v4740, 7
        %v4742 = vsub.s32 0, %v4741
        %v4743 = vrot.slane %v4738, %v4742
        %v4745 = vadd.f32 %v4722, %v4743
        %v4746 = vadd.f32 %v4723, %v4743
        %v4747 = vadd.f32 %v4724, %v4743
        %v4748 = vadd.f32 %v4725, %v4743
        %v4749 = vadd.f32 %v4726, %v4743
        %v4750 = vadd.f32 %v4727, %v4743
        %v4751 = vadd.f32 %v4728, %v4743
        %v4752 = vadd.f32 %v4729, %v4743
        %v4753 = vadd.f32 %v4730, %v4743
        %v4754 = vadd.f32 %v4731, %v4743
        %v4755 = vadd.f32 %v4732, %v4743
        %v4756 = vadd.f32 %v4733, %v4743
        %v4757 = vadd.f32 %v4734, %v4743
        %v4758 = vadd.f32 %v4735, %v4743
        %v4759 = vadd.f32 %v4736, %v4743
        %v4760 = vadd.f32 %v4737, %v4743
        %v4761 = vmax.f32 %v4745, 0.0
        %v4762 = vmax.f32 %v4746, 0.0
        %v4763 = vmax.f32 %v4747, 0.0
        %v4764 = vmax.f32 %v4748, 0.0
        %v4765 = vmax.f32 %v4749, 0.0
        %v4766 = vmax.f32 %v4750, 0.0
        %v4767 = vmax.f32 %v4751, 0.0
        %v4768 = vmax.f32 %v4752, 0.0
        %v4769 = vmax.f32 %v4753, 0.0
        %v4770 = vmax.f32 %v4754, 0.0
        %v4771 = vmax.f32 %v4755, 0.0
        %v4772 = vmax.f32 %v4756, 0.0
        %v4773 = vmax.f32 %v4757, 0.0
        %v4774 = vmax.f32 %v4758, 0.0
        %v4775 = vmax.f32 %v4759, 0.0
        %v4776 = vmax.f32 %v4760, 0.0
        %v4777 = vpack.c.bf16 %v4762, %v4761
        %v4778 = vpack.c.bf16 %v4764, %v4763
        %v4779 = vpack.c.bf16 %v4766, %v4765
        %v4780 = vpack.c.bf16 %v4768, %v4767
        %v4781 = vpack.c.bf16 %v4770, %v4769
        %v4782 = vpack.c.bf16 %v4772, %v4771
        %v4783 = vpack.c.bf16 %v4774, %v4773
        %v4784 = vpack.c.bf16 %v4776, %v4775
        %v4785 = vld [vmem:[%s9] sm:$0xf]
        %v4786 = vld [vmem:[%s9 + $0x4] sm:$0xf]
        %v4787 = vld [vmem:[%s9 + $0x8] sm:$0xf]
        %v4788 = vld [vmem:[%s9 + $0xc] sm:$0xf]
        %v4789 = vld [vmem:[%s9 + $0x10] sm:$0xf]
        %v4790 = vld [vmem:[%s9 + $0x14] sm:$0xf]
        %v4791 = vld [vmem:[%s9 + $0x18] sm:$0xf]
        %v4792 = vld [vmem:[%s9 + $0x1c] sm:$0xf]
        %v4793 = vld [vmem:[%s10] sm:$0x1]
        %v4795 = vlaneseq
        %v4796 = vshrl.u32 %v4795, 7
        %v4797 = vsub.s32 0, %v4796
        %v4798 = vrot.slane %v4793, %v4797
        %v4808 = vunpack.c.l.b16 %v4785
        %v4809 = vunpack.c.l.b16 %v4786
        %v4810 = vunpack.c.l.b16 %v4787
        %v4811 = vunpack.c.l.b16 %v4788
        %v4812 = vunpack.c.l.b16 %v4789
        %v4813 = vunpack.c.l.b16 %v4790
        %v4814 = vunpack.c.l.b16 %v4791
        %v4815 = vunpack.c.l.b16 %v4792
        %v4816 = vpack.c.b16 %v4809, %v4808
        %v4817 = vpack.c.b16 %v4811, %v4810
        %v4818 = vpack.c.b16 %v4813, %v4812
        %v4819 = vpack.c.b16 %v4815, %v4814
        %v4825 = vsel %vm746, %v4777, 0
        %v4828 = vsel %vm746, %v4778, 0
        %v4831 = vsel %vm746, %v4779, 0
        %v4834 = vsel %vm746, %v4780, 0
        %v4837 = vsel %vm746, %v4781, 0
        %v4840 = vsel %vm746, %v4782, 0
        %v4843 = vsel %vm746, %v4783, 0
        %v4846 = vsel %vm746, %v4784, 0
        %4848 = vmatprep.subr.bf16.mxu0 0
        %4849 = vmatpush1.bf16.msra.mxu0 0
        %4850 = vmatprep.subr.bf16.mxu0 0
        %4851 = vmatpush1.bf16.msra.mxu0 0
        %4852 = vmatprep.subr.bf16.mxu0 0
        %4853 = vmatpush1.bf16.msra.mxu0 0
        %4854 = vmatprep.subr.bf16.mxu0 0
        %4855 = vmatpush1.bf16.msra.mxu0 0
        %4856 = vmatprep.subr.bf16.mxu0 0
        %4857 = vmatpush1.bf16.msra.mxu0 %v4819
        %4858 = vmatprep.subr.bf16.mxu0 0
        %4859 = vmatpush1.bf16.msra.mxu0 %v4818
        %4860 = vmatprep.subr.bf16.mxu0 0
        %4861 = vmatpush1.bf16.msra.mxu0 %v4817
        %4862 = vmatprep.subr.bf16.mxu0 0
        %4863 = vmatpush1.bf16.msra.mxu0 %v4816
        %4864 = vmatprep.subr.bf16.mxu0 0
        %4865 = vmatpush2.bf16.msra.mxu0 0
        %4866 = vmatprep.subr.bf16.mxu0 0
        %4867 = vmatpush2.bf16.msra.mxu0 0
        %4868 = vmatprep.subr.bf16.mxu0 0
        %4869 = vmatpush2.bf16.msra.mxu0 0
        %4870 = vmatprep.subr.bf16.mxu0 0
        %4871 = vmatpush2.bf16.msra.mxu0 0
        %4872 = vmatprep.subr.bf16.mxu0 0
        %4873 = vmatpush2.bf16.msra.mxu0 0
        %4874 = vmatprep.subr.bf16.mxu0 0
        %4875 = vmatpush2.bf16.msra.mxu0 0
        %4876 = vmatprep.subr.bf16.mxu0 0
        %4877 = vmatpush2.bf16.msra.mxu0 0
        %4878 = vmatprep.subr.bf16.mxu0 0
        %4879 = vmatpush2.bf16.msra.mxu0 0
        %4880 = vmatprep.mubr.bf16.mxu0 0
        %4881 = vmatmul.mubr.bf16.gmra.mxu0 %v4825
        %v4882 = vpop.f32.mrf.mxu0
        %v4883 = vadd.f32 %v4798, %v4882
        %v4884 = vpop.f32.mrf.mxu0
        %v4885 = vpop.f32.mrf.mxu0
        %v4886 = vadd.f32 %v4798, %v4885
        %v4887 = vpop.f32.mrf.mxu0
        %4888 = vmatprep.mubr.bf16.mxu0 0
        %4889 = vmatmul.mubr.bf16.gmra.mxu0 %v4828
        %v4890 = vpop.f32.mrf.mxu0
        %v4891 = vadd.f32 %v4798, %v4890
        %v4892 = vpop.f32.mrf.mxu0
        %v4893 = vpop.f32.mrf.mxu0
        %v4894 = vadd.f32 %v4798, %v4893
        %v4895 = vpop.f32.mrf.mxu0
        %4896 = vmatprep.mubr.bf16.mxu0 0
        %4897 = vmatmul.mubr.bf16.gmra.mxu0 %v4831
        %v4898 = vpop.f32.mrf.mxu0
        %v4899 = vadd.f32 %v4798, %v4898
        %v4900 = vpop.f32.mrf.mxu0
        %v4901 = vpop.f32.mrf.mxu0
        %v4902 = vadd.f32 %v4798, %v4901
        %v4903 = vpop.f32.mrf.mxu0
        %4904 = vmatprep.mubr.bf16.mxu0 0
        %4905 = vmatmul.mubr.bf16.gmra.mxu0 %v4834
        %v4906 = vpop.f32.mrf.mxu0
        %v4907 = vadd.f32 %v4798, %v4906
        %v4908 = vpop.f32.mrf.mxu0
        %v4909 = vpop.f32.mrf.mxu0
        %v4910 = vadd.f32 %v4798, %v4909
        %v4911 = vpop.f32.mrf.mxu0
        %4912 = vmatprep.mubr.bf16.mxu0 0
        %4913 = vmatmul.mubr.bf16.gmra.mxu0 %v4837
        %v4914 = vpop.f32.mrf.mxu0
        %v4915 = vadd.f32 %v4798, %v4914
        %v4916 = vpop.f32.mrf.mxu0
        %v4917 = vpop.f32.mrf.mxu0
        %v4918 = vadd.f32 %v4798, %v4917
        %v4919 = vpop.f32.mrf.mxu0
        %4920 = vmatprep.mubr.bf16.mxu0 0
        %4921 = vmatmul.mubr.bf16.gmra.mxu0 %v4840
        %v4922 = vpop.f32.mrf.mxu0
        %v4923 = vadd.f32 %v4798, %v4922
        %v4924 = vpop.f32.mrf.mxu0
        %v4925 = vpop.f32.mrf.mxu0
        %v4926 = vadd.f32 %v4798, %v4925
        %v4927 = vpop.f32.mrf.mxu0
        %4928 = vmatprep.mubr.bf16.mxu0 0
        %4929 = vmatmul.mubr.bf16.gmra.mxu0 %v4843
        %v4930 = vpop.f32.mrf.mxu0
        %v4931 = vadd.f32 %v4798, %v4930
        %v4932 = vpop.f32.mrf.mxu0
        %v4933 = vpop.f32.mrf.mxu0
        %v4934 = vadd.f32 %v4798, %v4933
        %v4935 = vpop.f32.mrf.mxu0
        %4936 = vmatprep.mubr.bf16.mxu0 0
        %4937 = vmatmul.mubr.bf16.gmra.mxu0 %v4846
        %v4938 = vpop.f32.mrf.mxu0
        %v4939 = vadd.f32 %v4798, %v4938
        %v4940 = vpop.f32.mrf.mxu0
        %v4941 = vpop.f32.mrf.mxu0
        %v4942 = vadd.f32 %v4798, %v4941
        %v4943 = vpop.f32.mrf.mxu0
        %4944 = vdwg.mxu0
        %v4945 = vmax.f32 %v4883, 0.0
        %v4946 = vmax.f32 %v4886, 0.0
        %v4947 = vmax.f32 %v4891, 0.0
        %v4948 = vmax.f32 %v4894, 0.0
        %v4949 = vmax.f32 %v4899, 0.0
        %v4950 = vmax.f32 %v4902, 0.0
        %v4951 = vmax.f32 %v4907, 0.0
        %v4952 = vmax.f32 %v4910, 0.0
        %v4953 = vmax.f32 %v4915, 0.0
        %v4954 = vmax.f32 %v4918, 0.0
        %v4955 = vmax.f32 %v4923, 0.0
        %v4956 = vmax.f32 %v4926, 0.0
        %v4957 = vmax.f32 %v4931, 0.0
        %v4958 = vmax.f32 %v4934, 0.0
        %v4959 = vmax.f32 %v4939, 0.0
        %v4960 = vmax.f32 %v4942, 0.0
        %v4961 = vmax.f32 %v4945, %v4946
        %v4962 = vmax.f32 %v4947, %v4948
        %v4963 = vmax.f32 %v4949, %v4950
        %v4964 = vmax.f32 %v4951, %v4952
        %v4965 = vmax.f32 %v4953, %v4954
        %v4966 = vmax.f32 %v4955, %v4956
        %v4967 = vmax.f32 %v4957, %v4958
        %v4968 = vmax.f32 %v4959, %v4960
        %v4977 = vrot.slane %v4961, 1
        %v4978 = vrot.slane %v4962, 1
        %v4979 = vrot.slane %v4963, 1
        %v4980 = vrot.slane %v4964, 1
        %v4981 = vrot.slane %v4965, 1
        %v4982 = vrot.slane %v4966, 1
        %v4983 = vrot.slane %v4967, 1
        %v4984 = vrot.slane %v4968, 1
        %v4993 = vmax.f32 %v4961, %v4977
        %v4994 = vmax.f32 %v4962, %v4978
        %v4995 = vmax.f32 %v4963, %v4979
        %v4996 = vmax.f32 %v4964, %v4980
        %v4997 = vmax.f32 %v4965, %v4981
        %v4998 = vmax.f32 %v4966, %v4982
        %v4999 = vmax.f32 %v4967, %v4983
        %v5000 = vmax.f32 %v4968, %v4984
        %s5001 = scalar_lea.vmem [#allocation4], 8
        %5002 = vst [vmem:[%s5001 + $0x1] sm:$0x1] %v4993
        %5003 = vst [vmem:[%s5001 + $0x9] sm:$0x1] %v4994
        %5004 = vst [vmem:[%s5001 + $0x11] sm:$0x1] %v4995
        %5005 = vst [vmem:[%s5001 + $0x19] sm:$0x1] %v4996
        %5006 = vst [vmem:[%s5001 + $0x31] sm:$0x1] %v4997
        %5007 = vst [vmem:[%s5001 + $0x39] sm:$0x1] %v4998
        %5008 = vst [vmem:[%s5001 + $0x41] sm:$0x1] %v4999
        %5009 = vst [vmem:[%s5001 + $0x49] sm:$0x1] %v5000
        %5010 = vst [vmem:[%s5001] sm:$0x4] %v4993
        %5011 = vst [vmem:[%s5001 + $0x8] sm:$0x4] %v4994
        %5012 = vst [vmem:[%s5001 + $0x10] sm:$0x4] %v4995
        %5013 = vst [vmem:[%s5001 + $0x18] sm:$0x4] %v4996
        %5014 = vst [vmem:[%s5001 + $0x30] sm:$0x4] %v4997
        %5015 = vst [vmem:[%s5001 + $0x38] sm:$0x4] %v4998
        %5016 = vst [vmem:[%s5001 + $0x40] sm:$0x4] %v4999
        %5017 = vst [vmem:[%s5001 + $0x48] sm:$0x4] %v5000
        %5018 = vst [vmem:[%s5001 - $0x1] sm:$0x10] %v4993
        %5019 = vst [vmem:[%s5001 + $0x7] sm:$0x10] %v4994
        %5020 = vst [vmem:[%s5001 + $0xf] sm:$0x10] %v4995
        %5021 = vst [vmem:[%s5001 + $0x17] sm:$0x10] %v4996
        %5022 = vst [vmem:[%s5001 + $0x2f] sm:$0x10] %v4997
        %5023 = vst [vmem:[%s5001 + $0x37] sm:$0x10] %v4998
        %5024 = vst [vmem:[%s5001 + $0x3f] sm:$0x10] %v4999
        %5025 = vst [vmem:[%s5001 + $0x47] sm:$0x10] %v5000
        %5026 = vst [vmem:[%s5001 - $0x2] sm:$0x40] %v4993
        %5027 = vst [vmem:[%s5001 + $0x6] sm:$0x40] %v4994
        %5028 = vst [vmem:[%s5001 + $0xe] sm:$0x40] %v4995
        %5029 = vst [vmem:[%s5001 + $0x16] sm:$0x40] %v4996
        %5030 = vst [vmem:[%s5001 + $0x2e] sm:$0x40] %v4997
        %5031 = vst [vmem:[%s5001 + $0x36] sm:$0x40] %v4998
        %5032 = vst [vmem:[%s5001 + $0x3e] sm:$0x40] %v4999
        %5033 = vst [vmem:[%s5001 + $0x46] sm:$0x40] %v5000
        %v5034 = vld [vmem:[#allocation4] sm:$0xf]
        %v5035 = vld [vmem:[#allocation4 + $0x8] sm:$0xf]
        %v5036 = vld [vmem:[#allocation4 + $0x10] sm:$0xf]
        %v5037 = vld [vmem:[#allocation4 + $0x18] sm:$0xf]
        %v5038 = vld [vmem:[#allocation4 + $0x30] sm:$0xf]
        %v5039 = vld [vmem:[#allocation4 + $0x38] sm:$0xf]
        %v5040 = vld [vmem:[#allocation4 + $0x40] sm:$0xf]
        %v5041 = vld [vmem:[#allocation4 + $0x48] sm:$0xf]
        %v5042 = vld [vmem:[%s11] sm:$0x1]
        %v5043 = vlaneseq
        %v5044 = vshrl.u32 %v5043, 7
        %v5045 = vsub.s32 0, %v5044
        %v5046 = vrot.slane %v5042, %v5045
        %v5047 = vmul.f32 %v5034, %v5046
        %v5048 = vmul.f32 %v5035, %v5046
        %v5049 = vmul.f32 %v5036, %v5046
        %v5050 = vmul.f32 %v5037, %v5046
        %v5051 = vmul.f32 %v5038, %v5046
        %v5052 = vmul.f32 %v5039, %v5046
        %v5053 = vmul.f32 %v5040, %v5046
        %v5054 = vmul.f32 %v5041, %v5046
        %v5055 = vld [vmem:[#allocation4 + $0x1] sm:$0xf]
        %v5056 = vld [vmem:[#allocation4 + $0x9] sm:$0xf]
        %v5057 = vld [vmem:[#allocation4 + $0x11] sm:$0xf]
        %v5058 = vld [vmem:[#allocation4 + $0x19] sm:$0xf]
        %v5059 = vld [vmem:[#allocation4 + $0x31] sm:$0xf]
        %v5060 = vld [vmem:[#allocation4 + $0x39] sm:$0xf]
        %v5061 = vld [vmem:[#allocation4 + $0x41] sm:$0xf]
        %v5062 = vld [vmem:[#allocation4 + $0x49] sm:$0xf]
        %v5063 = vld [vmem:[%s11 + $0x1] sm:$0x1]
        %v5064 = vlaneseq
        %v5065 = vshrl.u32 %v5064, 7
        %v5066 = vsub.s32 0, %v5065
        %v5067 = vrot.slane %v5063, %v5066
        %v5068 = vmul.f32 %v5055, %v5067
        %v5069 = vmul.f32 %v5056, %v5067
        %v5070 = vmul.f32 %v5057, %v5067
        %v5071 = vmul.f32 %v5058, %v5067
        %v5072 = vmul.f32 %v5059, %v5067
        %v5073 = vmul.f32 %v5060, %v5067
        %v5074 = vmul.f32 %v5061, %v5067
        %v5075 = vmul.f32 %v5062, %v5067
        %v5076 = vadd.f32 %v5047, %v5068
        %v5077 = vadd.f32 %v5048, %v5069
        %v5078 = vadd.f32 %v5049, %v5070
        %v5079 = vadd.f32 %v5050, %v5071
        %v5080 = vadd.f32 %v5051, %v5072
        %v5081 = vadd.f32 %v5052, %v5073
        %v5082 = vadd.f32 %v5053, %v5074
        %v5083 = vadd.f32 %v5054, %v5075
        %v5084 = vld [vmem:[#allocation4 + $0x2] sm:$0xf]
        %v5085 = vld [vmem:[#allocation4 + $0xa] sm:$0xf]
        %v5086 = vld [vmem:[#allocation4 + $0x12] sm:$0xf]
        %v5087 = vld [vmem:[#allocation4 + $0x1a] sm:$0xf]
        %v5088 = vld [vmem:[#allocation4 + $0x32] sm:$0xf]
        %v5089 = vld [vmem:[#allocation4 + $0x3a] sm:$0xf]
        %v5090 = vld [vmem:[#allocation4 + $0x42] sm:$0xf]
        %v5091 = vld [vmem:[#allocation4 + $0x4a] sm:$0xf]
        %v5092 = vld [vmem:[%s11 + $0x2] sm:$0x1]
        %v5093 = vlaneseq
        %v5094 = vshrl.u32 %v5093, 7
        %v5095 = vsub.s32 0, %v5094
        %v5096 = vrot.slane %v5092, %v5095
        %v5097 = vmul.f32 %v5084, %v5096
        %v5098 = vmul.f32 %v5085, %v5096
        %v5099 = vmul.f32 %v5086, %v5096
        %v5100 = vmul.f32 %v5087, %v5096
        %v5101 = vmul.f32 %v5088, %v5096
        %v5102 = vmul.f32 %v5089, %v5096
        %v5103 = vmul.f32 %v5090, %v5096
        %v5104 = vmul.f32 %v5091, %v5096
        %v5105 = vadd.f32 %v5076, %v5097
        %v5106 = vadd.f32 %v5077, %v5098
        %v5107 = vadd.f32 %v5078, %v5099
        %v5108 = vadd.f32 %v5079, %v5100
        %v5109 = vadd.f32 %v5080, %v5101
        %v5110 = vadd.f32 %v5081, %v5102
        %v5111 = vadd.f32 %v5082, %v5103
        %v5112 = vadd.f32 %v5083, %v5104
        %v5113 = vld [vmem:[%s5001] sm:$0xf]
        %v5114 = vld [vmem:[%s5001 + $0x8] sm:$0xf]
        %v5115 = vld [vmem:[%s5001 + $0x10] sm:$0xf]
        %v5116 = vld [vmem:[%s5001 + $0x18] sm:$0xf]
        %v5117 = vld [vmem:[%s5001 + $0x30] sm:$0xf]
        %v5118 = vld [vmem:[%s5001 + $0x38] sm:$0xf]
        %v5119 = vld [vmem:[%s5001 + $0x40] sm:$0xf]
        %v5120 = vld [vmem:[%s5001 + $0x48] sm:$0xf]
        %v5121 = vld [vmem:[%s11 + $0x3] sm:$0x1]
        %v5122 = vlaneseq
        %v5123 = vshrl.u32 %v5122, 7
        %v5124 = vsub.s32 0, %v5123
        %v5125 = vrot.slane %v5121, %v5124
        %v5126 = vmul.f32 %v5113, %v5125
        %v5127 = vmul.f32 %v5114, %v5125
        %v5128 = vmul.f32 %v5115, %v5125
        %v5129 = vmul.f32 %v5116, %v5125
        %v5130 = vmul.f32 %v5117, %v5125
        %v5131 = vmul.f32 %v5118, %v5125
        %v5132 = vmul.f32 %v5119, %v5125
        %v5133 = vmul.f32 %v5120, %v5125
        %v5134 = vadd.f32 %v5105, %v5126
        %v5135 = vadd.f32 %v5106, %v5127
        %v5136 = vadd.f32 %v5107, %v5128
        %v5137 = vadd.f32 %v5108, %v5129
        %v5138 = vadd.f32 %v5109, %v5130
        %v5139 = vadd.f32 %v5110, %v5131
        %v5140 = vadd.f32 %v5111, %v5132
        %v5141 = vadd.f32 %v5112, %v5133
        %v5142 = vld [vmem:[%s5001 + $0x1] sm:$0xf]
        %v5143 = vld [vmem:[%s5001 + $0x9] sm:$0xf]
        %v5144 = vld [vmem:[%s5001 + $0x11] sm:$0xf]
        %v5145 = vld [vmem:[%s5001 + $0x19] sm:$0xf]
        %v5146 = vld [vmem:[%s5001 + $0x31] sm:$0xf]
        %v5147 = vld [vmem:[%s5001 + $0x39] sm:$0xf]
        %v5148 = vld [vmem:[%s5001 + $0x41] sm:$0xf]
        %v5149 = vld [vmem:[%s5001 + $0x49] sm:$0xf]
        %v5150 = vld [vmem:[%s11 + $0x4] sm:$0x1]
        %v5151 = vlaneseq
        %v5152 = vshrl.u32 %v5151, 7
        %v5153 = vsub.s32 0, %v5152
        %v5154 = vrot.slane %v5150, %v5153
        %v5155 = vmul.f32 %v5142, %v5154
        %v5156 = vmul.f32 %v5143, %v5154
        %v5157 = vmul.f32 %v5144, %v5154
        %v5158 = vmul.f32 %v5145, %v5154
        %v5159 = vmul.f32 %v5146, %v5154
        %v5160 = vmul.f32 %v5147, %v5154
        %v5161 = vmul.f32 %v5148, %v5154
        %v5162 = vmul.f32 %v5149, %v5154
        %v5163 = vadd.f32 %v5134, %v5155
        %v5164 = vadd.f32 %v5135, %v5156
        %v5165 = vadd.f32 %v5136, %v5157
        %v5166 = vadd.f32 %v5137, %v5158
        %v5167 = vadd.f32 %v5138, %v5159
        %v5168 = vadd.f32 %v5139, %v5160
        %v5169 = vadd.f32 %v5140, %v5161
        %v5170 = vadd.f32 %v5141, %v5162
        %v5171 = vld [vmem:[%s5001 + $0x2] sm:$0xf]
        %v5172 = vld [vmem:[%s5001 + $0xa] sm:$0xf]
        %v5173 = vld [vmem:[%s5001 + $0x12] sm:$0xf]
        %v5174 = vld [vmem:[%s5001 + $0x1a] sm:$0xf]
        %v5175 = vld [vmem:[%s5001 + $0x32] sm:$0xf]
        %v5176 = vld [vmem:[%s5001 + $0x3a] sm:$0xf]
        %v5177 = vld [vmem:[%s5001 + $0x42] sm:$0xf]
        %v5178 = vld [vmem:[%s5001 + $0x4a] sm:$0xf]
        %v5179 = vld [vmem:[%s11 + $0x5] sm:$0x1]
        %v5180 = vlaneseq
        %v5181 = vshrl.u32 %v5180, 7
        %v5182 = vsub.s32 0, %v5181
        %v5183 = vrot.slane %v5179, %v5182
        %v5184 = vmul.f32 %v5171, %v5183
        %v5185 = vmul.f32 %v5172, %v5183
        %v5186 = vmul.f32 %v5173, %v5183
        %v5187 = vmul.f32 %v5174, %v5183
        %v5188 = vmul.f32 %v5175, %v5183
        %v5189 = vmul.f32 %v5176, %v5183
        %v5190 = vmul.f32 %v5177, %v5183
        %v5191 = vmul.f32 %v5178, %v5183
        %v5192 = vadd.f32 %v5163, %v5184
        %v5193 = vadd.f32 %v5164, %v5185
        %v5194 = vadd.f32 %v5165, %v5186
        %v5195 = vadd.f32 %v5166, %v5187
        %v5196 = vadd.f32 %v5167, %v5188
        %v5197 = vadd.f32 %v5168, %v5189
        %v5198 = vadd.f32 %v5169, %v5190
        %v5199 = vadd.f32 %v5170, %v5191
        %s5200 = scalar_lea.vmem [#allocation4], 16
        %v5201 = vld [vmem:[%s5200] sm:$0xf]
        %v5202 = vld [vmem:[%s5200 + $0x8] sm:$0xf]
        %v5203 = vld [vmem:[%s5200 + $0x10] sm:$0xf]
        %v5204 = vld [vmem:[%s5200 + $0x18] sm:$0xf]
        %v5205 = vld [vmem:[%s5200 + $0x30] sm:$0xf]
        %v5206 = vld [vmem:[%s5200 + $0x38] sm:$0xf]
        %v5207 = vld [vmem:[%s5200 + $0x40] sm:$0xf]
        %v5208 = vld [vmem:[%s5200 + $0x48] sm:$0xf]
        %v5209 = vld [vmem:[%s11 + $0x6] sm:$0x1]
        %v5210 = vlaneseq
        %v5211 = vshrl.u32 %v5210, 7
        %v5212 = vsub.s32 0, %v5211
        %v5213 = vrot.slane %v5209, %v5212
        %v5214 = vmul.f32 %v5201, %v5213
        %v5215 = vmul.f32 %v5202, %v5213
        %v5216 = vmul.f32 %v5203, %v5213
        %v5217 = vmul.f32 %v5204, %v5213
        %v5218 = vmul.f32 %v5205, %v5213
        %v5219 = vmul.f32 %v5206, %v5213
        %v5220 = vmul.f32 %v5207, %v5213
        %v5221 = vmul.f32 %v5208, %v5213
        %v5222 = vadd.f32 %v5192, %v5214
        %v5223 = vadd.f32 %v5193, %v5215
        %v5224 = vadd.f32 %v5194, %v5216
        %v5225 = vadd.f32 %v5195, %v5217
        %v5226 = vadd.f32 %v5196, %v5218
        %v5227 = vadd.f32 %v5197, %v5219
        %v5228 = vadd.f32 %v5198, %v5220
        %v5229 = vadd.f32 %v5199, %v5221
        %v5230 = vld [vmem:[%s5200 + $0x1] sm:$0xf]
        %v5231 = vld [vmem:[%s5200 + $0x9] sm:$0xf]
        %v5232 = vld [vmem:[%s5200 + $0x11] sm:$0xf]
        %v5233 = vld [vmem:[%s5200 + $0x19] sm:$0xf]
        %v5234 = vld [vmem:[%s5200 + $0x31] sm:$0xf]
        %v5235 = vld [vmem:[%s5200 + $0x39] sm:$0xf]
        %v5236 = vld [vmem:[%s5200 + $0x41] sm:$0xf]
        %v5237 = vld [vmem:[%s5200 + $0x49] sm:$0xf]
        %v5238 = vld [vmem:[%s11 + $0x7] sm:$0x1]
        %v5239 = vlaneseq
        %v5240 = vshrl.u32 %v5239, 7
        %v5241 = vsub.s32 0, %v5240
        %v5242 = vrot.slane %v5238, %v5241
        %v5243 = vmul.f32 %v5230, %v5242
        %v5244 = vmul.f32 %v5231, %v5242
        %v5245 = vmul.f32 %v5232, %v5242
        %v5246 = vmul.f32 %v5233, %v5242
        %v5247 = vmul.f32 %v5234, %v5242
        %v5248 = vmul.f32 %v5235, %v5242
        %v5249 = vmul.f32 %v5236, %v5242
        %v5250 = vmul.f32 %v5237, %v5242
        %v5251 = vadd.f32 %v5222, %v5243
        %v5252 = vadd.f32 %v5223, %v5244
        %v5253 = vadd.f32 %v5224, %v5245
        %v5254 = vadd.f32 %v5225, %v5246
        %v5255 = vadd.f32 %v5226, %v5247
        %v5256 = vadd.f32 %v5227, %v5248
        %v5257 = vadd.f32 %v5228, %v5249
        %v5258 = vadd.f32 %v5229, %v5250
        %v5259 = vld [vmem:[%s5200 + $0x2] sm:$0xf]
        %v5260 = vld [vmem:[%s5200 + $0xa] sm:$0xf]
        %v5261 = vld [vmem:[%s5200 + $0x12] sm:$0xf]
        %v5262 = vld [vmem:[%s5200 + $0x1a] sm:$0xf]
        %v5263 = vld [vmem:[%s5200 + $0x32] sm:$0xf]
        %v5264 = vld [vmem:[%s5200 + $0x3a] sm:$0xf]
        %v5265 = vld [vmem:[%s5200 + $0x42] sm:$0xf]
        %v5266 = vld [vmem:[%s5200 + $0x4a] sm:$0xf]
        %v5267 = vld [vmem:[%s11 + $0x8] sm:$0x1]
        %v5268 = vlaneseq
        %v5269 = vshrl.u32 %v5268, 7
        %v5270 = vsub.s32 0, %v5269
        %v5271 = vrot.slane %v5267, %v5270
        %v5272 = vmul.f32 %v5259, %v5271
        %v5273 = vmul.f32 %v5260, %v5271
        %v5274 = vmul.f32 %v5261, %v5271
        %v5275 = vmul.f32 %v5262, %v5271
        %v5276 = vmul.f32 %v5263, %v5271
        %v5277 = vmul.f32 %v5264, %v5271
        %v5278 = vmul.f32 %v5265, %v5271
        %v5279 = vmul.f32 %v5266, %v5271
        %v5280 = vadd.f32 %v5251, %v5272
        %v5281 = vadd.f32 %v5252, %v5273
        %v5282 = vadd.f32 %v5253, %v5274
        %v5283 = vadd.f32 %v5254, %v5275
        %v5284 = vadd.f32 %v5255, %v5276
        %v5285 = vadd.f32 %v5256, %v5277
        %v5286 = vadd.f32 %v5257, %v5278
        %v5287 = vadd.f32 %v5258, %v5279
        %v5288 = vld [vmem:[%s12] sm:$0x1]
        %v5290 = vlaneseq
        %v5291 = vshrl.u32 %v5290, 7
        %v5292 = vsub.s32 0, %v5291
        %v5293 = vrot.slane %v5288, %v5292
        %v5295 = vadd.f32 %v5280, %v5293
        %v5296 = vadd.f32 %v5281, %v5293
        %v5297 = vadd.f32 %v5282, %v5293
        %v5298 = vadd.f32 %v5283, %v5293
        %v5299 = vadd.f32 %v5284, %v5293
        %v5300 = vadd.f32 %v5285, %v5293
        %v5301 = vadd.f32 %v5286, %v5293
        %v5302 = vadd.f32 %v5287, %v5293
        %v5303 = vmax.f32 %v5295, 0.0
        %v5304 = vmax.f32 %v5296, 0.0
        %v5305 = vmax.f32 %v5297, 0.0
        %v5306 = vmax.f32 %v5298, 0.0
        %v5307 = vmax.f32 %v5299, 0.0
        %v5308 = vmax.f32 %v5300, 0.0
        %v5309 = vmax.f32 %v5301, 0.0
        %v5310 = vmax.f32 %v5302, 0.0
        %v5319 = vcombine.low %v5303, %v5304
        %v5320 = vcombine.low %v5305, %v5306
        %v5321 = vcombine.low %v5307, %v5308
        %v5322 = vcombine.low %v5309, %v5310
        %v5327 = vpack.c.bf16 %v5320, %v5319
        %v5328 = vpack.c.bf16 %v5322, %v5321
        %v5329 = vld [vmem:[%s13] sm:$0xff]
        %v5330 = vld [vmem:[%s13 + $0x8] sm:$0xff]
        %v5331 = vld [vmem:[%s13 + $0x10] sm:$0xff]
        %v5332 = vld [vmem:[%s13 + $0x18] sm:$0xff]
        %v5333 = vld [vmem:[%s13 + $0x20] sm:$0xff]
        %v5334 = vld [vmem:[%s13 + $0x28] sm:$0xff]
        %v5335 = vld [vmem:[%s13 + $0x30] sm:$0xff]
        %v5336 = vld [vmem:[%s13 + $0x38] sm:$0xff]
        %v5337 = vld [vmem:[%s13 + $0x40] sm:$0xff]
        %v5338 = vld [vmem:[%s13 + $0x48] sm:$0xff]
        %v5339 = vld [vmem:[%s13 + $0x50] sm:$0xff]
        %v5340 = vld [vmem:[%s13 + $0x58] sm:$0xff]
        %v5341 = vld [vmem:[%s13 + $0x60] sm:$0xff]
        %v5342 = vld [vmem:[%s13 + $0x68] sm:$0xff]
        %v5343 = vld [vmem:[%s13 + $0x70] sm:$0xff]
        %v5344 = vld [vmem:[%s13 + $0x78] sm:$0xff]
        %v5345 = vld [vmem:[%s14] sm:$0x3]
        %v5347 = vlaneseq
        %v5348 = vshrl.u32 %v5347, 7
        %v5349 = vsub.s32 0, %v5348
        %v5350 = vrot.slane %v5345, %v5349
        %v5351 = vlaneseq
        %v5352 = vshrl.u32 %v5351, 7
        %v5353 = vsub.s32 1, %v5352
        %v5354 = vrot.slane %v5345, %v5353
        %v5373 = vunpack.c.l.b16 %v5329
        %v5374 = vunpack.c.h.b16 %v5329
        %v5375 = vunpack.c.l.b16 %v5330
        %v5376 = vunpack.c.h.b16 %v5330
        %v5377 = vunpack.c.l.b16 %v5331
        %v5378 = vunpack.c.h.b16 %v5331
        %v5379 = vunpack.c.l.b16 %v5332
        %v5380 = vunpack.c.h.b16 %v5332
        %v5381 = vunpack.c.l.b16 %v5333
        %v5382 = vunpack.c.h.b16 %v5333
        %v5383 = vunpack.c.l.b16 %v5334
        %v5384 = vunpack.c.h.b16 %v5334
        %v5385 = vunpack.c.l.b16 %v5335
        %v5386 = vunpack.c.h.b16 %v5335
        %v5387 = vunpack.c.l.b16 %v5336
        %v5388 = vunpack.c.h.b16 %v5336
        %v5389 = vunpack.c.l.b16 %v5337
        %v5390 = vunpack.c.h.b16 %v5337
        %v5391 = vunpack.c.l.b16 %v5338
        %v5392 = vunpack.c.h.b16 %v5338
        %v5393 = vunpack.c.l.b16 %v5339
        %v5394 = vunpack.c.h.b16 %v5339
        %v5395 = vunpack.c.l.b16 %v5340
        %v5396 = vunpack.c.h.b16 %v5340
        %v5397 = vunpack.c.l.b16 %v5341
        %v5398 = vunpack.c.h.b16 %v5341
        %v5399 = vunpack.c.l.b16 %v5342
        %v5400 = vunpack.c.h.b16 %v5342
        %v5401 = vunpack.c.l.b16 %v5343
        %v5402 = vunpack.c.h.b16 %v5343
        %v5403 = vunpack.c.l.b16 %v5344
        %v5404 = vunpack.c.h.b16 %v5344
        %v5405 = vpack.c.b16 %v5375, %v5373
        %v5406 = vpack.c.b16 %v5376, %v5374
        %v5407 = vpack.c.b16 %v5379, %v5377
        %v5408 = vpack.c.b16 %v5380, %v5378
        %v5409 = vpack.c.b16 %v5383, %v5381
        %v5410 = vpack.c.b16 %v5384, %v5382
        %v5411 = vpack.c.b16 %v5387, %v5385
        %v5412 = vpack.c.b16 %v5388, %v5386
        %v5413 = vpack.c.b16 %v5391, %v5389
        %v5414 = vpack.c.b16 %v5392, %v5390
        %v5415 = vpack.c.b16 %v5395, %v5393
        %v5416 = vpack.c.b16 %v5396, %v5394
        %v5417 = vpack.c.b16 %v5399, %v5397
        %v5418 = vpack.c.b16 %v5400, %v5398
        %v5419 = vpack.c.b16 %v5403, %v5401
        %v5420 = vpack.c.b16 %v5404, %v5402
        %5437 = vmatprep.subr.bf16.mxu0 %v5420
        %5438 = vmatpush1.bf16.msra.mxu0 %v5419
        %5439 = vmatprep.subr.bf16.mxu0 %v5418
        %5440 = vmatpush1.bf16.msra.mxu0 %v5417
        %5441 = vmatprep.subr.bf16.mxu0 %v5416
        %5442 = vmatpush1.bf16.msra.mxu0 %v5415
        %5443 = vmatprep.subr.bf16.mxu0 %v5414
        %5444 = vmatpush1.bf16.msra.mxu0 %v5413
        %5445 = vmatprep.subr.bf16.mxu0 %v5412
        %5446 = vmatpush1.bf16.msra.mxu0 %v5411
        %5447 = vmatprep.subr.bf16.mxu0 %v5410
        %5448 = vmatpush1.bf16.msra.mxu0 %v5409
        %5449 = vmatprep.subr.bf16.mxu0 %v5408
        %5450 = vmatpush1.bf16.msra.mxu0 %v5407
        %5451 = vmatprep.subr.bf16.mxu0 %v5406
        %5452 = vmatpush1.bf16.msra.mxu0 %v5405
        %5453 = vmatprep.subr.bf16.mxu0 0
        %5454 = vmatpush2.bf16.msra.mxu0 0
        %5455 = vmatprep.subr.bf16.mxu0 0
        %5456 = vmatpush2.bf16.msra.mxu0 0
        %5457 = vmatprep.subr.bf16.mxu0 0
        %5458 = vmatpush2.bf16.msra.mxu0 0
        %5459 = vmatprep.subr.bf16.mxu0 0
        %5460 = vmatpush2.bf16.msra.mxu0 0
        %5461 = vmatprep.subr.bf16.mxu0 0
        %5462 = vmatpush2.bf16.msra.mxu0 0
        %5463 = vmatprep.subr.bf16.mxu0 0
        %5464 = vmatpush2.bf16.msra.mxu0 0
        %5465 = vmatprep.subr.bf16.mxu0 0
        %5466 = vmatpush2.bf16.msra.mxu0 0
        %5467 = vmatprep.subr.bf16.mxu0 0
        %5468 = vmatpush2.bf16.msra.mxu0 0
        %5469 = vmatprep.mubr.bf16.mxu0 0
        %5470 = vmatmul.mubr.bf16.gmra.mxu0 %v5327
        %v5471 = vpop.f32.mrf.mxu0
        %v5472 = vadd.f32 %v5350, %v5471
        %v5473 = vpop.f32.mrf.mxu0
        %v5474 = vadd.f32 %v5354, %v5473
        %v5475 = vpop.f32.mrf.mxu0
        %v5476 = vadd.f32 %v5350, %v5475
        %v5477 = vpop.f32.mrf.mxu0
        %v5478 = vadd.f32 %v5354, %v5477
        %5479 = vmatprep.mubr.bf16.mxu0 0
        %5480 = vmatmul.mubr.bf16.gmra.mxu0 %v5328
        %v5481 = vpop.f32.mrf.mxu0
        %v5482 = vadd.f32 %v5350, %v5481
        %v5483 = vpop.f32.mrf.mxu0
        %v5484 = vadd.f32 %v5354, %v5483
        %v5485 = vpop.f32.mrf.mxu0
        %v5486 = vadd.f32 %v5350, %v5485
        %v5487 = vpop.f32.mrf.mxu0
        %v5488 = vadd.f32 %v5354, %v5487
        %5489 = vdwg.mxu0
        %v5490 = vmax.f32 %v5472, 0.0
        %v5491 = vmax.f32 %v5474, 0.0
        %v5492 = vmax.f32 %v5476, 0.0
        %v5493 = vmax.f32 %v5478, 0.0
        %v5494 = vmax.f32 %v5482, 0.0
        %v5495 = vmax.f32 %v5484, 0.0
        %v5496 = vmax.f32 %v5486, 0.0
        %v5497 = vmax.f32 %v5488, 0.0
        %v5506 = vrot.slane %v5490, 4
        %v5507 = vrot.slane %v5491, 4
        %v5508 = vrot.slane %v5492, 4
        %v5509 = vrot.slane %v5493, 4
        %v5510 = vrot.slane %v5494, 4
        %v5511 = vrot.slane %v5495, 4
        %v5512 = vrot.slane %v5496, 4
        %v5513 = vrot.slane %v5497, 4
        %v5522 = vmax.f32 %v5490, %v5506
        %v5523 = vmax.f32 %v5491, %v5507
        %v5524 = vmax.f32 %v5492, %v5508
        %v5525 = vmax.f32 %v5493, %v5509
        %v5526 = vmax.f32 %v5494, %v5510
        %v5527 = vmax.f32 %v5495, %v5511
        %v5528 = vmax.f32 %v5496, %v5512
        %v5529 = vmax.f32 %v5497, %v5513
        %v5538 = vrot.slane %v5522, 1
        %v5539 = vrot.slane %v5523, 1
        %v5540 = vrot.slane %v5524, 1
        %v5541 = vrot.slane %v5525, 1
        %v5542 = vrot.slane %v5526, 1
        %v5543 = vrot.slane %v5527, 1
        %v5544 = vrot.slane %v5528, 1
        %v5545 = vrot.slane %v5529, 1
        %v5554 = vmax.f32 %v5522, %v5538
        %v5555 = vmax.f32 %v5523, %v5539
        %v5556 = vmax.f32 %v5524, %v5540
        %v5557 = vmax.f32 %v5525, %v5541
        %v5558 = vmax.f32 %v5526, %v5542
        %v5559 = vmax.f32 %v5527, %v5543
        %v5560 = vmax.f32 %v5528, %v5544
        %v5561 = vmax.f32 %v5529, %v5545
        %v5570 = vcombine.low %v5554, %v5555
        %v5572 = vunpack.c.l.s4 1966171168
        %v5573 = vunpack.c.0.s8 %v5572
        %v5574 = vlaneseq
        %v5575 = vshrl.u32 %v5574, 7
        %v5576 = vsub.s32 %v5573, %v5575
        %v5577 = vrot.slane %v5570, %v5576
        %v5579 = vunpack.c.l.s4 1966171168
        %v5580 = vunpack.c.0.s8 %v5579
        %v5581 = vlaneseq
        %v5582 = vshrl.u32 %v5581, 7
        %v5583 = vsub.s32 %v5580, %v5582
        %v5584 = vrot.slane %v5577, %v5583
        %v5585 = vcombine.low %v5556, %v5557
        %v5587 = vunpack.c.l.s4 1966171168
        %v5588 = vunpack.c.0.s8 %v5587
        %v5589 = vlaneseq
        %v5590 = vshrl.u32 %v5589, 7
        %v5591 = vsub.s32 %v5588, %v5590
        %v5592 = vrot.slane %v5585, %v5591
        %v5594 = vunpack.c.l.s4 1966171168
        %v5595 = vunpack.c.0.s8 %v5594
        %v5596 = vlaneseq
        %v5597 = vshrl.u32 %v5596, 7
        %v5598 = vsub.s32 %v5595, %v5597
        %v5599 = vrot.slane %v5592, %v5598
        %v5600 = vcombine.low %v5558, %v5559
        %v5602 = vunpack.c.l.s4 1966171168
        %v5603 = vunpack.c.0.s8 %v5602
        %v5604 = vlaneseq
        %v5605 = vshrl.u32 %v5604, 7
        %v5606 = vsub.s32 %v5603, %v5605
        %v5607 = vrot.slane %v5600, %v5606
        %v5609 = vunpack.c.l.s4 1966171168
        %v5610 = vunpack.c.0.s8 %v5609
        %v5611 = vlaneseq
        %v5612 = vshrl.u32 %v5611, 7
        %v5613 = vsub.s32 %v5610, %v5612
        %v5614 = vrot.slane %v5607, %v5613
        %v5615 = vcombine.low %v5560, %v5561
        %v5617 = vunpack.c.l.s4 1966171168
        %v5618 = vunpack.c.0.s8 %v5617
        %v5619 = vlaneseq
        %v5620 = vshrl.u32 %v5619, 7
        %v5621 = vsub.s32 %v5618, %v5620
        %v5622 = vrot.slane %v5615, %v5621
        %v5624 = vunpack.c.l.s4 1966171168
        %v5625 = vunpack.c.0.s8 %v5624
        %v5626 = vlaneseq
        %v5627 = vshrl.u32 %v5626, 7
        %v5628 = vsub.s32 %v5625, %v5627
        %v5629 = vrot.slane %v5622, %v5628
        %s5634 = scalar_lea.vmem [#allocation5], 8
        %s5635 = scalar_lea.vmem %s5634, 1 [#allocation5]
        %5636 = vst.msk [vmem:[%s5635] ss:$4 sm:$0x3] %vm835, %v5584
        %s5637 = scalar_lea.vmem %s5634, 9 [#allocation5]
        %5638 = vst.msk [vmem:[%s5637] ss:$4 sm:$0x3] %vm835, %v5599
        %s5639 = scalar_lea.vmem %s5634, 33 [#allocation5]
        %5640 = vst.msk [vmem:[%s5639] ss:$4 sm:$0x3] %vm835, %v5614
        %s5641 = scalar_lea.vmem %s5634, 41 [#allocation5]
        %5642 = vst.msk [vmem:[%s5641] ss:$4 sm:$0x3] %vm835, %v5629
        %v5643 = vcombine.high %v5584, %v5584
        %v5644 = vcombine.high %v5599, %v5599
        %v5645 = vcombine.high %v5614, %v5614
        %v5646 = vcombine.high %v5629, %v5629
        %s5651 = scalar_lea.vmem %s5634, 2 [#allocation5]
        %5652 = vst.msk [vmem:[%s5651] ss:$4 sm:$0x3] %vm835, %v5643
        %s5653 = scalar_lea.vmem %s5634, 10 [#allocation5]
        %5654 = vst.msk [vmem:[%s5653] ss:$4 sm:$0x3] %vm835, %v5644
        %s5655 = scalar_lea.vmem %s5634, 34 [#allocation5]
        %5656 = vst.msk [vmem:[%s5655] ss:$4 sm:$0x3] %vm835, %v5645
        %s5657 = scalar_lea.vmem %s5634, 42 [#allocation5]
        %5658 = vst.msk [vmem:[%s5657] ss:$4 sm:$0x3] %vm835, %v5646
        %v5659 = vld [vmem:[#allocation5] sm:$0x33]
        %v5660 = vld [vmem:[#allocation5 + $0x8] sm:$0x33]
        %v5661 = vld [vmem:[#allocation5 + $0x20] sm:$0x33]
        %v5662 = vld [vmem:[#allocation5 + $0x28] sm:$0x33]
        %v5663 = vld [vmem:[%s15] ss:$8 sm:$0x3]
        %v5665 = vlaneseq
        %v5666 = vshrl.u32 %v5665, 7
        %v5667 = vsub.s32 0, %v5666
        %v5668 = vrot.slane %v5663, %v5667
        %v5669 = vlaneseq
        %v5670 = vshrl.u32 %v5669, 7
        %v5671 = vsub.s32 1, %v5670
        %v5672 = vrot.slane %v5663, %v5671
        %v5673 = vcombine.low %v5668, %v5672
        %v5675 = vmul.f32 %v5659, %v5673
        %v5676 = vmul.f32 %v5660, %v5673
        %v5677 = vmul.f32 %v5661, %v5673
        %v5678 = vmul.f32 %v5662, %v5673
        %v5679 = vld [vmem:[#allocation5] sm:$0x66]
        %v5680 = vld [vmem:[#allocation5 + $0x8] sm:$0x66]
        %v5681 = vld [vmem:[#allocation5 + $0x20] sm:$0x66]
        %v5682 = vld [vmem:[#allocation5 + $0x28] sm:$0x66]
        %s5683 = scalar_lea.vmem %s15, 1
        %v5684 = vld [vmem:[%s5683] ss:$8 sm:$0x3]
        %v5686 = vlaneseq
        %v5687 = vshrl.u32 %v5686, 7
        %v5688 = vsub.s32 0, %v5687
        %v5689 = vrot.slane %v5684, %v5688
        %v5690 = vlaneseq
        %v5691 = vshrl.u32 %v5690, 7
        %v5692 = vsub.s32 1, %v5691
        %v5693 = vrot.slane %v5684, %v5692
        %v5694 = vcombine.low %v5689, %v5693
        %v5695 = vrot.slane %v5694, 7
        %v5697 = vmul.f32 %v5679, %v5695
        %v5698 = vmul.f32 %v5680, %v5695
        %v5699 = vmul.f32 %v5681, %v5695
        %v5700 = vmul.f32 %v5682, %v5695
        %v5705 = vrot.slane %v5697, 5
        %v5706 = vrot.slane %v5705, 4
        %v5707 = vrot.slane %v5698, 5
        %v5708 = vrot.slane %v5707, 4
        %v5709 = vrot.slane %v5699, 5
        %v5710 = vrot.slane %v5709, 4
        %v5711 = vrot.slane %v5700, 5
        %v5712 = vrot.slane %v5711, 4
        %v5717 = vadd.f32 %v5675, %v5706
        %v5718 = vadd.f32 %v5676, %v5708
        %v5719 = vadd.f32 %v5677, %v5710
        %v5720 = vadd.f32 %v5678, %v5712
        %v5721 = vld [vmem:[#allocation5] sm:$0xcc]
        %v5722 = vld [vmem:[#allocation5 + $0x8] sm:$0xcc]
        %v5723 = vld [vmem:[#allocation5 + $0x20] sm:$0xcc]
        %v5724 = vld [vmem:[#allocation5 + $0x28] sm:$0xcc]
        %s5725 = scalar_lea.vmem %s15, 2
        %v5726 = vld [vmem:[%s5725] ss:$8 sm:$0x3]
        %v5728 = vlaneseq
        %v5729 = vshrl.u32 %v5728, 7
        %v5730 = vsub.s32 0, %v5729
        %v5731 = vrot.slane %v5726, %v5730
        %v5732 = vlaneseq
        %v5733 = vshrl.u32 %v5732, 7
        %v5734 = vsub.s32 1, %v5733
        %v5735 = vrot.slane %v5726, %v5734
        %v5736 = vcombine.low %v5731, %v5735
        %v5737 = vrot.slane %v5736, 6
        %v5739 = vmul.f32 %v5721, %v5737
        %v5740 = vmul.f32 %v5722, %v5737
        %v5741 = vmul.f32 %v5723, %v5737
        %v5742 = vmul.f32 %v5724, %v5737
        %v5747 = vrot.slane %v5739, 6
        %v5748 = vrot.slane %v5747, 4
        %v5749 = vrot.slane %v5740, 6
        %v5750 = vrot.slane %v5749, 4
        %v5751 = vrot.slane %v5741, 6
        %v5752 = vrot.slane %v5751, 4
        %v5753 = vrot.slane %v5742, 6
        %v5754 = vrot.slane %v5753, 4
        %v5759 = vadd.f32 %v5717, %v5748
        %v5760 = vadd.f32 %v5718, %v5750
        %v5761 = vadd.f32 %v5719, %v5752
        %v5762 = vadd.f32 %v5720, %v5754
        %v5763 = vld [vmem:[%s5634] sm:$0x33]
        %v5764 = vld [vmem:[%s5634 + $0x8] sm:$0x33]
        %v5765 = vld [vmem:[%s5634 + $0x20] sm:$0x33]
        %v5766 = vld [vmem:[%s5634 + $0x28] sm:$0x33]
        %s5767 = scalar_lea.vmem %s15, 3
        %v5768 = vld [vmem:[%s5767] ss:$8 sm:$0x3]
        %v5770 = vlaneseq
        %v5771 = vshrl.u32 %v5770, 7
        %v5772 = vsub.s32 0, %v5771
        %v5773 = vrot.slane %v5768, %v5772
        %v5774 = vlaneseq
        %v5775 = vshrl.u32 %v5774, 7
        %v5776 = vsub.s32 1, %v5775
        %v5777 = vrot.slane %v5768, %v5776
        %v5778 = vcombine.low %v5773, %v5777
        %v5780 = vmul.f32 %v5763, %v5778
        %v5781 = vmul.f32 %v5764, %v5778
        %v5782 = vmul.f32 %v5765, %v5778
        %v5783 = vmul.f32 %v5766, %v5778
        %v5784 = vadd.f32 %v5759, %v5780
        %v5785 = vadd.f32 %v5760, %v5781
        %v5786 = vadd.f32 %v5761, %v5782
        %v5787 = vadd.f32 %v5762, %v5783
        %v5788 = vld [vmem:[%s5634] sm:$0x66]
        %v5789 = vld [vmem:[%s5634 + $0x8] sm:$0x66]
        %v5790 = vld [vmem:[%s5634 + $0x20] sm:$0x66]
        %v5791 = vld [vmem:[%s5634 + $0x28] sm:$0x66]
        %s5792 = scalar_lea.vmem %s15, 4
        %v5793 = vld [vmem:[%s5792] ss:$8 sm:$0x3]
        %v5795 = vlaneseq
        %v5796 = vshrl.u32 %v5795, 7
        %v5797 = vsub.s32 0, %v5796
        %v5798 = vrot.slane %v5793, %v5797
        %v5799 = vlaneseq
        %v5800 = vshrl.u32 %v5799, 7
        %v5801 = vsub.s32 1, %v5800
        %v5802 = vrot.slane %v5793, %v5801
        %v5803 = vcombine.low %v5798, %v5802
        %v5804 = vrot.slane %v5803, 7
        %v5806 = vmul.f32 %v5788, %v5804
        %v5807 = vmul.f32 %v5789, %v5804
        %v5808 = vmul.f32 %v5790, %v5804
        %v5809 = vmul.f32 %v5791, %v5804
        %v5814 = vrot.slane %v5806, 5
        %v5815 = vrot.slane %v5814, 4
        %v5816 = vrot.slane %v5807, 5
        %v5817 = vrot.slane %v5816, 4
        %v5818 = vrot.slane %v5808, 5
        %v5819 = vrot.slane %v5818, 4
        %v5820 = vrot.slane %v5809, 5
        %v5821 = vrot.slane %v5820, 4
        %v5826 = vadd.f32 %v5784, %v5815
        %v5827 = vadd.f32 %v5785, %v5817
        %v5828 = vadd.f32 %v5786, %v5819
        %v5829 = vadd.f32 %v5787, %v5821
        %v5830 = vld [vmem:[%s5634] sm:$0xcc]
        %v5831 = vld [vmem:[%s5634 + $0x8] sm:$0xcc]
        %v5832 = vld [vmem:[%s5634 + $0x20] sm:$0xcc]
        %v5833 = vld [vmem:[%s5634 + $0x28] sm:$0xcc]
        %s5834 = scalar_lea.vmem %s15, 5
        %v5835 = vld [vmem:[%s5834] ss:$8 sm:$0x3]
        %v5837 = vlaneseq
        %v5838 = vshrl.u32 %v5837, 7
        %v5839 = vsub.s32 0, %v5838
        %v5840 = vrot.slane %v5835, %v5839
        %v5841 = vlaneseq
        %v5842 = vshrl.u32 %v5841, 7
        %v5843 = vsub.s32 1, %v5842
        %v5844 = vrot.slane %v5835, %v5843
        %v5845 = vcombine.low %v5840, %v5844
        %v5846 = vrot.slane %v5845, 6
        %v5848 = vmul.f32 %v5830, %v5846
        %v5849 = vmul.f32 %v5831, %v5846
        %v5850 = vmul.f32 %v5832, %v5846
        %v5851 = vmul.f32 %v5833, %v5846
        %v5856 = vrot.slane %v5848, 6
        %v5857 = vrot.slane %v5856, 4
        %v5858 = vrot.slane %v5849, 6
        %v5859 = vrot.slane %v5858, 4
        %v5860 = vrot.slane %v5850, 6
        %v5861 = vrot.slane %v5860, 4
        %v5862 = vrot.slane %v5851, 6
        %v5863 = vrot.slane %v5862, 4
        %v5868 = vadd.f32 %v5826, %v5857
        %v5869 = vadd.f32 %v5827, %v5859
        %v5870 = vadd.f32 %v5828, %v5861
        %v5871 = vadd.f32 %v5829, %v5863
        %s5872 = scalar_lea.vmem [#allocation5], 16
        %v5873 = vld [vmem:[%s5872] sm:$0x33]
        %v5874 = vld [vmem:[%s5872 + $0x8] sm:$0x33]
        %v5875 = vld [vmem:[%s5872 + $0x20] sm:$0x33]
        %v5876 = vld [vmem:[%s5872 + $0x28] sm:$0x33]
        %s5877 = scalar_lea.vmem %s15, 6
        %v5878 = vld [vmem:[%s5877] ss:$8 sm:$0x3]
        %v5880 = vlaneseq
        %v5881 = vshrl.u32 %v5880, 7
        %v5882 = vsub.s32 0, %v5881
        %v5883 = vrot.slane %v5878, %v5882
        %v5884 = vlaneseq
        %v5885 = vshrl.u32 %v5884, 7
        %v5886 = vsub.s32 1, %v5885
        %v5887 = vrot.slane %v5878, %v5886
        %v5888 = vcombine.low %v5883, %v5887
        %v5890 = vmul.f32 %v5873, %v5888
        %v5891 = vmul.f32 %v5874, %v5888
        %v5892 = vmul.f32 %v5875, %v5888
        %v5893 = vmul.f32 %v5876, %v5888
        %v5894 = vadd.f32 %v5868, %v5890
        %v5895 = vadd.f32 %v5869, %v5891
        %v5896 = vadd.f32 %v5870, %v5892
        %v5897 = vadd.f32 %v5871, %v5893
        %v5898 = vld [vmem:[%s5872] sm:$0x66]
        %v5899 = vld [vmem:[%s5872 + $0x8] sm:$0x66]
        %v5900 = vld [vmem:[%s5872 + $0x20] sm:$0x66]
        %v5901 = vld [vmem:[%s5872 + $0x28] sm:$0x66]
        %s5902 = scalar_lea.vmem %s15, 7
        %v5903 = vld [vmem:[%s5902] ss:$8 sm:$0x3]
        %v5905 = vlaneseq
        %v5906 = vshrl.u32 %v5905, 7
        %v5907 = vsub.s32 0, %v5906
        %v5908 = vrot.slane %v5903, %v5907
        %v5909 = vlaneseq
        %v5910 = vshrl.u32 %v5909, 7
        %v5911 = vsub.s32 1, %v5910
        %v5912 = vrot.slane %v5903, %v5911
        %v5913 = vcombine.low %v5908, %v5912
        %v5914 = vrot.slane %v5913, 7
        %v5916 = vmul.f32 %v5898, %v5914
        %v5917 = vmul.f32 %v5899, %v5914
        %v5918 = vmul.f32 %v5900, %v5914
        %v5919 = vmul.f32 %v5901, %v5914
        %v5924 = vrot.slane %v5916, 5
        %v5925 = vrot.slane %v5924, 4
        %v5926 = vrot.slane %v5917, 5
        %v5927 = vrot.slane %v5926, 4
        %v5928 = vrot.slane %v5918, 5
        %v5929 = vrot.slane %v5928, 4
        %v5930 = vrot.slane %v5919, 5
        %v5931 = vrot.slane %v5930, 4
        %v5936 = vadd.f32 %v5894, %v5925
        %v5937 = vadd.f32 %v5895, %v5927
        %v5938 = vadd.f32 %v5896, %v5929
        %v5939 = vadd.f32 %v5897, %v5931
        %v5940 = vld [vmem:[%s5872] sm:$0xcc]
        %v5941 = vld [vmem:[%s5872 + $0x8] sm:$0xcc]
        %v5942 = vld [vmem:[%s5872 + $0x20] sm:$0xcc]
        %v5943 = vld [vmem:[%s5872 + $0x28] sm:$0xcc]
        %s5944 = scalar_lea.vmem %s15, 16
        %v5945 = vld [vmem:[%s5944] ss:$8 sm:$0x3]
        %v5947 = vlaneseq
        %v5948 = vshrl.u32 %v5947, 7
        %v5949 = vsub.s32 0, %v5948
        %v5950 = vrot.slane %v5945, %v5949
        %v5951 = vlaneseq
        %v5952 = vshrl.u32 %v5951, 7
        %v5953 = vsub.s32 1, %v5952
        %v5954 = vrot.slane %v5945, %v5953
        %v5955 = vcombine.low %v5950, %v5954
        %v5956 = vrot.slane %v5955, 6
        %v5958 = vmul.f32 %v5940, %v5956
        %v5959 = vmul.f32 %v5941, %v5956
        %v5960 = vmul.f32 %v5942, %v5956
        %v5961 = vmul.f32 %v5943, %v5956
        %v5966 = vrot.slane %v5958, 6
        %v5967 = vrot.slane %v5966, 4
        %v5968 = vrot.slane %v5959, 6
        %v5969 = vrot.slane %v5968, 4
        %v5970 = vrot.slane %v5960, 6
        %v5971 = vrot.slane %v5970, 4
        %v5972 = vrot.slane %v5961, 6
        %v5973 = vrot.slane %v5972, 4
        %v5978 = vadd.f32 %v5936, %v5967
        %v5979 = vadd.f32 %v5937, %v5969
        %v5980 = vadd.f32 %v5938, %v5971
        %v5981 = vadd.f32 %v5939, %v5973
        %v5982 = vld [vmem:[%s16] sm:$0x3]
        %v5984 = vlaneseq
        %v5985 = vshrl.u32 %v5984, 7
        %v5986 = vsub.s32 0, %v5985
        %v5987 = vrot.slane %v5982, %v5986
        %v5988 = vlaneseq
        %v5989 = vshrl.u32 %v5988, 7
        %v5990 = vsub.s32 1, %v5989
        %v5991 = vrot.slane %v5982, %v5990
        %v5992 = vcombine.low %v5987, %v5991
        %v5994 = vadd.f32 %v5978, %v5992
        %v5995 = vadd.f32 %v5979, %v5992
        %v5996 = vadd.f32 %v5980, %v5992
        %v5997 = vadd.f32 %v5981, %v5992
        %v5998 = vmax.f32 %v5994, 0.0
        %v5999 = vmax.f32 %v5995, 0.0
        %v6000 = vmax.f32 %v5996, 0.0
        %v6001 = vmax.f32 %v5997, 0.0
        %v6007 = vunpack.c.l.s4 1983009808
        %v6008 = vunpack.c.0.s8 %v6007
        %v6009 = vlaneseq
        %v6010 = vshrl.u32 %v6009, 7
        %v6011 = vsub.s32 %v6008, %v6010
        %v6012 = vrot.slane %v5998, %v6011
        %v6014 = vunpack.c.l.s4 1983009808
        %v6015 = vunpack.c.0.s8 %v6014
        %v6016 = vlaneseq
        %v6017 = vshrl.u32 %v6016, 7
        %v6018 = vsub.s32 %v6015, %v6017
        %v6019 = vrot.slane %v5999, %v6018
        %v6021 = vunpack.c.l.s4 1983009808
        %v6022 = vunpack.c.0.s8 %v6021
        %v6023 = vlaneseq
        %v6024 = vshrl.u32 %v6023, 7
        %v6025 = vsub.s32 %v6022, %v6024
        %v6026 = vrot.slane %v6000, %v6025
        %v6028 = vunpack.c.l.s4 1983009808
        %v6029 = vunpack.c.0.s8 %v6028
        %v6030 = vlaneseq
        %v6031 = vshrl.u32 %v6030, 7
        %v6032 = vsub.s32 %v6029, %v6031
        %v6033 = vrot.slane %v6001, %v6032
        %v6034 = vcombine.low %v6012, %v6019
        %v6035 = vcombine.low %v6026, %v6033
        %v6037 = vunpack.c.l.s4 1983009808
        %v6038 = vunpack.c.0.s8 %v6037
        %v6039 = vlaneseq
        %v6040 = vshrl.u32 %v6039, 7
        %v6041 = vsub.s32 %v6038, %v6040
        %v6042 = vrot.slane %v6034, %v6041
        %v6044 = vunpack.c.l.s4 1983009808
        %v6045 = vunpack.c.0.s8 %v6044
        %v6046 = vlaneseq
        %v6047 = vshrl.u32 %v6046, 7
        %v6048 = vsub.s32 %v6045, %v6047
        %v6049 = vrot.slane %v6035, %v6048
        %v6050 = vcombine.low %v6042, %v6049
        %v6051 = vcombine.high %v6042, %v6049
        %v6054 = vpack.c.bf16 %v6050, %v6050
        %v6055 = vpack.c.bf16 %v6051, %v6051
        %v6056 = vld [vmem:[%s17] sm:$0xff]
        %v6057 = vld [vmem:[%s17 + $0x8] sm:$0xff]
        %v6058 = vld [vmem:[%s17 + $0x10] sm:$0xff]
        %v6059 = vld [vmem:[%s17 + $0x18] sm:$0xff]
        %v6060 = vld [vmem:[%s17 + $0x20] sm:$0xff]
        %v6061 = vld [vmem:[%s17 + $0x28] sm:$0xff]
        %v6062 = vld [vmem:[%s17 + $0x30] sm:$0xff]
        %v6063 = vld [vmem:[%s17 + $0x38] sm:$0xff]
        %v6064 = vld [vmem:[%s17 + $0x40] sm:$0xff]
        %v6065 = vld [vmem:[%s17 + $0x48] sm:$0xff]
        %v6066 = vld [vmem:[%s17 + $0x50] sm:$0xff]
        %v6067 = vld [vmem:[%s17 + $0x58] sm:$0xff]
        %v6068 = vld [vmem:[%s17 + $0x60] sm:$0xff]
        %v6069 = vld [vmem:[%s17 + $0x68] sm:$0xff]
        %v6070 = vld [vmem:[%s17 + $0x70] sm:$0xff]
        %v6071 = vld [vmem:[%s17 + $0x78] sm:$0xff]
        %v6072 = vld [vmem:[%s17 + $0x80] sm:$0xff]
        %v6073 = vld [vmem:[%s17 + $0x88] sm:$0xff]
        %v6074 = vld [vmem:[%s17 + $0x90] sm:$0xff]
        %v6075 = vld [vmem:[%s17 + $0x98] sm:$0xff]
        %v6076 = vld [vmem:[%s17 + $0xa0] sm:$0xff]
        %v6077 = vld [vmem:[%s17 + $0xa8] sm:$0xff]
        %v6078 = vld [vmem:[%s17 + $0xb0] sm:$0xff]
        %v6079 = vld [vmem:[%s17 + $0xb8] sm:$0xff]
        %v6080 = vld [vmem:[%s17 + $0xc0] sm:$0xff]
        %v6081 = vld [vmem:[%s17 + $0xc8] sm:$0xff]
        %v6082 = vld [vmem:[%s17 + $0xd0] sm:$0xff]
        %v6083 = vld [vmem:[%s17 + $0xd8] sm:$0xff]
        %v6084 = vld [vmem:[%s17 + $0xe0] sm:$0xff]
        %v6085 = vld [vmem:[%s17 + $0xe8] sm:$0xff]
        %v6086 = vld [vmem:[%s17 + $0xf0] sm:$0xff]
        %v6087 = vld [vmem:[%s17 + $0xf8] sm:$0xff]
        %v6088 = vld [vmem:[%s17 + $0x100] sm:$0xff]
        %v6089 = vld [vmem:[%s17 + $0x108] sm:$0xff]
        %v6090 = vld [vmem:[%s17 + $0x110] sm:$0xff]
        %v6091 = vld [vmem:[%s17 + $0x118] sm:$0xff]
        %v6092 = vld [vmem:[%s17 + $0x120] sm:$0xff]
        %v6093 = vld [vmem:[%s17 + $0x128] sm:$0xff]
        %v6094 = vld [vmem:[%s17 + $0x130] sm:$0xff]
        %v6095 = vld [vmem:[%s17 + $0x138] sm:$0xff]
        %v6096 = vld [vmem:[%s17 + $0x140] sm:$0xff]
        %v6097 = vld [vmem:[%s17 + $0x148] sm:$0xff]
        %v6098 = vld [vmem:[%s17 + $0x150] sm:$0xff]
        %v6099 = vld [vmem:[%s17 + $0x158] sm:$0xff]
        %v6100 = vld [vmem:[%s17 + $0x160] sm:$0xff]
        %v6101 = vld [vmem:[%s17 + $0x168] sm:$0xff]
        %v6102 = vld [vmem:[%s17 + $0x170] sm:$0xff]
        %v6103 = vld [vmem:[%s17 + $0x178] sm:$0xff]
        %v6104 = vld [vmem:[%s17 + $0x180] sm:$0xff]
        %v6105 = vld [vmem:[%s17 + $0x188] sm:$0xff]
        %v6106 = vld [vmem:[%s17 + $0x190] sm:$0xff]
        %v6107 = vld [vmem:[%s17 + $0x198] sm:$0xff]
        %v6108 = vld [vmem:[%s17 + $0x1a0] sm:$0xff]
        %v6109 = vld [vmem:[%s17 + $0x1a8] sm:$0xff]
        %v6110 = vld [vmem:[%s17 + $0x1b0] sm:$0xff]
        %v6111 = vld [vmem:[%s17 + $0x1b8] sm:$0xff]
        %v6112 = vld [vmem:[%s17 + $0x1c0] sm:$0xff]
        %v6113 = vld [vmem:[%s17 + $0x1c8] sm:$0xff]
        %v6114 = vld [vmem:[%s17 + $0x1d0] sm:$0xff]
        %v6115 = vld [vmem:[%s17 + $0x1d8] sm:$0xff]
        %v6116 = vld [vmem:[%s17 + $0x1e0] sm:$0xff]
        %v6117 = vld [vmem:[%s17 + $0x1e8] sm:$0xff]
        %v6118 = vld [vmem:[%s17 + $0x1f0] sm:$0xff]
        %v6119 = vld [vmem:[%s17 + $0x1f8] sm:$0xff]
        %v6120 = vld [vmem:[%s18] sm:$0xf]
        %v6122 = vlaneseq
        %v6123 = vshrl.u32 %v6122, 7
        %v6124 = vsub.s32 0, %v6123
        %v6125 = vrot.slane %v6120, %v6124
        %v6126 = vlaneseq
        %v6127 = vshrl.u32 %v6126, 7
        %v6128 = vsub.s32 1, %v6127
        %v6129 = vrot.slane %v6120, %v6128
        %v6130 = vlaneseq
        %v6131 = vshrl.u32 %v6130, 7
        %v6132 = vsub.s32 2, %v6131
        %v6133 = vrot.slane %v6120, %v6132
        %v6134 = vlaneseq
        %v6135 = vshrl.u32 %v6134, 7
        %v6136 = vsub.s32 3, %v6135
        %v6137 = vrot.slane %v6120, %v6136
        %v6206 = vunpack.c.l.b16 %v6056
        %v6207 = vunpack.c.h.b16 %v6056
        %v6208 = vunpack.c.l.b16 %v6057
        %v6209 = vunpack.c.h.b16 %v6057
        %v6210 = vunpack.c.l.b16 %v6058
        %v6211 = vunpack.c.h.b16 %v6058
        %v6212 = vunpack.c.l.b16 %v6059
        %v6213 = vunpack.c.h.b16 %v6059
        %v6214 = vunpack.c.l.b16 %v6060
        %v6215 = vunpack.c.h.b16 %v6060
        %v6216 = vunpack.c.l.b16 %v6061
        %v6217 = vunpack.c.h.b16 %v6061
        %v6218 = vunpack.c.l.b16 %v6062
        %v6219 = vunpack.c.h.b16 %v6062
        %v6220 = vunpack.c.l.b16 %v6063
        %v6221 = vunpack.c.h.b16 %v6063
        %v6222 = vunpack.c.l.b16 %v6064
        %v6223 = vunpack.c.h.b16 %v6064
        %v6224 = vunpack.c.l.b16 %v6065
        %v6225 = vunpack.c.h.b16 %v6065
        %v6226 = vunpack.c.l.b16 %v6066
        %v6227 = vunpack.c.h.b16 %v6066
        %v6228 = vunpack.c.l.b16 %v6067
        %v6229 = vunpack.c.h.b16 %v6067
        %v6230 = vunpack.c.l.b16 %v6068
        %v6231 = vunpack.c.h.b16 %v6068
        %v6232 = vunpack.c.l.b16 %v6069
        %v6233 = vunpack.c.h.b16 %v6069
        %v6234 = vunpack.c.l.b16 %v6070
        %v6235 = vunpack.c.h.b16 %v6070
        %v6236 = vunpack.c.l.b16 %v6071
        %v6237 = vunpack.c.h.b16 %v6071
        %v6238 = vunpack.c.l.b16 %v6072
        %v6239 = vunpack.c.h.b16 %v6072
        %v6240 = vunpack.c.l.b16 %v6073
        %v6241 = vunpack.c.h.b16 %v6073
        %v6242 = vunpack.c.l.b16 %v6074
        %v6243 = vunpack.c.h.b16 %v6074
        %v6244 = vunpack.c.l.b16 %v6075
        %v6245 = vunpack.c.h.b16 %v6075
        %v6246 = vunpack.c.l.b16 %v6076
        %v6247 = vunpack.c.h.b16 %v6076
        %v6248 = vunpack.c.l.b16 %v6077
        %v6249 = vunpack.c.h.b16 %v6077
        %v6250 = vunpack.c.l.b16 %v6078
        %v6251 = vunpack.c.h.b16 %v6078
        %v6252 = vunpack.c.l.b16 %v6079
        %v6253 = vunpack.c.h.b16 %v6079
        %v6254 = vunpack.c.l.b16 %v6080
        %v6255 = vunpack.c.h.b16 %v6080
        %v6256 = vunpack.c.l.b16 %v6081
        %v6257 = vunpack.c.h.b16 %v6081
        %v6258 = vunpack.c.l.b16 %v6082
        %v6259 = vunpack.c.h.b16 %v6082
        %v6260 = vunpack.c.l.b16 %v6083
        %v6261 = vunpack.c.h.b16 %v6083
        %v6262 = vunpack.c.l.b16 %v6084
        %v6263 = vunpack.c.h.b16 %v6084
        %v6264 = vunpack.c.l.b16 %v6085
        %v6265 = vunpack.c.h.b16 %v6085
        %v6266 = vunpack.c.l.b16 %v6086
        %v6267 = vunpack.c.h.b16 %v6086
        %v6268 = vunpack.c.l.b16 %v6087
        %v6269 = vunpack.c.h.b16 %v6087
        %v6270 = vunpack.c.l.b16 %v6088
        %v6271 = vunpack.c.h.b16 %v6088
        %v6272 = vunpack.c.l.b16 %v6089
        %v6273 = vunpack.c.h.b16 %v6089
        %v6274 = vunpack.c.l.b16 %v6090
        %v6275 = vunpack.c.h.b16 %v6090
        %v6276 = vunpack.c.l.b16 %v6091
        %v6277 = vunpack.c.h.b16 %v6091
        %v6278 = vunpack.c.l.b16 %v6092
        %v6279 = vunpack.c.h.b16 %v6092
        %v6280 = vunpack.c.l.b16 %v6093
        %v6281 = vunpack.c.h.b16 %v6093
        %v6282 = vunpack.c.l.b16 %v6094
        %v6283 = vunpack.c.h.b16 %v6094
        %v6284 = vunpack.c.l.b16 %v6095
        %v6285 = vunpack.c.h.b16 %v6095
        %v6286 = vunpack.c.l.b16 %v6096
        %v6287 = vunpack.c.h.b16 %v6096
        %v6288 = vunpack.c.l.b16 %v6097
        %v6289 = vunpack.c.h.b16 %v6097
        %v6290 = vunpack.c.l.b16 %v6098
        %v6291 = vunpack.c.h.b16 %v6098
        %v6292 = vunpack.c.l.b16 %v6099
        %v6293 = vunpack.c.h.b16 %v6099
        %v6294 = vunpack.c.l.b16 %v6100
        %v6295 = vunpack.c.h.b16 %v6100
        %v6296 = vunpack.c.l.b16 %v6101
        %v6297 = vunpack.c.h.b16 %v6101
        %v6298 = vunpack.c.l.b16 %v6102
        %v6299 = vunpack.c.h.b16 %v6102
        %v6300 = vunpack.c.l.b16 %v6103
        %v6301 = vunpack.c.h.b16 %v6103
        %v6302 = vunpack.c.l.b16 %v6104
        %v6303 = vunpack.c.h.b16 %v6104
        %v6304 = vunpack.c.l.b16 %v6105
        %v6305 = vunpack.c.h.b16 %v6105
        %v6306 = vunpack.c.l.b16 %v6106
        %v6307 = vunpack.c.h.b16 %v6106
        %v6308 = vunpack.c.l.b16 %v6107
        %v6309 = vunpack.c.h.b16 %v6107
        %v6310 = vunpack.c.l.b16 %v6108
        %v6311 = vunpack.c.h.b16 %v6108
        %v6312 = vunpack.c.l.b16 %v6109
        %v6313 = vunpack.c.h.b16 %v6109
        %v6314 = vunpack.c.l.b16 %v6110
        %v6315 = vunpack.c.h.b16 %v6110
        %v6316 = vunpack.c.l.b16 %v6111
        %v6317 = vunpack.c.h.b16 %v6111
        %v6318 = vunpack.c.l.b16 %v6112
        %v6319 = vunpack.c.h.b16 %v6112
        %v6320 = vunpack.c.l.b16 %v6113
        %v6321 = vunpack.c.h.b16 %v6113
        %v6322 = vunpack.c.l.b16 %v6114
        %v6323 = vunpack.c.h.b16 %v6114
        %v6324 = vunpack.c.l.b16 %v6115
        %v6325 = vunpack.c.h.b16 %v6115
        %v6326 = vunpack.c.l.b16 %v6116
        %v6327 = vunpack.c.h.b16 %v6116
        %v6328 = vunpack.c.l.b16 %v6117
        %v6329 = vunpack.c.h.b16 %v6117
        %v6330 = vunpack.c.l.b16 %v6118
        %v6331 = vunpack.c.h.b16 %v6118
        %v6332 = vunpack.c.l.b16 %v6119
        %v6333 = vunpack.c.h.b16 %v6119
        %v6334 = vpack.c.b16 %v6210, %v6206
        %v6335 = vpack.c.b16 %v6211, %v6207
        %v6336 = vpack.c.b16 %v6212, %v6208
        %v6337 = vpack.c.b16 %v6213, %v6209
        %v6338 = vpack.c.b16 %v6218, %v6214
        %v6339 = vpack.c.b16 %v6219, %v6215
        %v6340 = vpack.c.b16 %v6220, %v6216
        %v6341 = vpack.c.b16 %v6221, %v6217
        %v6342 = vpack.c.b16 %v6226, %v6222
        %v6343 = vpack.c.b16 %v6227, %v6223
        %v6344 = vpack.c.b16 %v6228, %v6224
        %v6345 = vpack.c.b16 %v6229, %v6225
        %v6346 = vpack.c.b16 %v6234, %v6230
        %v6347 = vpack.c.b16 %v6235, %v6231
        %v6348 = vpack.c.b16 %v6236, %v6232
        %v6349 = vpack.c.b16 %v6237, %v6233
        %v6350 = vpack.c.b16 %v6242, %v6238
        %v6351 = vpack.c.b16 %v6243, %v6239
        %v6352 = vpack.c.b16 %v6244, %v6240
        %v6353 = vpack.c.b16 %v6245, %v6241
        %v6354 = vpack.c.b16 %v6250, %v6246
        %v6355 = vpack.c.b16 %v6251, %v6247
        %v6356 = vpack.c.b16 %v6252, %v6248
        %v6357 = vpack.c.b16 %v6253, %v6249
        %v6358 = vpack.c.b16 %v6258, %v6254
        %v6359 = vpack.c.b16 %v6259, %v6255
        %v6360 = vpack.c.b16 %v6260, %v6256
        %v6361 = vpack.c.b16 %v6261, %v6257
        %v6362 = vpack.c.b16 %v6266, %v6262
        %v6363 = vpack.c.b16 %v6267, %v6263
        %v6364 = vpack.c.b16 %v6268, %v6264
        %v6365 = vpack.c.b16 %v6269, %v6265
        %v6366 = vpack.c.b16 %v6274, %v6270
        %v6367 = vpack.c.b16 %v6275, %v6271
        %v6368 = vpack.c.b16 %v6276, %v6272
        %v6369 = vpack.c.b16 %v6277, %v6273
        %v6370 = vpack.c.b16 %v6282, %v6278
        %v6371 = vpack.c.b16 %v6283, %v6279
        %v6372 = vpack.c.b16 %v6284, %v6280
        %v6373 = vpack.c.b16 %v6285, %v6281
        %v6374 = vpack.c.b16 %v6290, %v6286
        %v6375 = vpack.c.b16 %v6291, %v6287
        %v6376 = vpack.c.b16 %v6292, %v6288
        %v6377 = vpack.c.b16 %v6293, %v6289
        %v6378 = vpack.c.b16 %v6298, %v6294
        %v6379 = vpack.c.b16 %v6299, %v6295
        %v6380 = vpack.c.b16 %v6300, %v6296
        %v6381 = vpack.c.b16 %v6301, %v6297
        %v6382 = vpack.c.b16 %v6306, %v6302
        %v6383 = vpack.c.b16 %v6307, %v6303
        %v6384 = vpack.c.b16 %v6308, %v6304
        %v6385 = vpack.c.b16 %v6309, %v6305
        %v6386 = vpack.c.b16 %v6314, %v6310
        %v6387 = vpack.c.b16 %v6315, %v6311
        %v6388 = vpack.c.b16 %v6316, %v6312
        %v6389 = vpack.c.b16 %v6317, %v6313
        %v6390 = vpack.c.b16 %v6322, %v6318
        %v6391 = vpack.c.b16 %v6323, %v6319
        %v6392 = vpack.c.b16 %v6324, %v6320
        %v6393 = vpack.c.b16 %v6325, %v6321
        %v6394 = vpack.c.b16 %v6330, %v6326
        %v6395 = vpack.c.b16 %v6331, %v6327
        %v6396 = vpack.c.b16 %v6332, %v6328
        %v6397 = vpack.c.b16 %v6333, %v6329
        %6462 = vmatprep.subr.bf16.mxu0 %v6363
        %6463 = vmatpush1.bf16.msra.mxu0 %v6362
        %6464 = vmatprep.subr.bf16.mxu0 %v6359
        %6465 = vmatpush1.bf16.msra.mxu0 %v6358
        %6466 = vmatprep.subr.bf16.mxu0 %v6355
        %6467 = vmatpush1.bf16.msra.mxu0 %v6354
        %6468 = vmatprep.subr.bf16.mxu0 %v6351
        %6469 = vmatpush1.bf16.msra.mxu0 %v6350
        %6470 = vmatprep.subr.bf16.mxu0 %v6347
        %6471 = vmatpush1.bf16.msra.mxu0 %v6346
        %6472 = vmatprep.subr.bf16.mxu0 %v6343
        %6473 = vmatpush1.bf16.msra.mxu0 %v6342
        %6474 = vmatprep.subr.bf16.mxu0 %v6339
        %6475 = vmatpush1.bf16.msra.mxu0 %v6338
        %6476 = vmatprep.subr.bf16.mxu0 %v6335
        %6477 = vmatpush1.bf16.msra.mxu0 %v6334
        %6478 = vmatprep.subr.bf16.mxu0 %v6395
        %6479 = vmatpush2.bf16.msra.mxu0 %v6394
        %6480 = vmatprep.subr.bf16.mxu0 %v6391
        %6481 = vmatpush2.bf16.msra.mxu0 %v6390
        %6482 = vmatprep.subr.bf16.mxu0 %v6387
        %6483 = vmatpush2.bf16.msra.mxu0 %v6386
        %6484 = vmatprep.subr.bf16.mxu0 %v6383
        %6485 = vmatpush2.bf16.msra.mxu0 %v6382
        %6486 = vmatprep.subr.bf16.mxu0 %v6379
        %6487 = vmatpush2.bf16.msra.mxu0 %v6378
        %6488 = vmatprep.subr.bf16.mxu0 %v6375
        %6489 = vmatpush2.bf16.msra.mxu0 %v6374
        %6490 = vmatprep.subr.bf16.mxu0 %v6371
        %6491 = vmatpush2.bf16.msra.mxu0 %v6370
        %6492 = vmatprep.subr.bf16.mxu0 %v6367
        %6493 = vmatpush2.bf16.msra.mxu0 %v6366
        %6494 = vmatprep.mubr.bf16.mxu0 %v6055
        %6495 = vmatmul.mubr.bf16.gmra.mxu0 %v6054
        %v6496 = vpop.f32.mrf.mxu0
        %v6497 = vadd.f32 %v6125, %v6496
        %v6498 = vpop.f32.mrf.mxu0
        %v6499 = vadd.f32 %v6129, %v6498
        %v6500 = vpop.f32.mrf.mxu0
        %v6501 = vpop.f32.mrf.mxu0
        %6502 = vdwg.mxu0
        %6503 = vmatprep.subr.bf16.mxu0 %v6365
        %6504 = vmatpush1.bf16.msra.mxu0 %v6364
        %6505 = vmatprep.subr.bf16.mxu0 %v6361
        %6506 = vmatpush1.bf16.msra.mxu0 %v6360
        %6507 = vmatprep.subr.bf16.mxu0 %v6357
        %6508 = vmatpush1.bf16.msra.mxu0 %v6356
        %6509 = vmatprep.subr.bf16.mxu0 %v6353
        %6510 = vmatpush1.bf16.msra.mxu0 %v6352
        %6511 = vmatprep.subr.bf16.mxu0 %v6349
        %6512 = vmatpush1.bf16.msra.mxu0 %v6348
        %6513 = vmatprep.subr.bf16.mxu0 %v6345
        %6514 = vmatpush1.bf16.msra.mxu0 %v6344
        %6515 = vmatprep.subr.bf16.mxu0 %v6341
        %6516 = vmatpush1.bf16.msra.mxu0 %v6340
        %6517 = vmatprep.subr.bf16.mxu0 %v6337
        %6518 = vmatpush1.bf16.msra.mxu0 %v6336
        %6519 = vmatprep.subr.bf16.mxu0 %v6397
        %6520 = vmatpush2.bf16.msra.mxu0 %v6396
        %6521 = vmatprep.subr.bf16.mxu0 %v6393
        %6522 = vmatpush2.bf16.msra.mxu0 %v6392
        %6523 = vmatprep.subr.bf16.mxu0 %v6389
        %6524 = vmatpush2.bf16.msra.mxu0 %v6388
        %6525 = vmatprep.subr.bf16.mxu0 %v6385
        %6526 = vmatpush2.bf16.msra.mxu0 %v6384
        %6527 = vmatprep.subr.bf16.mxu0 %v6381
        %6528 = vmatpush2.bf16.msra.mxu0 %v6380
        %6529 = vmatprep.subr.bf16.mxu0 %v6377
        %6530 = vmatpush2.bf16.msra.mxu0 %v6376
        %6531 = vmatprep.subr.bf16.mxu0 %v6373
        %6532 = vmatpush2.bf16.msra.mxu0 %v6372
        %6533 = vmatprep.subr.bf16.mxu0 %v6369
        %6534 = vmatpush2.bf16.msra.mxu0 %v6368
        %6535 = vmatprep.mubr.bf16.mxu0 %v6055
        %6536 = vmatmul.mubr.bf16.gmra.mxu0 %v6054
        %v6537 = vpop.f32.mrf.mxu0
        %v6538 = vadd.f32 %v6133, %v6537
        %v6539 = vpop.f32.mrf.mxu0
        %v6540 = vadd.f32 %v6137, %v6539
        %v6541 = vpop.f32.mrf.mxu0
        %v6542 = vpop.f32.mrf.mxu0
        %6543 = vdwg.mxu0
        %v6544 = vmax.f32 %v6497, 0.0
        %v6545 = vmax.f32 %v6499, 0.0
        %v6546 = vmax.f32 %v6538, 0.0
        %v6547 = vmax.f32 %v6540, 0.0
        %vm6548 = vcmask 1043456
        %v6549 = vsel %vm6548, %v6544, 0.0
        %v6550 = vrot.slane %v6549, 4
        %v6551 = vadd.f32 %v6549, %v6550
        %v6552 = vrot.slane %v6551, 2
        %v6553 = vadd.f32 %v6551, %v6552
        %v6554 = vrot.slane %v6553, 1
        %v6555 = vadd.f32 %v6553, %v6554
        %v6556 = vsel %vm6548, %v6545, 0.0
        %v6557 = vrot.slane %v6556, 4
        %v6558 = vadd.f32 %v6556, %v6557
        %v6559 = vrot.slane %v6558, 2
        %v6560 = vadd.f32 %v6558, %v6559
        %v6561 = vrot.slane %v6560, 1
        %v6562 = vadd.f32 %v6560, %v6561
        %v6563 = vsel %vm6548, %v6546, 0.0
        %v6564 = vrot.slane %v6563, 4
        %v6565 = vadd.f32 %v6563, %v6564
        %v6566 = vrot.slane %v6565, 2
        %v6567 = vadd.f32 %v6565, %v6566
        %v6568 = vrot.slane %v6567, 1
        %v6569 = vadd.f32 %v6567, %v6568
        %v6570 = vsel %vm6548, %v6547, 0.0
        %v6571 = vrot.slane %v6570, 4
        %v6572 = vadd.f32 %v6570, %v6571
        %v6573 = vrot.slane %v6572, 2
        %v6574 = vadd.f32 %v6572, %v6573
        %v6575 = vrot.slane %v6574, 1
        %v6576 = vadd.f32 %v6574, %v6575
        %v6581 = vrot.slane %v6544, 4
        %v6582 = vrot.slane %v6545, 4
        %v6583 = vrot.slane %v6546, 4
        %v6584 = vrot.slane %v6547, 4
        %v6589 = vsel %vm6548, %v6581, 0.0
        %v6590 = vrot.slane %v6589, 4
        %v6591 = vadd.f32 %v6589, %v6590
        %v6592 = vrot.slane %v6591, 2
        %v6593 = vadd.f32 %v6591, %v6592
        %v6594 = vrot.slane %v6593, 1
        %v6595 = vadd.f32 %v6593, %v6594
        %v6596 = vsel %vm6548, %v6582, 0.0
        %v6597 = vrot.slane %v6596, 4
        %v6598 = vadd.f32 %v6596, %v6597
        %v6599 = vrot.slane %v6598, 2
        %v6600 = vadd.f32 %v6598, %v6599
        %v6601 = vrot.slane %v6600, 1
        %v6602 = vadd.f32 %v6600, %v6601
        %v6603 = vsel %vm6548, %v6583, 0.0
        %v6604 = vrot.slane %v6603, 4
        %v6605 = vadd.f32 %v6603, %v6604
        %v6606 = vrot.slane %v6605, 2
        %v6607 = vadd.f32 %v6605, %v6606
        %v6608 = vrot.slane %v6607, 1
        %v6609 = vadd.f32 %v6607, %v6608
        %v6610 = vsel %vm6548, %v6584, 0.0
        %v6611 = vrot.slane %v6610, 4
        %v6612 = vadd.f32 %v6610, %v6611
        %v6613 = vrot.slane %v6612, 2
        %v6614 = vadd.f32 %v6612, %v6613
        %v6615 = vrot.slane %v6614, 1
        %v6616 = vadd.f32 %v6614, %v6615
        %vm6617 = vcmask 1040384
        %v6618 = vsel %vm6617, %v6555, %v6595
        %v6619 = vsel %vm6617, %v6562, %v6602
        %v6620 = vsel %vm6617, %v6569, %v6609
        %v6621 = vsel %vm6617, %v6576, %v6616
        %v6622 = vmul.f32 %v6618, 0.25
        %v6623 = vmul.f32 %v6619, 0.25
        %v6624 = vmul.f32 %v6620, 0.25
        %v6625 = vmul.f32 %v6621, 0.25
        %v6626 = vpack.c.bf16 %v6622, %v6622
        %v6627 = vpack.c.bf16 %v6623, %v6623
        %v6628 = vpack.c.bf16 %v6624, %v6624
        %v6629 = vpack.c.bf16 %v6625, %v6625
        %v6630 = vld [vmem:[%s19] sm:$0xf]
        %v6631 = vld [vmem:[%s19 + $0x4] sm:$0xf]
        %v6632 = vld [vmem:[%s19 + $0x8] sm:$0xf]
        %v6633 = vld [vmem:[%s19 + $0xc] sm:$0xf]
        %v6634 = vld [vmem:[%s19 + $0x10] sm:$0xf]
        %v6635 = vld [vmem:[%s19 + $0x14] sm:$0xf]
        %v6636 = vld [vmem:[%s19 + $0x18] sm:$0xf]
        %v6637 = vld [vmem:[%s19 + $0x1c] sm:$0xf]
        %v6638 = vld [vmem:[%s19 + $0x20] sm:$0xf]
        %v6639 = vld [vmem:[%s19 + $0x24] sm:$0xf]
        %v6640 = vld [vmem:[%s19 + $0x28] sm:$0xf]
        %v6641 = vld [vmem:[%s19 + $0x2c] sm:$0xf]
        %v6642 = vld [vmem:[%s19 + $0x30] sm:$0xf]
        %v6643 = vld [vmem:[%s19 + $0x34] sm:$0xf]
        %v6644 = vld [vmem:[%s19 + $0x38] sm:$0xf]
        %v6645 = vld [vmem:[%s19 + $0x3c] sm:$0xf]
        %v6646 = vld [vmem:[%s19 + $0x40] sm:$0xf]
        %v6647 = vld [vmem:[%s19 + $0x44] sm:$0xf]
        %v6648 = vld [vmem:[%s19 + $0x48] sm:$0xf]
        %v6649 = vld [vmem:[%s19 + $0x4c] sm:$0xf]
        %v6650 = vld [vmem:[%s19 + $0x50] sm:$0xf]
        %v6651 = vld [vmem:[%s19 + $0x54] sm:$0xf]
        %v6652 = vld [vmem:[%s19 + $0x58] sm:$0xf]
        %v6653 = vld [vmem:[%s19 + $0x5c] sm:$0xf]
        %v6654 = vld [vmem:[%s19 + $0x60] sm:$0xf]
        %v6655 = vld [vmem:[%s19 + $0x64] sm:$0xf]
        %v6656 = vld [vmem:[%s19 + $0x68] sm:$0xf]
        %v6657 = vld [vmem:[%s19 + $0x6c] sm:$0xf]
        %v6658 = vld [vmem:[%s19 + $0x70] sm:$0xf]
        %v6659 = vld [vmem:[%s19 + $0x74] sm:$0xf]
        %v6660 = vld [vmem:[%s19 + $0x78] sm:$0xf]
        %v6661 = vld [vmem:[%s19 + $0x7c] sm:$0xf]
        %v6662 = vld [vmem:[%s19 + $0x80] sm:$0xf]
        %v6663 = vld [vmem:[%s19 + $0x84] sm:$0xf]
        %v6664 = vld [vmem:[%s19 + $0x88] sm:$0xf]
        %v6665 = vld [vmem:[%s19 + $0x8c] sm:$0xf]
        %v6666 = vld [vmem:[%s19 + $0x90] sm:$0xf]
        %v6667 = vld [vmem:[%s19 + $0x94] sm:$0xf]
        %v6668 = vld [vmem:[%s19 + $0x98] sm:$0xf]
        %v6669 = vld [vmem:[%s19 + $0x9c] sm:$0xf]
        %v6670 = vld [vmem:[%s19 + $0xa0] sm:$0xf]
        %v6671 = vld [vmem:[%s19 + $0xa4] sm:$0xf]
        %v6672 = vld [vmem:[%s19 + $0xa8] sm:$0xf]
        %v6673 = vld [vmem:[%s19 + $0xac] sm:$0xf]
        %v6674 = vld [vmem:[%s19 + $0xb0] sm:$0xf]
        %v6675 = vld [vmem:[%s19 + $0xb4] sm:$0xf]
        %v6676 = vld [vmem:[%s19 + $0xb8] sm:$0xf]
        %v6677 = vld [vmem:[%s19 + $0xbc] sm:$0xf]
        %v6678 = vld [vmem:[%s19 + $0xc0] sm:$0xf]
        %v6679 = vld [vmem:[%s19 + $0xc4] sm:$0xf]
        %v6680 = vld [vmem:[%s19 + $0xc8] sm:$0xf]
        %v6681 = vld [vmem:[%s19 + $0xcc] sm:$0xf]
        %v6682 = vld [vmem:[%s19 + $0xd0] sm:$0xf]
        %v6683 = vld [vmem:[%s19 + $0xd4] sm:$0xf]
        %v6684 = vld [vmem:[%s19 + $0xd8] sm:$0xf]
        %v6685 = vld [vmem:[%s19 + $0xdc] sm:$0xf]
        %v6686 = vld [vmem:[%s19 + $0xe0] sm:$0xf]
        %v6687 = vld [vmem:[%s19 + $0xe4] sm:$0xf]
        %v6688 = vld [vmem:[%s19 + $0xe8] sm:$0xf]
        %v6689 = vld [vmem:[%s19 + $0xec] sm:$0xf]
        %v6690 = vld [vmem:[%s19 + $0xf0] sm:$0xf]
        %v6691 = vld [vmem:[%s19 + $0xf4] sm:$0xf]
        %v6692 = vld [vmem:[%s19 + $0xf8] sm:$0xf]
        %v6693 = vld [vmem:[%s19 + $0xfc] sm:$0xf]
        %v6694 = vld [vmem:[%s20] sm:$0x1]
        %v6696 = vlaneseq
        %v6697 = vshrl.u32 %v6696, 7
        %v6698 = vsub.s32 0, %v6697
        %v6699 = vrot.slane %v6694, %v6698
        %v6765 = vunpack.c.l.b16 %v6630
        %v6766 = vunpack.c.l.b16 %v6631
        %v6767 = vunpack.c.l.b16 %v6632
        %v6768 = vunpack.c.l.b16 %v6633
        %v6769 = vunpack.c.l.b16 %v6634
        %v6770 = vunpack.c.l.b16 %v6635
        %v6771 = vunpack.c.l.b16 %v6636
        %v6772 = vunpack.c.l.b16 %v6637
        %v6773 = vunpack.c.l.b16 %v6638
        %v6774 = vunpack.c.l.b16 %v6639
        %v6775 = vunpack.c.l.b16 %v6640
        %v6776 = vunpack.c.l.b16 %v6641
        %v6777 = vunpack.c.l.b16 %v6642
        %v6778 = vunpack.c.l.b16 %v6643
        %v6779 = vunpack.c.l.b16 %v6644
        %v6780 = vunpack.c.l.b16 %v6645
        %v6781 = vunpack.c.l.b16 %v6646
        %v6782 = vunpack.c.l.b16 %v6647
        %v6783 = vunpack.c.l.b16 %v6648
        %v6784 = vunpack.c.l.b16 %v6649
        %v6785 = vunpack.c.l.b16 %v6650
        %v6786 = vunpack.c.l.b16 %v6651
        %v6787 = vunpack.c.l.b16 %v6652
        %v6788 = vunpack.c.l.b16 %v6653
        %v6789 = vunpack.c.l.b16 %v6654
        %v6790 = vunpack.c.l.b16 %v6655
        %v6791 = vunpack.c.l.b16 %v6656
        %v6792 = vunpack.c.l.b16 %v6657
        %v6793 = vunpack.c.l.b16 %v6658
        %v6794 = vunpack.c.l.b16 %v6659
        %v6795 = vunpack.c.l.b16 %v6660
        %v6796 = vunpack.c.l.b16 %v6661
        %v6797 = vunpack.c.l.b16 %v6662
        %v6798 = vunpack.c.l.b16 %v6663
        %v6799 = vunpack.c.l.b16 %v6664
        %v6800 = vunpack.c.l.b16 %v6665
        %v6801 = vunpack.c.l.b16 %v6666
        %v6802 = vunpack.c.l.b16 %v6667
        %v6803 = vunpack.c.l.b16 %v6668
        %v6804 = vunpack.c.l.b16 %v6669
        %v6805 = vunpack.c.l.b16 %v6670
        %v6806 = vunpack.c.l.b16 %v6671
        %v6807 = vunpack.c.l.b16 %v6672
        %v6808 = vunpack.c.l.b16 %v6673
        %v6809 = vunpack.c.l.b16 %v6674
        %v6810 = vunpack.c.l.b16 %v6675
        %v6811 = vunpack.c.l.b16 %v6676
        %v6812 = vunpack.c.l.b16 %v6677
        %v6813 = vunpack.c.l.b16 %v6678
        %v6814 = vunpack.c.l.b16 %v6679
        %v6815 = vunpack.c.l.b16 %v6680
        %v6816 = vunpack.c.l.b16 %v6681
        %v6817 = vunpack.c.l.b16 %v6682
        %v6818 = vunpack.c.l.b16 %v6683
        %v6819 = vunpack.c.l.b16 %v6684
        %v6820 = vunpack.c.l.b16 %v6685
        %v6821 = vunpack.c.l.b16 %v6686
        %v6822 = vunpack.c.l.b16 %v6687
        %v6823 = vunpack.c.l.b16 %v6688
        %v6824 = vunpack.c.l.b16 %v6689
        %v6825 = vunpack.c.l.b16 %v6690
        %v6826 = vunpack.c.l.b16 %v6691
        %v6827 = vunpack.c.l.b16 %v6692
        %v6828 = vunpack.c.l.b16 %v6693
        %v6829 = vpack.c.b16 %v6766, %v6765
        %v6830 = vpack.c.b16 %v6768, %v6767
        %v6831 = vpack.c.b16 %v6770, %v6769
        %v6832 = vpack.c.b16 %v6772, %v6771
        %v6833 = vpack.c.b16 %v6774, %v6773
        %v6834 = vpack.c.b16 %v6776, %v6775
        %v6835 = vpack.c.b16 %v6778, %v6777
        %v6836 = vpack.c.b16 %v6780, %v6779
        %v6837 = vpack.c.b16 %v6782, %v6781
        %v6838 = vpack.c.b16 %v6784, %v6783
        %v6839 = vpack.c.b16 %v6786, %v6785
        %v6840 = vpack.c.b16 %v6788, %v6787
        %v6841 = vpack.c.b16 %v6790, %v6789
        %v6842 = vpack.c.b16 %v6792, %v6791
        %v6843 = vpack.c.b16 %v6794, %v6793
        %v6844 = vpack.c.b16 %v6796, %v6795
        %v6845 = vpack.c.b16 %v6798, %v6797
        %v6846 = vpack.c.b16 %v6800, %v6799
        %v6847 = vpack.c.b16 %v6802, %v6801
        %v6848 = vpack.c.b16 %v6804, %v6803
        %v6849 = vpack.c.b16 %v6806, %v6805
        %v6850 = vpack.c.b16 %v6808, %v6807
        %v6851 = vpack.c.b16 %v6810, %v6809
        %v6852 = vpack.c.b16 %v6812, %v6811
        %v6853 = vpack.c.b16 %v6814, %v6813
        %v6854 = vpack.c.b16 %v6816, %v6815
        %v6855 = vpack.c.b16 %v6818, %v6817
        %v6856 = vpack.c.b16 %v6820, %v6819
        %v6857 = vpack.c.b16 %v6822, %v6821
        %v6858 = vpack.c.b16 %v6824, %v6823
        %v6859 = vpack.c.b16 %v6826, %v6825
        %v6860 = vpack.c.b16 %v6828, %v6827
        %6893 = vmatprep.subr.bf16.mxu0 0
        %6894 = vmatpush1.bf16.msra.mxu0 %v6836
        %6895 = vmatprep.subr.bf16.mxu0 0
        %6896 = vmatpush1.bf16.msra.mxu0 %v6835
        %6897 = vmatprep.subr.bf16.mxu0 0
        %6898 = vmatpush1.bf16.msra.mxu0 %v6834
        %6899 = vmatprep.subr.bf16.mxu0 0
        %6900 = vmatpush1.bf16.msra.mxu0 %v6833
        %6901 = vmatprep.subr.bf16.mxu0 0
        %6902 = vmatpush1.bf16.msra.mxu0 %v6832
        %6903 = vmatprep.subr.bf16.mxu0 0
        %6904 = vmatpush1.bf16.msra.mxu0 %v6831
        %6905 = vmatprep.subr.bf16.mxu0 0
        %6906 = vmatpush1.bf16.msra.mxu0 %v6830
        %6907 = vmatprep.subr.bf16.mxu0 0
        %6908 = vmatpush1.bf16.msra.mxu0 %v6829
        %6909 = vmatprep.subr.bf16.mxu0 0
        %6910 = vmatpush2.bf16.msra.mxu0 %v6844
        %6911 = vmatprep.subr.bf16.mxu0 0
        %6912 = vmatpush2.bf16.msra.mxu0 %v6843
        %6913 = vmatprep.subr.bf16.mxu0 0
        %6914 = vmatpush2.bf16.msra.mxu0 %v6842
        %6915 = vmatprep.subr.bf16.mxu0 0
        %6916 = vmatpush2.bf16.msra.mxu0 %v6841
        %6917 = vmatprep.subr.bf16.mxu0 0
        %6918 = vmatpush2.bf16.msra.mxu0 %v6840
        %6919 = vmatprep.subr.bf16.mxu0 0
        %6920 = vmatpush2.bf16.msra.mxu0 %v6839
        %6921 = vmatprep.subr.bf16.mxu0 0
        %6922 = vmatpush2.bf16.msra.mxu0 %v6838
        %6923 = vmatprep.subr.bf16.mxu0 0
        %6924 = vmatpush2.bf16.msra.mxu0 %v6837
        %6925 = vmatprep.mubr.bf16.mxu0 %v6627
        %6926 = vmatmul.mubr.bf16.gmra.mxu0 %v6626
        %v6927 = vpop.f32.mrf.mxu0
        %v6928 = vadd.f32 %v6699, %v6927
        %v6929 = vpop.f32.mrf.mxu0
        %v6930 = vpop.f32.mrf.mxu0
        %v6931 = vpop.f32.mrf.mxu0
        %6932 = vdwg.mxu0
        %6933 = vmatprep.subr.bf16.mxu0 0
        %6934 = vmatpush1.bf16.msra.mxu0 %v6852
        %6935 = vmatprep.subr.bf16.mxu0 0
        %6936 = vmatpush1.bf16.msra.mxu0 %v6851
        %6937 = vmatprep.subr.bf16.mxu0 0
        %6938 = vmatpush1.bf16.msra.mxu0 %v6850
        %6939 = vmatprep.subr.bf16.mxu0 0
        %6940 = vmatpush1.bf16.msra.mxu0 %v6849
        %6941 = vmatprep.subr.bf16.mxu0 0
        %6942 = vmatpush1.bf16.msra.mxu0 %v6848
        %6943 = vmatprep.subr.bf16.mxu0 0
        %6944 = vmatpush1.bf16.msra.mxu0 %v6847
        %6945 = vmatprep.subr.bf16.mxu0 0
        %6946 = vmatpush1.bf16.msra.mxu0 %v6846
        %6947 = vmatprep.subr.bf16.mxu0 0
        %6948 = vmatpush1.bf16.msra.mxu0 %v6845
        %6949 = vmatprep.subr.bf16.mxu0 0
        %6950 = vmatpush2.bf16.msra.mxu0 %v6860
        %6951 = vmatprep.subr.bf16.mxu0 0
        %6952 = vmatpush2.bf16.msra.mxu0 %v6859
        %6953 = vmatprep.subr.bf16.mxu0 0
        %6954 = vmatpush2.bf16.msra.mxu0 %v6858
        %6955 = vmatprep.subr.bf16.mxu0 0
        %6956 = vmatpush2.bf16.msra.mxu0 %v6857
        %6957 = vmatprep.subr.bf16.mxu0 0
        %6958 = vmatpush2.bf16.msra.mxu0 %v6856
        %6959 = vmatprep.subr.bf16.mxu0 0
        %6960 = vmatpush2.bf16.msra.mxu0 %v6855
        %6961 = vmatprep.subr.bf16.mxu0 0
        %6962 = vmatpush2.bf16.msra.mxu0 %v6854
        %6963 = vmatprep.subr.bf16.mxu0 0
        %6964 = vmatpush2.bf16.msra.mxu0 %v6853
        %6965 = vmatprep.mubr.bf16.mxu0 %v6629
        %6966 = vmatmul.mubr.bf16.gmra.mxu0 %v6628
        %v6967 = vpop.f32.mrf.mxu0
        %v6968 = vadd.f32 %v6928, %v6967
        %v6969 = vpop.f32.mrf.mxu0
        %v6970 = vpop.f32.mrf.mxu0
        %v6971 = vpop.f32.mrf.mxu0
        %6972 = vdwg.mxu0
        %6973 = vst [vmem:[%s650] sm:$0x3] %v6968
        %s6974 = sand.u32 %s489, 1
        %s6975 = scalar_lea.sflag [#allocation7], %s6974
        %s6976 = sand.u32 %s489, 1
        %s6977 = smul.addr %s6976, 2
        %s6978 = scalar_lea.vmem [#allocation6], %s6977
        // Predicated region
        $region105: #{image_feature_extractor.1} parent=103 // pred_check
          %p6979 = pneg %p499
        $region106: #{image_feature_extractor.1} parent=103 // pred_check_branch
          %6981 = sbr.rel (%p6979) target = $region108
        $region107: #{image_feature_extractor.1} parent=103 // pred_region
          %s6983 = ssub.s32 32, 32
          %6984 = vsyncadd %s6975, %s6983
          %s6985 = smul.addr %s35, 32
          %s6986 = scalar_lea.hbm %s21, %s6985
          %s6988 = sshll.u32 %s6978, 4
          %s6989 = int_to_ptr.vmem [resolvable:$true] %s6988
          %6991 = dma.vmem_to_hbm [thread:$0]  %s6989, 32, %s6986, %s6975
        $region108: #{image_feature_extractor.1} parent=103 // pred_fallthru
          _
      $region104: #{image_feature_extractor.1} parent=5 // pred_fallthru
        _
      %p6992 = scmp.le.s32.totalorder 2, %s30
      // Predicated region
      $region109: #{image_feature_extractor.1} parent=5 // pred_check
        %p6993 = pneg %p6992
      $region110: #{image_feature_extractor.1} parent=5 // pred_check_branch
        %6995 = sbr.rel (%p6993) target = $region112
      $region111: #{image_feature_extractor.1} parent=5 // pred_region
        %s6996 = ssub.s32 %s30, 2
        // Predicated region
        $region113: #{image_feature_extractor.1} parent=111 // pred_check
          %p6997 = pneg %p505
        $region114: #{image_feature_extractor.1} parent=111 // pred_check_branch
          %6999 = sbr.rel (%p6997) target = $region116
        $region115: #{image_feature_extractor.1} parent=111 // pred_region
          %s7000 = sand.u32 %s490, 1
          %s7001 = scalar_lea.sflag [#allocation7], %s7000
          %s7002 = sand.u32 %s490, 1
          %s7003 = smul.addr %s7002, 2
          %s7004 = scalar_lea.vmem [#allocation6], %s7003
          %7005 = dma.done %s7001, 32
        $region116: #{image_feature_extractor.1} parent=111 // pred_fallthru
          _
      $region112: #{image_feature_extractor.1} parent=5 // pred_fallthru
        _
    $region6: #{image_feature_extractor.1} parent=1 // loop_footer
      %s34 = sadd.s32 1, %s30
    $region7: #{image_feature_extractor.1} parent=1 // loop_footer_branch
      %29 = sbr.rel target = $region3
    $region8: #{image_feature_extractor.1} parent=1 // loop_exit
      _
    %7006 = vsyncpa [#allocation7], 1
    %s7007 = scalar_lea.sflag [#allocation7], 1
    %7008 = vsyncpa %s7007, 1

</llo_original>
